<compile_context>
chip_gen: v5e
topology: v5e:2x2
jax: 0.10.0
libtpu: 0.0.40
codegen_flags: <defaults>
</compile_context>

<pallas_src>
import functools

import jax
import jax.numpy as jnp
from jax import lax
from jax.experimental import pallas as pl
from jax.experimental.pallas import tpu as pltpu


def _msrb_kernel(xwin_ref, w1_ref, b1_ref, w2_ref, b2_ref, o_ref, p1_ref, *, th, w, c):
    # xwin_ref: (1, 1, C, TH+4, W+2) halo window of the reflection-padded input (VMEM, f32)
    # w*_ref:   (9*C*C,)             conv weights, flat [dy, dx, cin, cout] order (SMEM, f32)
    # b*_ref:   (C,)                 biases (SMEM, f32)
    # o_ref:    (1, C, TH, W)        output tile
    # p1_ref:   (C, TH+2, W+2)       VMEM scratch: reflection-padded conv1 output (incl. row halo)
    t = pl.program_id(1)
    nt = pl.num_programs(1)

    xwin = xwin_ref[0, 0]                                  # (C, TH+4, W+2)

    def conv3x3_chan(src, rows, w_ref, b_ref, co):
        # 3x3 cross-correlation for output channel `co` over `rows` output rows.
        # src: (C, rows+2, W+2); returns (rows, W) f32 (bias included).
        acc = jnp.full((rows, w), b_ref[co], dtype=jnp.float32)
        for ci in range(c):
            for dy in range(3):
                for dx in range(3):
                    wt = w_ref[((dy * 3 + dx) * c + ci) * c + co]   # SMEM scalar -> broadcast
                    acc = acc + wt * src[ci, dy:dy + rows, dx:dx + w]
        return acc

    # ---- conv1 + ReLU on TH+2 rows (1-row halo on each side for conv2), written straight
    # into the reflection-padded scratch; width reflection done per channel ----
    for co in range(c):
        a = jnp.maximum(conv3x3_chan(xwin, th + 2, w1_ref, b1_ref, co), 0.0)
        p1_ref[co, :, 1:w + 1] = a
        p1_ref[co, :, 0:1] = a[:, 1:2]                      # left  col = col 1
        p1_ref[co, :, w + 1:w + 2] = a[:, w - 2:w - 1]      # right col = col W-2

    # Row direction: the halo rows of p1 are *real* conv1 rows computed from the input halo,
    # except at the image top/bottom where ReflectionPad2d(1) semantics apply.
    @pl.when(t == 0)
    def _():
        p1_ref[:, 0:1, :] = p1_ref[:, 2:3, :]               # padded row -1 = conv1 row 1

    @pl.when(t == nt - 1)
    def _():
        p1_ref[:, th + 1:th + 2, :] = p1_ref[:, th - 1:th, :]   # padded row H = conv1 row H-2

    # ---- conv2 + residual (read from the interior of the resident input window) + ReLU ----
    p1 = p1_ref[...]                                        # (C, TH+2, W+2)
    for co in range(c):
        a = conv3x3_chan(p1, th, w2_ref, b2_ref, co)
        a = a + xwin[co, 2:th + 2, 1:w + 1]                 # residual: this tile's x rows
        o_ref[0, co] = jnp.maximum(a, 0.0).astype(o_ref.dtype)


def _choose_tile_rows(H, W, max_rows=64):
    """Largest TH <= max_rows dividing H with an (8,128)-legal (TH, W) output block."""
    best = H                       # full-height block is always legal (block dim == array dim)
    for th in range(1, min(H, max_rows) + 1):
        if H % th == 0 and th % 8 == 0:
            best = th
    return best


def _prep_w(w):
    # (Cout, Cin, 3, 3) -> flat [dy, dx, cin, cout] for SMEM scalar reads.
    return jnp.transpose(w, (2, 3, 1, 0)).reshape(-1)


@functools.partial(jax.jit, static_argnames=("tile_rows",))
def msrb_pallas(x, w1, b1, w2, b2, *, tile_rows=None):
    """x: (N, C, H, W) float32; w*: (C, C, 3, 3); b*: (C,).  Returns (N, C, H, W)."""
    N, C, H, W = x.shape
    assert H >= 2 and W >= 2, "ReflectionPad2d(1) needs H, W >= 2"
    TH = tile_rows if tile_rows is not None else _choose_tile_rows(H, W)
    assert H % TH == 0, "tile_rows must divide H"
    assert TH % 8 == 0 or TH == H, "tile_rows must be a multiple of 8 (or equal H)"
    nT = H // TH
    Wp = W + 2

    # Reflection pad (rows+cols) of the C-wide NCHW input, one extra edge row top/bottom so
    # every row tile can use a fixed-size (TH+4)-row window; then stack the per-tile windows
    # so plain Blocked BlockSpecs (auto double-buffered) can stream them.
    xpad = jnp.pad(x, ((0, 0), (0, 0), (1, 1), (1, 1)), mode="reflect")   # (N, C, H+2, W+2)
    xpad2 = jnp.pad(xpad, ((0, 0), (0, 0), (1, 1), (0, 0)), mode="edge")  # (N, C, H+4, W+2)
    windows = jnp.stack(
        [xpad2[:, :, t * TH:t * TH + TH + 4, :] for t in range(nT)], axis=1
    )                                                                      # (N, nT, C, TH+4, W+2)

    kernel = functools.partial(_msrb_kernel, th=TH, w=W, c=C)
    smem_spec = pl.BlockSpec(memory_space=pltpu.MemorySpace.SMEM)

    out = pl.pallas_call(
        kernel,
        out_shape=jax.ShapeDtypeStruct((N, C, H, W), x.dtype),
        grid_spec=pltpu.PrefetchScalarGridSpec(
            num_scalar_prefetch=0,
            grid=(N, nT),
            in_specs=[
                pl.BlockSpec((1, 1, C, TH + 4, Wp), lambda n, t: (n, t, 0, 0, 0)),
                smem_spec,   # w1 flat
                smem_spec,   # b1
                smem_spec,   # w2 flat
                smem_spec,   # b2
            ],
            out_specs=pl.BlockSpec((1, C, TH, W), lambda n, t: (n, 0, t, 0)),
            scratch_shapes=[pltpu.VMEM((C, TH + 2, Wp), jnp.float32)],
        ),
        compiler_params=pltpu.CompilerParams(
            dimension_semantics=("parallel", "parallel"),
        ),
    )(windows, _prep_w(w1), b1, _prep_w(w2), b2)
    return out


def msrb_reference(x_nchw, w1, b1, w2, b2):
    """Pure-JAX reference matching the PyTorch module semantics (NCHW)."""
    def refpad(x):
        return jnp.pad(x, ((0, 0), (0, 0), (1, 1), (1, 1)), mode="reflect")

    def conv(x, w, b):
        y = lax.conv_general_dilated(
            x, w, window_strides=(1, 1), padding="VALID",
            dimension_numbers=("NCHW", "OIHW", "NCHW"))
        return y + b.reshape(1, -1, 1, 1)

    out = jnp.maximum(conv(refpad(x_nchw), w1, b1), 0.0)
    out = conv(refpad(out), w2, b2) + x_nchw
    return jnp.maximum(out, 0.0)


if __name__ == "__main__":
    key = jax.random.PRNGKey(0)
    k_x, k_w1, k_b1, k_w2, k_b2 = jax.random.split(key, 5)

    N, C, H, W = 2, 4, 16, 16
    x = jax.random.normal(k_x, (N, C, H, W), dtype=jnp.float32)

    # Deterministic parameter init (same shapes as nn.Conv2d(C, C, 3)).
    fan_in = C * 3 * 3
    bound = 1.0 / (fan_in ** 0.5)
    w1 = jax.random.uniform(k_w1, (C, C, 3, 3), jnp.float32, -bound, bound)
    b1 = jax.random.uniform(k_b1, (C,), jnp.float32, -bound, bound)
    w2 = jax.random.uniform(k_w2, (C, C, 3, 3), jnp.float32, -bound, bound)
    b2 = jax.random.uniform(k_b2, (C,), jnp.float32, -bound, bound)

    ref = msrb_reference(x, w1, b1, w2, b2)

    # Multi-row-tile path (grid = (N, 2)): exercises the halo windows and the
    # top/bottom reflection fix-ups under pl.when.
    out = jax.block_until_ready(msrb_pallas(x, w1, b1, w2, b2, tile_rows=8))
    assert out.shape == ref.shape == (N, C, H, W)
    assert jnp.allclose(out, ref, rtol=1e-4, atol=1e-4)

    # Auto tile choice (single full-height tile at this size).
    out_auto = jax.block_until_ready(msrb_pallas(x, w1, b1, w2, b2))
    assert jnp.allclose(out_auto, ref, rtol=1e-4, atol=1e-4)

    print("KERNEL_OK")
</pallas_src>

<mosaic_0001>
module attributes {stable_mosaic.version = 11 : i64} {
  func.func @_msrb_kernel(%arg0: i32, %arg1: i32, %arg2: memref<1x1x4x12x18xf32, #tpu.memory_space<vmem>>, %arg3: memref<144xf32, #tpu.memory_space<smem>>, %arg4: memref<4xf32, #tpu.memory_space<smem>>, %arg5: memref<144xf32, #tpu.memory_space<smem>>, %arg6: memref<4xf32, #tpu.memory_space<smem>>, %arg7: memref<1x4x8x16xf32, #tpu.memory_space<vmem>>, %arg8: memref<4x10x18xf32, #tpu.memory_space<vmem>>) attributes {dimension_semantics = [#tpu.dimension_semantics<parallel>, #tpu.dimension_semantics<parallel>], iteration_bounds = array<i64: 2, 2>, scalar_prefetch = 0 : i64, scratch_operands = 1 : i64, tpu.core_type = #tpu.core_type<tc>, window_params = [{transform_indices = @transform_0, window_bounds = array<i64: 1, 1, 4, 12, 18>}, {transform_indices = @transform_1, window_bounds = array<i64: 144>}, {transform_indices = @transform_2, window_bounds = array<i64: 4>}, {transform_indices = @transform_3, window_bounds = array<i64: 144>}, {transform_indices = @transform_4, window_bounds = array<i64: 4>}, {transform_indices = @transform_5, window_bounds = array<i64: 1, 4, 8, 16>}]} {
    %c0 = arith.constant 0 : index
    %c0_0 = arith.constant 0 : index
    %c0_1 = arith.constant 0 : index
    %c0_2 = arith.constant 0 : index
    %c0_3 = arith.constant 0 : index
    %0 = vector.load %arg2[%c0, %c0_0, %c0_1, %c0_2, %c0_3] : memref<1x1x4x12x18xf32, #tpu.memory_space<vmem>>, vector<1x1x4x12x18xf32>
    %1 = vector.shape_cast %0 : vector<1x1x4x12x18xf32> to vector<4x12x18xf32>
    %c0_4 = arith.constant 0 : index
    %2 = memref.load %arg4[%c0_4] : memref<4xf32, #tpu.memory_space<smem>>
    %3 = vector.broadcast %2 : f32 to vector<10x16xf32>
    %c0_5 = arith.constant 0 : index
    %4 = memref.load %arg3[%c0_5] : memref<144xf32, #tpu.memory_space<smem>>
    %5 = vector.extract_strided_slice %1 {offsets = [0, 0, 0], sizes = [1, 10, 16], strides = [1, 1, 1]} : vector<4x12x18xf32> to vector<1x10x16xf32>
    %6 = vector.shape_cast %5 : vector<1x10x16xf32> to vector<10x16xf32>
    %7 = vector.broadcast %4 : f32 to vector<10x16xf32>
    %8 = arith.mulf %7, %6 : vector<10x16xf32>
    %9 = arith.addf %3, %8 : vector<10x16xf32>
    %c16 = arith.constant 16 : index
    %10 = memref.load %arg3[%c16] : memref<144xf32, #tpu.memory_space<smem>>
    %11 = vector.extract_strided_slice %1 {offsets = [0, 0, 1], sizes = [1, 10, 16], strides = [1, 1, 1]} : vector<4x12x18xf32> to vector<1x10x16xf32>
    %12 = vector.shape_cast %11 : vector<1x10x16xf32> to vector<10x16xf32>
    %13 = vector.broadcast %10 : f32 to vector<10x16xf32>
    %14 = arith.mulf %13, %12 : vector<10x16xf32>
    %15 = arith.addf %9, %14 : vector<10x16xf32>
    %c32 = arith.constant 32 : index
    %16 = memref.load %arg3[%c32] : memref<144xf32, #tpu.memory_space<smem>>
    %17 = vector.extract_strided_slice %1 {offsets = [0, 0, 2], sizes = [1, 10, 16], strides = [1, 1, 1]} : vector<4x12x18xf32> to vector<1x10x16xf32>
    %18 = vector.shape_cast %17 : vector<1x10x16xf32> to vector<10x16xf32>
    %19 = vector.broadcast %16 : f32 to vector<10x16xf32>
    %20 = arith.mulf %19, %18 : vector<10x16xf32>
    %21 = arith.addf %15, %20 : vector<10x16xf32>
    %c48 = arith.constant 48 : index
    %22 = memref.load %arg3[%c48] : memref<144xf32, #tpu.memory_space<smem>>
    %23 = vector.extract_strided_slice %1 {offsets = [0, 1, 0], sizes = [1, 10, 16], strides = [1, 1, 1]} : vector<4x12x18xf32> to vector<1x10x16xf32>
    %24 = vector.shape_cast %23 : vector<1x10x16xf32> to vector<10x16xf32>
    %25 = vector.broadcast %22 : f32 to vector<10x16xf32>
    %26 = arith.mulf %25, %24 : vector<10x16xf32>
    %27 = arith.addf %21, %26 : vector<10x16xf32>
    %c64 = arith.constant 64 : index
    %28 = memref.load %arg3[%c64] : memref<144xf32, #tpu.memory_space<smem>>
    %29 = vector.extract_strided_slice %1 {offsets = [0, 1, 1], sizes = [1, 10, 16], strides = [1, 1, 1]} : vector<4x12x18xf32> to vector<1x10x16xf32>
    %30 = vector.shape_cast %29 : vector<1x10x16xf32> to vector<10x16xf32>
    %31 = vector.broadcast %28 : f32 to vector<10x16xf32>
    %32 = arith.mulf %31, %30 : vector<10x16xf32>
    %33 = arith.addf %27, %32 : vector<10x16xf32>
    %c80 = arith.constant 80 : index
    %34 = memref.load %arg3[%c80] : memref<144xf32, #tpu.memory_space<smem>>
    %35 = vector.extract_strided_slice %1 {offsets = [0, 1, 2], sizes = [1, 10, 16], strides = [1, 1, 1]} : vector<4x12x18xf32> to vector<1x10x16xf32>
    %36 = vector.shape_cast %35 : vector<1x10x16xf32> to vector<10x16xf32>
    %37 = vector.broadcast %34 : f32 to vector<10x16xf32>
    %38 = arith.mulf %37, %36 : vector<10x16xf32>
    %39 = arith.addf %33, %38 : vector<10x16xf32>
    %c96 = arith.constant 96 : index
    %40 = memref.load %arg3[%c96] : memref<144xf32, #tpu.memory_space<smem>>
    %41 = vector.extract_strided_slice %1 {offsets = [0, 2, 0], sizes = [1, 10, 16], strides = [1, 1, 1]} : vector<4x12x18xf32> to vector<1x10x16xf32>
    %42 = vector.shape_cast %41 : vector<1x10x16xf32> to vector<10x16xf32>
    %43 = vector.broadcast %40 : f32 to vector<10x16xf32>
    %44 = arith.mulf %43, %42 : vector<10x16xf32>
    %45 = arith.addf %39, %44 : vector<10x16xf32>
    %c112 = arith.constant 112 : index
    %46 = memref.load %arg3[%c112] : memref<144xf32, #tpu.memory_space<smem>>
    %47 = vector.extract_strided_slice %1 {offsets = [0, 2, 1], sizes = [1, 10, 16], strides = [1, 1, 1]} : vector<4x12x18xf32> to vector<1x10x16xf32>
    %48 = vector.shape_cast %47 : vector<1x10x16xf32> to vector<10x16xf32>
    %49 = vector.broadcast %46 : f32 to vector<10x16xf32>
    %50 = arith.mulf %49, %48 : vector<10x16xf32>
    %51 = arith.addf %45, %50 : vector<10x16xf32>
    %c128 = arith.constant 128 : index
    %52 = memref.load %arg3[%c128] : memref<144xf32, #tpu.memory_space<smem>>
    %53 = vector.extract_strided_slice %1 {offsets = [0, 2, 2], sizes = [1, 10, 16], strides = [1, 1, 1]} : vector<4x12x18xf32> to vector<1x10x16xf32>
    %54 = vector.shape_cast %53 : vector<1x10x16xf32> to vector<10x16xf32>
    %55 = vector.broadcast %52 : f32 to vector<10x16xf32>
    %56 = arith.mulf %55, %54 : vector<10x16xf32>
    %57 = arith.addf %51, %56 : vector<10x16xf32>
    %c4 = arith.constant 4 : index
    %58 = memref.load %arg3[%c4] : memref<144xf32, #tpu.memory_space<smem>>
    %59 = vector.extract_strided_slice %1 {offsets = [1, 0, 0], sizes = [1, 10, 16], strides = [1, 1, 1]} : vector<4x12x18xf32> to vector<1x10x16xf32>
    %60 = vector.shape_cast %59 : vector<1x10x16xf32> to vector<10x16xf32>
    %61 = vector.broadcast %58 : f32 to vector<10x16xf32>
    %62 = arith.mulf %61, %60 : vector<10x16xf32>
    %63 = arith.addf %57, %62 : vector<10x16xf32>
    %c20 = arith.constant 20 : index
    %64 = memref.load %arg3[%c20] : memref<144xf32, #tpu.memory_space<smem>>
    %65 = vector.extract_strided_slice %1 {offsets = [1, 0, 1], sizes = [1, 10, 16], strides = [1, 1, 1]} : vector<4x12x18xf32> to vector<1x10x16xf32>
    %66 = vector.shape_cast %65 : vector<1x10x16xf32> to vector<10x16xf32>
    %67 = vector.broadcast %64 : f32 to vector<10x16xf32>
    %68 = arith.mulf %67, %66 : vector<10x16xf32>
    %69 = arith.addf %63, %68 : vector<10x16xf32>
    %c36 = arith.constant 36 : index
    %70 = memref.load %arg3[%c36] : memref<144xf32, #tpu.memory_space<smem>>
    %71 = vector.extract_strided_slice %1 {offsets = [1, 0, 2], sizes = [1, 10, 16], strides = [1, 1, 1]} : vector<4x12x18xf32> to vector<1x10x16xf32>
    %72 = vector.shape_cast %71 : vector<1x10x16xf32> to vector<10x16xf32>
    %73 = vector.broadcast %70 : f32 to vector<10x16xf32>
    %74 = arith.mulf %73, %72 : vector<10x16xf32>
    %75 = arith.addf %69, %74 : vector<10x16xf32>
    %c52 = arith.constant 52 : index
    %76 = memref.load %arg3[%c52] : memref<144xf32, #tpu.memory_space<smem>>
    %77 = vector.extract_strided_slice %1 {offsets = [1, 1, 0], sizes = [1, 10, 16], strides = [1, 1, 1]} : vector<4x12x18xf32> to vector<1x10x16xf32>
    %78 = vector.shape_cast %77 : vector<1x10x16xf32> to vector<10x16xf32>
    %79 = vector.broadcast %76 : f32 to vector<10x16xf32>
    %80 = arith.mulf %79, %78 : vector<10x16xf32>
    %81 = arith.addf %75, %80 : vector<10x16xf32>
    %c68 = arith.constant 68 : index
    %82 = memref.load %arg3[%c68] : memref<144xf32, #tpu.memory_space<smem>>
    %83 = vector.extract_strided_slice %1 {offsets = [1, 1, 1], sizes = [1, 10, 16], strides = [1, 1, 1]} : vector<4x12x18xf32> to vector<1x10x16xf32>
    %84 = vector.shape_cast %83 : vector<1x10x16xf32> to vector<10x16xf32>
    %85 = vector.broadcast %82 : f32 to vector<10x16xf32>
    %86 = arith.mulf %85, %84 : vector<10x16xf32>
    %87 = arith.addf %81, %86 : vector<10x16xf32>
    %c84 = arith.constant 84 : index
    %88 = memref.load %arg3[%c84] : memref<144xf32, #tpu.memory_space<smem>>
    %89 = vector.extract_strided_slice %1 {offsets = [1, 1, 2], sizes = [1, 10, 16], strides = [1, 1, 1]} : vector<4x12x18xf32> to vector<1x10x16xf32>
    %90 = vector.shape_cast %89 : vector<1x10x16xf32> to vector<10x16xf32>
    %91 = vector.broadcast %88 : f32 to vector<10x16xf32>
    %92 = arith.mulf %91, %90 : vector<10x16xf32>
    %93 = arith.addf %87, %92 : vector<10x16xf32>
    %c100 = arith.constant 100 : index
    %94 = memref.load %arg3[%c100] : memref<144xf32, #tpu.memory_space<smem>>
    %95 = vector.extract_strided_slice %1 {offsets = [1, 2, 0], sizes = [1, 10, 16], strides = [1, 1, 1]} : vector<4x12x18xf32> to vector<1x10x16xf32>
    %96 = vector.shape_cast %95 : vector<1x10x16xf32> to vector<10x16xf32>
    %97 = vector.broadcast %94 : f32 to vector<10x16xf32>
    %98 = arith.mulf %97, %96 : vector<10x16xf32>
    %99 = arith.addf %93, %98 : vector<10x16xf32>
    %c116 = arith.constant 116 : index
    %100 = memref.load %arg3[%c116] : memref<144xf32, #tpu.memory_space<smem>>
    %101 = vector.extract_strided_slice %1 {offsets = [1, 2, 1], sizes = [1, 10, 16], strides = [1, 1, 1]} : vector<4x12x18xf32> to vector<1x10x16xf32>
    %102 = vector.shape_cast %101 : vector<1x10x16xf32> to vector<10x16xf32>
    %103 = vector.broadcast %100 : f32 to vector<10x16xf32>
    %104 = arith.mulf %103, %102 : vector<10x16xf32>
    %105 = arith.addf %99, %104 : vector<10x16xf32>
    %c132 = arith.constant 132 : index
    %106 = memref.load %arg3[%c132] : memref<144xf32, #tpu.memory_space<smem>>
    %107 = vector.extract_strided_slice %1 {offsets = [1, 2, 2], sizes = [1, 10, 16], strides = [1, 1, 1]} : vector<4x12x18xf32> to vector<1x10x16xf32>
    %108 = vector.shape_cast %107 : vector<1x10x16xf32> to vector<10x16xf32>
    %109 = vector.broadcast %106 : f32 to vector<10x16xf32>
    %110 = arith.mulf %109, %108 : vector<10x16xf32>
    %111 = arith.addf %105, %110 : vector<10x16xf32>
    %c8 = arith.constant 8 : index
    %112 = memref.load %arg3[%c8] : memref<144xf32, #tpu.memory_space<smem>>
    %113 = vector.extract_strided_slice %1 {offsets = [2, 0, 0], sizes = [1, 10, 16], strides = [1, 1, 1]} : vector<4x12x18xf32> to vector<1x10x16xf32>
    %114 = vector.shape_cast %113 : vector<1x10x16xf32> to vector<10x16xf32>
    %115 = vector.broadcast %112 : f32 to vector<10x16xf32>
    %116 = arith.mulf %115, %114 : vector<10x16xf32>
    %117 = arith.addf %111, %116 : vector<10x16xf32>
    %c24 = arith.constant 24 : index
    %118 = memref.load %arg3[%c24] : memref<144xf32, #tpu.memory_space<smem>>
    %119 = vector.extract_strided_slice %1 {offsets = [2, 0, 1], sizes = [1, 10, 16], strides = [1, 1, 1]} : vector<4x12x18xf32> to vector<1x10x16xf32>
    %120 = vector.shape_cast %119 : vector<1x10x16xf32> to vector<10x16xf32>
    %121 = vector.broadcast %118 : f32 to vector<10x16xf32>
    %122 = arith.mulf %121, %120 : vector<10x16xf32>
    %123 = arith.addf %117, %122 : vector<10x16xf32>
    %c40 = arith.constant 40 : index
    %124 = memref.load %arg3[%c40] : memref<144xf32, #tpu.memory_space<smem>>
    %125 = vector.extract_strided_slice %1 {offsets = [2, 0, 2], sizes = [1, 10, 16], strides = [1, 1, 1]} : vector<4x12x18xf32> to vector<1x10x16xf32>
    %126 = vector.shape_cast %125 : vector<1x10x16xf32> to vector<10x16xf32>
    %127 = vector.broadcast %124 : f32 to vector<10x16xf32>
    %128 = arith.mulf %127, %126 : vector<10x16xf32>
    %129 = arith.addf %123, %128 : vector<10x16xf32>
    %c56 = arith.constant 56 : index
    %130 = memref.load %arg3[%c56] : memref<144xf32, #tpu.memory_space<smem>>
    %131 = vector.extract_strided_slice %1 {offsets = [2, 1, 0], sizes = [1, 10, 16], strides = [1, 1, 1]} : vector<4x12x18xf32> to vector<1x10x16xf32>
    %132 = vector.shape_cast %131 : vector<1x10x16xf32> to vector<10x16xf32>
    %133 = vector.broadcast %130 : f32 to vector<10x16xf32>
    %134 = arith.mulf %133, %132 : vector<10x16xf32>
    %135 = arith.addf %129, %134 : vector<10x16xf32>
    %c72 = arith.constant 72 : index
    %136 = memref.load %arg3[%c72] : memref<144xf32, #tpu.memory_space<smem>>
    %137 = vector.extract_strided_slice %1 {offsets = [2, 1, 1], sizes = [1, 10, 16], strides = [1, 1, 1]} : vector<4x12x18xf32> to vector<1x10x16xf32>
    %138 = vector.shape_cast %137 : vector<1x10x16xf32> to vector<10x16xf32>
    %139 = vector.broadcast %136 : f32 to vector<10x16xf32>
    %140 = arith.mulf %139, %138 : vector<10x16xf32>
    %141 = arith.addf %135, %140 : vector<10x16xf32>
    %c88 = arith.constant 88 : index
    %142 = memref.load %arg3[%c88] : memref<144xf32, #tpu.memory_space<smem>>
    %143 = vector.extract_strided_slice %1 {offsets = [2, 1, 2], sizes = [1, 10, 16], strides = [1, 1, 1]} : vector<4x12x18xf32> to vector<1x10x16xf32>
    %144 = vector.shape_cast %143 : vector<1x10x16xf32> to vector<10x16xf32>
    %145 = vector.broadcast %142 : f32 to vector<10x16xf32>
    %146 = arith.mulf %145, %144 : vector<10x16xf32>
    %147 = arith.addf %141, %146 : vector<10x16xf32>
    %c104 = arith.constant 104 : index
    %148 = memref.load %arg3[%c104] : memref<144xf32, #tpu.memory_space<smem>>
    %149 = vector.extract_strided_slice %1 {offsets = [2, 2, 0], sizes = [1, 10, 16], strides = [1, 1, 1]} : vector<4x12x18xf32> to vector<1x10x16xf32>
    %150 = vector.shape_cast %149 : vector<1x10x16xf32> to vector<10x16xf32>
    %151 = vector.broadcast %148 : f32 to vector<10x16xf32>
    %152 = arith.mulf %151, %150 : vector<10x16xf32>
    %153 = arith.addf %147, %152 : vector<10x16xf32>
    %c120 = arith.constant 120 : index
    %154 = memref.load %arg3[%c120] : memref<144xf32, #tpu.memory_space<smem>>
    %155 = vector.extract_strided_slice %1 {offsets = [2, 2, 1], sizes = [1, 10, 16], strides = [1, 1, 1]} : vector<4x12x18xf32> to vector<1x10x16xf32>
    %156 = vector.shape_cast %155 : vector<1x10x16xf32> to vector<10x16xf32>
    %157 = vector.broadcast %154 : f32 to vector<10x16xf32>
    %158 = arith.mulf %157, %156 : vector<10x16xf32>
    %159 = arith.addf %153, %158 : vector<10x16xf32>
    %c136 = arith.constant 136 : index
    %160 = memref.load %arg3[%c136] : memref<144xf32, #tpu.memory_space<smem>>
    %161 = vector.extract_strided_slice %1 {offsets = [2, 2, 2], sizes = [1, 10, 16], strides = [1, 1, 1]} : vector<4x12x18xf32> to vector<1x10x16xf32>
    %162 = vector.shape_cast %161 : vector<1x10x16xf32> to vector<10x16xf32>
    %163 = vector.broadcast %160 : f32 to vector<10x16xf32>
    %164 = arith.mulf %163, %162 : vector<10x16xf32>
    %165 = arith.addf %159, %164 : vector<10x16xf32>
    %c12 = arith.constant 12 : index
    %166 = memref.load %arg3[%c12] : memref<144xf32, #tpu.memory_space<smem>>
    %167 = vector.extract_strided_slice %1 {offsets = [3, 0, 0], sizes = [1, 10, 16], strides = [1, 1, 1]} : vector<4x12x18xf32> to vector<1x10x16xf32>
    %168 = vector.shape_cast %167 : vector<1x10x16xf32> to vector<10x16xf32>
    %169 = vector.broadcast %166 : f32 to vector<10x16xf32>
    %170 = arith.mulf %169, %168 : vector<10x16xf32>
    %171 = arith.addf %165, %170 : vector<10x16xf32>
    %c28 = arith.constant 28 : index
    %172 = memref.load %arg3[%c28] : memref<144xf32, #tpu.memory_space<smem>>
    %173 = vector.extract_strided_slice %1 {offsets = [3, 0, 1], sizes = [1, 10, 16], strides = [1, 1, 1]} : vector<4x12x18xf32> to vector<1x10x16xf32>
    %174 = vector.shape_cast %173 : vector<1x10x16xf32> to vector<10x16xf32>
    %175 = vector.broadcast %172 : f32 to vector<10x16xf32>
    %176 = arith.mulf %175, %174 : vector<10x16xf32>
    %177 = arith.addf %171, %176 : vector<10x16xf32>
    %c44 = arith.constant 44 : index
    %178 = memref.load %arg3[%c44] : memref<144xf32, #tpu.memory_space<smem>>
    %179 = vector.extract_strided_slice %1 {offsets = [3, 0, 2], sizes = [1, 10, 16], strides = [1, 1, 1]} : vector<4x12x18xf32> to vector<1x10x16xf32>
    %180 = vector.shape_cast %179 : vector<1x10x16xf32> to vector<10x16xf32>
    %181 = vector.broadcast %178 : f32 to vector<10x16xf32>
    %182 = arith.mulf %181, %180 : vector<10x16xf32>
    %183 = arith.addf %177, %182 : vector<10x16xf32>
    %c60 = arith.constant 60 : index
    %184 = memref.load %arg3[%c60] : memref<144xf32, #tpu.memory_space<smem>>
    %185 = vector.extract_strided_slice %1 {offsets = [3, 1, 0], sizes = [1, 10, 16], strides = [1, 1, 1]} : vector<4x12x18xf32> to vector<1x10x16xf32>
    %186 = vector.shape_cast %185 : vector<1x10x16xf32> to vector<10x16xf32>
    %187 = vector.broadcast %184 : f32 to vector<10x16xf32>
    %188 = arith.mulf %187, %186 : vector<10x16xf32>
    %189 = arith.addf %183, %188 : vector<10x16xf32>
    %c76 = arith.constant 76 : index
    %190 = memref.load %arg3[%c76] : memref<144xf32, #tpu.memory_space<smem>>
    %191 = vector.extract_strided_slice %1 {offsets = [3, 1, 1], sizes = [1, 10, 16], strides = [1, 1, 1]} : vector<4x12x18xf32> to vector<1x10x16xf32>
    %192 = vector.shape_cast %191 : vector<1x10x16xf32> to vector<10x16xf32>
    %193 = vector.broadcast %190 : f32 to vector<10x16xf32>
    %194 = arith.mulf %193, %192 : vector<10x16xf32>
    %195 = arith.addf %189, %194 : vector<10x16xf32>
    %c92 = arith.constant 92 : index
    %196 = memref.load %arg3[%c92] : memref<144xf32, #tpu.memory_space<smem>>
    %197 = vector.extract_strided_slice %1 {offsets = [3, 1, 2], sizes = [1, 10, 16], strides = [1, 1, 1]} : vector<4x12x18xf32> to vector<1x10x16xf32>
    %198 = vector.shape_cast %197 : vector<1x10x16xf32> to vector<10x16xf32>
    %199 = vector.broadcast %196 : f32 to vector<10x16xf32>
    %200 = arith.mulf %199, %198 : vector<10x16xf32>
    %201 = arith.addf %195, %200 : vector<10x16xf32>
    %c108 = arith.constant 108 : index
    %202 = memref.load %arg3[%c108] : memref<144xf32, #tpu.memory_space<smem>>
    %203 = vector.extract_strided_slice %1 {offsets = [3, 2, 0], sizes = [1, 10, 16], strides = [1, 1, 1]} : vector<4x12x18xf32> to vector<1x10x16xf32>
    %204 = vector.shape_cast %203 : vector<1x10x16xf32> to vector<10x16xf32>
    %205 = vector.broadcast %202 : f32 to vector<10x16xf32>
    %206 = arith.mulf %205, %204 : vector<10x16xf32>
    %207 = arith.addf %201, %206 : vector<10x16xf32>
    %c124 = arith.constant 124 : index
    %208 = memref.load %arg3[%c124] : memref<144xf32, #tpu.memory_space<smem>>
    %209 = vector.extract_strided_slice %1 {offsets = [3, 2, 1], sizes = [1, 10, 16], strides = [1, 1, 1]} : vector<4x12x18xf32> to vector<1x10x16xf32>
    %210 = vector.shape_cast %209 : vector<1x10x16xf32> to vector<10x16xf32>
    %211 = vector.broadcast %208 : f32 to vector<10x16xf32>
    %212 = arith.mulf %211, %210 : vector<10x16xf32>
    %213 = arith.addf %207, %212 : vector<10x16xf32>
    %c140 = arith.constant 140 : index
    %214 = memref.load %arg3[%c140] : memref<144xf32, #tpu.memory_space<smem>>
    %215 = vector.extract_strided_slice %1 {offsets = [3, 2, 2], sizes = [1, 10, 16], strides = [1, 1, 1]} : vector<4x12x18xf32> to vector<1x10x16xf32>
    %216 = vector.shape_cast %215 : vector<1x10x16xf32> to vector<10x16xf32>
    %217 = vector.broadcast %214 : f32 to vector<10x16xf32>
    %218 = arith.mulf %217, %216 : vector<10x16xf32>
    %219 = arith.addf %213, %218 : vector<10x16xf32>
    %cst = arith.constant 0.000000e+00 : f32
    %220 = vector.broadcast %cst : f32 to vector<10x16xf32>
    %221 = arith.maximumf %219, %220 : vector<10x16xf32>
    %c0_6 = arith.constant 0 : index
    %c0_7 = arith.constant 0 : index
    %c1 = arith.constant 1 : index
    %222 = vector.load %arg8[%c0_6, %c0_7, %c1] : memref<4x10x18xf32, #tpu.memory_space<vmem>>, vector<1x10x16xf32>
    %223 = vector.shape_cast %222 : vector<1x10x16xf32> to vector<10x16xf32>
    %224 = vector.shape_cast %221 : vector<10x16xf32> to vector<1x10x16xf32>
    tpu.vector_store %arg8[%c0_6, %c0_7, %c1], %224 {strides = array<i32>} : memref<4x10x18xf32, #tpu.memory_space<vmem>>, vector<1x10x16xf32>,
    %225 = vector.extract_strided_slice %221 {offsets = [0, 1], sizes = [10, 1], strides = [1, 1]} : vector<10x16xf32> to vector<10x1xf32>
    %c0_8 = arith.constant 0 : index
    %c0_9 = arith.constant 0 : index
    %c0_10 = arith.constant 0 : index
    %226 = vector.load %arg8[%c0_8, %c0_9, %c0_10] : memref<4x10x18xf32, #tpu.memory_space<vmem>>, vector<1x10x1xf32>
    %227 = vector.shape_cast %226 : vector<1x10x1xf32> to vector<10x1xf32>
    %228 = vector.shape_cast %225 : vector<10x1xf32> to vector<1x10x1xf32>
    tpu.vector_store %arg8[%c0_8, %c0_9, %c0_10], %228 {strides = array<i32>} : memref<4x10x18xf32, #tpu.memory_space<vmem>>, vector<1x10x1xf32>,
    %229 = vector.extract_strided_slice %221 {offsets = [0, 14], sizes = [10, 1], strides = [1, 1]} : vector<10x16xf32> to vector<10x1xf32>
    %c0_11 = arith.constant 0 : index
    %c0_12 = arith.constant 0 : index
    %c17 = arith.constant 17 : index
    %230 = vector.load %arg8[%c0_11, %c0_12, %c17] : memref<4x10x18xf32, #tpu.memory_space<vmem>>, vector<1x10x1xf32>
    %231 = vector.shape_cast %230 : vector<1x10x1xf32> to vector<10x1xf32>
    %232 = vector.shape_cast %229 : vector<10x1xf32> to vector<1x10x1xf32>
    tpu.vector_store %arg8[%c0_11, %c0_12, %c17], %232 {strides = array<i32>} : memref<4x10x18xf32, #tpu.memory_space<vmem>>, vector<1x10x1xf32>,
    %c1_13 = arith.constant 1 : index
    %233 = memref.load %arg4[%c1_13] : memref<4xf32, #tpu.memory_space<smem>>
    %234 = vector.broadcast %233 : f32 to vector<10x16xf32>
    %c1_14 = arith.constant 1 : index
    %235 = memref.load %arg3[%c1_14] : memref<144xf32, #tpu.memory_space<smem>>
    %236 = vector.extract_strided_slice %1 {offsets = [0, 0, 0], sizes = [1, 10, 16], strides = [1, 1, 1]} : vector<4x12x18xf32> to vector<1x10x16xf32>
    %237 = vector.shape_cast %236 : vector<1x10x16xf32> to vector<10x16xf32>
    %238 = vector.broadcast %235 : f32 to vector<10x16xf32>
    %239 = arith.mulf %238, %237 : vector<10x16xf32>
    %240 = arith.addf %234, %239 : vector<10x16xf32>
    %c17_15 = arith.constant 17 : index
    %241 = memref.load %arg3[%c17_15] : memref<144xf32, #tpu.memory_space<smem>>
    %242 = vector.extract_strided_slice %1 {offsets = [0, 0, 1], sizes = [1, 10, 16], strides = [1, 1, 1]} : vector<4x12x18xf32> to vector<1x10x16xf32>
    %243 = vector.shape_cast %242 : vector<1x10x16xf32> to vector<10x16xf32>
    %244 = vector.broadcast %241 : f32 to vector<10x16xf32>
    %245 = arith.mulf %244, %243 : vector<10x16xf32>
    %246 = arith.addf %240, %245 : vector<10x16xf32>
    %c33 = arith.constant 33 : index
    %247 = memref.load %arg3[%c33] : memref<144xf32, #tpu.memory_space<smem>>
    %248 = vector.extract_strided_slice %1 {offsets = [0, 0, 2], sizes = [1, 10, 16], strides = [1, 1, 1]} : vector<4x12x18xf32> to vector<1x10x16xf32>
    %249 = vector.shape_cast %248 : vector<1x10x16xf32> to vector<10x16xf32>
    %250 = vector.broadcast %247 : f32 to vector<10x16xf32>
    %251 = arith.mulf %250, %249 : vector<10x16xf32>
    %252 = arith.addf %246, %251 : vector<10x16xf32>
    %c49 = arith.constant 49 : index
    %253 = memref.load %arg3[%c49] : memref<144xf32, #tpu.memory_space<smem>>
    %254 = vector.extract_strided_slice %1 {offsets = [0, 1, 0], sizes = [1, 10, 16], strides = [1, 1, 1]} : vector<4x12x18xf32> to vector<1x10x16xf32>
    %255 = vector.shape_cast %254 : vector<1x10x16xf32> to vector<10x16xf32>
    %256 = vector.broadcast %253 : f32 to vector<10x16xf32>
    %257 = arith.mulf %256, %255 : vector<10x16xf32>
    %258 = arith.addf %252, %257 : vector<10x16xf32>
    %c65 = arith.constant 65 : index
    %259 = memref.load %arg3[%c65] : memref<144xf32, #tpu.memory_space<smem>>
    %260 = vector.extract_strided_slice %1 {offsets = [0, 1, 1], sizes = [1, 10, 16], strides = [1, 1, 1]} : vector<4x12x18xf32> to vector<1x10x16xf32>
    %261 = vector.shape_cast %260 : vector<1x10x16xf32> to vector<10x16xf32>
    %262 = vector.broadcast %259 : f32 to vector<10x16xf32>
    %263 = arith.mulf %262, %261 : vector<10x16xf32>
    %264 = arith.addf %258, %263 : vector<10x16xf32>
    %c81 = arith.constant 81 : index
    %265 = memref.load %arg3[%c81] : memref<144xf32, #tpu.memory_space<smem>>
    %266 = vector.extract_strided_slice %1 {offsets = [0, 1, 2], sizes = [1, 10, 16], strides = [1, 1, 1]} : vector<4x12x18xf32> to vector<1x10x16xf32>
    %267 = vector.shape_cast %266 : vector<1x10x16xf32> to vector<10x16xf32>
    %268 = vector.broadcast %265 : f32 to vector<10x16xf32>
    %269 = arith.mulf %268, %267 : vector<10x16xf32>
    %270 = arith.addf %264, %269 : vector<10x16xf32>
    %c97 = arith.constant 97 : index
    %271 = memref.load %arg3[%c97] : memref<144xf32, #tpu.memory_space<smem>>
    %272 = vector.extract_strided_slice %1 {offsets = [0, 2, 0], sizes = [1, 10, 16], strides = [1, 1, 1]} : vector<4x12x18xf32> to vector<1x10x16xf32>
    %273 = vector.shape_cast %272 : vector<1x10x16xf32> to vector<10x16xf32>
    %274 = vector.broadcast %271 : f32 to vector<10x16xf32>
    %275 = arith.mulf %274, %273 : vector<10x16xf32>
    %276 = arith.addf %270, %275 : vector<10x16xf32>
    %c113 = arith.constant 113 : index
    %277 = memref.load %arg3[%c113] : memref<144xf32, #tpu.memory_space<smem>>
    %278 = vector.extract_strided_slice %1 {offsets = [0, 2, 1], sizes = [1, 10, 16], strides = [1, 1, 1]} : vector<4x12x18xf32> to vector<1x10x16xf32>
    %279 = vector.shape_cast %278 : vector<1x10x16xf32> to vector<10x16xf32>
    %280 = vector.broadcast %277 : f32 to vector<10x16xf32>
    %281 = arith.mulf %280, %279 : vector<10x16xf32>
    %282 = arith.addf %276, %281 : vector<10x16xf32>
    %c129 = arith.constant 129 : index
    %283 = memref.load %arg3[%c129] : memref<144xf32, #tpu.memory_space<smem>>
    %284 = vector.extract_strided_slice %1 {offsets = [0, 2, 2], sizes = [1, 10, 16], strides = [1, 1, 1]} : vector<4x12x18xf32> to vector<1x10x16xf32>
    %285 = vector.shape_cast %284 : vector<1x10x16xf32> to vector<10x16xf32>
    %286 = vector.broadcast %283 : f32 to vector<10x16xf32>
    %287 = arith.mulf %286, %285 : vector<10x16xf32>
    %288 = arith.addf %282, %287 : vector<10x16xf32>
    %c5 = arith.constant 5 : index
    %289 = memref.load %arg3[%c5] : memref<144xf32, #tpu.memory_space<smem>>
    %290 = vector.extract_strided_slice %1 {offsets = [1, 0, 0], sizes = [1, 10, 16], strides = [1, 1, 1]} : vector<4x12x18xf32> to vector<1x10x16xf32>
    %291 = vector.shape_cast %290 : vector<1x10x16xf32> to vector<10x16xf32>
    %292 = vector.broadcast %289 : f32 to vector<10x16xf32>
    %293 = arith.mulf %292, %291 : vector<10x16xf32>
    %294 = arith.addf %288, %293 : vector<10x16xf32>
    %c21 = arith.constant 21 : index
    %295 = memref.load %arg3[%c21] : memref<144xf32, #tpu.memory_space<smem>>
    %296 = vector.extract_strided_slice %1 {offsets = [1, 0, 1], sizes = [1, 10, 16], strides = [1, 1, 1]} : vector<4x12x18xf32> to vector<1x10x16xf32>
    %297 = vector.shape_cast %296 : vector<1x10x16xf32> to vector<10x16xf32>
    %298 = vector.broadcast %295 : f32 to vector<10x16xf32>
    %299 = arith.mulf %298, %297 : vector<10x16xf32>
    %300 = arith.addf %294, %299 : vector<10x16xf32>
    %c37 = arith.constant 37 : index
    %301 = memref.load %arg3[%c37] : memref<144xf32, #tpu.memory_space<smem>>
    %302 = vector.extract_strided_slice %1 {offsets = [1, 0, 2], sizes = [1, 10, 16], strides = [1, 1, 1]} : vector<4x12x18xf32> to vector<1x10x16xf32>
    %303 = vector.shape_cast %302 : vector<1x10x16xf32> to vector<10x16xf32>
    %304 = vector.broadcast %301 : f32 to vector<10x16xf32>
    %305 = arith.mulf %304, %303 : vector<10x16xf32>
    %306 = arith.addf %300, %305 : vector<10x16xf32>
    %c53 = arith.constant 53 : index
    %307 = memref.load %arg3[%c53] : memref<144xf32, #tpu.memory_space<smem>>
    %308 = vector.extract_strided_slice %1 {offsets = [1, 1, 0], sizes = [1, 10, 16], strides = [1, 1, 1]} : vector<4x12x18xf32> to vector<1x10x16xf32>
    %309 = vector.shape_cast %308 : vector<1x10x16xf32> to vector<10x16xf32>
    %310 = vector.broadcast %307 : f32 to vector<10x16xf32>
    %311 = arith.mulf %310, %309 : vector<10x16xf32>
    %312 = arith.addf %306, %311 : vector<10x16xf32>
    %c69 = arith.constant 69 : index
    %313 = memref.load %arg3[%c69] : memref<144xf32, #tpu.memory_space<smem>>
    %314 = vector.extract_strided_slice %1 {offsets = [1, 1, 1], sizes = [1, 10, 16], strides = [1, 1, 1]} : vector<4x12x18xf32> to vector<1x10x16xf32>
    %315 = vector.shape_cast %314 : vector<1x10x16xf32> to vector<10x16xf32>
    %316 = vector.broadcast %313 : f32 to vector<10x16xf32>
    %317 = arith.mulf %316, %315 : vector<10x16xf32>
    %318 = arith.addf %312, %317 : vector<10x16xf32>
    %c85 = arith.constant 85 : index
    %319 = memref.load %arg3[%c85] : memref<144xf32, #tpu.memory_space<smem>>
    %320 = vector.extract_strided_slice %1 {offsets = [1, 1, 2], sizes = [1, 10, 16], strides = [1, 1, 1]} : vector<4x12x18xf32> to vector<1x10x16xf32>
    %321 = vector.shape_cast %320 : vector<1x10x16xf32> to vector<10x16xf32>
    %322 = vector.broadcast %319 : f32 to vector<10x16xf32>
    %323 = arith.mulf %322, %321 : vector<10x16xf32>
    %324 = arith.addf %318, %323 : vector<10x16xf32>
    %c101 = arith.constant 101 : index
    %325 = memref.load %arg3[%c101] : memref<144xf32, #tpu.memory_space<smem>>
    %326 = vector.extract_strided_slice %1 {offsets = [1, 2, 0], sizes = [1, 10, 16], strides = [1, 1, 1]} : vector<4x12x18xf32> to vector<1x10x16xf32>
    %327 = vector.shape_cast %326 : vector<1x10x16xf32> to vector<10x16xf32>
    %328 = vector.broadcast %325 : f32 to vector<10x16xf32>
    %329 = arith.mulf %328, %327 : vector<10x16xf32>
    %330 = arith.addf %324, %329 : vector<10x16xf32>
    %c117 = arith.constant 117 : index
    %331 = memref.load %arg3[%c117] : memref<144xf32, #tpu.memory_space<smem>>
    %332 = vector.extract_strided_slice %1 {offsets = [1, 2, 1], sizes = [1, 10, 16], strides = [1, 1, 1]} : vector<4x12x18xf32> to vector<1x10x16xf32>
    %333 = vector.shape_cast %332 : vector<1x10x16xf32> to vector<10x16xf32>
    %334 = vector.broadcast %331 : f32 to vector<10x16xf32>
    %335 = arith.mulf %334, %333 : vector<10x16xf32>
    %336 = arith.addf %330, %335 : vector<10x16xf32>
    %c133 = arith.constant 133 : index
    %337 = memref.load %arg3[%c133] : memref<144xf32, #tpu.memory_space<smem>>
    %338 = vector.extract_strided_slice %1 {offsets = [1, 2, 2], sizes = [1, 10, 16], strides = [1, 1, 1]} : vector<4x12x18xf32> to vector<1x10x16xf32>
    %339 = vector.shape_cast %338 : vector<1x10x16xf32> to vector<10x16xf32>
    %340 = vector.broadcast %337 : f32 to vector<10x16xf32>
    %341 = arith.mulf %340, %339 : vector<10x16xf32>
    %342 = arith.addf %336, %341 : vector<10x16xf32>
    %c9 = arith.constant 9 : index
    %343 = memref.load %arg3[%c9] : memref<144xf32, #tpu.memory_space<smem>>
    %344 = vector.extract_strided_slice %1 {offsets = [2, 0, 0], sizes = [1, 10, 16], strides = [1, 1, 1]} : vector<4x12x18xf32> to vector<1x10x16xf32>
    %345 = vector.shape_cast %344 : vector<1x10x16xf32> to vector<10x16xf32>
    %346 = vector.broadcast %343 : f32 to vector<10x16xf32>
    %347 = arith.mulf %346, %345 : vector<10x16xf32>
    %348 = arith.addf %342, %347 : vector<10x16xf32>
    %c25 = arith.constant 25 : index
    %349 = memref.load %arg3[%c25] : memref<144xf32, #tpu.memory_space<smem>>
    %350 = vector.extract_strided_slice %1 {offsets = [2, 0, 1], sizes = [1, 10, 16], strides = [1, 1, 1]} : vector<4x12x18xf32> to vector<1x10x16xf32>
    %351 = vector.shape_cast %350 : vector<1x10x16xf32> to vector<10x16xf32>
    %352 = vector.broadcast %349 : f32 to vector<10x16xf32>
    %353 = arith.mulf %352, %351 : vector<10x16xf32>
    %354 = arith.addf %348, %353 : vector<10x16xf32>
    %c41 = arith.constant 41 : index
    %355 = memref.load %arg3[%c41] : memref<144xf32, #tpu.memory_space<smem>>
    %356 = vector.extract_strided_slice %1 {offsets = [2, 0, 2], sizes = [1, 10, 16], strides = [1, 1, 1]} : vector<4x12x18xf32> to vector<1x10x16xf32>
    %357 = vector.shape_cast %356 : vector<1x10x16xf32> to vector<10x16xf32>
    %358 = vector.broadcast %355 : f32 to vector<10x16xf32>
    %359 = arith.mulf %358, %357 : vector<10x16xf32>
    %360 = arith.addf %354, %359 : vector<10x16xf32>
    %c57 = arith.constant 57 : index
    %361 = memref.load %arg3[%c57] : memref<144xf32, #tpu.memory_space<smem>>
    %362 = vector.extract_strided_slice %1 {offsets = [2, 1, 0], sizes = [1, 10, 16], strides = [1, 1, 1]} : vector<4x12x18xf32> to vector<1x10x16xf32>
    %363 = vector.shape_cast %362 : vector<1x10x16xf32> to vector<10x16xf32>
    %364 = vector.broadcast %361 : f32 to vector<10x16xf32>
    %365 = arith.mulf %364, %363 : vector<10x16xf32>
    %366 = arith.addf %360, %365 : vector<10x16xf32>
    %c73 = arith.constant 73 : index
    %367 = memref.load %arg3[%c73] : memref<144xf32, #tpu.memory_space<smem>>
    %368 = vector.extract_strided_slice %1 {offsets = [2, 1, 1], sizes = [1, 10, 16], strides = [1, 1, 1]} : vector<4x12x18xf32> to vector<1x10x16xf32>
    %369 = vector.shape_cast %368 : vector<1x10x16xf32> to vector<10x16xf32>
    %370 = vector.broadcast %367 : f32 to vector<10x16xf32>
    %371 = arith.mulf %370, %369 : vector<10x16xf32>
    %372 = arith.addf %366, %371 : vector<10x16xf32>
    %c89 = arith.constant 89 : index
    %373 = memref.load %arg3[%c89] : memref<144xf32, #tpu.memory_space<smem>>
    %374 = vector.extract_strided_slice %1 {offsets = [2, 1, 2], sizes = [1, 10, 16], strides = [1, 1, 1]} : vector<4x12x18xf32> to vector<1x10x16xf32>
    %375 = vector.shape_cast %374 : vector<1x10x16xf32> to vector<10x16xf32>
    %376 = vector.broadcast %373 : f32 to vector<10x16xf32>
    %377 = arith.mulf %376, %375 : vector<10x16xf32>
    %378 = arith.addf %372, %377 : vector<10x16xf32>
    %c105 = arith.constant 105 : index
    %379 = memref.load %arg3[%c105] : memref<144xf32, #tpu.memory_space<smem>>
    %380 = vector.extract_strided_slice %1 {offsets = [2, 2, 0], sizes = [1, 10, 16], strides = [1, 1, 1]} : vector<4x12x18xf32> to vector<1x10x16xf32>
    %381 = vector.shape_cast %380 : vector<1x10x16xf32> to vector<10x16xf32>
    %382 = vector.broadcast %379 : f32 to vector<10x16xf32>
    %383 = arith.mulf %382, %381 : vector<10x16xf32>
    %384 = arith.addf %378, %383 : vector<10x16xf32>
    %c121 = arith.constant 121 : index
    %385 = memref.load %arg3[%c121] : memref<144xf32, #tpu.memory_space<smem>>
    %386 = vector.extract_strided_slice %1 {offsets = [2, 2, 1], sizes = [1, 10, 16], strides = [1, 1, 1]} : vector<4x12x18xf32> to vector<1x10x16xf32>
    %387 = vector.shape_cast %386 : vector<1x10x16xf32> to vector<10x16xf32>
    %388 = vector.broadcast %385 : f32 to vector<10x16xf32>
    %389 = arith.mulf %388, %387 : vector<10x16xf32>
    %390 = arith.addf %384, %389 : vector<10x16xf32>
    %c137 = arith.constant 137 : index
    %391 = memref.load %arg3[%c137] : memref<144xf32, #tpu.memory_space<smem>>
    %392 = vector.extract_strided_slice %1 {offsets = [2, 2, 2], sizes = [1, 10, 16], strides = [1, 1, 1]} : vector<4x12x18xf32> to vector<1x10x16xf32>
    %393 = vector.shape_cast %392 : vector<1x10x16xf32> to vector<10x16xf32>
    %394 = vector.broadcast %391 : f32 to vector<10x16xf32>
    %395 = arith.mulf %394, %393 : vector<10x16xf32>
    %396 = arith.addf %390, %395 : vector<10x16xf32>
    %c13 = arith.constant 13 : index
    %397 = memref.load %arg3[%c13] : memref<144xf32, #tpu.memory_space<smem>>
    %398 = vector.extract_strided_slice %1 {offsets = [3, 0, 0], sizes = [1, 10, 16], strides = [1, 1, 1]} : vector<4x12x18xf32> to vector<1x10x16xf32>
    %399 = vector.shape_cast %398 : vector<1x10x16xf32> to vector<10x16xf32>
    %400 = vector.broadcast %397 : f32 to vector<10x16xf32>
    %401 = arith.mulf %400, %399 : vector<10x16xf32>
    %402 = arith.addf %396, %401 : vector<10x16xf32>
    %c29 = arith.constant 29 : index
    %403 = memref.load %arg3[%c29] : memref<144xf32, #tpu.memory_space<smem>>
    %404 = vector.extract_strided_slice %1 {offsets = [3, 0, 1], sizes = [1, 10, 16], strides = [1, 1, 1]} : vector<4x12x18xf32> to vector<1x10x16xf32>
    %405 = vector.shape_cast %404 : vector<1x10x16xf32> to vector<10x16xf32>
    %406 = vector.broadcast %403 : f32 to vector<10x16xf32>
    %407 = arith.mulf %406, %405 : vector<10x16xf32>
    %408 = arith.addf %402, %407 : vector<10x16xf32>
    %c45 = arith.constant 45 : index
    %409 = memref.load %arg3[%c45] : memref<144xf32, #tpu.memory_space<smem>>
    %410 = vector.extract_strided_slice %1 {offsets = [3, 0, 2], sizes = [1, 10, 16], strides = [1, 1, 1]} : vector<4x12x18xf32> to vector<1x10x16xf32>
    %411 = vector.shape_cast %410 : vector<1x10x16xf32> to vector<10x16xf32>
    %412 = vector.broadcast %409 : f32 to vector<10x16xf32>
    %413 = arith.mulf %412, %411 : vector<10x16xf32>
    %414 = arith.addf %408, %413 : vector<10x16xf32>
    %c61 = arith.constant 61 : index
    %415 = memref.load %arg3[%c61] : memref<144xf32, #tpu.memory_space<smem>>
    %416 = vector.extract_strided_slice %1 {offsets = [3, 1, 0], sizes = [1, 10, 16], strides = [1, 1, 1]} : vector<4x12x18xf32> to vector<1x10x16xf32>
    %417 = vector.shape_cast %416 : vector<1x10x16xf32> to vector<10x16xf32>
    %418 = vector.broadcast %415 : f32 to vector<10x16xf32>
    %419 = arith.mulf %418, %417 : vector<10x16xf32>
    %420 = arith.addf %414, %419 : vector<10x16xf32>
    %c77 = arith.constant 77 : index
    %421 = memref.load %arg3[%c77] : memref<144xf32, #tpu.memory_space<smem>>
    %422 = vector.extract_strided_slice %1 {offsets = [3, 1, 1], sizes = [1, 10, 16], strides = [1, 1, 1]} : vector<4x12x18xf32> to vector<1x10x16xf32>
    %423 = vector.shape_cast %422 : vector<1x10x16xf32> to vector<10x16xf32>
    %424 = vector.broadcast %421 : f32 to vector<10x16xf32>
    %425 = arith.mulf %424, %423 : vector<10x16xf32>
    %426 = arith.addf %420, %425 : vector<10x16xf32>
    %c93 = arith.constant 93 : index
    %427 = memref.load %arg3[%c93] : memref<144xf32, #tpu.memory_space<smem>>
    %428 = vector.extract_strided_slice %1 {offsets = [3, 1, 2], sizes = [1, 10, 16], strides = [1, 1, 1]} : vector<4x12x18xf32> to vector<1x10x16xf32>
    %429 = vector.shape_cast %428 : vector<1x10x16xf32> to vector<10x16xf32>
    %430 = vector.broadcast %427 : f32 to vector<10x16xf32>
    %431 = arith.mulf %430, %429 : vector<10x16xf32>
    %432 = arith.addf %426, %431 : vector<10x16xf32>
    %c109 = arith.constant 109 : index
    %433 = memref.load %arg3[%c109] : memref<144xf32, #tpu.memory_space<smem>>
    %434 = vector.extract_strided_slice %1 {offsets = [3, 2, 0], sizes = [1, 10, 16], strides = [1, 1, 1]} : vector<4x12x18xf32> to vector<1x10x16xf32>
    %435 = vector.shape_cast %434 : vector<1x10x16xf32> to vector<10x16xf32>
    %436 = vector.broadcast %433 : f32 to vector<10x16xf32>
    %437 = arith.mulf %436, %435 : vector<10x16xf32>
    %438 = arith.addf %432, %437 : vector<10x16xf32>
    %c125 = arith.constant 125 : index
    %439 = memref.load %arg3[%c125] : memref<144xf32, #tpu.memory_space<smem>>
    %440 = vector.extract_strided_slice %1 {offsets = [3, 2, 1], sizes = [1, 10, 16], strides = [1, 1, 1]} : vector<4x12x18xf32> to vector<1x10x16xf32>
    %441 = vector.shape_cast %440 : vector<1x10x16xf32> to vector<10x16xf32>
    %442 = vector.broadcast %439 : f32 to vector<10x16xf32>
    %443 = arith.mulf %442, %441 : vector<10x16xf32>
    %444 = arith.addf %438, %443 : vector<10x16xf32>
    %c141 = arith.constant 141 : index
    %445 = memref.load %arg3[%c141] : memref<144xf32, #tpu.memory_space<smem>>
    %446 = vector.extract_strided_slice %1 {offsets = [3, 2, 2], sizes = [1, 10, 16], strides = [1, 1, 1]} : vector<4x12x18xf32> to vector<1x10x16xf32>
    %447 = vector.shape_cast %446 : vector<1x10x16xf32> to vector<10x16xf32>
    %448 = vector.broadcast %445 : f32 to vector<10x16xf32>
    %449 = arith.mulf %448, %447 : vector<10x16xf32>
    %450 = arith.addf %444, %449 : vector<10x16xf32>
    %cst_16 = arith.constant 0.000000e+00 : f32
    %451 = vector.broadcast %cst_16 : f32 to vector<10x16xf32>
    %452 = arith.maximumf %450, %451 : vector<10x16xf32>
    %c1_17 = arith.constant 1 : index
    %c0_18 = arith.constant 0 : index
    %c1_19 = arith.constant 1 : index
    %453 = vector.load %arg8[%c1_17, %c0_18, %c1_19] : memref<4x10x18xf32, #tpu.memory_space<vmem>>, vector<1x10x16xf32>
    %454 = vector.shape_cast %453 : vector<1x10x16xf32> to vector<10x16xf32>
    %455 = vector.shape_cast %452 : vector<10x16xf32> to vector<1x10x16xf32>
    tpu.vector_store %arg8[%c1_17, %c0_18, %c1_19], %455 {strides = array<i32>} : memref<4x10x18xf32, #tpu.memory_space<vmem>>, vector<1x10x16xf32>,
    %456 = vector.extract_strided_slice %452 {offsets = [0, 1], sizes = [10, 1], strides = [1, 1]} : vector<10x16xf32> to vector<10x1xf32>
    %c1_20 = arith.constant 1 : index
    %c0_21 = arith.constant 0 : index
    %c0_22 = arith.constant 0 : index
    %457 = vector.load %arg8[%c1_20, %c0_21, %c0_22] : memref<4x10x18xf32, #tpu.memory_space<vmem>>, vector<1x10x1xf32>
    %458 = vector.shape_cast %457 : vector<1x10x1xf32> to vector<10x1xf32>
    %459 = vector.shape_cast %456 : vector<10x1xf32> to vector<1x10x1xf32>
    tpu.vector_store %arg8[%c1_20, %c0_21, %c0_22], %459 {strides = array<i32>} : memref<4x10x18xf32, #tpu.memory_space<vmem>>, vector<1x10x1xf32>,
    %460 = vector.extract_strided_slice %452 {offsets = [0, 14], sizes = [10, 1], strides = [1, 1]} : vector<10x16xf32> to vector<10x1xf32>
    %c1_23 = arith.constant 1 : index
    %c0_24 = arith.constant 0 : index
    %c17_25 = arith.constant 17 : index
    %461 = vector.load %arg8[%c1_23, %c0_24, %c17_25] : memref<4x10x18xf32, #tpu.memory_space<vmem>>, vector<1x10x1xf32>
    %462 = vector.shape_cast %461 : vector<1x10x1xf32> to vector<10x1xf32>
    %463 = vector.shape_cast %460 : vector<10x1xf32> to vector<1x10x1xf32>
    tpu.vector_store %arg8[%c1_23, %c0_24, %c17_25], %463 {strides = array<i32>} : memref<4x10x18xf32, #tpu.memory_space<vmem>>, vector<1x10x1xf32>,
    %c2 = arith.constant 2 : index
    %464 = memref.load %arg4[%c2] : memref<4xf32, #tpu.memory_space<smem>>
    %465 = vector.broadcast %464 : f32 to vector<10x16xf32>
    %c2_26 = arith.constant 2 : index
    %466 = memref.load %arg3[%c2_26] : memref<144xf32, #tpu.memory_space<smem>>
    %467 = vector.extract_strided_slice %1 {offsets = [0, 0, 0], sizes = [1, 10, 16], strides = [1, 1, 1]} : vector<4x12x18xf32> to vector<1x10x16xf32>
    %468 = vector.shape_cast %467 : vector<1x10x16xf32> to vector<10x16xf32>
    %469 = vector.broadcast %466 : f32 to vector<10x16xf32>
    %470 = arith.mulf %469, %468 : vector<10x16xf32>
    %471 = arith.addf %465, %470 : vector<10x16xf32>
    %c18 = arith.constant 18 : index
    %472 = memref.load %arg3[%c18] : memref<144xf32, #tpu.memory_space<smem>>
    %473 = vector.extract_strided_slice %1 {offsets = [0, 0, 1], sizes = [1, 10, 16], strides = [1, 1, 1]} : vector<4x12x18xf32> to vector<1x10x16xf32>
    %474 = vector.shape_cast %473 : vector<1x10x16xf32> to vector<10x16xf32>
    %475 = vector.broadcast %472 : f32 to vector<10x16xf32>
    %476 = arith.mulf %475, %474 : vector<10x16xf32>
    %477 = arith.addf %471, %476 : vector<10x16xf32>
    %c34 = arith.constant 34 : index
    %478 = memref.load %arg3[%c34] : memref<144xf32, #tpu.memory_space<smem>>
    %479 = vector.extract_strided_slice %1 {offsets = [0, 0, 2], sizes = [1, 10, 16], strides = [1, 1, 1]} : vector<4x12x18xf32> to vector<1x10x16xf32>
    %480 = vector.shape_cast %479 : vector<1x10x16xf32> to vector<10x16xf32>
    %481 = vector.broadcast %478 : f32 to vector<10x16xf32>
    %482 = arith.mulf %481, %480 : vector<10x16xf32>
    %483 = arith.addf %477, %482 : vector<10x16xf32>
    %c50 = arith.constant 50 : index
    %484 = memref.load %arg3[%c50] : memref<144xf32, #tpu.memory_space<smem>>
    %485 = vector.extract_strided_slice %1 {offsets = [0, 1, 0], sizes = [1, 10, 16], strides = [1, 1, 1]} : vector<4x12x18xf32> to vector<1x10x16xf32>
    %486 = vector.shape_cast %485 : vector<1x10x16xf32> to vector<10x16xf32>
    %487 = vector.broadcast %484 : f32 to vector<10x16xf32>
    %488 = arith.mulf %487, %486 : vector<10x16xf32>
    %489 = arith.addf %483, %488 : vector<10x16xf32>
    %c66 = arith.constant 66 : index
    %490 = memref.load %arg3[%c66] : memref<144xf32, #tpu.memory_space<smem>>
    %491 = vector.extract_strided_slice %1 {offsets = [0, 1, 1], sizes = [1, 10, 16], strides = [1, 1, 1]} : vector<4x12x18xf32> to vector<1x10x16xf32>
    %492 = vector.shape_cast %491 : vector<1x10x16xf32> to vector<10x16xf32>
    %493 = vector.broadcast %490 : f32 to vector<10x16xf32>
    %494 = arith.mulf %493, %492 : vector<10x16xf32>
    %495 = arith.addf %489, %494 : vector<10x16xf32>
    %c82 = arith.constant 82 : index
    %496 = memref.load %arg3[%c82] : memref<144xf32, #tpu.memory_space<smem>>
    %497 = vector.extract_strided_slice %1 {offsets = [0, 1, 2], sizes = [1, 10, 16], strides = [1, 1, 1]} : vector<4x12x18xf32> to vector<1x10x16xf32>
    %498 = vector.shape_cast %497 : vector<1x10x16xf32> to vector<10x16xf32>
    %499 = vector.broadcast %496 : f32 to vector<10x16xf32>
    %500 = arith.mulf %499, %498 : vector<10x16xf32>
    %501 = arith.addf %495, %500 : vector<10x16xf32>
    %c98 = arith.constant 98 : index
    %502 = memref.load %arg3[%c98] : memref<144xf32, #tpu.memory_space<smem>>
    %503 = vector.extract_strided_slice %1 {offsets = [0, 2, 0], sizes = [1, 10, 16], strides = [1, 1, 1]} : vector<4x12x18xf32> to vector<1x10x16xf32>
    %504 = vector.shape_cast %503 : vector<1x10x16xf32> to vector<10x16xf32>
    %505 = vector.broadcast %502 : f32 to vector<10x16xf32>
    %506 = arith.mulf %505, %504 : vector<10x16xf32>
    %507 = arith.addf %501, %506 : vector<10x16xf32>
    %c114 = arith.constant 114 : index
    %508 = memref.load %arg3[%c114] : memref<144xf32, #tpu.memory_space<smem>>
    %509 = vector.extract_strided_slice %1 {offsets = [0, 2, 1], sizes = [1, 10, 16], strides = [1, 1, 1]} : vector<4x12x18xf32> to vector<1x10x16xf32>
    %510 = vector.shape_cast %509 : vector<1x10x16xf32> to vector<10x16xf32>
    %511 = vector.broadcast %508 : f32 to vector<10x16xf32>
    %512 = arith.mulf %511, %510 : vector<10x16xf32>
    %513 = arith.addf %507, %512 : vector<10x16xf32>
    %c130 = arith.constant 130 : index
    %514 = memref.load %arg3[%c130] : memref<144xf32, #tpu.memory_space<smem>>
    %515 = vector.extract_strided_slice %1 {offsets = [0, 2, 2], sizes = [1, 10, 16], strides = [1, 1, 1]} : vector<4x12x18xf32> to vector<1x10x16xf32>
    %516 = vector.shape_cast %515 : vector<1x10x16xf32> to vector<10x16xf32>
    %517 = vector.broadcast %514 : f32 to vector<10x16xf32>
    %518 = arith.mulf %517, %516 : vector<10x16xf32>
    %519 = arith.addf %513, %518 : vector<10x16xf32>
    %c6 = arith.constant 6 : index
    %520 = memref.load %arg3[%c6] : memref<144xf32, #tpu.memory_space<smem>>
    %521 = vector.extract_strided_slice %1 {offsets = [1, 0, 0], sizes = [1, 10, 16], strides = [1, 1, 1]} : vector<4x12x18xf32> to vector<1x10x16xf32>
    %522 = vector.shape_cast %521 : vector<1x10x16xf32> to vector<10x16xf32>
    %523 = vector.broadcast %520 : f32 to vector<10x16xf32>
    %524 = arith.mulf %523, %522 : vector<10x16xf32>
    %525 = arith.addf %519, %524 : vector<10x16xf32>
    %c22 = arith.constant 22 : index
    %526 = memref.load %arg3[%c22] : memref<144xf32, #tpu.memory_space<smem>>
    %527 = vector.extract_strided_slice %1 {offsets = [1, 0, 1], sizes = [1, 10, 16], strides = [1, 1, 1]} : vector<4x12x18xf32> to vector<1x10x16xf32>
    %528 = vector.shape_cast %527 : vector<1x10x16xf32> to vector<10x16xf32>
    %529 = vector.broadcast %526 : f32 to vector<10x16xf32>
    %530 = arith.mulf %529, %528 : vector<10x16xf32>
    %531 = arith.addf %525, %530 : vector<10x16xf32>
    %c38 = arith.constant 38 : index
    %532 = memref.load %arg3[%c38] : memref<144xf32, #tpu.memory_space<smem>>
    %533 = vector.extract_strided_slice %1 {offsets = [1, 0, 2], sizes = [1, 10, 16], strides = [1, 1, 1]} : vector<4x12x18xf32> to vector<1x10x16xf32>
    %534 = vector.shape_cast %533 : vector<1x10x16xf32> to vector<10x16xf32>
    %535 = vector.broadcast %532 : f32 to vector<10x16xf32>
    %536 = arith.mulf %535, %534 : vector<10x16xf32>
    %537 = arith.addf %531, %536 : vector<10x16xf32>
    %c54 = arith.constant 54 : index
    %538 = memref.load %arg3[%c54] : memref<144xf32, #tpu.memory_space<smem>>
    %539 = vector.extract_strided_slice %1 {offsets = [1, 1, 0], sizes = [1, 10, 16], strides = [1, 1, 1]} : vector<4x12x18xf32> to vector<1x10x16xf32>
    %540 = vector.shape_cast %539 : vector<1x10x16xf32> to vector<10x16xf32>
    %541 = vector.broadcast %538 : f32 to vector<10x16xf32>
    %542 = arith.mulf %541, %540 : vector<10x16xf32>
    %543 = arith.addf %537, %542 : vector<10x16xf32>
    %c70 = arith.constant 70 : index
    %544 = memref.load %arg3[%c70] : memref<144xf32, #tpu.memory_space<smem>>
    %545 = vector.extract_strided_slice %1 {offsets = [1, 1, 1], sizes = [1, 10, 16], strides = [1, 1, 1]} : vector<4x12x18xf32> to vector<1x10x16xf32>
    %546 = vector.shape_cast %545 : vector<1x10x16xf32> to vector<10x16xf32>
    %547 = vector.broadcast %544 : f32 to vector<10x16xf32>
    %548 = arith.mulf %547, %546 : vector<10x16xf32>
    %549 = arith.addf %543, %548 : vector<10x16xf32>
    %c86 = arith.constant 86 : index
    %550 = memref.load %arg3[%c86] : memref<144xf32, #tpu.memory_space<smem>>
    %551 = vector.extract_strided_slice %1 {offsets = [1, 1, 2], sizes = [1, 10, 16], strides = [1, 1, 1]} : vector<4x12x18xf32> to vector<1x10x16xf32>
    %552 = vector.shape_cast %551 : vector<1x10x16xf32> to vector<10x16xf32>
    %553 = vector.broadcast %550 : f32 to vector<10x16xf32>
    %554 = arith.mulf %553, %552 : vector<10x16xf32>
    %555 = arith.addf %549, %554 : vector<10x16xf32>
    %c102 = arith.constant 102 : index
    %556 = memref.load %arg3[%c102] : memref<144xf32, #tpu.memory_space<smem>>
    %557 = vector.extract_strided_slice %1 {offsets = [1, 2, 0], sizes = [1, 10, 16], strides = [1, 1, 1]} : vector<4x12x18xf32> to vector<1x10x16xf32>
    %558 = vector.shape_cast %557 : vector<1x10x16xf32> to vector<10x16xf32>
    %559 = vector.broadcast %556 : f32 to vector<10x16xf32>
    %560 = arith.mulf %559, %558 : vector<10x16xf32>
    %561 = arith.addf %555, %560 : vector<10x16xf32>
    %c118 = arith.constant 118 : index
    %562 = memref.load %arg3[%c118] : memref<144xf32, #tpu.memory_space<smem>>
    %563 = vector.extract_strided_slice %1 {offsets = [1, 2, 1], sizes = [1, 10, 16], strides = [1, 1, 1]} : vector<4x12x18xf32> to vector<1x10x16xf32>
    %564 = vector.shape_cast %563 : vector<1x10x16xf32> to vector<10x16xf32>
    %565 = vector.broadcast %562 : f32 to vector<10x16xf32>
    %566 = arith.mulf %565, %564 : vector<10x16xf32>
    %567 = arith.addf %561, %566 : vector<10x16xf32>
    %c134 = arith.constant 134 : index
    %568 = memref.load %arg3[%c134] : memref<144xf32, #tpu.memory_space<smem>>
    %569 = vector.extract_strided_slice %1 {offsets = [1, 2, 2], sizes = [1, 10, 16], strides = [1, 1, 1]} : vector<4x12x18xf32> to vector<1x10x16xf32>
    %570 = vector.shape_cast %569 : vector<1x10x16xf32> to vector<10x16xf32>
    %571 = vector.broadcast %568 : f32 to vector<10x16xf32>
    %572 = arith.mulf %571, %570 : vector<10x16xf32>
    %573 = arith.addf %567, %572 : vector<10x16xf32>
    %c10 = arith.constant 10 : index
    %574 = memref.load %arg3[%c10] : memref<144xf32, #tpu.memory_space<smem>>
    %575 = vector.extract_strided_slice %1 {offsets = [2, 0, 0], sizes = [1, 10, 16], strides = [1, 1, 1]} : vector<4x12x18xf32> to vector<1x10x16xf32>
    %576 = vector.shape_cast %575 : vector<1x10x16xf32> to vector<10x16xf32>
    %577 = vector.broadcast %574 : f32 to vector<10x16xf32>
    %578 = arith.mulf %577, %576 : vector<10x16xf32>
    %579 = arith.addf %573, %578 : vector<10x16xf32>
    %c26 = arith.constant 26 : index
    %580 = memref.load %arg3[%c26] : memref<144xf32, #tpu.memory_space<smem>>
    %581 = vector.extract_strided_slice %1 {offsets = [2, 0, 1], sizes = [1, 10, 16], strides = [1, 1, 1]} : vector<4x12x18xf32> to vector<1x10x16xf32>
    %582 = vector.shape_cast %581 : vector<1x10x16xf32> to vector<10x16xf32>
    %583 = vector.broadcast %580 : f32 to vector<10x16xf32>
    %584 = arith.mulf %583, %582 : vector<10x16xf32>
    %585 = arith.addf %579, %584 : vector<10x16xf32>
    %c42 = arith.constant 42 : index
    %586 = memref.load %arg3[%c42] : memref<144xf32, #tpu.memory_space<smem>>
    %587 = vector.extract_strided_slice %1 {offsets = [2, 0, 2], sizes = [1, 10, 16], strides = [1, 1, 1]} : vector<4x12x18xf32> to vector<1x10x16xf32>
    %588 = vector.shape_cast %587 : vector<1x10x16xf32> to vector<10x16xf32>
    %589 = vector.broadcast %586 : f32 to vector<10x16xf32>
    %590 = arith.mulf %589, %588 : vector<10x16xf32>
    %591 = arith.addf %585, %590 : vector<10x16xf32>
    %c58 = arith.constant 58 : index
    %592 = memref.load %arg3[%c58] : memref<144xf32, #tpu.memory_space<smem>>
    %593 = vector.extract_strided_slice %1 {offsets = [2, 1, 0], sizes = [1, 10, 16], strides = [1, 1, 1]} : vector<4x12x18xf32> to vector<1x10x16xf32>
    %594 = vector.shape_cast %593 : vector<1x10x16xf32> to vector<10x16xf32>
    %595 = vector.broadcast %592 : f32 to vector<10x16xf32>
    %596 = arith.mulf %595, %594 : vector<10x16xf32>
    %597 = arith.addf %591, %596 : vector<10x16xf32>
    %c74 = arith.constant 74 : index
    %598 = memref.load %arg3[%c74] : memref<144xf32, #tpu.memory_space<smem>>
    %599 = vector.extract_strided_slice %1 {offsets = [2, 1, 1], sizes = [1, 10, 16], strides = [1, 1, 1]} : vector<4x12x18xf32> to vector<1x10x16xf32>
    %600 = vector.shape_cast %599 : vector<1x10x16xf32> to vector<10x16xf32>
    %601 = vector.broadcast %598 : f32 to vector<10x16xf32>
    %602 = arith.mulf %601, %600 : vector<10x16xf32>
    %603 = arith.addf %597, %602 : vector<10x16xf32>
    %c90 = arith.constant 90 : index
    %604 = memref.load %arg3[%c90] : memref<144xf32, #tpu.memory_space<smem>>
    %605 = vector.extract_strided_slice %1 {offsets = [2, 1, 2], sizes = [1, 10, 16], strides = [1, 1, 1]} : vector<4x12x18xf32> to vector<1x10x16xf32>
    %606 = vector.shape_cast %605 : vector<1x10x16xf32> to vector<10x16xf32>
    %607 = vector.broadcast %604 : f32 to vector<10x16xf32>
    %608 = arith.mulf %607, %606 : vector<10x16xf32>
    %609 = arith.addf %603, %608 : vector<10x16xf32>
    %c106 = arith.constant 106 : index
    %610 = memref.load %arg3[%c106] : memref<144xf32, #tpu.memory_space<smem>>
    %611 = vector.extract_strided_slice %1 {offsets = [2, 2, 0], sizes = [1, 10, 16], strides = [1, 1, 1]} : vector<4x12x18xf32> to vector<1x10x16xf32>
    %612 = vector.shape_cast %611 : vector<1x10x16xf32> to vector<10x16xf32>
    %613 = vector.broadcast %610 : f32 to vector<10x16xf32>
    %614 = arith.mulf %613, %612 : vector<10x16xf32>
    %615 = arith.addf %609, %614 : vector<10x16xf32>
    %c122 = arith.constant 122 : index
    %616 = memref.load %arg3[%c122] : memref<144xf32, #tpu.memory_space<smem>>
    %617 = vector.extract_strided_slice %1 {offsets = [2, 2, 1], sizes = [1, 10, 16], strides = [1, 1, 1]} : vector<4x12x18xf32> to vector<1x10x16xf32>
    %618 = vector.shape_cast %617 : vector<1x10x16xf32> to vector<10x16xf32>
    %619 = vector.broadcast %616 : f32 to vector<10x16xf32>
    %620 = arith.mulf %619, %618 : vector<10x16xf32>
    %621 = arith.addf %615, %620 : vector<10x16xf32>
    %c138 = arith.constant 138 : index
    %622 = memref.load %arg3[%c138] : memref<144xf32, #tpu.memory_space<smem>>
    %623 = vector.extract_strided_slice %1 {offsets = [2, 2, 2], sizes = [1, 10, 16], strides = [1, 1, 1]} : vector<4x12x18xf32> to vector<1x10x16xf32>
    %624 = vector.shape_cast %623 : vector<1x10x16xf32> to vector<10x16xf32>
    %625 = vector.broadcast %622 : f32 to vector<10x16xf32>
    %626 = arith.mulf %625, %624 : vector<10x16xf32>
    %627 = arith.addf %621, %626 : vector<10x16xf32>
    %c14 = arith.constant 14 : index
    %628 = memref.load %arg3[%c14] : memref<144xf32, #tpu.memory_space<smem>>
    %629 = vector.extract_strided_slice %1 {offsets = [3, 0, 0], sizes = [1, 10, 16], strides = [1, 1, 1]} : vector<4x12x18xf32> to vector<1x10x16xf32>
    %630 = vector.shape_cast %629 : vector<1x10x16xf32> to vector<10x16xf32>
    %631 = vector.broadcast %628 : f32 to vector<10x16xf32>
    %632 = arith.mulf %631, %630 : vector<10x16xf32>
    %633 = arith.addf %627, %632 : vector<10x16xf32>
    %c30 = arith.constant 30 : index
    %634 = memref.load %arg3[%c30] : memref<144xf32, #tpu.memory_space<smem>>
    %635 = vector.extract_strided_slice %1 {offsets = [3, 0, 1], sizes = [1, 10, 16], strides = [1, 1, 1]} : vector<4x12x18xf32> to vector<1x10x16xf32>
    %636 = vector.shape_cast %635 : vector<1x10x16xf32> to vector<10x16xf32>
    %637 = vector.broadcast %634 : f32 to vector<10x16xf32>
    %638 = arith.mulf %637, %636 : vector<10x16xf32>
    %639 = arith.addf %633, %638 : vector<10x16xf32>
    %c46 = arith.constant 46 : index
    %640 = memref.load %arg3[%c46] : memref<144xf32, #tpu.memory_space<smem>>
    %641 = vector.extract_strided_slice %1 {offsets = [3, 0, 2], sizes = [1, 10, 16], strides = [1, 1, 1]} : vector<4x12x18xf32> to vector<1x10x16xf32>
    %642 = vector.shape_cast %641 : vector<1x10x16xf32> to vector<10x16xf32>
    %643 = vector.broadcast %640 : f32 to vector<10x16xf32>
    %644 = arith.mulf %643, %642 : vector<10x16xf32>
    %645 = arith.addf %639, %644 : vector<10x16xf32>
    %c62 = arith.constant 62 : index
    %646 = memref.load %arg3[%c62] : memref<144xf32, #tpu.memory_space<smem>>
    %647 = vector.extract_strided_slice %1 {offsets = [3, 1, 0], sizes = [1, 10, 16], strides = [1, 1, 1]} : vector<4x12x18xf32> to vector<1x10x16xf32>
    %648 = vector.shape_cast %647 : vector<1x10x16xf32> to vector<10x16xf32>
    %649 = vector.broadcast %646 : f32 to vector<10x16xf32>
    %650 = arith.mulf %649, %648 : vector<10x16xf32>
    %651 = arith.addf %645, %650 : vector<10x16xf32>
    %c78 = arith.constant 78 : index
    %652 = memref.load %arg3[%c78] : memref<144xf32, #tpu.memory_space<smem>>
    %653 = vector.extract_strided_slice %1 {offsets = [3, 1, 1], sizes = [1, 10, 16], strides = [1, 1, 1]} : vector<4x12x18xf32> to vector<1x10x16xf32>
    %654 = vector.shape_cast %653 : vector<1x10x16xf32> to vector<10x16xf32>
    %655 = vector.broadcast %652 : f32 to vector<10x16xf32>
    %656 = arith.mulf %655, %654 : vector<10x16xf32>
    %657 = arith.addf %651, %656 : vector<10x16xf32>
    %c94 = arith.constant 94 : index
    %658 = memref.load %arg3[%c94] : memref<144xf32, #tpu.memory_space<smem>>
    %659 = vector.extract_strided_slice %1 {offsets = [3, 1, 2], sizes = [1, 10, 16], strides = [1, 1, 1]} : vector<4x12x18xf32> to vector<1x10x16xf32>
    %660 = vector.shape_cast %659 : vector<1x10x16xf32> to vector<10x16xf32>
    %661 = vector.broadcast %658 : f32 to vector<10x16xf32>
    %662 = arith.mulf %661, %660 : vector<10x16xf32>
    %663 = arith.addf %657, %662 : vector<10x16xf32>
    %c110 = arith.constant 110 : index
    %664 = memref.load %arg3[%c110] : memref<144xf32, #tpu.memory_space<smem>>
    %665 = vector.extract_strided_slice %1 {offsets = [3, 2, 0], sizes = [1, 10, 16], strides = [1, 1, 1]} : vector<4x12x18xf32> to vector<1x10x16xf32>
    %666 = vector.shape_cast %665 : vector<1x10x16xf32> to vector<10x16xf32>
    %667 = vector.broadcast %664 : f32 to vector<10x16xf32>
    %668 = arith.mulf %667, %666 : vector<10x16xf32>
    %669 = arith.addf %663, %668 : vector<10x16xf32>
    %c126 = arith.constant 126 : index
    %670 = memref.load %arg3[%c126] : memref<144xf32, #tpu.memory_space<smem>>
    %671 = vector.extract_strided_slice %1 {offsets = [3, 2, 1], sizes = [1, 10, 16], strides = [1, 1, 1]} : vector<4x12x18xf32> to vector<1x10x16xf32>
    %672 = vector.shape_cast %671 : vector<1x10x16xf32> to vector<10x16xf32>
    %673 = vector.broadcast %670 : f32 to vector<10x16xf32>
    %674 = arith.mulf %673, %672 : vector<10x16xf32>
    %675 = arith.addf %669, %674 : vector<10x16xf32>
    %c142 = arith.constant 142 : index
    %676 = memref.load %arg3[%c142] : memref<144xf32, #tpu.memory_space<smem>>
    %677 = vector.extract_strided_slice %1 {offsets = [3, 2, 2], sizes = [1, 10, 16], strides = [1, 1, 1]} : vector<4x12x18xf32> to vector<1x10x16xf32>
    %678 = vector.shape_cast %677 : vector<1x10x16xf32> to vector<10x16xf32>
    %679 = vector.broadcast %676 : f32 to vector<10x16xf32>
    %680 = arith.mulf %679, %678 : vector<10x16xf32>
    %681 = arith.addf %675, %680 : vector<10x16xf32>
    %cst_27 = arith.constant 0.000000e+00 : f32
    %682 = vector.broadcast %cst_27 : f32 to vector<10x16xf32>
    %683 = arith.maximumf %681, %682 : vector<10x16xf32>
    %c2_28 = arith.constant 2 : index
    %c0_29 = arith.constant 0 : index
    %c1_30 = arith.constant 1 : index
    %684 = vector.load %arg8[%c2_28, %c0_29, %c1_30] : memref<4x10x18xf32, #tpu.memory_space<vmem>>, vector<1x10x16xf32>
    %685 = vector.shape_cast %684 : vector<1x10x16xf32> to vector<10x16xf32>
    %686 = vector.shape_cast %683 : vector<10x16xf32> to vector<1x10x16xf32>
    tpu.vector_store %arg8[%c2_28, %c0_29, %c1_30], %686 {strides = array<i32>} : memref<4x10x18xf32, #tpu.memory_space<vmem>>, vector<1x10x16xf32>,
    %687 = vector.extract_strided_slice %683 {offsets = [0, 1], sizes = [10, 1], strides = [1, 1]} : vector<10x16xf32> to vector<10x1xf32>
    %c2_31 = arith.constant 2 : index
    %c0_32 = arith.constant 0 : index
    %c0_33 = arith.constant 0 : index
    %688 = vector.load %arg8[%c2_31, %c0_32, %c0_33] : memref<4x10x18xf32, #tpu.memory_space<vmem>>, vector<1x10x1xf32>
    %689 = vector.shape_cast %688 : vector<1x10x1xf32> to vector<10x1xf32>
    %690 = vector.shape_cast %687 : vector<10x1xf32> to vector<1x10x1xf32>
    tpu.vector_store %arg8[%c2_31, %c0_32, %c0_33], %690 {strides = array<i32>} : memref<4x10x18xf32, #tpu.memory_space<vmem>>, vector<1x10x1xf32>,
    %691 = vector.extract_strided_slice %683 {offsets = [0, 14], sizes = [10, 1], strides = [1, 1]} : vector<10x16xf32> to vector<10x1xf32>
    %c2_34 = arith.constant 2 : index
    %c0_35 = arith.constant 0 : index
    %c17_36 = arith.constant 17 : index
    %692 = vector.load %arg8[%c2_34, %c0_35, %c17_36] : memref<4x10x18xf32, #tpu.memory_space<vmem>>, vector<1x10x1xf32>
    %693 = vector.shape_cast %692 : vector<1x10x1xf32> to vector<10x1xf32>
    %694 = vector.shape_cast %691 : vector<10x1xf32> to vector<1x10x1xf32>
    tpu.vector_store %arg8[%c2_34, %c0_35, %c17_36], %694 {strides = array<i32>} : memref<4x10x18xf32, #tpu.memory_space<vmem>>, vector<1x10x1xf32>,
    %c3 = arith.constant 3 : index
    %695 = memref.load %arg4[%c3] : memref<4xf32, #tpu.memory_space<smem>>
    %696 = vector.broadcast %695 : f32 to vector<10x16xf32>
    %c3_37 = arith.constant 3 : index
    %697 = memref.load %arg3[%c3_37] : memref<144xf32, #tpu.memory_space<smem>>
    %698 = vector.extract_strided_slice %1 {offsets = [0, 0, 0], sizes = [1, 10, 16], strides = [1, 1, 1]} : vector<4x12x18xf32> to vector<1x10x16xf32>
    %699 = vector.shape_cast %698 : vector<1x10x16xf32> to vector<10x16xf32>
    %700 = vector.broadcast %697 : f32 to vector<10x16xf32>
    %701 = arith.mulf %700, %699 : vector<10x16xf32>
    %702 = arith.addf %696, %701 : vector<10x16xf32>
    %c19 = arith.constant 19 : index
    %703 = memref.load %arg3[%c19] : memref<144xf32, #tpu.memory_space<smem>>
    %704 = vector.extract_strided_slice %1 {offsets = [0, 0, 1], sizes = [1, 10, 16], strides = [1, 1, 1]} : vector<4x12x18xf32> to vector<1x10x16xf32>
    %705 = vector.shape_cast %704 : vector<1x10x16xf32> to vector<10x16xf32>
    %706 = vector.broadcast %703 : f32 to vector<10x16xf32>
    %707 = arith.mulf %706, %705 : vector<10x16xf32>
    %708 = arith.addf %702, %707 : vector<10x16xf32>
    %c35 = arith.constant 35 : index
    %709 = memref.load %arg3[%c35] : memref<144xf32, #tpu.memory_space<smem>>
    %710 = vector.extract_strided_slice %1 {offsets = [0, 0, 2], sizes = [1, 10, 16], strides = [1, 1, 1]} : vector<4x12x18xf32> to vector<1x10x16xf32>
    %711 = vector.shape_cast %710 : vector<1x10x16xf32> to vector<10x16xf32>
    %712 = vector.broadcast %709 : f32 to vector<10x16xf32>
    %713 = arith.mulf %712, %711 : vector<10x16xf32>
    %714 = arith.addf %708, %713 : vector<10x16xf32>
    %c51 = arith.constant 51 : index
    %715 = memref.load %arg3[%c51] : memref<144xf32, #tpu.memory_space<smem>>
    %716 = vector.extract_strided_slice %1 {offsets = [0, 1, 0], sizes = [1, 10, 16], strides = [1, 1, 1]} : vector<4x12x18xf32> to vector<1x10x16xf32>
    %717 = vector.shape_cast %716 : vector<1x10x16xf32> to vector<10x16xf32>
    %718 = vector.broadcast %715 : f32 to vector<10x16xf32>
    %719 = arith.mulf %718, %717 : vector<10x16xf32>
    %720 = arith.addf %714, %719 : vector<10x16xf32>
    %c67 = arith.constant 67 : index
    %721 = memref.load %arg3[%c67] : memref<144xf32, #tpu.memory_space<smem>>
    %722 = vector.extract_strided_slice %1 {offsets = [0, 1, 1], sizes = [1, 10, 16], strides = [1, 1, 1]} : vector<4x12x18xf32> to vector<1x10x16xf32>
    %723 = vector.shape_cast %722 : vector<1x10x16xf32> to vector<10x16xf32>
    %724 = vector.broadcast %721 : f32 to vector<10x16xf32>
    %725 = arith.mulf %724, %723 : vector<10x16xf32>
    %726 = arith.addf %720, %725 : vector<10x16xf32>
    %c83 = arith.constant 83 : index
    %727 = memref.load %arg3[%c83] : memref<144xf32, #tpu.memory_space<smem>>
    %728 = vector.extract_strided_slice %1 {offsets = [0, 1, 2], sizes = [1, 10, 16], strides = [1, 1, 1]} : vector<4x12x18xf32> to vector<1x10x16xf32>
    %729 = vector.shape_cast %728 : vector<1x10x16xf32> to vector<10x16xf32>
    %730 = vector.broadcast %727 : f32 to vector<10x16xf32>
    %731 = arith.mulf %730, %729 : vector<10x16xf32>
    %732 = arith.addf %726, %731 : vector<10x16xf32>
    %c99 = arith.constant 99 : index
    %733 = memref.load %arg3[%c99] : memref<144xf32, #tpu.memory_space<smem>>
    %734 = vector.extract_strided_slice %1 {offsets = [0, 2, 0], sizes = [1, 10, 16], strides = [1, 1, 1]} : vector<4x12x18xf32> to vector<1x10x16xf32>
    %735 = vector.shape_cast %734 : vector<1x10x16xf32> to vector<10x16xf32>
    %736 = vector.broadcast %733 : f32 to vector<10x16xf32>
    %737 = arith.mulf %736, %735 : vector<10x16xf32>
    %738 = arith.addf %732, %737 : vector<10x16xf32>
    %c115 = arith.constant 115 : index
    %739 = memref.load %arg3[%c115] : memref<144xf32, #tpu.memory_space<smem>>
    %740 = vector.extract_strided_slice %1 {offsets = [0, 2, 1], sizes = [1, 10, 16], strides = [1, 1, 1]} : vector<4x12x18xf32> to vector<1x10x16xf32>
    %741 = vector.shape_cast %740 : vector<1x10x16xf32> to vector<10x16xf32>
    %742 = vector.broadcast %739 : f32 to vector<10x16xf32>
    %743 = arith.mulf %742, %741 : vector<10x16xf32>
    %744 = arith.addf %738, %743 : vector<10x16xf32>
    %c131 = arith.constant 131 : index
    %745 = memref.load %arg3[%c131] : memref<144xf32, #tpu.memory_space<smem>>
    %746 = vector.extract_strided_slice %1 {offsets = [0, 2, 2], sizes = [1, 10, 16], strides = [1, 1, 1]} : vector<4x12x18xf32> to vector<1x10x16xf32>
    %747 = vector.shape_cast %746 : vector<1x10x16xf32> to vector<10x16xf32>
    %748 = vector.broadcast %745 : f32 to vector<10x16xf32>
    %749 = arith.mulf %748, %747 : vector<10x16xf32>
    %750 = arith.addf %744, %749 : vector<10x16xf32>
    %c7 = arith.constant 7 : index
    %751 = memref.load %arg3[%c7] : memref<144xf32, #tpu.memory_space<smem>>
    %752 = vector.extract_strided_slice %1 {offsets = [1, 0, 0], sizes = [1, 10, 16], strides = [1, 1, 1]} : vector<4x12x18xf32> to vector<1x10x16xf32>
    %753 = vector.shape_cast %752 : vector<1x10x16xf32> to vector<10x16xf32>
    %754 = vector.broadcast %751 : f32 to vector<10x16xf32>
    %755 = arith.mulf %754, %753 : vector<10x16xf32>
    %756 = arith.addf %750, %755 : vector<10x16xf32>
    %c23 = arith.constant 23 : index
    %757 = memref.load %arg3[%c23] : memref<144xf32, #tpu.memory_space<smem>>
    %758 = vector.extract_strided_slice %1 {offsets = [1, 0, 1], sizes = [1, 10, 16], strides = [1, 1, 1]} : vector<4x12x18xf32> to vector<1x10x16xf32>
    %759 = vector.shape_cast %758 : vector<1x10x16xf32> to vector<10x16xf32>
    %760 = vector.broadcast %757 : f32 to vector<10x16xf32>
    %761 = arith.mulf %760, %759 : vector<10x16xf32>
    %762 = arith.addf %756, %761 : vector<10x16xf32>
    %c39 = arith.constant 39 : index
    %763 = memref.load %arg3[%c39] : memref<144xf32, #tpu.memory_space<smem>>
    %764 = vector.extract_strided_slice %1 {offsets = [1, 0, 2], sizes = [1, 10, 16], strides = [1, 1, 1]} : vector<4x12x18xf32> to vector<1x10x16xf32>
    %765 = vector.shape_cast %764 : vector<1x10x16xf32> to vector<10x16xf32>
    %766 = vector.broadcast %763 : f32 to vector<10x16xf32>
    %767 = arith.mulf %766, %765 : vector<10x16xf32>
    %768 = arith.addf %762, %767 : vector<10x16xf32>
    %c55 = arith.constant 55 : index
    %769 = memref.load %arg3[%c55] : memref<144xf32, #tpu.memory_space<smem>>
    %770 = vector.extract_strided_slice %1 {offsets = [1, 1, 0], sizes = [1, 10, 16], strides = [1, 1, 1]} : vector<4x12x18xf32> to vector<1x10x16xf32>
    %771 = vector.shape_cast %770 : vector<1x10x16xf32> to vector<10x16xf32>
    %772 = vector.broadcast %769 : f32 to vector<10x16xf32>
    %773 = arith.mulf %772, %771 : vector<10x16xf32>
    %774 = arith.addf %768, %773 : vector<10x16xf32>
    %c71 = arith.constant 71 : index
    %775 = memref.load %arg3[%c71] : memref<144xf32, #tpu.memory_space<smem>>
    %776 = vector.extract_strided_slice %1 {offsets = [1, 1, 1], sizes = [1, 10, 16], strides = [1, 1, 1]} : vector<4x12x18xf32> to vector<1x10x16xf32>
    %777 = vector.shape_cast %776 : vector<1x10x16xf32> to vector<10x16xf32>
    %778 = vector.broadcast %775 : f32 to vector<10x16xf32>
    %779 = arith.mulf %778, %777 : vector<10x16xf32>
    %780 = arith.addf %774, %779 : vector<10x16xf32>
    %c87 = arith.constant 87 : index
    %781 = memref.load %arg3[%c87] : memref<144xf32, #tpu.memory_space<smem>>
    %782 = vector.extract_strided_slice %1 {offsets = [1, 1, 2], sizes = [1, 10, 16], strides = [1, 1, 1]} : vector<4x12x18xf32> to vector<1x10x16xf32>
    %783 = vector.shape_cast %782 : vector<1x10x16xf32> to vector<10x16xf32>
    %784 = vector.broadcast %781 : f32 to vector<10x16xf32>
    %785 = arith.mulf %784, %783 : vector<10x16xf32>
    %786 = arith.addf %780, %785 : vector<10x16xf32>
    %c103 = arith.constant 103 : index
    %787 = memref.load %arg3[%c103] : memref<144xf32, #tpu.memory_space<smem>>
    %788 = vector.extract_strided_slice %1 {offsets = [1, 2, 0], sizes = [1, 10, 16], strides = [1, 1, 1]} : vector<4x12x18xf32> to vector<1x10x16xf32>
    %789 = vector.shape_cast %788 : vector<1x10x16xf32> to vector<10x16xf32>
    %790 = vector.broadcast %787 : f32 to vector<10x16xf32>
    %791 = arith.mulf %790, %789 : vector<10x16xf32>
    %792 = arith.addf %786, %791 : vector<10x16xf32>
    %c119 = arith.constant 119 : index
    %793 = memref.load %arg3[%c119] : memref<144xf32, #tpu.memory_space<smem>>
    %794 = vector.extract_strided_slice %1 {offsets = [1, 2, 1], sizes = [1, 10, 16], strides = [1, 1, 1]} : vector<4x12x18xf32> to vector<1x10x16xf32>
    %795 = vector.shape_cast %794 : vector<1x10x16xf32> to vector<10x16xf32>
    %796 = vector.broadcast %793 : f32 to vector<10x16xf32>
    %797 = arith.mulf %796, %795 : vector<10x16xf32>
    %798 = arith.addf %792, %797 : vector<10x16xf32>
    %c135 = arith.constant 135 : index
    %799 = memref.load %arg3[%c135] : memref<144xf32, #tpu.memory_space<smem>>
    %800 = vector.extract_strided_slice %1 {offsets = [1, 2, 2], sizes = [1, 10, 16], strides = [1, 1, 1]} : vector<4x12x18xf32> to vector<1x10x16xf32>
    %801 = vector.shape_cast %800 : vector<1x10x16xf32> to vector<10x16xf32>
    %802 = vector.broadcast %799 : f32 to vector<10x16xf32>
    %803 = arith.mulf %802, %801 : vector<10x16xf32>
    %804 = arith.addf %798, %803 : vector<10x16xf32>
    %c11 = arith.constant 11 : index
    %805 = memref.load %arg3[%c11] : memref<144xf32, #tpu.memory_space<smem>>
    %806 = vector.extract_strided_slice %1 {offsets = [2, 0, 0], sizes = [1, 10, 16], strides = [1, 1, 1]} : vector<4x12x18xf32> to vector<1x10x16xf32>
    %807 = vector.shape_cast %806 : vector<1x10x16xf32> to vector<10x16xf32>
    %808 = vector.broadcast %805 : f32 to vector<10x16xf32>
    %809 = arith.mulf %808, %807 : vector<10x16xf32>
    %810 = arith.addf %804, %809 : vector<10x16xf32>
    %c27 = arith.constant 27 : index
    %811 = memref.load %arg3[%c27] : memref<144xf32, #tpu.memory_space<smem>>
    %812 = vector.extract_strided_slice %1 {offsets = [2, 0, 1], sizes = [1, 10, 16], strides = [1, 1, 1]} : vector<4x12x18xf32> to vector<1x10x16xf32>
    %813 = vector.shape_cast %812 : vector<1x10x16xf32> to vector<10x16xf32>
    %814 = vector.broadcast %811 : f32 to vector<10x16xf32>
    %815 = arith.mulf %814, %813 : vector<10x16xf32>
    %816 = arith.addf %810, %815 : vector<10x16xf32>
    %c43 = arith.constant 43 : index
    %817 = memref.load %arg3[%c43] : memref<144xf32, #tpu.memory_space<smem>>
    %818 = vector.extract_strided_slice %1 {offsets = [2, 0, 2], sizes = [1, 10, 16], strides = [1, 1, 1]} : vector<4x12x18xf32> to vector<1x10x16xf32>
    %819 = vector.shape_cast %818 : vector<1x10x16xf32> to vector<10x16xf32>
    %820 = vector.broadcast %817 : f32 to vector<10x16xf32>
    %821 = arith.mulf %820, %819 : vector<10x16xf32>
    %822 = arith.addf %816, %821 : vector<10x16xf32>
    %c59 = arith.constant 59 : index
    %823 = memref.load %arg3[%c59] : memref<144xf32, #tpu.memory_space<smem>>
    %824 = vector.extract_strided_slice %1 {offsets = [2, 1, 0], sizes = [1, 10, 16], strides = [1, 1, 1]} : vector<4x12x18xf32> to vector<1x10x16xf32>
    %825 = vector.shape_cast %824 : vector<1x10x16xf32> to vector<10x16xf32>
    %826 = vector.broadcast %823 : f32 to vector<10x16xf32>
    %827 = arith.mulf %826, %825 : vector<10x16xf32>
    %828 = arith.addf %822, %827 : vector<10x16xf32>
    %c75 = arith.constant 75 : index
    %829 = memref.load %arg3[%c75] : memref<144xf32, #tpu.memory_space<smem>>
    %830 = vector.extract_strided_slice %1 {offsets = [2, 1, 1], sizes = [1, 10, 16], strides = [1, 1, 1]} : vector<4x12x18xf32> to vector<1x10x16xf32>
    %831 = vector.shape_cast %830 : vector<1x10x16xf32> to vector<10x16xf32>
    %832 = vector.broadcast %829 : f32 to vector<10x16xf32>
    %833 = arith.mulf %832, %831 : vector<10x16xf32>
    %834 = arith.addf %828, %833 : vector<10x16xf32>
    %c91 = arith.constant 91 : index
    %835 = memref.load %arg3[%c91] : memref<144xf32, #tpu.memory_space<smem>>
    %836 = vector.extract_strided_slice %1 {offsets = [2, 1, 2], sizes = [1, 10, 16], strides = [1, 1, 1]} : vector<4x12x18xf32> to vector<1x10x16xf32>
    %837 = vector.shape_cast %836 : vector<1x10x16xf32> to vector<10x16xf32>
    %838 = vector.broadcast %835 : f32 to vector<10x16xf32>
    %839 = arith.mulf %838, %837 : vector<10x16xf32>
    %840 = arith.addf %834, %839 : vector<10x16xf32>
    %c107 = arith.constant 107 : index
    %841 = memref.load %arg3[%c107] : memref<144xf32, #tpu.memory_space<smem>>
    %842 = vector.extract_strided_slice %1 {offsets = [2, 2, 0], sizes = [1, 10, 16], strides = [1, 1, 1]} : vector<4x12x18xf32> to vector<1x10x16xf32>
    %843 = vector.shape_cast %842 : vector<1x10x16xf32> to vector<10x16xf32>
    %844 = vector.broadcast %841 : f32 to vector<10x16xf32>
    %845 = arith.mulf %844, %843 : vector<10x16xf32>
    %846 = arith.addf %840, %845 : vector<10x16xf32>
    %c123 = arith.constant 123 : index
    %847 = memref.load %arg3[%c123] : memref<144xf32, #tpu.memory_space<smem>>
    %848 = vector.extract_strided_slice %1 {offsets = [2, 2, 1], sizes = [1, 10, 16], strides = [1, 1, 1]} : vector<4x12x18xf32> to vector<1x10x16xf32>
    %849 = vector.shape_cast %848 : vector<1x10x16xf32> to vector<10x16xf32>
    %850 = vector.broadcast %847 : f32 to vector<10x16xf32>
    %851 = arith.mulf %850, %849 : vector<10x16xf32>
    %852 = arith.addf %846, %851 : vector<10x16xf32>
    %c139 = arith.constant 139 : index
    %853 = memref.load %arg3[%c139] : memref<144xf32, #tpu.memory_space<smem>>
    %854 = vector.extract_strided_slice %1 {offsets = [2, 2, 2], sizes = [1, 10, 16], strides = [1, 1, 1]} : vector<4x12x18xf32> to vector<1x10x16xf32>
    %855 = vector.shape_cast %854 : vector<1x10x16xf32> to vector<10x16xf32>
    %856 = vector.broadcast %853 : f32 to vector<10x16xf32>
    %857 = arith.mulf %856, %855 : vector<10x16xf32>
    %858 = arith.addf %852, %857 : vector<10x16xf32>
    %c15 = arith.constant 15 : index
    %859 = memref.load %arg3[%c15] : memref<144xf32, #tpu.memory_space<smem>>
    %860 = vector.extract_strided_slice %1 {offsets = [3, 0, 0], sizes = [1, 10, 16], strides = [1, 1, 1]} : vector<4x12x18xf32> to vector<1x10x16xf32>
    %861 = vector.shape_cast %860 : vector<1x10x16xf32> to vector<10x16xf32>
    %862 = vector.broadcast %859 : f32 to vector<10x16xf32>
    %863 = arith.mulf %862, %861 : vector<10x16xf32>
    %864 = arith.addf %858, %863 : vector<10x16xf32>
    %c31 = arith.constant 31 : index
    %865 = memref.load %arg3[%c31] : memref<144xf32, #tpu.memory_space<smem>>
    %866 = vector.extract_strided_slice %1 {offsets = [3, 0, 1], sizes = [1, 10, 16], strides = [1, 1, 1]} : vector<4x12x18xf32> to vector<1x10x16xf32>
    %867 = vector.shape_cast %866 : vector<1x10x16xf32> to vector<10x16xf32>
    %868 = vector.broadcast %865 : f32 to vector<10x16xf32>
    %869 = arith.mulf %868, %867 : vector<10x16xf32>
    %870 = arith.addf %864, %869 : vector<10x16xf32>
    %c47 = arith.constant 47 : index
    %871 = memref.load %arg3[%c47] : memref<144xf32, #tpu.memory_space<smem>>
    %872 = vector.extract_strided_slice %1 {offsets = [3, 0, 2], sizes = [1, 10, 16], strides = [1, 1, 1]} : vector<4x12x18xf32> to vector<1x10x16xf32>
    %873 = vector.shape_cast %872 : vector<1x10x16xf32> to vector<10x16xf32>
    %874 = vector.broadcast %871 : f32 to vector<10x16xf32>
    %875 = arith.mulf %874, %873 : vector<10x16xf32>
    %876 = arith.addf %870, %875 : vector<10x16xf32>
    %c63 = arith.constant 63 : index
    %877 = memref.load %arg3[%c63] : memref<144xf32, #tpu.memory_space<smem>>
    %878 = vector.extract_strided_slice %1 {offsets = [3, 1, 0], sizes = [1, 10, 16], strides = [1, 1, 1]} : vector<4x12x18xf32> to vector<1x10x16xf32>
    %879 = vector.shape_cast %878 : vector<1x10x16xf32> to vector<10x16xf32>
    %880 = vector.broadcast %877 : f32 to vector<10x16xf32>
    %881 = arith.mulf %880, %879 : vector<10x16xf32>
    %882 = arith.addf %876, %881 : vector<10x16xf32>
    %c79 = arith.constant 79 : index
    %883 = memref.load %arg3[%c79] : memref<144xf32, #tpu.memory_space<smem>>
    %884 = vector.extract_strided_slice %1 {offsets = [3, 1, 1], sizes = [1, 10, 16], strides = [1, 1, 1]} : vector<4x12x18xf32> to vector<1x10x16xf32>
    %885 = vector.shape_cast %884 : vector<1x10x16xf32> to vector<10x16xf32>
    %886 = vector.broadcast %883 : f32 to vector<10x16xf32>
    %887 = arith.mulf %886, %885 : vector<10x16xf32>
    %888 = arith.addf %882, %887 : vector<10x16xf32>
    %c95 = arith.constant 95 : index
    %889 = memref.load %arg3[%c95] : memref<144xf32, #tpu.memory_space<smem>>
    %890 = vector.extract_strided_slice %1 {offsets = [3, 1, 2], sizes = [1, 10, 16], strides = [1, 1, 1]} : vector<4x12x18xf32> to vector<1x10x16xf32>
    %891 = vector.shape_cast %890 : vector<1x10x16xf32> to vector<10x16xf32>
    %892 = vector.broadcast %889 : f32 to vector<10x16xf32>
    %893 = arith.mulf %892, %891 : vector<10x16xf32>
    %894 = arith.addf %888, %893 : vector<10x16xf32>
    %c111 = arith.constant 111 : index
    %895 = memref.load %arg3[%c111] : memref<144xf32, #tpu.memory_space<smem>>
    %896 = vector.extract_strided_slice %1 {offsets = [3, 2, 0], sizes = [1, 10, 16], strides = [1, 1, 1]} : vector<4x12x18xf32> to vector<1x10x16xf32>
    %897 = vector.shape_cast %896 : vector<1x10x16xf32> to vector<10x16xf32>
    %898 = vector.broadcast %895 : f32 to vector<10x16xf32>
    %899 = arith.mulf %898, %897 : vector<10x16xf32>
    %900 = arith.addf %894, %899 : vector<10x16xf32>
    %c127 = arith.constant 127 : index
    %901 = memref.load %arg3[%c127] : memref<144xf32, #tpu.memory_space<smem>>
    %902 = vector.extract_strided_slice %1 {offsets = [3, 2, 1], sizes = [1, 10, 16], strides = [1, 1, 1]} : vector<4x12x18xf32> to vector<1x10x16xf32>
    %903 = vector.shape_cast %902 : vector<1x10x16xf32> to vector<10x16xf32>
    %904 = vector.broadcast %901 : f32 to vector<10x16xf32>
    %905 = arith.mulf %904, %903 : vector<10x16xf32>
    %906 = arith.addf %900, %905 : vector<10x16xf32>
    %c143 = arith.constant 143 : index
    %907 = memref.load %arg3[%c143] : memref<144xf32, #tpu.memory_space<smem>>
    %908 = vector.extract_strided_slice %1 {offsets = [3, 2, 2], sizes = [1, 10, 16], strides = [1, 1, 1]} : vector<4x12x18xf32> to vector<1x10x16xf32>
    %909 = vector.shape_cast %908 : vector<1x10x16xf32> to vector<10x16xf32>
    %910 = vector.broadcast %907 : f32 to vector<10x16xf32>
    %911 = arith.mulf %910, %909 : vector<10x16xf32>
    %912 = arith.addf %906, %911 : vector<10x16xf32>
    %cst_38 = arith.constant 0.000000e+00 : f32
    %913 = vector.broadcast %cst_38 : f32 to vector<10x16xf32>
    %914 = arith.maximumf %912, %913 : vector<10x16xf32>
    %c3_39 = arith.constant 3 : index
    %c0_40 = arith.constant 0 : index
    %c1_41 = arith.constant 1 : index
    %915 = vector.load %arg8[%c3_39, %c0_40, %c1_41] : memref<4x10x18xf32, #tpu.memory_space<vmem>>, vector<1x10x16xf32>
    %916 = vector.shape_cast %915 : vector<1x10x16xf32> to vector<10x16xf32>
    %917 = vector.shape_cast %914 : vector<10x16xf32> to vector<1x10x16xf32>
    tpu.vector_store %arg8[%c3_39, %c0_40, %c1_41], %917 {strides = array<i32>} : memref<4x10x18xf32, #tpu.memory_space<vmem>>, vector<1x10x16xf32>,
    %918 = vector.extract_strided_slice %914 {offsets = [0, 1], sizes = [10, 1], strides = [1, 1]} : vector<10x16xf32> to vector<10x1xf32>
    %c3_42 = arith.constant 3 : index
    %c0_43 = arith.constant 0 : index
    %c0_44 = arith.constant 0 : index
    %919 = vector.load %arg8[%c3_42, %c0_43, %c0_44] : memref<4x10x18xf32, #tpu.memory_space<vmem>>, vector<1x10x1xf32>
    %920 = vector.shape_cast %919 : vector<1x10x1xf32> to vector<10x1xf32>
    %921 = vector.shape_cast %918 : vector<10x1xf32> to vector<1x10x1xf32>
    tpu.vector_store %arg8[%c3_42, %c0_43, %c0_44], %921 {strides = array<i32>} : memref<4x10x18xf32, #tpu.memory_space<vmem>>, vector<1x10x1xf32>,
    %922 = vector.extract_strided_slice %914 {offsets = [0, 14], sizes = [10, 1], strides = [1, 1]} : vector<10x16xf32> to vector<10x1xf32>
    %c3_45 = arith.constant 3 : index
    %c0_46 = arith.constant 0 : index
    %c17_47 = arith.constant 17 : index
    %923 = vector.load %arg8[%c3_45, %c0_46, %c17_47] : memref<4x10x18xf32, #tpu.memory_space<vmem>>, vector<1x10x1xf32>
    %924 = vector.shape_cast %923 : vector<1x10x1xf32> to vector<10x1xf32>
    %925 = vector.shape_cast %922 : vector<10x1xf32> to vector<1x10x1xf32>
    tpu.vector_store %arg8[%c3_45, %c0_46, %c17_47], %925 {strides = array<i32>} : memref<4x10x18xf32, #tpu.memory_space<vmem>>, vector<1x10x1xf32>,
    %c0_i32 = arith.constant 0 : i32
    %926 = arith.cmpi eq, %arg1, %c0_i32 : i32
    %927 = arith.extui %926 : i1 to i32
    %c0_i32_48 = arith.constant 0 : i32
    %928 = arith.cmpi ne, %927, %c0_i32_48 : i32
    scf.if %928 {
      %c0_221 = arith.constant 0 : index
      %c2_222 = arith.constant 2 : index
      %c0_223 = arith.constant 0 : index
      %1837 = vector.load %arg8[%c0_221, %c2_222, %c0_223] : memref<4x10x18xf32, #tpu.memory_space<vmem>>, vector<4x1x18xf32>
      %c0_224 = arith.constant 0 : index
      %c0_225 = arith.constant 0 : index
      %c0_226 = arith.constant 0 : index
      %1838 = vector.load %arg8[%c0_224, %c0_225, %c0_226] : memref<4x10x18xf32, #tpu.memory_space<vmem>>, vector<4x1x18xf32>
      tpu.vector_store %arg8[%c0_224, %c0_225, %c0_226], %1837 {strides = array<i32>} : memref<4x10x18xf32, #tpu.memory_space<vmem>>, vector<4x1x18xf32>,
    } else {
    }
    %c1_i32 = arith.constant 1 : i32
    %929 = arith.cmpi eq, %arg1, %c1_i32 : i32
    %930 = arith.extui %929 : i1 to i32
    %c0_i32_49 = arith.constant 0 : i32
    %931 = arith.cmpi ne, %930, %c0_i32_49 : i32
    scf.if %931 {
      %c0_221 = arith.constant 0 : index
      %c7_222 = arith.constant 7 : index
      %c0_223 = arith.constant 0 : index
      %1837 = vector.load %arg8[%c0_221, %c7_222, %c0_223] : memref<4x10x18xf32, #tpu.memory_space<vmem>>, vector<4x1x18xf32>
      %c0_224 = arith.constant 0 : index
      %c9_225 = arith.constant 9 : index
      %c0_226 = arith.constant 0 : index
      %1838 = vector.load %arg8[%c0_224, %c9_225, %c0_226] : memref<4x10x18xf32, #tpu.memory_space<vmem>>, vector<4x1x18xf32>
      tpu.vector_store %arg8[%c0_224, %c9_225, %c0_226], %1837 {strides = array<i32>} : memref<4x10x18xf32, #tpu.memory_space<vmem>>, vector<4x1x18xf32>,
    } else {
    }
    %c0_50 = arith.constant 0 : index
    %c0_51 = arith.constant 0 : index
    %c0_52 = arith.constant 0 : index
    %932 = vector.load %arg8[%c0_50, %c0_51, %c0_52] : memref<4x10x18xf32, #tpu.memory_space<vmem>>, vector<4x10x18xf32>
    %c0_53 = arith.constant 0 : index
    %933 = memref.load %arg6[%c0_53] : memref<4xf32, #tpu.memory_space<smem>>
    %934 = vector.broadcast %933 : f32 to vector<8x16xf32>
    %c0_54 = arith.constant 0 : index
    %935 = memref.load %arg5[%c0_54] : memref<144xf32, #tpu.memory_space<smem>>
    %936 = vector.extract_strided_slice %932 {offsets = [0, 0, 0], sizes = [1, 8, 16], strides = [1, 1, 1]} : vector<4x10x18xf32> to vector<1x8x16xf32>
    %937 = vector.shape_cast %936 : vector<1x8x16xf32> to vector<8x16xf32>
    %938 = vector.broadcast %935 : f32 to vector<8x16xf32>
    %939 = arith.mulf %938, %937 : vector<8x16xf32>
    %940 = arith.addf %934, %939 : vector<8x16xf32>
    %c16_55 = arith.constant 16 : index
    %941 = memref.load %arg5[%c16_55] : memref<144xf32, #tpu.memory_space<smem>>
    %942 = vector.extract_strided_slice %932 {offsets = [0, 0, 1], sizes = [1, 8, 16], strides = [1, 1, 1]} : vector<4x10x18xf32> to vector<1x8x16xf32>
    %943 = vector.shape_cast %942 : vector<1x8x16xf32> to vector<8x16xf32>
    %944 = vector.broadcast %941 : f32 to vector<8x16xf32>
    %945 = arith.mulf %944, %943 : vector<8x16xf32>
    %946 = arith.addf %940, %945 : vector<8x16xf32>
    %c32_56 = arith.constant 32 : index
    %947 = memref.load %arg5[%c32_56] : memref<144xf32, #tpu.memory_space<smem>>
    %948 = vector.extract_strided_slice %932 {offsets = [0, 0, 2], sizes = [1, 8, 16], strides = [1, 1, 1]} : vector<4x10x18xf32> to vector<1x8x16xf32>
    %949 = vector.shape_cast %948 : vector<1x8x16xf32> to vector<8x16xf32>
    %950 = vector.broadcast %947 : f32 to vector<8x16xf32>
    %951 = arith.mulf %950, %949 : vector<8x16xf32>
    %952 = arith.addf %946, %951 : vector<8x16xf32>
    %c48_57 = arith.constant 48 : index
    %953 = memref.load %arg5[%c48_57] : memref<144xf32, #tpu.memory_space<smem>>
    %954 = vector.extract_strided_slice %932 {offsets = [0, 1, 0], sizes = [1, 8, 16], strides = [1, 1, 1]} : vector<4x10x18xf32> to vector<1x8x16xf32>
    %955 = vector.shape_cast %954 : vector<1x8x16xf32> to vector<8x16xf32>
    %956 = vector.broadcast %953 : f32 to vector<8x16xf32>
    %957 = arith.mulf %956, %955 : vector<8x16xf32>
    %958 = arith.addf %952, %957 : vector<8x16xf32>
    %c64_58 = arith.constant 64 : index
    %959 = memref.load %arg5[%c64_58] : memref<144xf32, #tpu.memory_space<smem>>
    %960 = vector.extract_strided_slice %932 {offsets = [0, 1, 1], sizes = [1, 8, 16], strides = [1, 1, 1]} : vector<4x10x18xf32> to vector<1x8x16xf32>
    %961 = vector.shape_cast %960 : vector<1x8x16xf32> to vector<8x16xf32>
    %962 = vector.broadcast %959 : f32 to vector<8x16xf32>
    %963 = arith.mulf %962, %961 : vector<8x16xf32>
    %964 = arith.addf %958, %963 : vector<8x16xf32>
    %c80_59 = arith.constant 80 : index
    %965 = memref.load %arg5[%c80_59] : memref<144xf32, #tpu.memory_space<smem>>
    %966 = vector.extract_strided_slice %932 {offsets = [0, 1, 2], sizes = [1, 8, 16], strides = [1, 1, 1]} : vector<4x10x18xf32> to vector<1x8x16xf32>
    %967 = vector.shape_cast %966 : vector<1x8x16xf32> to vector<8x16xf32>
    %968 = vector.broadcast %965 : f32 to vector<8x16xf32>
    %969 = arith.mulf %968, %967 : vector<8x16xf32>
    %970 = arith.addf %964, %969 : vector<8x16xf32>
    %c96_60 = arith.constant 96 : index
    %971 = memref.load %arg5[%c96_60] : memref<144xf32, #tpu.memory_space<smem>>
    %972 = vector.extract_strided_slice %932 {offsets = [0, 2, 0], sizes = [1, 8, 16], strides = [1, 1, 1]} : vector<4x10x18xf32> to vector<1x8x16xf32>
    %973 = vector.shape_cast %972 : vector<1x8x16xf32> to vector<8x16xf32>
    %974 = vector.broadcast %971 : f32 to vector<8x16xf32>
    %975 = arith.mulf %974, %973 : vector<8x16xf32>
    %976 = arith.addf %970, %975 : vector<8x16xf32>
    %c112_61 = arith.constant 112 : index
    %977 = memref.load %arg5[%c112_61] : memref<144xf32, #tpu.memory_space<smem>>
    %978 = vector.extract_strided_slice %932 {offsets = [0, 2, 1], sizes = [1, 8, 16], strides = [1, 1, 1]} : vector<4x10x18xf32> to vector<1x8x16xf32>
    %979 = vector.shape_cast %978 : vector<1x8x16xf32> to vector<8x16xf32>
    %980 = vector.broadcast %977 : f32 to vector<8x16xf32>
    %981 = arith.mulf %980, %979 : vector<8x16xf32>
    %982 = arith.addf %976, %981 : vector<8x16xf32>
    %c128_62 = arith.constant 128 : index
    %983 = memref.load %arg5[%c128_62] : memref<144xf32, #tpu.memory_space<smem>>
    %984 = vector.extract_strided_slice %932 {offsets = [0, 2, 2], sizes = [1, 8, 16], strides = [1, 1, 1]} : vector<4x10x18xf32> to vector<1x8x16xf32>
    %985 = vector.shape_cast %984 : vector<1x8x16xf32> to vector<8x16xf32>
    %986 = vector.broadcast %983 : f32 to vector<8x16xf32>
    %987 = arith.mulf %986, %985 : vector<8x16xf32>
    %988 = arith.addf %982, %987 : vector<8x16xf32>
    %c4_63 = arith.constant 4 : index
    %989 = memref.load %arg5[%c4_63] : memref<144xf32, #tpu.memory_space<smem>>
    %990 = vector.extract_strided_slice %932 {offsets = [1, 0, 0], sizes = [1, 8, 16], strides = [1, 1, 1]} : vector<4x10x18xf32> to vector<1x8x16xf32>
    %991 = vector.shape_cast %990 : vector<1x8x16xf32> to vector<8x16xf32>
    %992 = vector.broadcast %989 : f32 to vector<8x16xf32>
    %993 = arith.mulf %992, %991 : vector<8x16xf32>
    %994 = arith.addf %988, %993 : vector<8x16xf32>
    %c20_64 = arith.constant 20 : index
    %995 = memref.load %arg5[%c20_64] : memref<144xf32, #tpu.memory_space<smem>>
    %996 = vector.extract_strided_slice %932 {offsets = [1, 0, 1], sizes = [1, 8, 16], strides = [1, 1, 1]} : vector<4x10x18xf32> to vector<1x8x16xf32>
    %997 = vector.shape_cast %996 : vector<1x8x16xf32> to vector<8x16xf32>
    %998 = vector.broadcast %995 : f32 to vector<8x16xf32>
    %999 = arith.mulf %998, %997 : vector<8x16xf32>
    %1000 = arith.addf %994, %999 : vector<8x16xf32>
    %c36_65 = arith.constant 36 : index
    %1001 = memref.load %arg5[%c36_65] : memref<144xf32, #tpu.memory_space<smem>>
    %1002 = vector.extract_strided_slice %932 {offsets = [1, 0, 2], sizes = [1, 8, 16], strides = [1, 1, 1]} : vector<4x10x18xf32> to vector<1x8x16xf32>
    %1003 = vector.shape_cast %1002 : vector<1x8x16xf32> to vector<8x16xf32>
    %1004 = vector.broadcast %1001 : f32 to vector<8x16xf32>
    %1005 = arith.mulf %1004, %1003 : vector<8x16xf32>
    %1006 = arith.addf %1000, %1005 : vector<8x16xf32>
    %c52_66 = arith.constant 52 : index
    %1007 = memref.load %arg5[%c52_66] : memref<144xf32, #tpu.memory_space<smem>>
    %1008 = vector.extract_strided_slice %932 {offsets = [1, 1, 0], sizes = [1, 8, 16], strides = [1, 1, 1]} : vector<4x10x18xf32> to vector<1x8x16xf32>
    %1009 = vector.shape_cast %1008 : vector<1x8x16xf32> to vector<8x16xf32>
    %1010 = vector.broadcast %1007 : f32 to vector<8x16xf32>
    %1011 = arith.mulf %1010, %1009 : vector<8x16xf32>
    %1012 = arith.addf %1006, %1011 : vector<8x16xf32>
    %c68_67 = arith.constant 68 : index
    %1013 = memref.load %arg5[%c68_67] : memref<144xf32, #tpu.memory_space<smem>>
    %1014 = vector.extract_strided_slice %932 {offsets = [1, 1, 1], sizes = [1, 8, 16], strides = [1, 1, 1]} : vector<4x10x18xf32> to vector<1x8x16xf32>
    %1015 = vector.shape_cast %1014 : vector<1x8x16xf32> to vector<8x16xf32>
    %1016 = vector.broadcast %1013 : f32 to vector<8x16xf32>
    %1017 = arith.mulf %1016, %1015 : vector<8x16xf32>
    %1018 = arith.addf %1012, %1017 : vector<8x16xf32>
    %c84_68 = arith.constant 84 : index
    %1019 = memref.load %arg5[%c84_68] : memref<144xf32, #tpu.memory_space<smem>>
    %1020 = vector.extract_strided_slice %932 {offsets = [1, 1, 2], sizes = [1, 8, 16], strides = [1, 1, 1]} : vector<4x10x18xf32> to vector<1x8x16xf32>
    %1021 = vector.shape_cast %1020 : vector<1x8x16xf32> to vector<8x16xf32>
    %1022 = vector.broadcast %1019 : f32 to vector<8x16xf32>
    %1023 = arith.mulf %1022, %1021 : vector<8x16xf32>
    %1024 = arith.addf %1018, %1023 : vector<8x16xf32>
    %c100_69 = arith.constant 100 : index
    %1025 = memref.load %arg5[%c100_69] : memref<144xf32, #tpu.memory_space<smem>>
    %1026 = vector.extract_strided_slice %932 {offsets = [1, 2, 0], sizes = [1, 8, 16], strides = [1, 1, 1]} : vector<4x10x18xf32> to vector<1x8x16xf32>
    %1027 = vector.shape_cast %1026 : vector<1x8x16xf32> to vector<8x16xf32>
    %1028 = vector.broadcast %1025 : f32 to vector<8x16xf32>
    %1029 = arith.mulf %1028, %1027 : vector<8x16xf32>
    %1030 = arith.addf %1024, %1029 : vector<8x16xf32>
    %c116_70 = arith.constant 116 : index
    %1031 = memref.load %arg5[%c116_70] : memref<144xf32, #tpu.memory_space<smem>>
    %1032 = vector.extract_strided_slice %932 {offsets = [1, 2, 1], sizes = [1, 8, 16], strides = [1, 1, 1]} : vector<4x10x18xf32> to vector<1x8x16xf32>
    %1033 = vector.shape_cast %1032 : vector<1x8x16xf32> to vector<8x16xf32>
    %1034 = vector.broadcast %1031 : f32 to vector<8x16xf32>
    %1035 = arith.mulf %1034, %1033 : vector<8x16xf32>
    %1036 = arith.addf %1030, %1035 : vector<8x16xf32>
    %c132_71 = arith.constant 132 : index
    %1037 = memref.load %arg5[%c132_71] : memref<144xf32, #tpu.memory_space<smem>>
    %1038 = vector.extract_strided_slice %932 {offsets = [1, 2, 2], sizes = [1, 8, 16], strides = [1, 1, 1]} : vector<4x10x18xf32> to vector<1x8x16xf32>
    %1039 = vector.shape_cast %1038 : vector<1x8x16xf32> to vector<8x16xf32>
    %1040 = vector.broadcast %1037 : f32 to vector<8x16xf32>
    %1041 = arith.mulf %1040, %1039 : vector<8x16xf32>
    %1042 = arith.addf %1036, %1041 : vector<8x16xf32>
    %c8_72 = arith.constant 8 : index
    %1043 = memref.load %arg5[%c8_72] : memref<144xf32, #tpu.memory_space<smem>>
    %1044 = vector.extract_strided_slice %932 {offsets = [2, 0, 0], sizes = [1, 8, 16], strides = [1, 1, 1]} : vector<4x10x18xf32> to vector<1x8x16xf32>
    %1045 = vector.shape_cast %1044 : vector<1x8x16xf32> to vector<8x16xf32>
    %1046 = vector.broadcast %1043 : f32 to vector<8x16xf32>
    %1047 = arith.mulf %1046, %1045 : vector<8x16xf32>
    %1048 = arith.addf %1042, %1047 : vector<8x16xf32>
    %c24_73 = arith.constant 24 : index
    %1049 = memref.load %arg5[%c24_73] : memref<144xf32, #tpu.memory_space<smem>>
    %1050 = vector.extract_strided_slice %932 {offsets = [2, 0, 1], sizes = [1, 8, 16], strides = [1, 1, 1]} : vector<4x10x18xf32> to vector<1x8x16xf32>
    %1051 = vector.shape_cast %1050 : vector<1x8x16xf32> to vector<8x16xf32>
    %1052 = vector.broadcast %1049 : f32 to vector<8x16xf32>
    %1053 = arith.mulf %1052, %1051 : vector<8x16xf32>
    %1054 = arith.addf %1048, %1053 : vector<8x16xf32>
    %c40_74 = arith.constant 40 : index
    %1055 = memref.load %arg5[%c40_74] : memref<144xf32, #tpu.memory_space<smem>>
    %1056 = vector.extract_strided_slice %932 {offsets = [2, 0, 2], sizes = [1, 8, 16], strides = [1, 1, 1]} : vector<4x10x18xf32> to vector<1x8x16xf32>
    %1057 = vector.shape_cast %1056 : vector<1x8x16xf32> to vector<8x16xf32>
    %1058 = vector.broadcast %1055 : f32 to vector<8x16xf32>
    %1059 = arith.mulf %1058, %1057 : vector<8x16xf32>
    %1060 = arith.addf %1054, %1059 : vector<8x16xf32>
    %c56_75 = arith.constant 56 : index
    %1061 = memref.load %arg5[%c56_75] : memref<144xf32, #tpu.memory_space<smem>>
    %1062 = vector.extract_strided_slice %932 {offsets = [2, 1, 0], sizes = [1, 8, 16], strides = [1, 1, 1]} : vector<4x10x18xf32> to vector<1x8x16xf32>
    %1063 = vector.shape_cast %1062 : vector<1x8x16xf32> to vector<8x16xf32>
    %1064 = vector.broadcast %1061 : f32 to vector<8x16xf32>
    %1065 = arith.mulf %1064, %1063 : vector<8x16xf32>
    %1066 = arith.addf %1060, %1065 : vector<8x16xf32>
    %c72_76 = arith.constant 72 : index
    %1067 = memref.load %arg5[%c72_76] : memref<144xf32, #tpu.memory_space<smem>>
    %1068 = vector.extract_strided_slice %932 {offsets = [2, 1, 1], sizes = [1, 8, 16], strides = [1, 1, 1]} : vector<4x10x18xf32> to vector<1x8x16xf32>
    %1069 = vector.shape_cast %1068 : vector<1x8x16xf32> to vector<8x16xf32>
    %1070 = vector.broadcast %1067 : f32 to vector<8x16xf32>
    %1071 = arith.mulf %1070, %1069 : vector<8x16xf32>
    %1072 = arith.addf %1066, %1071 : vector<8x16xf32>
    %c88_77 = arith.constant 88 : index
    %1073 = memref.load %arg5[%c88_77] : memref<144xf32, #tpu.memory_space<smem>>
    %1074 = vector.extract_strided_slice %932 {offsets = [2, 1, 2], sizes = [1, 8, 16], strides = [1, 1, 1]} : vector<4x10x18xf32> to vector<1x8x16xf32>
    %1075 = vector.shape_cast %1074 : vector<1x8x16xf32> to vector<8x16xf32>
    %1076 = vector.broadcast %1073 : f32 to vector<8x16xf32>
    %1077 = arith.mulf %1076, %1075 : vector<8x16xf32>
    %1078 = arith.addf %1072, %1077 : vector<8x16xf32>
    %c104_78 = arith.constant 104 : index
    %1079 = memref.load %arg5[%c104_78] : memref<144xf32, #tpu.memory_space<smem>>
    %1080 = vector.extract_strided_slice %932 {offsets = [2, 2, 0], sizes = [1, 8, 16], strides = [1, 1, 1]} : vector<4x10x18xf32> to vector<1x8x16xf32>
    %1081 = vector.shape_cast %1080 : vector<1x8x16xf32> to vector<8x16xf32>
    %1082 = vector.broadcast %1079 : f32 to vector<8x16xf32>
    %1083 = arith.mulf %1082, %1081 : vector<8x16xf32>
    %1084 = arith.addf %1078, %1083 : vector<8x16xf32>
    %c120_79 = arith.constant 120 : index
    %1085 = memref.load %arg5[%c120_79] : memref<144xf32, #tpu.memory_space<smem>>
    %1086 = vector.extract_strided_slice %932 {offsets = [2, 2, 1], sizes = [1, 8, 16], strides = [1, 1, 1]} : vector<4x10x18xf32> to vector<1x8x16xf32>
    %1087 = vector.shape_cast %1086 : vector<1x8x16xf32> to vector<8x16xf32>
    %1088 = vector.broadcast %1085 : f32 to vector<8x16xf32>
    %1089 = arith.mulf %1088, %1087 : vector<8x16xf32>
    %1090 = arith.addf %1084, %1089 : vector<8x16xf32>
    %c136_80 = arith.constant 136 : index
    %1091 = memref.load %arg5[%c136_80] : memref<144xf32, #tpu.memory_space<smem>>
    %1092 = vector.extract_strided_slice %932 {offsets = [2, 2, 2], sizes = [1, 8, 16], strides = [1, 1, 1]} : vector<4x10x18xf32> to vector<1x8x16xf32>
    %1093 = vector.shape_cast %1092 : vector<1x8x16xf32> to vector<8x16xf32>
    %1094 = vector.broadcast %1091 : f32 to vector<8x16xf32>
    %1095 = arith.mulf %1094, %1093 : vector<8x16xf32>
    %1096 = arith.addf %1090, %1095 : vector<8x16xf32>
    %c12_81 = arith.constant 12 : index
    %1097 = memref.load %arg5[%c12_81] : memref<144xf32, #tpu.memory_space<smem>>
    %1098 = vector.extract_strided_slice %932 {offsets = [3, 0, 0], sizes = [1, 8, 16], strides = [1, 1, 1]} : vector<4x10x18xf32> to vector<1x8x16xf32>
    %1099 = vector.shape_cast %1098 : vector<1x8x16xf32> to vector<8x16xf32>
    %1100 = vector.broadcast %1097 : f32 to vector<8x16xf32>
    %1101 = arith.mulf %1100, %1099 : vector<8x16xf32>
    %1102 = arith.addf %1096, %1101 : vector<8x16xf32>
    %c28_82 = arith.constant 28 : index
    %1103 = memref.load %arg5[%c28_82] : memref<144xf32, #tpu.memory_space<smem>>
    %1104 = vector.extract_strided_slice %932 {offsets = [3, 0, 1], sizes = [1, 8, 16], strides = [1, 1, 1]} : vector<4x10x18xf32> to vector<1x8x16xf32>
    %1105 = vector.shape_cast %1104 : vector<1x8x16xf32> to vector<8x16xf32>
    %1106 = vector.broadcast %1103 : f32 to vector<8x16xf32>
    %1107 = arith.mulf %1106, %1105 : vector<8x16xf32>
    %1108 = arith.addf %1102, %1107 : vector<8x16xf32>
    %c44_83 = arith.constant 44 : index
    %1109 = memref.load %arg5[%c44_83] : memref<144xf32, #tpu.memory_space<smem>>
    %1110 = vector.extract_strided_slice %932 {offsets = [3, 0, 2], sizes = [1, 8, 16], strides = [1, 1, 1]} : vector<4x10x18xf32> to vector<1x8x16xf32>
    %1111 = vector.shape_cast %1110 : vector<1x8x16xf32> to vector<8x16xf32>
    %1112 = vector.broadcast %1109 : f32 to vector<8x16xf32>
    %1113 = arith.mulf %1112, %1111 : vector<8x16xf32>
    %1114 = arith.addf %1108, %1113 : vector<8x16xf32>
    %c60_84 = arith.constant 60 : index
    %1115 = memref.load %arg5[%c60_84] : memref<144xf32, #tpu.memory_space<smem>>
    %1116 = vector.extract_strided_slice %932 {offsets = [3, 1, 0], sizes = [1, 8, 16], strides = [1, 1, 1]} : vector<4x10x18xf32> to vector<1x8x16xf32>
    %1117 = vector.shape_cast %1116 : vector<1x8x16xf32> to vector<8x16xf32>
    %1118 = vector.broadcast %1115 : f32 to vector<8x16xf32>
    %1119 = arith.mulf %1118, %1117 : vector<8x16xf32>
    %1120 = arith.addf %1114, %1119 : vector<8x16xf32>
    %c76_85 = arith.constant 76 : index
    %1121 = memref.load %arg5[%c76_85] : memref<144xf32, #tpu.memory_space<smem>>
    %1122 = vector.extract_strided_slice %932 {offsets = [3, 1, 1], sizes = [1, 8, 16], strides = [1, 1, 1]} : vector<4x10x18xf32> to vector<1x8x16xf32>
    %1123 = vector.shape_cast %1122 : vector<1x8x16xf32> to vector<8x16xf32>
    %1124 = vector.broadcast %1121 : f32 to vector<8x16xf32>
    %1125 = arith.mulf %1124, %1123 : vector<8x16xf32>
    %1126 = arith.addf %1120, %1125 : vector<8x16xf32>
    %c92_86 = arith.constant 92 : index
    %1127 = memref.load %arg5[%c92_86] : memref<144xf32, #tpu.memory_space<smem>>
    %1128 = vector.extract_strided_slice %932 {offsets = [3, 1, 2], sizes = [1, 8, 16], strides = [1, 1, 1]} : vector<4x10x18xf32> to vector<1x8x16xf32>
    %1129 = vector.shape_cast %1128 : vector<1x8x16xf32> to vector<8x16xf32>
    %1130 = vector.broadcast %1127 : f32 to vector<8x16xf32>
    %1131 = arith.mulf %1130, %1129 : vector<8x16xf32>
    %1132 = arith.addf %1126, %1131 : vector<8x16xf32>
    %c108_87 = arith.constant 108 : index
    %1133 = memref.load %arg5[%c108_87] : memref<144xf32, #tpu.memory_space<smem>>
    %1134 = vector.extract_strided_slice %932 {offsets = [3, 2, 0], sizes = [1, 8, 16], strides = [1, 1, 1]} : vector<4x10x18xf32> to vector<1x8x16xf32>
    %1135 = vector.shape_cast %1134 : vector<1x8x16xf32> to vector<8x16xf32>
    %1136 = vector.broadcast %1133 : f32 to vector<8x16xf32>
    %1137 = arith.mulf %1136, %1135 : vector<8x16xf32>
    %1138 = arith.addf %1132, %1137 : vector<8x16xf32>
    %c124_88 = arith.constant 124 : index
    %1139 = memref.load %arg5[%c124_88] : memref<144xf32, #tpu.memory_space<smem>>
    %1140 = vector.extract_strided_slice %932 {offsets = [3, 2, 1], sizes = [1, 8, 16], strides = [1, 1, 1]} : vector<4x10x18xf32> to vector<1x8x16xf32>
    %1141 = vector.shape_cast %1140 : vector<1x8x16xf32> to vector<8x16xf32>
    %1142 = vector.broadcast %1139 : f32 to vector<8x16xf32>
    %1143 = arith.mulf %1142, %1141 : vector<8x16xf32>
    %1144 = arith.addf %1138, %1143 : vector<8x16xf32>
    %c140_89 = arith.constant 140 : index
    %1145 = memref.load %arg5[%c140_89] : memref<144xf32, #tpu.memory_space<smem>>
    %1146 = vector.extract_strided_slice %932 {offsets = [3, 2, 2], sizes = [1, 8, 16], strides = [1, 1, 1]} : vector<4x10x18xf32> to vector<1x8x16xf32>
    %1147 = vector.shape_cast %1146 : vector<1x8x16xf32> to vector<8x16xf32>
    %1148 = vector.broadcast %1145 : f32 to vector<8x16xf32>
    %1149 = arith.mulf %1148, %1147 : vector<8x16xf32>
    %1150 = arith.addf %1144, %1149 : vector<8x16xf32>
    %1151 = vector.extract_strided_slice %1 {offsets = [0, 2, 1], sizes = [1, 8, 16], strides = [1, 1, 1]} : vector<4x12x18xf32> to vector<1x8x16xf32>
    %1152 = vector.shape_cast %1151 : vector<1x8x16xf32> to vector<8x16xf32>
    %1153 = arith.addf %1150, %1152 : vector<8x16xf32>
    %cst_90 = arith.constant 0.000000e+00 : f32
    %1154 = vector.broadcast %cst_90 : f32 to vector<8x16xf32>
    %1155 = arith.maximumf %1153, %1154 : vector<8x16xf32>
    %c0_91 = arith.constant 0 : index
    %c0_92 = arith.constant 0 : index
    %c0_93 = arith.constant 0 : index
    %c0_94 = arith.constant 0 : index
    %1156 = vector.load %arg7[%c0_91, %c0_92, %c0_93, %c0_94] : memref<1x4x8x16xf32, #tpu.memory_space<vmem>>, vector<1x1x8x16xf32>
    %1157 = vector.shape_cast %1156 : vector<1x1x8x16xf32> to vector<8x16xf32>
    %1158 = vector.shape_cast %1155 : vector<8x16xf32> to vector<1x1x8x16xf32>
    tpu.vector_store %arg7[%c0_91, %c0_92, %c0_93, %c0_94], %1158 {strides = array<i32>} : memref<1x4x8x16xf32, #tpu.memory_space<vmem>>, vector<1x1x8x16xf32>,
    %c1_95 = arith.constant 1 : index
    %1159 = memref.load %arg6[%c1_95] : memref<4xf32, #tpu.memory_space<smem>>
    %1160 = vector.broadcast %1159 : f32 to vector<8x16xf32>
    %c1_96 = arith.constant 1 : index
    %1161 = memref.load %arg5[%c1_96] : memref<144xf32, #tpu.memory_space<smem>>
    %1162 = vector.extract_strided_slice %932 {offsets = [0, 0, 0], sizes = [1, 8, 16], strides = [1, 1, 1]} : vector<4x10x18xf32> to vector<1x8x16xf32>
    %1163 = vector.shape_cast %1162 : vector<1x8x16xf32> to vector<8x16xf32>
    %1164 = vector.broadcast %1161 : f32 to vector<8x16xf32>
    %1165 = arith.mulf %1164, %1163 : vector<8x16xf32>
    %1166 = arith.addf %1160, %1165 : vector<8x16xf32>
    %c17_97 = arith.constant 17 : index
    %1167 = memref.load %arg5[%c17_97] : memref<144xf32, #tpu.memory_space<smem>>
    %1168 = vector.extract_strided_slice %932 {offsets = [0, 0, 1], sizes = [1, 8, 16], strides = [1, 1, 1]} : vector<4x10x18xf32> to vector<1x8x16xf32>
    %1169 = vector.shape_cast %1168 : vector<1x8x16xf32> to vector<8x16xf32>
    %1170 = vector.broadcast %1167 : f32 to vector<8x16xf32>
    %1171 = arith.mulf %1170, %1169 : vector<8x16xf32>
    %1172 = arith.addf %1166, %1171 : vector<8x16xf32>
    %c33_98 = arith.constant 33 : index
    %1173 = memref.load %arg5[%c33_98] : memref<144xf32, #tpu.memory_space<smem>>
    %1174 = vector.extract_strided_slice %932 {offsets = [0, 0, 2], sizes = [1, 8, 16], strides = [1, 1, 1]} : vector<4x10x18xf32> to vector<1x8x16xf32>
    %1175 = vector.shape_cast %1174 : vector<1x8x16xf32> to vector<8x16xf32>
    %1176 = vector.broadcast %1173 : f32 to vector<8x16xf32>
    %1177 = arith.mulf %1176, %1175 : vector<8x16xf32>
    %1178 = arith.addf %1172, %1177 : vector<8x16xf32>
    %c49_99 = arith.constant 49 : index
    %1179 = memref.load %arg5[%c49_99] : memref<144xf32, #tpu.memory_space<smem>>
    %1180 = vector.extract_strided_slice %932 {offsets = [0, 1, 0], sizes = [1, 8, 16], strides = [1, 1, 1]} : vector<4x10x18xf32> to vector<1x8x16xf32>
    %1181 = vector.shape_cast %1180 : vector<1x8x16xf32> to vector<8x16xf32>
    %1182 = vector.broadcast %1179 : f32 to vector<8x16xf32>
    %1183 = arith.mulf %1182, %1181 : vector<8x16xf32>
    %1184 = arith.addf %1178, %1183 : vector<8x16xf32>
    %c65_100 = arith.constant 65 : index
    %1185 = memref.load %arg5[%c65_100] : memref<144xf32, #tpu.memory_space<smem>>
    %1186 = vector.extract_strided_slice %932 {offsets = [0, 1, 1], sizes = [1, 8, 16], strides = [1, 1, 1]} : vector<4x10x18xf32> to vector<1x8x16xf32>
    %1187 = vector.shape_cast %1186 : vector<1x8x16xf32> to vector<8x16xf32>
    %1188 = vector.broadcast %1185 : f32 to vector<8x16xf32>
    %1189 = arith.mulf %1188, %1187 : vector<8x16xf32>
    %1190 = arith.addf %1184, %1189 : vector<8x16xf32>
    %c81_101 = arith.constant 81 : index
    %1191 = memref.load %arg5[%c81_101] : memref<144xf32, #tpu.memory_space<smem>>
    %1192 = vector.extract_strided_slice %932 {offsets = [0, 1, 2], sizes = [1, 8, 16], strides = [1, 1, 1]} : vector<4x10x18xf32> to vector<1x8x16xf32>
    %1193 = vector.shape_cast %1192 : vector<1x8x16xf32> to vector<8x16xf32>
    %1194 = vector.broadcast %1191 : f32 to vector<8x16xf32>
    %1195 = arith.mulf %1194, %1193 : vector<8x16xf32>
    %1196 = arith.addf %1190, %1195 : vector<8x16xf32>
    %c97_102 = arith.constant 97 : index
    %1197 = memref.load %arg5[%c97_102] : memref<144xf32, #tpu.memory_space<smem>>
    %1198 = vector.extract_strided_slice %932 {offsets = [0, 2, 0], sizes = [1, 8, 16], strides = [1, 1, 1]} : vector<4x10x18xf32> to vector<1x8x16xf32>
    %1199 = vector.shape_cast %1198 : vector<1x8x16xf32> to vector<8x16xf32>
    %1200 = vector.broadcast %1197 : f32 to vector<8x16xf32>
    %1201 = arith.mulf %1200, %1199 : vector<8x16xf32>
    %1202 = arith.addf %1196, %1201 : vector<8x16xf32>
    %c113_103 = arith.constant 113 : index
    %1203 = memref.load %arg5[%c113_103] : memref<144xf32, #tpu.memory_space<smem>>
    %1204 = vector.extract_strided_slice %932 {offsets = [0, 2, 1], sizes = [1, 8, 16], strides = [1, 1, 1]} : vector<4x10x18xf32> to vector<1x8x16xf32>
    %1205 = vector.shape_cast %1204 : vector<1x8x16xf32> to vector<8x16xf32>
    %1206 = vector.broadcast %1203 : f32 to vector<8x16xf32>
    %1207 = arith.mulf %1206, %1205 : vector<8x16xf32>
    %1208 = arith.addf %1202, %1207 : vector<8x16xf32>
    %c129_104 = arith.constant 129 : index
    %1209 = memref.load %arg5[%c129_104] : memref<144xf32, #tpu.memory_space<smem>>
    %1210 = vector.extract_strided_slice %932 {offsets = [0, 2, 2], sizes = [1, 8, 16], strides = [1, 1, 1]} : vector<4x10x18xf32> to vector<1x8x16xf32>
    %1211 = vector.shape_cast %1210 : vector<1x8x16xf32> to vector<8x16xf32>
    %1212 = vector.broadcast %1209 : f32 to vector<8x16xf32>
    %1213 = arith.mulf %1212, %1211 : vector<8x16xf32>
    %1214 = arith.addf %1208, %1213 : vector<8x16xf32>
    %c5_105 = arith.constant 5 : index
    %1215 = memref.load %arg5[%c5_105] : memref<144xf32, #tpu.memory_space<smem>>
    %1216 = vector.extract_strided_slice %932 {offsets = [1, 0, 0], sizes = [1, 8, 16], strides = [1, 1, 1]} : vector<4x10x18xf32> to vector<1x8x16xf32>
    %1217 = vector.shape_cast %1216 : vector<1x8x16xf32> to vector<8x16xf32>
    %1218 = vector.broadcast %1215 : f32 to vector<8x16xf32>
    %1219 = arith.mulf %1218, %1217 : vector<8x16xf32>
    %1220 = arith.addf %1214, %1219 : vector<8x16xf32>
    %c21_106 = arith.constant 21 : index
    %1221 = memref.load %arg5[%c21_106] : memref<144xf32, #tpu.memory_space<smem>>
    %1222 = vector.extract_strided_slice %932 {offsets = [1, 0, 1], sizes = [1, 8, 16], strides = [1, 1, 1]} : vector<4x10x18xf32> to vector<1x8x16xf32>
    %1223 = vector.shape_cast %1222 : vector<1x8x16xf32> to vector<8x16xf32>
    %1224 = vector.broadcast %1221 : f32 to vector<8x16xf32>
    %1225 = arith.mulf %1224, %1223 : vector<8x16xf32>
    %1226 = arith.addf %1220, %1225 : vector<8x16xf32>
    %c37_107 = arith.constant 37 : index
    %1227 = memref.load %arg5[%c37_107] : memref<144xf32, #tpu.memory_space<smem>>
    %1228 = vector.extract_strided_slice %932 {offsets = [1, 0, 2], sizes = [1, 8, 16], strides = [1, 1, 1]} : vector<4x10x18xf32> to vector<1x8x16xf32>
    %1229 = vector.shape_cast %1228 : vector<1x8x16xf32> to vector<8x16xf32>
    %1230 = vector.broadcast %1227 : f32 to vector<8x16xf32>
    %1231 = arith.mulf %1230, %1229 : vector<8x16xf32>
    %1232 = arith.addf %1226, %1231 : vector<8x16xf32>
    %c53_108 = arith.constant 53 : index
    %1233 = memref.load %arg5[%c53_108] : memref<144xf32, #tpu.memory_space<smem>>
    %1234 = vector.extract_strided_slice %932 {offsets = [1, 1, 0], sizes = [1, 8, 16], strides = [1, 1, 1]} : vector<4x10x18xf32> to vector<1x8x16xf32>
    %1235 = vector.shape_cast %1234 : vector<1x8x16xf32> to vector<8x16xf32>
    %1236 = vector.broadcast %1233 : f32 to vector<8x16xf32>
    %1237 = arith.mulf %1236, %1235 : vector<8x16xf32>
    %1238 = arith.addf %1232, %1237 : vector<8x16xf32>
    %c69_109 = arith.constant 69 : index
    %1239 = memref.load %arg5[%c69_109] : memref<144xf32, #tpu.memory_space<smem>>
    %1240 = vector.extract_strided_slice %932 {offsets = [1, 1, 1], sizes = [1, 8, 16], strides = [1, 1, 1]} : vector<4x10x18xf32> to vector<1x8x16xf32>
    %1241 = vector.shape_cast %1240 : vector<1x8x16xf32> to vector<8x16xf32>
    %1242 = vector.broadcast %1239 : f32 to vector<8x16xf32>
    %1243 = arith.mulf %1242, %1241 : vector<8x16xf32>
    %1244 = arith.addf %1238, %1243 : vector<8x16xf32>
    %c85_110 = arith.constant 85 : index
    %1245 = memref.load %arg5[%c85_110] : memref<144xf32, #tpu.memory_space<smem>>
    %1246 = vector.extract_strided_slice %932 {offsets = [1, 1, 2], sizes = [1, 8, 16], strides = [1, 1, 1]} : vector<4x10x18xf32> to vector<1x8x16xf32>
    %1247 = vector.shape_cast %1246 : vector<1x8x16xf32> to vector<8x16xf32>
    %1248 = vector.broadcast %1245 : f32 to vector<8x16xf32>
    %1249 = arith.mulf %1248, %1247 : vector<8x16xf32>
    %1250 = arith.addf %1244, %1249 : vector<8x16xf32>
    %c101_111 = arith.constant 101 : index
    %1251 = memref.load %arg5[%c101_111] : memref<144xf32, #tpu.memory_space<smem>>
    %1252 = vector.extract_strided_slice %932 {offsets = [1, 2, 0], sizes = [1, 8, 16], strides = [1, 1, 1]} : vector<4x10x18xf32> to vector<1x8x16xf32>
    %1253 = vector.shape_cast %1252 : vector<1x8x16xf32> to vector<8x16xf32>
    %1254 = vector.broadcast %1251 : f32 to vector<8x16xf32>
    %1255 = arith.mulf %1254, %1253 : vector<8x16xf32>
    %1256 = arith.addf %1250, %1255 : vector<8x16xf32>
    %c117_112 = arith.constant 117 : index
    %1257 = memref.load %arg5[%c117_112] : memref<144xf32, #tpu.memory_space<smem>>
    %1258 = vector.extract_strided_slice %932 {offsets = [1, 2, 1], sizes = [1, 8, 16], strides = [1, 1, 1]} : vector<4x10x18xf32> to vector<1x8x16xf32>
    %1259 = vector.shape_cast %1258 : vector<1x8x16xf32> to vector<8x16xf32>
    %1260 = vector.broadcast %1257 : f32 to vector<8x16xf32>
    %1261 = arith.mulf %1260, %1259 : vector<8x16xf32>
    %1262 = arith.addf %1256, %1261 : vector<8x16xf32>
    %c133_113 = arith.constant 133 : index
    %1263 = memref.load %arg5[%c133_113] : memref<144xf32, #tpu.memory_space<smem>>
    %1264 = vector.extract_strided_slice %932 {offsets = [1, 2, 2], sizes = [1, 8, 16], strides = [1, 1, 1]} : vector<4x10x18xf32> to vector<1x8x16xf32>
    %1265 = vector.shape_cast %1264 : vector<1x8x16xf32> to vector<8x16xf32>
    %1266 = vector.broadcast %1263 : f32 to vector<8x16xf32>
    %1267 = arith.mulf %1266, %1265 : vector<8x16xf32>
    %1268 = arith.addf %1262, %1267 : vector<8x16xf32>
    %c9_114 = arith.constant 9 : index
    %1269 = memref.load %arg5[%c9_114] : memref<144xf32, #tpu.memory_space<smem>>
    %1270 = vector.extract_strided_slice %932 {offsets = [2, 0, 0], sizes = [1, 8, 16], strides = [1, 1, 1]} : vector<4x10x18xf32> to vector<1x8x16xf32>
    %1271 = vector.shape_cast %1270 : vector<1x8x16xf32> to vector<8x16xf32>
    %1272 = vector.broadcast %1269 : f32 to vector<8x16xf32>
    %1273 = arith.mulf %1272, %1271 : vector<8x16xf32>
    %1274 = arith.addf %1268, %1273 : vector<8x16xf32>
    %c25_115 = arith.constant 25 : index
    %1275 = memref.load %arg5[%c25_115] : memref<144xf32, #tpu.memory_space<smem>>
    %1276 = vector.extract_strided_slice %932 {offsets = [2, 0, 1], sizes = [1, 8, 16], strides = [1, 1, 1]} : vector<4x10x18xf32> to vector<1x8x16xf32>
    %1277 = vector.shape_cast %1276 : vector<1x8x16xf32> to vector<8x16xf32>
    %1278 = vector.broadcast %1275 : f32 to vector<8x16xf32>
    %1279 = arith.mulf %1278, %1277 : vector<8x16xf32>
    %1280 = arith.addf %1274, %1279 : vector<8x16xf32>
    %c41_116 = arith.constant 41 : index
    %1281 = memref.load %arg5[%c41_116] : memref<144xf32, #tpu.memory_space<smem>>
    %1282 = vector.extract_strided_slice %932 {offsets = [2, 0, 2], sizes = [1, 8, 16], strides = [1, 1, 1]} : vector<4x10x18xf32> to vector<1x8x16xf32>
    %1283 = vector.shape_cast %1282 : vector<1x8x16xf32> to vector<8x16xf32>
    %1284 = vector.broadcast %1281 : f32 to vector<8x16xf32>
    %1285 = arith.mulf %1284, %1283 : vector<8x16xf32>
    %1286 = arith.addf %1280, %1285 : vector<8x16xf32>
    %c57_117 = arith.constant 57 : index
    %1287 = memref.load %arg5[%c57_117] : memref<144xf32, #tpu.memory_space<smem>>
    %1288 = vector.extract_strided_slice %932 {offsets = [2, 1, 0], sizes = [1, 8, 16], strides = [1, 1, 1]} : vector<4x10x18xf32> to vector<1x8x16xf32>
    %1289 = vector.shape_cast %1288 : vector<1x8x16xf32> to vector<8x16xf32>
    %1290 = vector.broadcast %1287 : f32 to vector<8x16xf32>
    %1291 = arith.mulf %1290, %1289 : vector<8x16xf32>
    %1292 = arith.addf %1286, %1291 : vector<8x16xf32>
    %c73_118 = arith.constant 73 : index
    %1293 = memref.load %arg5[%c73_118] : memref<144xf32, #tpu.memory_space<smem>>
    %1294 = vector.extract_strided_slice %932 {offsets = [2, 1, 1], sizes = [1, 8, 16], strides = [1, 1, 1]} : vector<4x10x18xf32> to vector<1x8x16xf32>
    %1295 = vector.shape_cast %1294 : vector<1x8x16xf32> to vector<8x16xf32>
    %1296 = vector.broadcast %1293 : f32 to vector<8x16xf32>
    %1297 = arith.mulf %1296, %1295 : vector<8x16xf32>
    %1298 = arith.addf %1292, %1297 : vector<8x16xf32>
    %c89_119 = arith.constant 89 : index
    %1299 = memref.load %arg5[%c89_119] : memref<144xf32, #tpu.memory_space<smem>>
    %1300 = vector.extract_strided_slice %932 {offsets = [2, 1, 2], sizes = [1, 8, 16], strides = [1, 1, 1]} : vector<4x10x18xf32> to vector<1x8x16xf32>
    %1301 = vector.shape_cast %1300 : vector<1x8x16xf32> to vector<8x16xf32>
    %1302 = vector.broadcast %1299 : f32 to vector<8x16xf32>
    %1303 = arith.mulf %1302, %1301 : vector<8x16xf32>
    %1304 = arith.addf %1298, %1303 : vector<8x16xf32>
    %c105_120 = arith.constant 105 : index
    %1305 = memref.load %arg5[%c105_120] : memref<144xf32, #tpu.memory_space<smem>>
    %1306 = vector.extract_strided_slice %932 {offsets = [2, 2, 0], sizes = [1, 8, 16], strides = [1, 1, 1]} : vector<4x10x18xf32> to vector<1x8x16xf32>
    %1307 = vector.shape_cast %1306 : vector<1x8x16xf32> to vector<8x16xf32>
    %1308 = vector.broadcast %1305 : f32 to vector<8x16xf32>
    %1309 = arith.mulf %1308, %1307 : vector<8x16xf32>
    %1310 = arith.addf %1304, %1309 : vector<8x16xf32>
    %c121_121 = arith.constant 121 : index
    %1311 = memref.load %arg5[%c121_121] : memref<144xf32, #tpu.memory_space<smem>>
    %1312 = vector.extract_strided_slice %932 {offsets = [2, 2, 1], sizes = [1, 8, 16], strides = [1, 1, 1]} : vector<4x10x18xf32> to vector<1x8x16xf32>
    %1313 = vector.shape_cast %1312 : vector<1x8x16xf32> to vector<8x16xf32>
    %1314 = vector.broadcast %1311 : f32 to vector<8x16xf32>
    %1315 = arith.mulf %1314, %1313 : vector<8x16xf32>
    %1316 = arith.addf %1310, %1315 : vector<8x16xf32>
    %c137_122 = arith.constant 137 : index
    %1317 = memref.load %arg5[%c137_122] : memref<144xf32, #tpu.memory_space<smem>>
    %1318 = vector.extract_strided_slice %932 {offsets = [2, 2, 2], sizes = [1, 8, 16], strides = [1, 1, 1]} : vector<4x10x18xf32> to vector<1x8x16xf32>
    %1319 = vector.shape_cast %1318 : vector<1x8x16xf32> to vector<8x16xf32>
    %1320 = vector.broadcast %1317 : f32 to vector<8x16xf32>
    %1321 = arith.mulf %1320, %1319 : vector<8x16xf32>
    %1322 = arith.addf %1316, %1321 : vector<8x16xf32>
    %c13_123 = arith.constant 13 : index
    %1323 = memref.load %arg5[%c13_123] : memref<144xf32, #tpu.memory_space<smem>>
    %1324 = vector.extract_strided_slice %932 {offsets = [3, 0, 0], sizes = [1, 8, 16], strides = [1, 1, 1]} : vector<4x10x18xf32> to vector<1x8x16xf32>
    %1325 = vector.shape_cast %1324 : vector<1x8x16xf32> to vector<8x16xf32>
    %1326 = vector.broadcast %1323 : f32 to vector<8x16xf32>
    %1327 = arith.mulf %1326, %1325 : vector<8x16xf32>
    %1328 = arith.addf %1322, %1327 : vector<8x16xf32>
    %c29_124 = arith.constant 29 : index
    %1329 = memref.load %arg5[%c29_124] : memref<144xf32, #tpu.memory_space<smem>>
    %1330 = vector.extract_strided_slice %932 {offsets = [3, 0, 1], sizes = [1, 8, 16], strides = [1, 1, 1]} : vector<4x10x18xf32> to vector<1x8x16xf32>
    %1331 = vector.shape_cast %1330 : vector<1x8x16xf32> to vector<8x16xf32>
    %1332 = vector.broadcast %1329 : f32 to vector<8x16xf32>
    %1333 = arith.mulf %1332, %1331 : vector<8x16xf32>
    %1334 = arith.addf %1328, %1333 : vector<8x16xf32>
    %c45_125 = arith.constant 45 : index
    %1335 = memref.load %arg5[%c45_125] : memref<144xf32, #tpu.memory_space<smem>>
    %1336 = vector.extract_strided_slice %932 {offsets = [3, 0, 2], sizes = [1, 8, 16], strides = [1, 1, 1]} : vector<4x10x18xf32> to vector<1x8x16xf32>
    %1337 = vector.shape_cast %1336 : vector<1x8x16xf32> to vector<8x16xf32>
    %1338 = vector.broadcast %1335 : f32 to vector<8x16xf32>
    %1339 = arith.mulf %1338, %1337 : vector<8x16xf32>
    %1340 = arith.addf %1334, %1339 : vector<8x16xf32>
    %c61_126 = arith.constant 61 : index
    %1341 = memref.load %arg5[%c61_126] : memref<144xf32, #tpu.memory_space<smem>>
    %1342 = vector.extract_strided_slice %932 {offsets = [3, 1, 0], sizes = [1, 8, 16], strides = [1, 1, 1]} : vector<4x10x18xf32> to vector<1x8x16xf32>
    %1343 = vector.shape_cast %1342 : vector<1x8x16xf32> to vector<8x16xf32>
    %1344 = vector.broadcast %1341 : f32 to vector<8x16xf32>
    %1345 = arith.mulf %1344, %1343 : vector<8x16xf32>
    %1346 = arith.addf %1340, %1345 : vector<8x16xf32>
    %c77_127 = arith.constant 77 : index
    %1347 = memref.load %arg5[%c77_127] : memref<144xf32, #tpu.memory_space<smem>>
    %1348 = vector.extract_strided_slice %932 {offsets = [3, 1, 1], sizes = [1, 8, 16], strides = [1, 1, 1]} : vector<4x10x18xf32> to vector<1x8x16xf32>
    %1349 = vector.shape_cast %1348 : vector<1x8x16xf32> to vector<8x16xf32>
    %1350 = vector.broadcast %1347 : f32 to vector<8x16xf32>
    %1351 = arith.mulf %1350, %1349 : vector<8x16xf32>
    %1352 = arith.addf %1346, %1351 : vector<8x16xf32>
    %c93_128 = arith.constant 93 : index
    %1353 = memref.load %arg5[%c93_128] : memref<144xf32, #tpu.memory_space<smem>>
    %1354 = vector.extract_strided_slice %932 {offsets = [3, 1, 2], sizes = [1, 8, 16], strides = [1, 1, 1]} : vector<4x10x18xf32> to vector<1x8x16xf32>
    %1355 = vector.shape_cast %1354 : vector<1x8x16xf32> to vector<8x16xf32>
    %1356 = vector.broadcast %1353 : f32 to vector<8x16xf32>
    %1357 = arith.mulf %1356, %1355 : vector<8x16xf32>
    %1358 = arith.addf %1352, %1357 : vector<8x16xf32>
    %c109_129 = arith.constant 109 : index
    %1359 = memref.load %arg5[%c109_129] : memref<144xf32, #tpu.memory_space<smem>>
    %1360 = vector.extract_strided_slice %932 {offsets = [3, 2, 0], sizes = [1, 8, 16], strides = [1, 1, 1]} : vector<4x10x18xf32> to vector<1x8x16xf32>
    %1361 = vector.shape_cast %1360 : vector<1x8x16xf32> to vector<8x16xf32>
    %1362 = vector.broadcast %1359 : f32 to vector<8x16xf32>
    %1363 = arith.mulf %1362, %1361 : vector<8x16xf32>
    %1364 = arith.addf %1358, %1363 : vector<8x16xf32>
    %c125_130 = arith.constant 125 : index
    %1365 = memref.load %arg5[%c125_130] : memref<144xf32, #tpu.memory_space<smem>>
    %1366 = vector.extract_strided_slice %932 {offsets = [3, 2, 1], sizes = [1, 8, 16], strides = [1, 1, 1]} : vector<4x10x18xf32> to vector<1x8x16xf32>
    %1367 = vector.shape_cast %1366 : vector<1x8x16xf32> to vector<8x16xf32>
    %1368 = vector.broadcast %1365 : f32 to vector<8x16xf32>
    %1369 = arith.mulf %1368, %1367 : vector<8x16xf32>
    %1370 = arith.addf %1364, %1369 : vector<8x16xf32>
    %c141_131 = arith.constant 141 : index
    %1371 = memref.load %arg5[%c141_131] : memref<144xf32, #tpu.memory_space<smem>>
    %1372 = vector.extract_strided_slice %932 {offsets = [3, 2, 2], sizes = [1, 8, 16], strides = [1, 1, 1]} : vector<4x10x18xf32> to vector<1x8x16xf32>
    %1373 = vector.shape_cast %1372 : vector<1x8x16xf32> to vector<8x16xf32>
    %1374 = vector.broadcast %1371 : f32 to vector<8x16xf32>
    %1375 = arith.mulf %1374, %1373 : vector<8x16xf32>
    %1376 = arith.addf %1370, %1375 : vector<8x16xf32>
    %1377 = vector.extract_strided_slice %1 {offsets = [1, 2, 1], sizes = [1, 8, 16], strides = [1, 1, 1]} : vector<4x12x18xf32> to vector<1x8x16xf32>
    %1378 = vector.shape_cast %1377 : vector<1x8x16xf32> to vector<8x16xf32>
    %1379 = arith.addf %1376, %1378 : vector<8x16xf32>
    %cst_132 = arith.constant 0.000000e+00 : f32
    %1380 = vector.broadcast %cst_132 : f32 to vector<8x16xf32>
    %1381 = arith.maximumf %1379, %1380 : vector<8x16xf32>
    %c0_133 = arith.constant 0 : index
    %c1_134 = arith.constant 1 : index
    %c0_135 = arith.constant 0 : index
    %c0_136 = arith.constant 0 : index
    %1382 = vector.load %arg7[%c0_133, %c1_134, %c0_135, %c0_136] : memref<1x4x8x16xf32, #tpu.memory_space<vmem>>, vector<1x1x8x16xf32>
    %1383 = vector.shape_cast %1382 : vector<1x1x8x16xf32> to vector<8x16xf32>
    %1384 = vector.shape_cast %1381 : vector<8x16xf32> to vector<1x1x8x16xf32>
    tpu.vector_store %arg7[%c0_133, %c1_134, %c0_135, %c0_136], %1384 {strides = array<i32>} : memref<1x4x8x16xf32, #tpu.memory_space<vmem>>, vector<1x1x8x16xf32>,
    %c2_137 = arith.constant 2 : index
    %1385 = memref.load %arg6[%c2_137] : memref<4xf32, #tpu.memory_space<smem>>
    %1386 = vector.broadcast %1385 : f32 to vector<8x16xf32>
    %c2_138 = arith.constant 2 : index
    %1387 = memref.load %arg5[%c2_138] : memref<144xf32, #tpu.memory_space<smem>>
    %1388 = vector.extract_strided_slice %932 {offsets = [0, 0, 0], sizes = [1, 8, 16], strides = [1, 1, 1]} : vector<4x10x18xf32> to vector<1x8x16xf32>
    %1389 = vector.shape_cast %1388 : vector<1x8x16xf32> to vector<8x16xf32>
    %1390 = vector.broadcast %1387 : f32 to vector<8x16xf32>
    %1391 = arith.mulf %1390, %1389 : vector<8x16xf32>
    %1392 = arith.addf %1386, %1391 : vector<8x16xf32>
    %c18_139 = arith.constant 18 : index
    %1393 = memref.load %arg5[%c18_139] : memref<144xf32, #tpu.memory_space<smem>>
    %1394 = vector.extract_strided_slice %932 {offsets = [0, 0, 1], sizes = [1, 8, 16], strides = [1, 1, 1]} : vector<4x10x18xf32> to vector<1x8x16xf32>
    %1395 = vector.shape_cast %1394 : vector<1x8x16xf32> to vector<8x16xf32>
    %1396 = vector.broadcast %1393 : f32 to vector<8x16xf32>
    %1397 = arith.mulf %1396, %1395 : vector<8x16xf32>
    %1398 = arith.addf %1392, %1397 : vector<8x16xf32>
    %c34_140 = arith.constant 34 : index
    %1399 = memref.load %arg5[%c34_140] : memref<144xf32, #tpu.memory_space<smem>>
    %1400 = vector.extract_strided_slice %932 {offsets = [0, 0, 2], sizes = [1, 8, 16], strides = [1, 1, 1]} : vector<4x10x18xf32> to vector<1x8x16xf32>
    %1401 = vector.shape_cast %1400 : vector<1x8x16xf32> to vector<8x16xf32>
    %1402 = vector.broadcast %1399 : f32 to vector<8x16xf32>
    %1403 = arith.mulf %1402, %1401 : vector<8x16xf32>
    %1404 = arith.addf %1398, %1403 : vector<8x16xf32>
    %c50_141 = arith.constant 50 : index
    %1405 = memref.load %arg5[%c50_141] : memref<144xf32, #tpu.memory_space<smem>>
    %1406 = vector.extract_strided_slice %932 {offsets = [0, 1, 0], sizes = [1, 8, 16], strides = [1, 1, 1]} : vector<4x10x18xf32> to vector<1x8x16xf32>
    %1407 = vector.shape_cast %1406 : vector<1x8x16xf32> to vector<8x16xf32>
    %1408 = vector.broadcast %1405 : f32 to vector<8x16xf32>
    %1409 = arith.mulf %1408, %1407 : vector<8x16xf32>
    %1410 = arith.addf %1404, %1409 : vector<8x16xf32>
    %c66_142 = arith.constant 66 : index
    %1411 = memref.load %arg5[%c66_142] : memref<144xf32, #tpu.memory_space<smem>>
    %1412 = vector.extract_strided_slice %932 {offsets = [0, 1, 1], sizes = [1, 8, 16], strides = [1, 1, 1]} : vector<4x10x18xf32> to vector<1x8x16xf32>
    %1413 = vector.shape_cast %1412 : vector<1x8x16xf32> to vector<8x16xf32>
    %1414 = vector.broadcast %1411 : f32 to vector<8x16xf32>
    %1415 = arith.mulf %1414, %1413 : vector<8x16xf32>
    %1416 = arith.addf %1410, %1415 : vector<8x16xf32>
    %c82_143 = arith.constant 82 : index
    %1417 = memref.load %arg5[%c82_143] : memref<144xf32, #tpu.memory_space<smem>>
    %1418 = vector.extract_strided_slice %932 {offsets = [0, 1, 2], sizes = [1, 8, 16], strides = [1, 1, 1]} : vector<4x10x18xf32> to vector<1x8x16xf32>
    %1419 = vector.shape_cast %1418 : vector<1x8x16xf32> to vector<8x16xf32>
    %1420 = vector.broadcast %1417 : f32 to vector<8x16xf32>
    %1421 = arith.mulf %1420, %1419 : vector<8x16xf32>
    %1422 = arith.addf %1416, %1421 : vector<8x16xf32>
    %c98_144 = arith.constant 98 : index
    %1423 = memref.load %arg5[%c98_144] : memref<144xf32, #tpu.memory_space<smem>>
    %1424 = vector.extract_strided_slice %932 {offsets = [0, 2, 0], sizes = [1, 8, 16], strides = [1, 1, 1]} : vector<4x10x18xf32> to vector<1x8x16xf32>
    %1425 = vector.shape_cast %1424 : vector<1x8x16xf32> to vector<8x16xf32>
    %1426 = vector.broadcast %1423 : f32 to vector<8x16xf32>
    %1427 = arith.mulf %1426, %1425 : vector<8x16xf32>
    %1428 = arith.addf %1422, %1427 : vector<8x16xf32>
    %c114_145 = arith.constant 114 : index
    %1429 = memref.load %arg5[%c114_145] : memref<144xf32, #tpu.memory_space<smem>>
    %1430 = vector.extract_strided_slice %932 {offsets = [0, 2, 1], sizes = [1, 8, 16], strides = [1, 1, 1]} : vector<4x10x18xf32> to vector<1x8x16xf32>
    %1431 = vector.shape_cast %1430 : vector<1x8x16xf32> to vector<8x16xf32>
    %1432 = vector.broadcast %1429 : f32 to vector<8x16xf32>
    %1433 = arith.mulf %1432, %1431 : vector<8x16xf32>
    %1434 = arith.addf %1428, %1433 : vector<8x16xf32>
    %c130_146 = arith.constant 130 : index
    %1435 = memref.load %arg5[%c130_146] : memref<144xf32, #tpu.memory_space<smem>>
    %1436 = vector.extract_strided_slice %932 {offsets = [0, 2, 2], sizes = [1, 8, 16], strides = [1, 1, 1]} : vector<4x10x18xf32> to vector<1x8x16xf32>
    %1437 = vector.shape_cast %1436 : vector<1x8x16xf32> to vector<8x16xf32>
    %1438 = vector.broadcast %1435 : f32 to vector<8x16xf32>
    %1439 = arith.mulf %1438, %1437 : vector<8x16xf32>
    %1440 = arith.addf %1434, %1439 : vector<8x16xf32>
    %c6_147 = arith.constant 6 : index
    %1441 = memref.load %arg5[%c6_147] : memref<144xf32, #tpu.memory_space<smem>>
    %1442 = vector.extract_strided_slice %932 {offsets = [1, 0, 0], sizes = [1, 8, 16], strides = [1, 1, 1]} : vector<4x10x18xf32> to vector<1x8x16xf32>
    %1443 = vector.shape_cast %1442 : vector<1x8x16xf32> to vector<8x16xf32>
    %1444 = vector.broadcast %1441 : f32 to vector<8x16xf32>
    %1445 = arith.mulf %1444, %1443 : vector<8x16xf32>
    %1446 = arith.addf %1440, %1445 : vector<8x16xf32>
    %c22_148 = arith.constant 22 : index
    %1447 = memref.load %arg5[%c22_148] : memref<144xf32, #tpu.memory_space<smem>>
    %1448 = vector.extract_strided_slice %932 {offsets = [1, 0, 1], sizes = [1, 8, 16], strides = [1, 1, 1]} : vector<4x10x18xf32> to vector<1x8x16xf32>
    %1449 = vector.shape_cast %1448 : vector<1x8x16xf32> to vector<8x16xf32>
    %1450 = vector.broadcast %1447 : f32 to vector<8x16xf32>
    %1451 = arith.mulf %1450, %1449 : vector<8x16xf32>
    %1452 = arith.addf %1446, %1451 : vector<8x16xf32>
    %c38_149 = arith.constant 38 : index
    %1453 = memref.load %arg5[%c38_149] : memref<144xf32, #tpu.memory_space<smem>>
    %1454 = vector.extract_strided_slice %932 {offsets = [1, 0, 2], sizes = [1, 8, 16], strides = [1, 1, 1]} : vector<4x10x18xf32> to vector<1x8x16xf32>
    %1455 = vector.shape_cast %1454 : vector<1x8x16xf32> to vector<8x16xf32>
    %1456 = vector.broadcast %1453 : f32 to vector<8x16xf32>
    %1457 = arith.mulf %1456, %1455 : vector<8x16xf32>
    %1458 = arith.addf %1452, %1457 : vector<8x16xf32>
    %c54_150 = arith.constant 54 : index
    %1459 = memref.load %arg5[%c54_150] : memref<144xf32, #tpu.memory_space<smem>>
    %1460 = vector.extract_strided_slice %932 {offsets = [1, 1, 0], sizes = [1, 8, 16], strides = [1, 1, 1]} : vector<4x10x18xf32> to vector<1x8x16xf32>
    %1461 = vector.shape_cast %1460 : vector<1x8x16xf32> to vector<8x16xf32>
    %1462 = vector.broadcast %1459 : f32 to vector<8x16xf32>
    %1463 = arith.mulf %1462, %1461 : vector<8x16xf32>
    %1464 = arith.addf %1458, %1463 : vector<8x16xf32>
    %c70_151 = arith.constant 70 : index
    %1465 = memref.load %arg5[%c70_151] : memref<144xf32, #tpu.memory_space<smem>>
    %1466 = vector.extract_strided_slice %932 {offsets = [1, 1, 1], sizes = [1, 8, 16], strides = [1, 1, 1]} : vector<4x10x18xf32> to vector<1x8x16xf32>
    %1467 = vector.shape_cast %1466 : vector<1x8x16xf32> to vector<8x16xf32>
    %1468 = vector.broadcast %1465 : f32 to vector<8x16xf32>
    %1469 = arith.mulf %1468, %1467 : vector<8x16xf32>
    %1470 = arith.addf %1464, %1469 : vector<8x16xf32>
    %c86_152 = arith.constant 86 : index
    %1471 = memref.load %arg5[%c86_152] : memref<144xf32, #tpu.memory_space<smem>>
    %1472 = vector.extract_strided_slice %932 {offsets = [1, 1, 2], sizes = [1, 8, 16], strides = [1, 1, 1]} : vector<4x10x18xf32> to vector<1x8x16xf32>
    %1473 = vector.shape_cast %1472 : vector<1x8x16xf32> to vector<8x16xf32>
    %1474 = vector.broadcast %1471 : f32 to vector<8x16xf32>
    %1475 = arith.mulf %1474, %1473 : vector<8x16xf32>
    %1476 = arith.addf %1470, %1475 : vector<8x16xf32>
    %c102_153 = arith.constant 102 : index
    %1477 = memref.load %arg5[%c102_153] : memref<144xf32, #tpu.memory_space<smem>>
    %1478 = vector.extract_strided_slice %932 {offsets = [1, 2, 0], sizes = [1, 8, 16], strides = [1, 1, 1]} : vector<4x10x18xf32> to vector<1x8x16xf32>
    %1479 = vector.shape_cast %1478 : vector<1x8x16xf32> to vector<8x16xf32>
    %1480 = vector.broadcast %1477 : f32 to vector<8x16xf32>
    %1481 = arith.mulf %1480, %1479 : vector<8x16xf32>
    %1482 = arith.addf %1476, %1481 : vector<8x16xf32>
    %c118_154 = arith.constant 118 : index
    %1483 = memref.load %arg5[%c118_154] : memref<144xf32, #tpu.memory_space<smem>>
    %1484 = vector.extract_strided_slice %932 {offsets = [1, 2, 1], sizes = [1, 8, 16], strides = [1, 1, 1]} : vector<4x10x18xf32> to vector<1x8x16xf32>
    %1485 = vector.shape_cast %1484 : vector<1x8x16xf32> to vector<8x16xf32>
    %1486 = vector.broadcast %1483 : f32 to vector<8x16xf32>
    %1487 = arith.mulf %1486, %1485 : vector<8x16xf32>
    %1488 = arith.addf %1482, %1487 : vector<8x16xf32>
    %c134_155 = arith.constant 134 : index
    %1489 = memref.load %arg5[%c134_155] : memref<144xf32, #tpu.memory_space<smem>>
    %1490 = vector.extract_strided_slice %932 {offsets = [1, 2, 2], sizes = [1, 8, 16], strides = [1, 1, 1]} : vector<4x10x18xf32> to vector<1x8x16xf32>
    %1491 = vector.shape_cast %1490 : vector<1x8x16xf32> to vector<8x16xf32>
    %1492 = vector.broadcast %1489 : f32 to vector<8x16xf32>
    %1493 = arith.mulf %1492, %1491 : vector<8x16xf32>
    %1494 = arith.addf %1488, %1493 : vector<8x16xf32>
    %c10_156 = arith.constant 10 : index
    %1495 = memref.load %arg5[%c10_156] : memref<144xf32, #tpu.memory_space<smem>>
    %1496 = vector.extract_strided_slice %932 {offsets = [2, 0, 0], sizes = [1, 8, 16], strides = [1, 1, 1]} : vector<4x10x18xf32> to vector<1x8x16xf32>
    %1497 = vector.shape_cast %1496 : vector<1x8x16xf32> to vector<8x16xf32>
    %1498 = vector.broadcast %1495 : f32 to vector<8x16xf32>
    %1499 = arith.mulf %1498, %1497 : vector<8x16xf32>
    %1500 = arith.addf %1494, %1499 : vector<8x16xf32>
    %c26_157 = arith.constant 26 : index
    %1501 = memref.load %arg5[%c26_157] : memref<144xf32, #tpu.memory_space<smem>>
    %1502 = vector.extract_strided_slice %932 {offsets = [2, 0, 1], sizes = [1, 8, 16], strides = [1, 1, 1]} : vector<4x10x18xf32> to vector<1x8x16xf32>
    %1503 = vector.shape_cast %1502 : vector<1x8x16xf32> to vector<8x16xf32>
    %1504 = vector.broadcast %1501 : f32 to vector<8x16xf32>
    %1505 = arith.mulf %1504, %1503 : vector<8x16xf32>
    %1506 = arith.addf %1500, %1505 : vector<8x16xf32>
    %c42_158 = arith.constant 42 : index
    %1507 = memref.load %arg5[%c42_158] : memref<144xf32, #tpu.memory_space<smem>>
    %1508 = vector.extract_strided_slice %932 {offsets = [2, 0, 2], sizes = [1, 8, 16], strides = [1, 1, 1]} : vector<4x10x18xf32> to vector<1x8x16xf32>
    %1509 = vector.shape_cast %1508 : vector<1x8x16xf32> to vector<8x16xf32>
    %1510 = vector.broadcast %1507 : f32 to vector<8x16xf32>
    %1511 = arith.mulf %1510, %1509 : vector<8x16xf32>
    %1512 = arith.addf %1506, %1511 : vector<8x16xf32>
    %c58_159 = arith.constant 58 : index
    %1513 = memref.load %arg5[%c58_159] : memref<144xf32, #tpu.memory_space<smem>>
    %1514 = vector.extract_strided_slice %932 {offsets = [2, 1, 0], sizes = [1, 8, 16], strides = [1, 1, 1]} : vector<4x10x18xf32> to vector<1x8x16xf32>
    %1515 = vector.shape_cast %1514 : vector<1x8x16xf32> to vector<8x16xf32>
    %1516 = vector.broadcast %1513 : f32 to vector<8x16xf32>
    %1517 = arith.mulf %1516, %1515 : vector<8x16xf32>
    %1518 = arith.addf %1512, %1517 : vector<8x16xf32>
    %c74_160 = arith.constant 74 : index
    %1519 = memref.load %arg5[%c74_160] : memref<144xf32, #tpu.memory_space<smem>>
    %1520 = vector.extract_strided_slice %932 {offsets = [2, 1, 1], sizes = [1, 8, 16], strides = [1, 1, 1]} : vector<4x10x18xf32> to vector<1x8x16xf32>
    %1521 = vector.shape_cast %1520 : vector<1x8x16xf32> to vector<8x16xf32>
    %1522 = vector.broadcast %1519 : f32 to vector<8x16xf32>
    %1523 = arith.mulf %1522, %1521 : vector<8x16xf32>
    %1524 = arith.addf %1518, %1523 : vector<8x16xf32>
    %c90_161 = arith.constant 90 : index
    %1525 = memref.load %arg5[%c90_161] : memref<144xf32, #tpu.memory_space<smem>>
    %1526 = vector.extract_strided_slice %932 {offsets = [2, 1, 2], sizes = [1, 8, 16], strides = [1, 1, 1]} : vector<4x10x18xf32> to vector<1x8x16xf32>
    %1527 = vector.shape_cast %1526 : vector<1x8x16xf32> to vector<8x16xf32>
    %1528 = vector.broadcast %1525 : f32 to vector<8x16xf32>
    %1529 = arith.mulf %1528, %1527 : vector<8x16xf32>
    %1530 = arith.addf %1524, %1529 : vector<8x16xf32>
    %c106_162 = arith.constant 106 : index
    %1531 = memref.load %arg5[%c106_162] : memref<144xf32, #tpu.memory_space<smem>>
    %1532 = vector.extract_strided_slice %932 {offsets = [2, 2, 0], sizes = [1, 8, 16], strides = [1, 1, 1]} : vector<4x10x18xf32> to vector<1x8x16xf32>
    %1533 = vector.shape_cast %1532 : vector<1x8x16xf32> to vector<8x16xf32>
    %1534 = vector.broadcast %1531 : f32 to vector<8x16xf32>
    %1535 = arith.mulf %1534, %1533 : vector<8x16xf32>
    %1536 = arith.addf %1530, %1535 : vector<8x16xf32>
    %c122_163 = arith.constant 122 : index
    %1537 = memref.load %arg5[%c122_163] : memref<144xf32, #tpu.memory_space<smem>>
    %1538 = vector.extract_strided_slice %932 {offsets = [2, 2, 1], sizes = [1, 8, 16], strides = [1, 1, 1]} : vector<4x10x18xf32> to vector<1x8x16xf32>
    %1539 = vector.shape_cast %1538 : vector<1x8x16xf32> to vector<8x16xf32>
    %1540 = vector.broadcast %1537 : f32 to vector<8x16xf32>
    %1541 = arith.mulf %1540, %1539 : vector<8x16xf32>
    %1542 = arith.addf %1536, %1541 : vector<8x16xf32>
    %c138_164 = arith.constant 138 : index
    %1543 = memref.load %arg5[%c138_164] : memref<144xf32, #tpu.memory_space<smem>>
    %1544 = vector.extract_strided_slice %932 {offsets = [2, 2, 2], sizes = [1, 8, 16], strides = [1, 1, 1]} : vector<4x10x18xf32> to vector<1x8x16xf32>
    %1545 = vector.shape_cast %1544 : vector<1x8x16xf32> to vector<8x16xf32>
    %1546 = vector.broadcast %1543 : f32 to vector<8x16xf32>
    %1547 = arith.mulf %1546, %1545 : vector<8x16xf32>
    %1548 = arith.addf %1542, %1547 : vector<8x16xf32>
    %c14_165 = arith.constant 14 : index
    %1549 = memref.load %arg5[%c14_165] : memref<144xf32, #tpu.memory_space<smem>>
    %1550 = vector.extract_strided_slice %932 {offsets = [3, 0, 0], sizes = [1, 8, 16], strides = [1, 1, 1]} : vector<4x10x18xf32> to vector<1x8x16xf32>
    %1551 = vector.shape_cast %1550 : vector<1x8x16xf32> to vector<8x16xf32>
    %1552 = vector.broadcast %1549 : f32 to vector<8x16xf32>
    %1553 = arith.mulf %1552, %1551 : vector<8x16xf32>
    %1554 = arith.addf %1548, %1553 : vector<8x16xf32>
    %c30_166 = arith.constant 30 : index
    %1555 = memref.load %arg5[%c30_166] : memref<144xf32, #tpu.memory_space<smem>>
    %1556 = vector.extract_strided_slice %932 {offsets = [3, 0, 1], sizes = [1, 8, 16], strides = [1, 1, 1]} : vector<4x10x18xf32> to vector<1x8x16xf32>
    %1557 = vector.shape_cast %1556 : vector<1x8x16xf32> to vector<8x16xf32>
    %1558 = vector.broadcast %1555 : f32 to vector<8x16xf32>
    %1559 = arith.mulf %1558, %1557 : vector<8x16xf32>
    %1560 = arith.addf %1554, %1559 : vector<8x16xf32>
    %c46_167 = arith.constant 46 : index
    %1561 = memref.load %arg5[%c46_167] : memref<144xf32, #tpu.memory_space<smem>>
    %1562 = vector.extract_strided_slice %932 {offsets = [3, 0, 2], sizes = [1, 8, 16], strides = [1, 1, 1]} : vector<4x10x18xf32> to vector<1x8x16xf32>
    %1563 = vector.shape_cast %1562 : vector<1x8x16xf32> to vector<8x16xf32>
    %1564 = vector.broadcast %1561 : f32 to vector<8x16xf32>
    %1565 = arith.mulf %1564, %1563 : vector<8x16xf32>
    %1566 = arith.addf %1560, %1565 : vector<8x16xf32>
    %c62_168 = arith.constant 62 : index
    %1567 = memref.load %arg5[%c62_168] : memref<144xf32, #tpu.memory_space<smem>>
    %1568 = vector.extract_strided_slice %932 {offsets = [3, 1, 0], sizes = [1, 8, 16], strides = [1, 1, 1]} : vector<4x10x18xf32> to vector<1x8x16xf32>
    %1569 = vector.shape_cast %1568 : vector<1x8x16xf32> to vector<8x16xf32>
    %1570 = vector.broadcast %1567 : f32 to vector<8x16xf32>
    %1571 = arith.mulf %1570, %1569 : vector<8x16xf32>
    %1572 = arith.addf %1566, %1571 : vector<8x16xf32>
    %c78_169 = arith.constant 78 : index
    %1573 = memref.load %arg5[%c78_169] : memref<144xf32, #tpu.memory_space<smem>>
    %1574 = vector.extract_strided_slice %932 {offsets = [3, 1, 1], sizes = [1, 8, 16], strides = [1, 1, 1]} : vector<4x10x18xf32> to vector<1x8x16xf32>
    %1575 = vector.shape_cast %1574 : vector<1x8x16xf32> to vector<8x16xf32>
    %1576 = vector.broadcast %1573 : f32 to vector<8x16xf32>
    %1577 = arith.mulf %1576, %1575 : vector<8x16xf32>
    %1578 = arith.addf %1572, %1577 : vector<8x16xf32>
    %c94_170 = arith.constant 94 : index
    %1579 = memref.load %arg5[%c94_170] : memref<144xf32, #tpu.memory_space<smem>>
    %1580 = vector.extract_strided_slice %932 {offsets = [3, 1, 2], sizes = [1, 8, 16], strides = [1, 1, 1]} : vector<4x10x18xf32> to vector<1x8x16xf32>
    %1581 = vector.shape_cast %1580 : vector<1x8x16xf32> to vector<8x16xf32>
    %1582 = vector.broadcast %1579 : f32 to vector<8x16xf32>
    %1583 = arith.mulf %1582, %1581 : vector<8x16xf32>
    %1584 = arith.addf %1578, %1583 : vector<8x16xf32>
    %c110_171 = arith.constant 110 : index
    %1585 = memref.load %arg5[%c110_171] : memref<144xf32, #tpu.memory_space<smem>>
    %1586 = vector.extract_strided_slice %932 {offsets = [3, 2, 0], sizes = [1, 8, 16], strides = [1, 1, 1]} : vector<4x10x18xf32> to vector<1x8x16xf32>
    %1587 = vector.shape_cast %1586 : vector<1x8x16xf32> to vector<8x16xf32>
    %1588 = vector.broadcast %1585 : f32 to vector<8x16xf32>
    %1589 = arith.mulf %1588, %1587 : vector<8x16xf32>
    %1590 = arith.addf %1584, %1589 : vector<8x16xf32>
    %c126_172 = arith.constant 126 : index
    %1591 = memref.load %arg5[%c126_172] : memref<144xf32, #tpu.memory_space<smem>>
    %1592 = vector.extract_strided_slice %932 {offsets = [3, 2, 1], sizes = [1, 8, 16], strides = [1, 1, 1]} : vector<4x10x18xf32> to vector<1x8x16xf32>
    %1593 = vector.shape_cast %1592 : vector<1x8x16xf32> to vector<8x16xf32>
    %1594 = vector.broadcast %1591 : f32 to vector<8x16xf32>
    %1595 = arith.mulf %1594, %1593 : vector<8x16xf32>
    %1596 = arith.addf %1590, %1595 : vector<8x16xf32>
    %c142_173 = arith.constant 142 : index
    %1597 = memref.load %arg5[%c142_173] : memref<144xf32, #tpu.memory_space<smem>>
    %1598 = vector.extract_strided_slice %932 {offsets = [3, 2, 2], sizes = [1, 8, 16], strides = [1, 1, 1]} : vector<4x10x18xf32> to vector<1x8x16xf32>
    %1599 = vector.shape_cast %1598 : vector<1x8x16xf32> to vector<8x16xf32>
    %1600 = vector.broadcast %1597 : f32 to vector<8x16xf32>
    %1601 = arith.mulf %1600, %1599 : vector<8x16xf32>
    %1602 = arith.addf %1596, %1601 : vector<8x16xf32>
    %1603 = vector.extract_strided_slice %1 {offsets = [2, 2, 1], sizes = [1, 8, 16], strides = [1, 1, 1]} : vector<4x12x18xf32> to vector<1x8x16xf32>
    %1604 = vector.shape_cast %1603 : vector<1x8x16xf32> to vector<8x16xf32>
    %1605 = arith.addf %1602, %1604 : vector<8x16xf32>
    %cst_174 = arith.constant 0.000000e+00 : f32
    %1606 = vector.broadcast %cst_174 : f32 to vector<8x16xf32>
    %1607 = arith.maximumf %1605, %1606 : vector<8x16xf32>
    %c0_175 = arith.constant 0 : index
    %c2_176 = arith.constant 2 : index
    %c0_177 = arith.constant 0 : index
    %c0_178 = arith.constant 0 : index
    %1608 = vector.load %arg7[%c0_175, %c2_176, %c0_177, %c0_178] : memref<1x4x8x16xf32, #tpu.memory_space<vmem>>, vector<1x1x8x16xf32>
    %1609 = vector.shape_cast %1608 : vector<1x1x8x16xf32> to vector<8x16xf32>
    %1610 = vector.shape_cast %1607 : vector<8x16xf32> to vector<1x1x8x16xf32>
    tpu.vector_store %arg7[%c0_175, %c2_176, %c0_177, %c0_178], %1610 {strides = array<i32>} : memref<1x4x8x16xf32, #tpu.memory_space<vmem>>, vector<1x1x8x16xf32>,
    %c3_179 = arith.constant 3 : index
    %1611 = memref.load %arg6[%c3_179] : memref<4xf32, #tpu.memory_space<smem>>
    %1612 = vector.broadcast %1611 : f32 to vector<8x16xf32>
    %c3_180 = arith.constant 3 : index
    %1613 = memref.load %arg5[%c3_180] : memref<144xf32, #tpu.memory_space<smem>>
    %1614 = vector.extract_strided_slice %932 {offsets = [0, 0, 0], sizes = [1, 8, 16], strides = [1, 1, 1]} : vector<4x10x18xf32> to vector<1x8x16xf32>
    %1615 = vector.shape_cast %1614 : vector<1x8x16xf32> to vector<8x16xf32>
    %1616 = vector.broadcast %1613 : f32 to vector<8x16xf32>
    %1617 = arith.mulf %1616, %1615 : vector<8x16xf32>
    %1618 = arith.addf %1612, %1617 : vector<8x16xf32>
    %c19_181 = arith.constant 19 : index
    %1619 = memref.load %arg5[%c19_181] : memref<144xf32, #tpu.memory_space<smem>>
    %1620 = vector.extract_strided_slice %932 {offsets = [0, 0, 1], sizes = [1, 8, 16], strides = [1, 1, 1]} : vector<4x10x18xf32> to vector<1x8x16xf32>
    %1621 = vector.shape_cast %1620 : vector<1x8x16xf32> to vector<8x16xf32>
    %1622 = vector.broadcast %1619 : f32 to vector<8x16xf32>
    %1623 = arith.mulf %1622, %1621 : vector<8x16xf32>
    %1624 = arith.addf %1618, %1623 : vector<8x16xf32>
    %c35_182 = arith.constant 35 : index
    %1625 = memref.load %arg5[%c35_182] : memref<144xf32, #tpu.memory_space<smem>>
    %1626 = vector.extract_strided_slice %932 {offsets = [0, 0, 2], sizes = [1, 8, 16], strides = [1, 1, 1]} : vector<4x10x18xf32> to vector<1x8x16xf32>
    %1627 = vector.shape_cast %1626 : vector<1x8x16xf32> to vector<8x16xf32>
    %1628 = vector.broadcast %1625 : f32 to vector<8x16xf32>
    %1629 = arith.mulf %1628, %1627 : vector<8x16xf32>
    %1630 = arith.addf %1624, %1629 : vector<8x16xf32>
    %c51_183 = arith.constant 51 : index
    %1631 = memref.load %arg5[%c51_183] : memref<144xf32, #tpu.memory_space<smem>>
    %1632 = vector.extract_strided_slice %932 {offsets = [0, 1, 0], sizes = [1, 8, 16], strides = [1, 1, 1]} : vector<4x10x18xf32> to vector<1x8x16xf32>
    %1633 = vector.shape_cast %1632 : vector<1x8x16xf32> to vector<8x16xf32>
    %1634 = vector.broadcast %1631 : f32 to vector<8x16xf32>
    %1635 = arith.mulf %1634, %1633 : vector<8x16xf32>
    %1636 = arith.addf %1630, %1635 : vector<8x16xf32>
    %c67_184 = arith.constant 67 : index
    %1637 = memref.load %arg5[%c67_184] : memref<144xf32, #tpu.memory_space<smem>>
    %1638 = vector.extract_strided_slice %932 {offsets = [0, 1, 1], sizes = [1, 8, 16], strides = [1, 1, 1]} : vector<4x10x18xf32> to vector<1x8x16xf32>
    %1639 = vector.shape_cast %1638 : vector<1x8x16xf32> to vector<8x16xf32>
    %1640 = vector.broadcast %1637 : f32 to vector<8x16xf32>
    %1641 = arith.mulf %1640, %1639 : vector<8x16xf32>
    %1642 = arith.addf %1636, %1641 : vector<8x16xf32>
    %c83_185 = arith.constant 83 : index
    %1643 = memref.load %arg5[%c83_185] : memref<144xf32, #tpu.memory_space<smem>>
    %1644 = vector.extract_strided_slice %932 {offsets = [0, 1, 2], sizes = [1, 8, 16], strides = [1, 1, 1]} : vector<4x10x18xf32> to vector<1x8x16xf32>
    %1645 = vector.shape_cast %1644 : vector<1x8x16xf32> to vector<8x16xf32>
    %1646 = vector.broadcast %1643 : f32 to vector<8x16xf32>
    %1647 = arith.mulf %1646, %1645 : vector<8x16xf32>
    %1648 = arith.addf %1642, %1647 : vector<8x16xf32>
    %c99_186 = arith.constant 99 : index
    %1649 = memref.load %arg5[%c99_186] : memref<144xf32, #tpu.memory_space<smem>>
    %1650 = vector.extract_strided_slice %932 {offsets = [0, 2, 0], sizes = [1, 8, 16], strides = [1, 1, 1]} : vector<4x10x18xf32> to vector<1x8x16xf32>
    %1651 = vector.shape_cast %1650 : vector<1x8x16xf32> to vector<8x16xf32>
    %1652 = vector.broadcast %1649 : f32 to vector<8x16xf32>
    %1653 = arith.mulf %1652, %1651 : vector<8x16xf32>
    %1654 = arith.addf %1648, %1653 : vector<8x16xf32>
    %c115_187 = arith.constant 115 : index
    %1655 = memref.load %arg5[%c115_187] : memref<144xf32, #tpu.memory_space<smem>>
    %1656 = vector.extract_strided_slice %932 {offsets = [0, 2, 1], sizes = [1, 8, 16], strides = [1, 1, 1]} : vector<4x10x18xf32> to vector<1x8x16xf32>
    %1657 = vector.shape_cast %1656 : vector<1x8x16xf32> to vector<8x16xf32>
    %1658 = vector.broadcast %1655 : f32 to vector<8x16xf32>
    %1659 = arith.mulf %1658, %1657 : vector<8x16xf32>
    %1660 = arith.addf %1654, %1659 : vector<8x16xf32>
    %c131_188 = arith.constant 131 : index
    %1661 = memref.load %arg5[%c131_188] : memref<144xf32, #tpu.memory_space<smem>>
    %1662 = vector.extract_strided_slice %932 {offsets = [0, 2, 2], sizes = [1, 8, 16], strides = [1, 1, 1]} : vector<4x10x18xf32> to vector<1x8x16xf32>
    %1663 = vector.shape_cast %1662 : vector<1x8x16xf32> to vector<8x16xf32>
    %1664 = vector.broadcast %1661 : f32 to vector<8x16xf32>
    %1665 = arith.mulf %1664, %1663 : vector<8x16xf32>
    %1666 = arith.addf %1660, %1665 : vector<8x16xf32>
    %c7_189 = arith.constant 7 : index
    %1667 = memref.load %arg5[%c7_189] : memref<144xf32, #tpu.memory_space<smem>>
    %1668 = vector.extract_strided_slice %932 {offsets = [1, 0, 0], sizes = [1, 8, 16], strides = [1, 1, 1]} : vector<4x10x18xf32> to vector<1x8x16xf32>
    %1669 = vector.shape_cast %1668 : vector<1x8x16xf32> to vector<8x16xf32>
    %1670 = vector.broadcast %1667 : f32 to vector<8x16xf32>
    %1671 = arith.mulf %1670, %1669 : vector<8x16xf32>
    %1672 = arith.addf %1666, %1671 : vector<8x16xf32>
    %c23_190 = arith.constant 23 : index
    %1673 = memref.load %arg5[%c23_190] : memref<144xf32, #tpu.memory_space<smem>>
    %1674 = vector.extract_strided_slice %932 {offsets = [1, 0, 1], sizes = [1, 8, 16], strides = [1, 1, 1]} : vector<4x10x18xf32> to vector<1x8x16xf32>
    %1675 = vector.shape_cast %1674 : vector<1x8x16xf32> to vector<8x16xf32>
    %1676 = vector.broadcast %1673 : f32 to vector<8x16xf32>
    %1677 = arith.mulf %1676, %1675 : vector<8x16xf32>
    %1678 = arith.addf %1672, %1677 : vector<8x16xf32>
    %c39_191 = arith.constant 39 : index
    %1679 = memref.load %arg5[%c39_191] : memref<144xf32, #tpu.memory_space<smem>>
    %1680 = vector.extract_strided_slice %932 {offsets = [1, 0, 2], sizes = [1, 8, 16], strides = [1, 1, 1]} : vector<4x10x18xf32> to vector<1x8x16xf32>
    %1681 = vector.shape_cast %1680 : vector<1x8x16xf32> to vector<8x16xf32>
    %1682 = vector.broadcast %1679 : f32 to vector<8x16xf32>
    %1683 = arith.mulf %1682, %1681 : vector<8x16xf32>
    %1684 = arith.addf %1678, %1683 : vector<8x16xf32>
    %c55_192 = arith.constant 55 : index
    %1685 = memref.load %arg5[%c55_192] : memref<144xf32, #tpu.memory_space<smem>>
    %1686 = vector.extract_strided_slice %932 {offsets = [1, 1, 0], sizes = [1, 8, 16], strides = [1, 1, 1]} : vector<4x10x18xf32> to vector<1x8x16xf32>
    %1687 = vector.shape_cast %1686 : vector<1x8x16xf32> to vector<8x16xf32>
    %1688 = vector.broadcast %1685 : f32 to vector<8x16xf32>
    %1689 = arith.mulf %1688, %1687 : vector<8x16xf32>
    %1690 = arith.addf %1684, %1689 : vector<8x16xf32>
    %c71_193 = arith.constant 71 : index
    %1691 = memref.load %arg5[%c71_193] : memref<144xf32, #tpu.memory_space<smem>>
    %1692 = vector.extract_strided_slice %932 {offsets = [1, 1, 1], sizes = [1, 8, 16], strides = [1, 1, 1]} : vector<4x10x18xf32> to vector<1x8x16xf32>
    %1693 = vector.shape_cast %1692 : vector<1x8x16xf32> to vector<8x16xf32>
    %1694 = vector.broadcast %1691 : f32 to vector<8x16xf32>
    %1695 = arith.mulf %1694, %1693 : vector<8x16xf32>
    %1696 = arith.addf %1690, %1695 : vector<8x16xf32>
    %c87_194 = arith.constant 87 : index
    %1697 = memref.load %arg5[%c87_194] : memref<144xf32, #tpu.memory_space<smem>>
    %1698 = vector.extract_strided_slice %932 {offsets = [1, 1, 2], sizes = [1, 8, 16], strides = [1, 1, 1]} : vector<4x10x18xf32> to vector<1x8x16xf32>
    %1699 = vector.shape_cast %1698 : vector<1x8x16xf32> to vector<8x16xf32>
    %1700 = vector.broadcast %1697 : f32 to vector<8x16xf32>
    %1701 = arith.mulf %1700, %1699 : vector<8x16xf32>
    %1702 = arith.addf %1696, %1701 : vector<8x16xf32>
    %c103_195 = arith.constant 103 : index
    %1703 = memref.load %arg5[%c103_195] : memref<144xf32, #tpu.memory_space<smem>>
    %1704 = vector.extract_strided_slice %932 {offsets = [1, 2, 0], sizes = [1, 8, 16], strides = [1, 1, 1]} : vector<4x10x18xf32> to vector<1x8x16xf32>
    %1705 = vector.shape_cast %1704 : vector<1x8x16xf32> to vector<8x16xf32>
    %1706 = vector.broadcast %1703 : f32 to vector<8x16xf32>
    %1707 = arith.mulf %1706, %1705 : vector<8x16xf32>
    %1708 = arith.addf %1702, %1707 : vector<8x16xf32>
    %c119_196 = arith.constant 119 : index
    %1709 = memref.load %arg5[%c119_196] : memref<144xf32, #tpu.memory_space<smem>>
    %1710 = vector.extract_strided_slice %932 {offsets = [1, 2, 1], sizes = [1, 8, 16], strides = [1, 1, 1]} : vector<4x10x18xf32> to vector<1x8x16xf32>
    %1711 = vector.shape_cast %1710 : vector<1x8x16xf32> to vector<8x16xf32>
    %1712 = vector.broadcast %1709 : f32 to vector<8x16xf32>
    %1713 = arith.mulf %1712, %1711 : vector<8x16xf32>
    %1714 = arith.addf %1708, %1713 : vector<8x16xf32>
    %c135_197 = arith.constant 135 : index
    %1715 = memref.load %arg5[%c135_197] : memref<144xf32, #tpu.memory_space<smem>>
    %1716 = vector.extract_strided_slice %932 {offsets = [1, 2, 2], sizes = [1, 8, 16], strides = [1, 1, 1]} : vector<4x10x18xf32> to vector<1x8x16xf32>
    %1717 = vector.shape_cast %1716 : vector<1x8x16xf32> to vector<8x16xf32>
    %1718 = vector.broadcast %1715 : f32 to vector<8x16xf32>
    %1719 = arith.mulf %1718, %1717 : vector<8x16xf32>
    %1720 = arith.addf %1714, %1719 : vector<8x16xf32>
    %c11_198 = arith.constant 11 : index
    %1721 = memref.load %arg5[%c11_198] : memref<144xf32, #tpu.memory_space<smem>>
    %1722 = vector.extract_strided_slice %932 {offsets = [2, 0, 0], sizes = [1, 8, 16], strides = [1, 1, 1]} : vector<4x10x18xf32> to vector<1x8x16xf32>
    %1723 = vector.shape_cast %1722 : vector<1x8x16xf32> to vector<8x16xf32>
    %1724 = vector.broadcast %1721 : f32 to vector<8x16xf32>
    %1725 = arith.mulf %1724, %1723 : vector<8x16xf32>
    %1726 = arith.addf %1720, %1725 : vector<8x16xf32>
    %c27_199 = arith.constant 27 : index
    %1727 = memref.load %arg5[%c27_199] : memref<144xf32, #tpu.memory_space<smem>>
    %1728 = vector.extract_strided_slice %932 {offsets = [2, 0, 1], sizes = [1, 8, 16], strides = [1, 1, 1]} : vector<4x10x18xf32> to vector<1x8x16xf32>
    %1729 = vector.shape_cast %1728 : vector<1x8x16xf32> to vector<8x16xf32>
    %1730 = vector.broadcast %1727 : f32 to vector<8x16xf32>
    %1731 = arith.mulf %1730, %1729 : vector<8x16xf32>
    %1732 = arith.addf %1726, %1731 : vector<8x16xf32>
    %c43_200 = arith.constant 43 : index
    %1733 = memref.load %arg5[%c43_200] : memref<144xf32, #tpu.memory_space<smem>>
    %1734 = vector.extract_strided_slice %932 {offsets = [2, 0, 2], sizes = [1, 8, 16], strides = [1, 1, 1]} : vector<4x10x18xf32> to vector<1x8x16xf32>
    %1735 = vector.shape_cast %1734 : vector<1x8x16xf32> to vector<8x16xf32>
    %1736 = vector.broadcast %1733 : f32 to vector<8x16xf32>
    %1737 = arith.mulf %1736, %1735 : vector<8x16xf32>
    %1738 = arith.addf %1732, %1737 : vector<8x16xf32>
    %c59_201 = arith.constant 59 : index
    %1739 = memref.load %arg5[%c59_201] : memref<144xf32, #tpu.memory_space<smem>>
    %1740 = vector.extract_strided_slice %932 {offsets = [2, 1, 0], sizes = [1, 8, 16], strides = [1, 1, 1]} : vector<4x10x18xf32> to vector<1x8x16xf32>
    %1741 = vector.shape_cast %1740 : vector<1x8x16xf32> to vector<8x16xf32>
    %1742 = vector.broadcast %1739 : f32 to vector<8x16xf32>
    %1743 = arith.mulf %1742, %1741 : vector<8x16xf32>
    %1744 = arith.addf %1738, %1743 : vector<8x16xf32>
    %c75_202 = arith.constant 75 : index
    %1745 = memref.load %arg5[%c75_202] : memref<144xf32, #tpu.memory_space<smem>>
    %1746 = vector.extract_strided_slice %932 {offsets = [2, 1, 1], sizes = [1, 8, 16], strides = [1, 1, 1]} : vector<4x10x18xf32> to vector<1x8x16xf32>
    %1747 = vector.shape_cast %1746 : vector<1x8x16xf32> to vector<8x16xf32>
    %1748 = vector.broadcast %1745 : f32 to vector<8x16xf32>
    %1749 = arith.mulf %1748, %1747 : vector<8x16xf32>
    %1750 = arith.addf %1744, %1749 : vector<8x16xf32>
    %c91_203 = arith.constant 91 : index
    %1751 = memref.load %arg5[%c91_203] : memref<144xf32, #tpu.memory_space<smem>>
    %1752 = vector.extract_strided_slice %932 {offsets = [2, 1, 2], sizes = [1, 8, 16], strides = [1, 1, 1]} : vector<4x10x18xf32> to vector<1x8x16xf32>
    %1753 = vector.shape_cast %1752 : vector<1x8x16xf32> to vector<8x16xf32>
    %1754 = vector.broadcast %1751 : f32 to vector<8x16xf32>
    %1755 = arith.mulf %1754, %1753 : vector<8x16xf32>
    %1756 = arith.addf %1750, %1755 : vector<8x16xf32>
    %c107_204 = arith.constant 107 : index
    %1757 = memref.load %arg5[%c107_204] : memref<144xf32, #tpu.memory_space<smem>>
    %1758 = vector.extract_strided_slice %932 {offsets = [2, 2, 0], sizes = [1, 8, 16], strides = [1, 1, 1]} : vector<4x10x18xf32> to vector<1x8x16xf32>
    %1759 = vector.shape_cast %1758 : vector<1x8x16xf32> to vector<8x16xf32>
    %1760 = vector.broadcast %1757 : f32 to vector<8x16xf32>
    %1761 = arith.mulf %1760, %1759 : vector<8x16xf32>
    %1762 = arith.addf %1756, %1761 : vector<8x16xf32>
    %c123_205 = arith.constant 123 : index
    %1763 = memref.load %arg5[%c123_205] : memref<144xf32, #tpu.memory_space<smem>>
    %1764 = vector.extract_strided_slice %932 {offsets = [2, 2, 1], sizes = [1, 8, 16], strides = [1, 1, 1]} : vector<4x10x18xf32> to vector<1x8x16xf32>
    %1765 = vector.shape_cast %1764 : vector<1x8x16xf32> to vector<8x16xf32>
    %1766 = vector.broadcast %1763 : f32 to vector<8x16xf32>
    %1767 = arith.mulf %1766, %1765 : vector<8x16xf32>
    %1768 = arith.addf %1762, %1767 : vector<8x16xf32>
    %c139_206 = arith.constant 139 : index
    %1769 = memref.load %arg5[%c139_206] : memref<144xf32, #tpu.memory_space<smem>>
    %1770 = vector.extract_strided_slice %932 {offsets = [2, 2, 2], sizes = [1, 8, 16], strides = [1, 1, 1]} : vector<4x10x18xf32> to vector<1x8x16xf32>
    %1771 = vector.shape_cast %1770 : vector<1x8x16xf32> to vector<8x16xf32>
    %1772 = vector.broadcast %1769 : f32 to vector<8x16xf32>
    %1773 = arith.mulf %1772, %1771 : vector<8x16xf32>
    %1774 = arith.addf %1768, %1773 : vector<8x16xf32>
    %c15_207 = arith.constant 15 : index
    %1775 = memref.load %arg5[%c15_207] : memref<144xf32, #tpu.memory_space<smem>>
    %1776 = vector.extract_strided_slice %932 {offsets = [3, 0, 0], sizes = [1, 8, 16], strides = [1, 1, 1]} : vector<4x10x18xf32> to vector<1x8x16xf32>
    %1777 = vector.shape_cast %1776 : vector<1x8x16xf32> to vector<8x16xf32>
    %1778 = vector.broadcast %1775 : f32 to vector<8x16xf32>
    %1779 = arith.mulf %1778, %1777 : vector<8x16xf32>
    %1780 = arith.addf %1774, %1779 : vector<8x16xf32>
    %c31_208 = arith.constant 31 : index
    %1781 = memref.load %arg5[%c31_208] : memref<144xf32, #tpu.memory_space<smem>>
    %1782 = vector.extract_strided_slice %932 {offsets = [3, 0, 1], sizes = [1, 8, 16], strides = [1, 1, 1]} : vector<4x10x18xf32> to vector<1x8x16xf32>
    %1783 = vector.shape_cast %1782 : vector<1x8x16xf32> to vector<8x16xf32>
    %1784 = vector.broadcast %1781 : f32 to vector<8x16xf32>
    %1785 = arith.mulf %1784, %1783 : vector<8x16xf32>
    %1786 = arith.addf %1780, %1785 : vector<8x16xf32>
    %c47_209 = arith.constant 47 : index
    %1787 = memref.load %arg5[%c47_209] : memref<144xf32, #tpu.memory_space<smem>>
    %1788 = vector.extract_strided_slice %932 {offsets = [3, 0, 2], sizes = [1, 8, 16], strides = [1, 1, 1]} : vector<4x10x18xf32> to vector<1x8x16xf32>
    %1789 = vector.shape_cast %1788 : vector<1x8x16xf32> to vector<8x16xf32>
    %1790 = vector.broadcast %1787 : f32 to vector<8x16xf32>
    %1791 = arith.mulf %1790, %1789 : vector<8x16xf32>
    %1792 = arith.addf %1786, %1791 : vector<8x16xf32>
    %c63_210 = arith.constant 63 : index
    %1793 = memref.load %arg5[%c63_210] : memref<144xf32, #tpu.memory_space<smem>>
    %1794 = vector.extract_strided_slice %932 {offsets = [3, 1, 0], sizes = [1, 8, 16], strides = [1, 1, 1]} : vector<4x10x18xf32> to vector<1x8x16xf32>
    %1795 = vector.shape_cast %1794 : vector<1x8x16xf32> to vector<8x16xf32>
    %1796 = vector.broadcast %1793 : f32 to vector<8x16xf32>
    %1797 = arith.mulf %1796, %1795 : vector<8x16xf32>
    %1798 = arith.addf %1792, %1797 : vector<8x16xf32>
    %c79_211 = arith.constant 79 : index
    %1799 = memref.load %arg5[%c79_211] : memref<144xf32, #tpu.memory_space<smem>>
    %1800 = vector.extract_strided_slice %932 {offsets = [3, 1, 1], sizes = [1, 8, 16], strides = [1, 1, 1]} : vector<4x10x18xf32> to vector<1x8x16xf32>
    %1801 = vector.shape_cast %1800 : vector<1x8x16xf32> to vector<8x16xf32>
    %1802 = vector.broadcast %1799 : f32 to vector<8x16xf32>
    %1803 = arith.mulf %1802, %1801 : vector<8x16xf32>
    %1804 = arith.addf %1798, %1803 : vector<8x16xf32>
    %c95_212 = arith.constant 95 : index
    %1805 = memref.load %arg5[%c95_212] : memref<144xf32, #tpu.memory_space<smem>>
    %1806 = vector.extract_strided_slice %932 {offsets = [3, 1, 2], sizes = [1, 8, 16], strides = [1, 1, 1]} : vector<4x10x18xf32> to vector<1x8x16xf32>
    %1807 = vector.shape_cast %1806 : vector<1x8x16xf32> to vector<8x16xf32>
    %1808 = vector.broadcast %1805 : f32 to vector<8x16xf32>
    %1809 = arith.mulf %1808, %1807 : vector<8x16xf32>
    %1810 = arith.addf %1804, %1809 : vector<8x16xf32>
    %c111_213 = arith.constant 111 : index
    %1811 = memref.load %arg5[%c111_213] : memref<144xf32, #tpu.memory_space<smem>>
    %1812 = vector.extract_strided_slice %932 {offsets = [3, 2, 0], sizes = [1, 8, 16], strides = [1, 1, 1]} : vector<4x10x18xf32> to vector<1x8x16xf32>
    %1813 = vector.shape_cast %1812 : vector<1x8x16xf32> to vector<8x16xf32>
    %1814 = vector.broadcast %1811 : f32 to vector<8x16xf32>
    %1815 = arith.mulf %1814, %1813 : vector<8x16xf32>
    %1816 = arith.addf %1810, %1815 : vector<8x16xf32>
    %c127_214 = arith.constant 127 : index
    %1817 = memref.load %arg5[%c127_214] : memref<144xf32, #tpu.memory_space<smem>>
    %1818 = vector.extract_strided_slice %932 {offsets = [3, 2, 1], sizes = [1, 8, 16], strides = [1, 1, 1]} : vector<4x10x18xf32> to vector<1x8x16xf32>
    %1819 = vector.shape_cast %1818 : vector<1x8x16xf32> to vector<8x16xf32>
    %1820 = vector.broadcast %1817 : f32 to vector<8x16xf32>
    %1821 = arith.mulf %1820, %1819 : vector<8x16xf32>
    %1822 = arith.addf %1816, %1821 : vector<8x16xf32>
    %c143_215 = arith.constant 143 : index
    %1823 = memref.load %arg5[%c143_215] : memref<144xf32, #tpu.memory_space<smem>>
    %1824 = vector.extract_strided_slice %932 {offsets = [3, 2, 2], sizes = [1, 8, 16], strides = [1, 1, 1]} : vector<4x10x18xf32> to vector<1x8x16xf32>
    %1825 = vector.shape_cast %1824 : vector<1x8x16xf32> to vector<8x16xf32>
    %1826 = vector.broadcast %1823 : f32 to vector<8x16xf32>
    %1827 = arith.mulf %1826, %1825 : vector<8x16xf32>
    %1828 = arith.addf %1822, %1827 : vector<8x16xf32>
    %1829 = vector.extract_strided_slice %1 {offsets = [3, 2, 1], sizes = [1, 8, 16], strides = [1, 1, 1]} : vector<4x12x18xf32> to vector<1x8x16xf32>
    %1830 = vector.shape_cast %1829 : vector<1x8x16xf32> to vector<8x16xf32>
    %1831 = arith.addf %1828, %1830 : vector<8x16xf32>
    %cst_216 = arith.constant 0.000000e+00 : f32
    %1832 = vector.broadcast %cst_216 : f32 to vector<8x16xf32>
    %1833 = arith.maximumf %1831, %1832 : vector<8x16xf32>
    %c0_217 = arith.constant 0 : index
    %c3_218 = arith.constant 3 : index
    %c0_219 = arith.constant 0 : index
    %c0_220 = arith.constant 0 : index
    %1834 = vector.load %arg7[%c0_217, %c3_218, %c0_219, %c0_220] : memref<1x4x8x16xf32, #tpu.memory_space<vmem>>, vector<1x1x8x16xf32>
    %1835 = vector.shape_cast %1834 : vector<1x1x8x16xf32> to vector<8x16xf32>
    %1836 = vector.shape_cast %1833 : vector<8x16xf32> to vector<1x1x8x16xf32>
    tpu.vector_store %arg7[%c0_217, %c3_218, %c0_219, %c0_220], %1836 {strides = array<i32>} : memref<1x4x8x16xf32, #tpu.memory_space<vmem>>, vector<1x1x8x16xf32>,
    return
  }
  func.func @transform_0(%arg0: i32, %arg1: i32) -> (i32, i32, i32, i32, i32) {
    %c0_i32 = arith.constant 0 : i32
    %c0_i32_0 = arith.constant 0 : i32
    %c0_i32_1 = arith.constant 0 : i32
    %c0_i32_2 = arith.constant 0 : i32
    return %arg0, %arg1, %c0_i32, %c0_i32_0, %c0_i32_1 : i32, i32, i32, i32, i32
  }
  func.func @transform_1(%arg0: i32, %arg1: i32) -> i32 {
    %c0_i32 = arith.constant 0 : i32
    %c0_i32_0 = arith.constant 0 : i32
    return %c0_i32 : i32
  }
  func.func @transform_2(%arg0: i32, %arg1: i32) -> i32 {
    %c0_i32 = arith.constant 0 : i32
    %c0_i32_0 = arith.constant 0 : i32
    return %c0_i32 : i32
  }
  func.func @transform_3(%arg0: i32, %arg1: i32) -> i32 {
    %c0_i32 = arith.constant 0 : i32
    %c0_i32_0 = arith.constant 0 : i32
    return %c0_i32 : i32
  }
  func.func @transform_4(%arg0: i32, %arg1: i32) -> i32 {
    %c0_i32 = arith.constant 0 : i32
    %c0_i32_0 = arith.constant 0 : i32
    return %c0_i32 : i32
  }
  func.func @transform_5(%arg0: i32, %arg1: i32) -> (i32, i32, i32, i32) {
    %c0_i32 = arith.constant 0 : i32
    %c0_i32_0 = arith.constant 0 : i32
    %c0_i32_1 = arith.constant 0 : i32
    return %arg0, %c0_i32, %arg1, %c0_i32_0 : i32, i32, i32, i32
  }
}

</mosaic_0001>

<llo_original>
// kernel: msrb_pallas.1
$region0: #{msrb_pallas.1}
  #allocation0 [shape = 'u32[]', space=smem, size = 0x4, offset = 0x4, fixed_abs, tag = 'smem constant byte address 0x4 - core index']
  #allocation1 [shape = 'u32[72,128]{1,0:T(1,128)}', space=vmem, size = 0x9000, scoped, tag = 'internal scratch']
  #allocation2 [shape = 'f32[4,10,18]{2,1,0:T(8,128)}', space=vmem, size = 0x8000, scoped, tag = 'scratch operand']
  %s0 = inlined_call_operand.vmem [shape: f32[2,2,4,12,18], index: 0, kind: input, shape index: {}]
  %s1 = inlined_call_operand.vmem [shape: f32[144], index: 1, kind: input, shape index: {}]
  %s2 = inlined_call_operand.vmem [shape: f32[4], index: 2, kind: input, shape index: {}]
  %s3 = inlined_call_operand.vmem [shape: f32[144], index: 3, kind: input, shape index: {}]
  %s4 = inlined_call_operand.vmem [shape: f32[4], index: 4, kind: input, shape index: {}]
  %s5 = inlined_call_operand.hbm [shape: f32[2,4,16,16], index: 5, kind: output, shape index: {}]
  %s6 = sld [smem:[#allocation0]]
  $region77: #{msrb_pallas.1} parent=0
    _
  %s8 = ssub.s32 1, %s6
  %s9 = scalar_select 0, %s8, %s6
  $region1: #{msrb_pallas.1} parent=0
    #allocation3 [shape = 'u8[1024]{0}', space=smem, size = 0x400, scoped, tag = 'input window, operand 1, single buffered']
    #allocation4 [shape = 's32[2]{0}', space=sflag, size = 0x8, scoped, tag = 'scoped memory for msrb_pallas.1']
    #allocation5 [shape = 's32[2]{0}', space=sflag, size = 0x8, scoped, tag = 'scoped memory for msrb_pallas.1']
    #allocation6 [shape = 'u8[512]{0}', space=smem, size = 0x200, scoped, tag = 'input window, operand 2, single buffered']
    #allocation7 [shape = 's32[1]{0}', space=sflag, size = 0x4, scoped, tag = 'scoped memory for msrb_pallas.1']
    #allocation8 [shape = 'u8[1024]{0}', space=smem, size = 0x400, scoped, tag = 'input window, operand 3, single buffered']
    #allocation9 [shape = 'u8[512]{0}', space=smem, size = 0x200, scoped, tag = 'input window, operand 4, single buffered']
    #allocation10 [shape = 's32[1]{0}', space=sflag, size = 0x4, scoped, tag = 'scoped memory for msrb_pallas.1']
    #allocation11 [shape = 'u8[32768]{0}', space=vmem, size = 0x8000, scoped, tag = 'output window, operand 0']
    %10 = vsyncpa [#allocation5], 0
    %11 = vsyncpa [#allocation7], 0
    %12 = vsyncpa [#allocation10], 0
    %13 = vsyncpa [#allocation4], 0
    %s14 = scalar_lea.sflag [#allocation4], 1
    %15 = vsyncpa %s14, 0
    loop: start=0, step=1, limit=6
    $region2: #{msrb_pallas.1} parent=1 // loop_pre_header
      _
    $region3: #{msrb_pallas.1} parent=1 // loop_header
      %s17 = sphi 0, %s21
      %p18 = scmp.ge.s32.totalorder %s17, 6
      %s24 = sphi 0, %s36
      %s25 = sphi 0, %s32
      %s26 = sphi 0, %s24
      %s27 = sphi 0, %s25
      %s28 = sphi 0, %s26
      %s29 = sphi 0, %s27
      %s41 = sphi 0, %s43
      %s44 = sphi 0, %s41
      %s45 = sphi 0, %s44
      %s61 = sphi 0, %s45
      %s65 = sphi 0, %s65
      %s67 = sphi 0, %s65
      %s68 = sphi 0, %s67
      %s82 = sphi 0, %s68
      %s86 = sphi 0, %s86
      %s88 = sphi 0, %s86
      %s89 = sphi 0, %s88
      %s103 = sphi 0, %s89
      %s107 = sphi 0, %s107
      %s109 = sphi 0, %s107
      %s110 = sphi 0, %s109
      %s124 = sphi 0, %s110
      %s128 = sphi 0, %s128
      %s130 = sphi 0, %s128
      %s131 = sphi 0, %s130
      %s145 = sphi 0, %s131
      %s153 = sphi 0, %s155
      %s156 = sphi 0, %s153
      %s157 = sphi 0, %s156
      %s173 = sphi 0, %s157
    $region4: #{msrb_pallas.1} parent=1 // loop_header_branch
      %20 = sbr.rel (%p18) target = $region8
    $region5: #{msrb_pallas.1} parent=1 // loop_body
      %s22 = ssub.s32 %s17, 1
      %s23 = ssub.s32 %s17, 2
      %s30 = sadd.s32 1, %s25
      %p31 = scmp.ge.s32.totalorder %s30, 2
      %s32 = scalar_select %p31, 0, %s30
      %s33 = sadd.s32 1, %s24
      %s34 = scalar_select %p31, %s33, %s24
      %p35 = scmp.ge.s32.totalorder %s34, 2
      %s36 = scalar_select %p35, 0, %s34
      %s37 = ssub.s32 %s24, %s36
      %s38 = ssub.s32 %s25, %s32
      %s39 = sor.u32 %s37, %s38
      %p40 = scmp.eq.s32.totalorder %s39, 0
      %s42 = sadd.s32 %s41, 1
      %s43 = scalar_select %p40, %s41, %s42
      %p46 = pneg %p40
      %p47 = scmp.eq.s32.totalorder %s17, 3
      %p48 = por %p46, %p47
      %p49 = scmp.ne.s32.totalorder %s41, %s44
      %p50 = scmp.eq.s32.totalorder %s17, 0
      %p51 = por %p49, %p50
      %p52 = scmp.ne.s32.totalorder %s41, %s44
      %p53 = scmp.eq.s32.totalorder %s22, 3
      %p54 = por %p52, %p53
      %p55 = scmp.ne.s32.totalorder %s44, %s45
      %p56 = scmp.eq.s32.totalorder %s22, 0
      %p57 = por %p55, %p56
      %p58 = scmp.ne.s32.totalorder %s44, %s45
      %p59 = scmp.eq.s32.totalorder %s23, 3
      %p60 = por %p58, %p59
      %p62 = scmp.ne.s32.totalorder %s45, %s61
      %p63 = scmp.eq.s32.totalorder %s23, 0
      %p64 = por %p62, %p63
      %s66 = sadd.s32 %s65, 1
      %p69 = scmp.eq.s32.totalorder %s17, 3
      %p70 = scmp.ne.s32.totalorder %s65, %s67
      %p71 = scmp.eq.s32.totalorder %s17, 0
      %p72 = por %p70, %p71
      %p73 = scmp.ne.s32.totalorder %s65, %s67
      %p74 = scmp.eq.s32.totalorder %s22, 3
      %p75 = por %p73, %p74
      %p76 = scmp.ne.s32.totalorder %s67, %s68
      %p77 = scmp.eq.s32.totalorder %s22, 0
      %p78 = por %p76, %p77
      %p79 = scmp.ne.s32.totalorder %s67, %s68
      %p80 = scmp.eq.s32.totalorder %s23, 3
      %p81 = por %p79, %p80
      %p83 = scmp.ne.s32.totalorder %s68, %s82
      %p84 = scmp.eq.s32.totalorder %s23, 0
      %p85 = por %p83, %p84
      %s87 = sadd.s32 %s86, 1
      %p90 = scmp.eq.s32.totalorder %s17, 3
      %p91 = scmp.ne.s32.totalorder %s86, %s88
      %p92 = scmp.eq.s32.totalorder %s17, 0
      %p93 = por %p91, %p92
      %p94 = scmp.ne.s32.totalorder %s86, %s88
      %p95 = scmp.eq.s32.totalorder %s22, 3
      %p96 = por %p94, %p95
      %p97 = scmp.ne.s32.totalorder %s88, %s89
      %p98 = scmp.eq.s32.totalorder %s22, 0
      %p99 = por %p97, %p98
      %p100 = scmp.ne.s32.totalorder %s88, %s89
      %p101 = scmp.eq.s32.totalorder %s23, 3
      %p102 = por %p100, %p101
      %p104 = scmp.ne.s32.totalorder %s89, %s103
      %p105 = scmp.eq.s32.totalorder %s23, 0
      %p106 = por %p104, %p105
      %s108 = sadd.s32 %s107, 1
      %p111 = scmp.eq.s32.totalorder %s17, 3
      %p112 = scmp.ne.s32.totalorder %s107, %s109
      %p113 = scmp.eq.s32.totalorder %s17, 0
      %p114 = por %p112, %p113
      %p115 = scmp.ne.s32.totalorder %s107, %s109
      %p116 = scmp.eq.s32.totalorder %s22, 3
      %p117 = por %p115, %p116
      %p118 = scmp.ne.s32.totalorder %s109, %s110
      %p119 = scmp.eq.s32.totalorder %s22, 0
      %p120 = por %p118, %p119
      %p121 = scmp.ne.s32.totalorder %s109, %s110
      %p122 = scmp.eq.s32.totalorder %s23, 3
      %p123 = por %p121, %p122
      %p125 = scmp.ne.s32.totalorder %s110, %s124
      %p126 = scmp.eq.s32.totalorder %s23, 0
      %p127 = por %p125, %p126
      %s129 = sadd.s32 %s128, 1
      %p132 = scmp.eq.s32.totalorder %s17, 3
      %p133 = scmp.ne.s32.totalorder %s128, %s130
      %p134 = scmp.eq.s32.totalorder %s17, 0
      %p135 = por %p133, %p134
      %p136 = scmp.ne.s32.totalorder %s128, %s130
      %p137 = scmp.eq.s32.totalorder %s22, 3
      %p138 = por %p136, %p137
      %p139 = scmp.ne.s32.totalorder %s130, %s131
      %p140 = scmp.eq.s32.totalorder %s22, 0
      %p141 = por %p139, %p140
      %p142 = scmp.ne.s32.totalorder %s130, %s131
      %p143 = scmp.eq.s32.totalorder %s23, 3
      %p144 = por %p142, %p143
      %p146 = scmp.ne.s32.totalorder %s131, %s145
      %p147 = scmp.eq.s32.totalorder %s23, 0
      %p148 = por %p146, %p147
      %s149 = ssub.s32 %s24, %s36
      %s150 = ssub.s32 %s25, %s32
      %s151 = sor.u32 %s149, %s150
      %p152 = scmp.eq.s32.totalorder %s151, 0
      %s154 = sadd.s32 %s153, 1
      %s155 = scalar_select %p152, %s153, %s154
      %p158 = pneg %p152
      %p159 = scmp.eq.s32.totalorder %s17, 3
      %p160 = por %p158, %p159
      %p161 = scmp.ne.s32.totalorder %s153, %s156
      %p162 = scmp.eq.s32.totalorder %s17, 0
      %p163 = por %p161, %p162
      %p164 = scmp.ne.s32.totalorder %s153, %s156
      %p165 = scmp.eq.s32.totalorder %s22, 3
      %p166 = por %p164, %p165
      %p167 = scmp.ne.s32.totalorder %s156, %s157
      %p168 = scmp.eq.s32.totalorder %s22, 0
      %p169 = por %p167, %p168
      %p170 = scmp.ne.s32.totalorder %s156, %s157
      %p171 = scmp.eq.s32.totalorder %s23, 3
      %p172 = por %p170, %p171
      %p174 = scmp.ne.s32.totalorder %s157, %s173
      %p175 = scmp.eq.s32.totalorder %s23, 0
      %p176 = por %p174, %p175
      %p177 = scmp.le.s32.totalorder 1, %s17
      %p178 = scmp.lt.s32.totalorder %s17, 5
      %p179 = pnand %p177, %p178
      %p180 = pneg %p179
      // Predicated region
      $region9: #{msrb_pallas.1} parent=5 // pred_check
        _
      $region10: #{msrb_pallas.1} parent=5 // pred_check_branch
        %182 = sbr.rel (%p179) target = $region12
      $region11: #{msrb_pallas.1} parent=5 // pred_region
        %s183 = ssub.s32 %s17, 1
        // Predicated region
        $region13: #{msrb_pallas.1} parent=11 // pred_check
          %p184 = pneg %p78
        $region14: #{msrb_pallas.1} parent=11 // pred_check_branch
          %186 = sbr.rel (%p184) target = $region16
        $region15: #{msrb_pallas.1} parent=11 // pred_region
          %188 = vsyncadd [#allocation5], 0
          %s190 = sshll.u32 %s1, 4
          %s191 = int_to_ptr.vmem [resolvable:$true] %s190
          %193 = dma.vmem_to_smem %s191, 32, [#allocation3], [#allocation5]
        $region16: #{msrb_pallas.1} parent=11 // pred_fallthru
          _
        // Predicated region
        $region17: #{msrb_pallas.1} parent=11 // pred_check
          %p194 = pneg %p99
        $region18: #{msrb_pallas.1} parent=11 // pred_check_branch
          %196 = sbr.rel (%p194) target = $region20
        $region19: #{msrb_pallas.1} parent=11 // pred_region
          %198 = vsyncadd [#allocation7], 0
          %s200 = sshll.u32 %s2, 4
          %s201 = int_to_ptr.vmem [resolvable:$true] %s200
          %203 = dma.vmem_to_smem %s201, 16, [#allocation6], [#allocation7]
        $region20: #{msrb_pallas.1} parent=11 // pred_fallthru
          _
        // Predicated region
        $region21: #{msrb_pallas.1} parent=11 // pred_check
          %p204 = pneg %p120
        $region22: #{msrb_pallas.1} parent=11 // pred_check_branch
          %206 = sbr.rel (%p204) target = $region24
        $region23: #{msrb_pallas.1} parent=11 // pred_region
          %208 = vsyncadd [#allocation7], 0
          %s210 = sshll.u32 %s3, 4
          %s211 = int_to_ptr.vmem [resolvable:$true] %s210
          %213 = dma.vmem_to_smem %s211, 32, [#allocation8], [#allocation7]
        $region24: #{msrb_pallas.1} parent=11 // pred_fallthru
          _
        // Predicated region
        $region25: #{msrb_pallas.1} parent=11 // pred_check
          %p214 = pneg %p141
        $region26: #{msrb_pallas.1} parent=11 // pred_check_branch
          %216 = sbr.rel (%p214) target = $region28
        $region27: #{msrb_pallas.1} parent=11 // pred_region
          %218 = vsyncadd [#allocation10], 0
          %s220 = sshll.u32 %s4, 4
          %s221 = int_to_ptr.vmem [resolvable:$true] %s220
          %223 = dma.vmem_to_smem %s221, 16, [#allocation9], [#allocation10]
        $region28: #{msrb_pallas.1} parent=11 // pred_fallthru
          _
      $region12: #{msrb_pallas.1} parent=5 // pred_fallthru
        _
      %p224 = scmp.lt.s32.totalorder %s17, 4
      // Predicated region
      $region29: #{msrb_pallas.1} parent=5 // pred_check
        %p225 = pneg %p224
      $region30: #{msrb_pallas.1} parent=5 // pred_check_branch
        %227 = sbr.rel (%p225) target = $region32
      $region31: #{msrb_pallas.1} parent=5 // pred_region
        // Predicated region
        $region33: #{msrb_pallas.1} parent=31 // pred_check
          %p228 = pneg %p51
        $region34: #{msrb_pallas.1} parent=31 // pred_check_branch
          %230 = sbr.rel (%p228) target = $region36
        $region35: #{msrb_pallas.1} parent=31 // pred_region
          %p231 = scmp.lt.s32.totalorder %s24, 1
          %s232 = scalar_select %p231, %s24, 1
          %p233 = scmp.lt.s32.totalorder %s25, 1
          %s234 = scalar_select %p233, %s25, 1
          %s235 = smul.addr %s234, 8
          %s236 = smul.addr %s232, 16
          %s237 = sadd.s32 %s235, %s236
          %s238 = smul.addr %s237, 8
          %s239 = scalar_lea.vmem %s0, %s238
        $region36: #{msrb_pallas.1} parent=31 // pred_fallthru
          _
      $region32: #{msrb_pallas.1} parent=5 // pred_fallthru
        _
      %p240 = scmp.le.s32.totalorder 1, %s17
      %p241 = scmp.lt.s32.totalorder %s17, 5
      %p242 = pnand %p240, %p241
      %p243 = pneg %p242
      // Predicated region
      $region37: #{msrb_pallas.1} parent=5 // pred_check
        _
      $region38: #{msrb_pallas.1} parent=5 // pred_check_branch
        %245 = sbr.rel (%p242) target = $region40
      $region39: #{msrb_pallas.1} parent=5 // pred_region
        %s246 = ssub.s32 %s17, 1
        // Predicated region
        $region41: #{msrb_pallas.1} parent=39 // pred_check
          %p247 = pneg %p78
        $region42: #{msrb_pallas.1} parent=39 // pred_check_branch
          %249 = sbr.rel (%p247) target = $region44
        $region43: #{msrb_pallas.1} parent=39 // pred_region
          %251 = dma.done [#allocation5], 32
        $region44: #{msrb_pallas.1} parent=39 // pred_fallthru
          _
        // Predicated region
        $region45: #{msrb_pallas.1} parent=39 // pred_check
          %p252 = pneg %p99
        $region46: #{msrb_pallas.1} parent=39 // pred_check_branch
          %254 = sbr.rel (%p252) target = $region48
        $region47: #{msrb_pallas.1} parent=39 // pred_region
          %256 = dma.done [#allocation7], 16
        $region48: #{msrb_pallas.1} parent=39 // pred_fallthru
          _
        // Predicated region
        $region49: #{msrb_pallas.1} parent=39 // pred_check
          %p257 = pneg %p120
        $region50: #{msrb_pallas.1} parent=39 // pred_check_branch
          %259 = sbr.rel (%p257) target = $region52
        $region51: #{msrb_pallas.1} parent=39 // pred_region
          %261 = dma.done [#allocation7], 32
        $region52: #{msrb_pallas.1} parent=39 // pred_fallthru
          _
        // Predicated region
        $region53: #{msrb_pallas.1} parent=39 // pred_check
          %p262 = pneg %p141
        $region54: #{msrb_pallas.1} parent=39 // pred_check_branch
          %264 = sbr.rel (%p262) target = $region56
        $region55: #{msrb_pallas.1} parent=39 // pred_region
          %266 = dma.done [#allocation10], 16
        $region56: #{msrb_pallas.1} parent=39 // pred_fallthru
          _
        %267 = sfence
        %p268 = scmp.lt.s32.totalorder %s26, 1
        %s269 = scalar_select %p268, %s26, 1
        %p270 = scmp.lt.s32.totalorder %s27, 1
        %s271 = scalar_select %p270, %s27, 1
        %s272 = smul.addr %s271, 8
        %s273 = smul.addr %s269, 16
        %s274 = sadd.s32 %s272, %s273
        %s275 = smul.addr %s274, 8
        %s276 = scalar_lea.vmem %s0, %s275
        %p277 = pneg %p57
        %p278 = pneg %p54
        %p279 = pneg %p78
        %p280 = pneg %p75
        %p281 = pneg %p99
        %p282 = pneg %p96
        %p283 = pneg %p120
        %p284 = pneg %p117
        %p285 = pneg %p141
        %p286 = pneg %p138
        %p287 = pneg %p169
        %p288 = pneg %p166
        %s289 = sand.u32 %s156, 1
        %s290 = scalar_lea.sflag [#allocation4], %s289
        %s291 = sand.u32 %s156, 1
        %s292 = smul.addr %s291, 32
        %s293 = scalar_lea.vmem [#allocation11], %s292
        %p294 = scmp.lt.s32.totalorder %s26, 1
        %s295 = scalar_select %p294, %s26, 1
        %p296 = scmp.lt.s32.totalorder %s27, 1
        %s297 = scalar_select %p296, %s27, 1
        %s298 = smul.addr %s297, 8
        %s299 = smul.addr %s295, 16
        %s300 = sadd.s32 %s298, %s299
        %s301 = smul.addr %s300, 8
        %s302 = scalar_lea.vmem %s0, %s301
        %v303 = vld [vmem:[%s302] sm:$0xff]
        %v304 = vld [vmem:[%s302 + $0x8] sm:$0xf]
        %v305 = vld [vmem:[%s302 + $0x10] sm:$0xff]
        %v306 = vld [vmem:[%s302 + $0x18] sm:$0xf]
        %v307 = vld [vmem:[%s302 + $0x20] sm:$0xff]
        %v308 = vld [vmem:[%s302 + $0x28] sm:$0xf]
        %v309 = vld [vmem:[%s302 + $0x30] sm:$0xff]
        %v310 = vld [vmem:[%s302 + $0x38] sm:$0xf]
        %s311 = sld [smem:[#allocation6]]
        %v312 = vstv %s311
        %s313 = sld [smem:[#allocation3]]
        %v314 = vstv %s313
        %v315 = vmul.f32 %v314, %v303
        %v316 = vmul.f32 %v314, %v304
        %v317 = vadd.f32 %v312, %v315
        %v318 = vadd.f32 %v312, %v316
        %s319 = sld [smem:[#allocation3 + $0x10]]
        %v320 = vstv %s319
        %v321 = vmul.f32 %v320, %v303
        %v322 = vmul.f32 %v320, %v304
        %325 = vrot.lane.b32.xlu0 %v321, 127
        %v326 = vpop.permute.xlu0 %325
        %327 = vrot.lane.b32.xlu0 %v322, 127
        %v328 = vpop.permute.xlu0 %327
        %v331 = vadd.f32 %v317, %v326
        %v332 = vadd.f32 %v318, %v328
        %s333 = sld [smem:[#allocation3 + $0x20]]
        %v334 = vstv %s333
        %v335 = vmul.f32 %v334, %v303
        %v336 = vmul.f32 %v334, %v304
        %339 = vrot.lane.b32.xlu0 %v335, 126
        %v340 = vpop.permute.xlu0 %339
        %341 = vrot.lane.b32.xlu0 %v336, 126
        %v342 = vpop.permute.xlu0 %341
        %v345 = vadd.f32 %v331, %v340
        %v346 = vadd.f32 %v332, %v342
        %s347 = sld [smem:[#allocation3 + $0x30]]
        %v348 = vstv %s347
        %v349 = vmul.f32 %v348, %v303
        %v350 = vmul.f32 %v348, %v304
        %vm353 = vcmask 1046528
        %v354 = vrot.slane %v349, 1
        %v355 = vrot.slane %v350, 1
        %v356 = vsel %vm353, %v354, %v355
        %v359 = vadd.f32 %v345, %v356
        %v360 = vadd.f32 %v346, %v355
        %s361 = sld [smem:[#allocation3 + $0x40]]
        %v362 = vstv %s361
        %v363 = vmul.f32 %v362, %v303
        %v364 = vmul.f32 %v362, %v304
        %v367 = vrot.slane %v363, 1
        %v368 = vrot.slane %v364, 1
        %v369 = vsel %vm353, %v367, %v368
        %370 = vrot.lane.b32.xlu0 %v369, 127
        %v371 = vpop.permute.xlu0 %370
        %372 = vrot.lane.b32.xlu0 %v368, 127
        %v373 = vpop.permute.xlu0 %372
        %v376 = vadd.f32 %v359, %v371
        %v377 = vadd.f32 %v360, %v373
        %s378 = sld [smem:[#allocation3 + $0x50]]
        %v379 = vstv %s378
        %v380 = vmul.f32 %v379, %v303
        %v381 = vmul.f32 %v379, %v304
        %v384 = vrot.slane %v380, 1
        %v385 = vrot.slane %v381, 1
        %v386 = vsel %vm353, %v384, %v385
        %387 = vrot.lane.b32.xlu0 %v386, 126
        %v388 = vpop.permute.xlu0 %387
        %389 = vrot.lane.b32.xlu0 %v385, 126
        %v390 = vpop.permute.xlu0 %389
        %v393 = vadd.f32 %v376, %v388
        %v394 = vadd.f32 %v377, %v390
        %s395 = sld [smem:[#allocation3 + $0x60]]
        %v396 = vstv %s395
        %v397 = vmul.f32 %v396, %v303
        %v398 = vmul.f32 %v396, %v304
        %vm401 = vcmask 1045504
        %v402 = vrot.slane %v397, 2
        %v403 = vrot.slane %v398, 2
        %v404 = vsel %vm401, %v402, %v403
        %v407 = vadd.f32 %v393, %v404
        %v408 = vadd.f32 %v394, %v403
        %s409 = sld [smem:[#allocation3 + $0x70]]
        %v410 = vstv %s409
        %v411 = vmul.f32 %v410, %v303
        %v412 = vmul.f32 %v410, %v304
        %v415 = vrot.slane %v411, 2
        %v416 = vrot.slane %v412, 2
        %v417 = vsel %vm401, %v415, %v416
        %418 = vrot.lane.b32.xlu0 %v417, 127
        %v419 = vpop.permute.xlu0 %418
        %420 = vrot.lane.b32.xlu0 %v416, 127
        %v421 = vpop.permute.xlu0 %420
        %v424 = vadd.f32 %v407, %v419
        %v425 = vadd.f32 %v408, %v421
        %s426 = sld [smem:[#allocation3 + $0x80]]
        %v427 = vstv %s426
        %v428 = vmul.f32 %v427, %v303
        %v429 = vmul.f32 %v427, %v304
        %v432 = vrot.slane %v428, 2
        %v433 = vrot.slane %v429, 2
        %v434 = vsel %vm401, %v432, %v433
        %435 = vrot.lane.b32.xlu0 %v434, 126
        %v436 = vpop.permute.xlu0 %435
        %437 = vrot.lane.b32.xlu0 %v433, 126
        %v438 = vpop.permute.xlu0 %437
        %v441 = vadd.f32 %v424, %v436
        %v442 = vadd.f32 %v425, %v438
        %s443 = sld [smem:[#allocation3 + $0x4]]
        %v444 = vstv %s443
        %v445 = vmul.f32 %v444, %v305
        %v446 = vmul.f32 %v444, %v306
        %v447 = vadd.f32 %v441, %v445
        %v448 = vadd.f32 %v442, %v446
        %s449 = sld [smem:[#allocation3 + $0x14]]
        %v450 = vstv %s449
        %v451 = vmul.f32 %v450, %v305
        %v452 = vmul.f32 %v450, %v306
        %455 = vrot.lane.b32.xlu0 %v451, 127
        %v456 = vpop.permute.xlu0 %455
        %457 = vrot.lane.b32.xlu0 %v452, 127
        %v458 = vpop.permute.xlu0 %457
        %v461 = vadd.f32 %v447, %v456
        %v462 = vadd.f32 %v448, %v458
        %s463 = sld [smem:[#allocation3 + $0x24]]
        %v464 = vstv %s463
        %v465 = vmul.f32 %v464, %v305
        %v466 = vmul.f32 %v464, %v306
        %469 = vrot.lane.b32.xlu0 %v465, 126
        %v470 = vpop.permute.xlu0 %469
        %471 = vrot.lane.b32.xlu0 %v466, 126
        %v472 = vpop.permute.xlu0 %471
        %v475 = vadd.f32 %v461, %v470
        %v476 = vadd.f32 %v462, %v472
        %s477 = sld [smem:[#allocation3 + $0x34]]
        %v478 = vstv %s477
        %v479 = vmul.f32 %v478, %v305
        %v480 = vmul.f32 %v478, %v306
        %v483 = vrot.slane %v479, 1
        %v484 = vrot.slane %v480, 1
        %v485 = vsel %vm353, %v483, %v484
        %v488 = vadd.f32 %v475, %v485
        %v489 = vadd.f32 %v476, %v484
        %s490 = sld [smem:[#allocation3 + $0x44]]
        %v491 = vstv %s490
        %v492 = vmul.f32 %v491, %v305
        %v493 = vmul.f32 %v491, %v306
        %v496 = vrot.slane %v492, 1
        %v497 = vrot.slane %v493, 1
        %v498 = vsel %vm353, %v496, %v497
        %499 = vrot.lane.b32.xlu0 %v498, 127
        %v500 = vpop.permute.xlu0 %499
        %501 = vrot.lane.b32.xlu0 %v497, 127
        %v502 = vpop.permute.xlu0 %501
        %v505 = vadd.f32 %v488, %v500
        %v506 = vadd.f32 %v489, %v502
        %s507 = sld [smem:[#allocation3 + $0x54]]
        %v508 = vstv %s507
        %v509 = vmul.f32 %v508, %v305
        %v510 = vmul.f32 %v508, %v306
        %v513 = vrot.slane %v509, 1
        %v514 = vrot.slane %v510, 1
        %v515 = vsel %vm353, %v513, %v514
        %516 = vrot.lane.b32.xlu0 %v515, 126
        %v517 = vpop.permute.xlu0 %516
        %518 = vrot.lane.b32.xlu0 %v514, 126
        %v519 = vpop.permute.xlu0 %518
        %v522 = vadd.f32 %v505, %v517
        %v523 = vadd.f32 %v506, %v519
        %s524 = sld [smem:[#allocation3 + $0x64]]
        %v525 = vstv %s524
        %v526 = vmul.f32 %v525, %v305
        %v527 = vmul.f32 %v525, %v306
        %v530 = vrot.slane %v526, 2
        %v531 = vrot.slane %v527, 2
        %v532 = vsel %vm401, %v530, %v531
        %v535 = vadd.f32 %v522, %v532
        %v536 = vadd.f32 %v523, %v531
        %s537 = sld [smem:[#allocation3 + $0x74]]
        %v538 = vstv %s537
        %v539 = vmul.f32 %v538, %v305
        %v540 = vmul.f32 %v538, %v306
        %v543 = vrot.slane %v539, 2
        %v544 = vrot.slane %v540, 2
        %v545 = vsel %vm401, %v543, %v544
        %546 = vrot.lane.b32.xlu0 %v545, 127
        %v547 = vpop.permute.xlu0 %546
        %548 = vrot.lane.b32.xlu0 %v544, 127
        %v549 = vpop.permute.xlu0 %548
        %v552 = vadd.f32 %v535, %v547
        %v553 = vadd.f32 %v536, %v549
        %s554 = sld [smem:[#allocation3 + $0x84]]
        %v555 = vstv %s554
        %v556 = vmul.f32 %v555, %v305
        %v557 = vmul.f32 %v555, %v306
        %v560 = vrot.slane %v556, 2
        %v561 = vrot.slane %v557, 2
        %v562 = vsel %vm401, %v560, %v561
        %563 = vrot.lane.b32.xlu0 %v562, 126
        %v564 = vpop.permute.xlu0 %563
        %565 = vrot.lane.b32.xlu0 %v561, 126
        %v566 = vpop.permute.xlu0 %565
        %v569 = vadd.f32 %v552, %v564
        %v570 = vadd.f32 %v553, %v566
        %s571 = sld [smem:[#allocation3 + $0x8]]
        %v572 = vstv %s571
        %v573 = vmul.f32 %v572, %v307
        %v574 = vmul.f32 %v572, %v308
        %v575 = vadd.f32 %v569, %v573
        %v576 = vadd.f32 %v570, %v574
        %s577 = sld [smem:[#allocation3 + $0x18]]
        %v578 = vstv %s577
        %v579 = vmul.f32 %v578, %v307
        %v580 = vmul.f32 %v578, %v308
        %583 = vrot.lane.b32.xlu0 %v579, 127
        %v584 = vpop.permute.xlu0 %583
        %585 = vrot.lane.b32.xlu0 %v580, 127
        %v586 = vpop.permute.xlu0 %585
        %v589 = vadd.f32 %v575, %v584
        %v590 = vadd.f32 %v576, %v586
        %s591 = sld [smem:[#allocation3 + $0x28]]
        %v592 = vstv %s591
        %v593 = vmul.f32 %v592, %v307
        %v594 = vmul.f32 %v592, %v308
        %597 = vrot.lane.b32.xlu0 %v593, 126
        %v598 = vpop.permute.xlu0 %597
        %599 = vrot.lane.b32.xlu0 %v594, 126
        %v600 = vpop.permute.xlu0 %599
        %v603 = vadd.f32 %v589, %v598
        %v604 = vadd.f32 %v590, %v600
        %s605 = sld [smem:[#allocation3 + $0x38]]
        %v606 = vstv %s605
        %v607 = vmul.f32 %v606, %v307
        %v608 = vmul.f32 %v606, %v308
        %v611 = vrot.slane %v607, 1
        %v612 = vrot.slane %v608, 1
        %v613 = vsel %vm353, %v611, %v612
        %v616 = vadd.f32 %v603, %v613
        %v617 = vadd.f32 %v604, %v612
        %s618 = sld [smem:[#allocation3 + $0x48]]
        %v619 = vstv %s618
        %v620 = vmul.f32 %v619, %v307
        %v621 = vmul.f32 %v619, %v308
        %v624 = vrot.slane %v620, 1
        %v625 = vrot.slane %v621, 1
        %v626 = vsel %vm353, %v624, %v625
        %627 = vrot.lane.b32.xlu0 %v626, 127
        %v628 = vpop.permute.xlu0 %627
        %629 = vrot.lane.b32.xlu0 %v625, 127
        %v630 = vpop.permute.xlu0 %629
        %v633 = vadd.f32 %v616, %v628
        %v634 = vadd.f32 %v617, %v630
        %s635 = sld [smem:[#allocation3 + $0x58]]
        %v636 = vstv %s635
        %v637 = vmul.f32 %v636, %v307
        %v638 = vmul.f32 %v636, %v308
        %v641 = vrot.slane %v637, 1
        %v642 = vrot.slane %v638, 1
        %v643 = vsel %vm353, %v641, %v642
        %644 = vrot.lane.b32.xlu0 %v643, 126
        %v645 = vpop.permute.xlu0 %644
        %646 = vrot.lane.b32.xlu0 %v642, 126
        %v647 = vpop.permute.xlu0 %646
        %v650 = vadd.f32 %v633, %v645
        %v651 = vadd.f32 %v634, %v647
        %s652 = sld [smem:[#allocation3 + $0x68]]
        %v653 = vstv %s652
        %v654 = vmul.f32 %v653, %v307
        %v655 = vmul.f32 %v653, %v308
        %v658 = vrot.slane %v654, 2
        %v659 = vrot.slane %v655, 2
        %v660 = vsel %vm401, %v658, %v659
        %v663 = vadd.f32 %v650, %v660
        %v664 = vadd.f32 %v651, %v659
        %s665 = sld [smem:[#allocation3 + $0x78]]
        %v666 = vstv %s665
        %v667 = vmul.f32 %v666, %v307
        %v668 = vmul.f32 %v666, %v308
        %v671 = vrot.slane %v667, 2
        %v672 = vrot.slane %v668, 2
        %v673 = vsel %vm401, %v671, %v672
        %674 = vrot.lane.b32.xlu0 %v673, 127
        %v675 = vpop.permute.xlu0 %674
        %676 = vrot.lane.b32.xlu0 %v672, 127
        %v677 = vpop.permute.xlu0 %676
        %v680 = vadd.f32 %v663, %v675
        %v681 = vadd.f32 %v664, %v677
        %s682 = sld [smem:[#allocation3 + $0x88]]
        %v683 = vstv %s682
        %v684 = vmul.f32 %v683, %v307
        %v685 = vmul.f32 %v683, %v308
        %v688 = vrot.slane %v684, 2
        %v689 = vrot.slane %v685, 2
        %v690 = vsel %vm401, %v688, %v689
        %691 = vrot.lane.b32.xlu0 %v690, 126
        %v692 = vpop.permute.xlu0 %691
        %693 = vrot.lane.b32.xlu0 %v689, 126
        %v694 = vpop.permute.xlu0 %693
        %v697 = vadd.f32 %v680, %v692
        %v698 = vadd.f32 %v681, %v694
        %s699 = sld [smem:[#allocation3 + $0xc]]
        %v700 = vstv %s699
        %v701 = vmul.f32 %v700, %v309
        %v702 = vmul.f32 %v700, %v310
        %v703 = vadd.f32 %v697, %v701
        %v704 = vadd.f32 %v698, %v702
        %s705 = sld [smem:[#allocation3 + $0x1c]]
        %v706 = vstv %s705
        %v707 = vmul.f32 %v706, %v309
        %v708 = vmul.f32 %v706, %v310
        %711 = vrot.lane.b32.xlu0 %v707, 127
        %v712 = vpop.permute.xlu0 %711
        %713 = vrot.lane.b32.xlu0 %v708, 127
        %v714 = vpop.permute.xlu0 %713
        %v717 = vadd.f32 %v703, %v712
        %v718 = vadd.f32 %v704, %v714
        %s719 = sld [smem:[#allocation3 + $0x2c]]
        %v720 = vstv %s719
        %v721 = vmul.f32 %v720, %v309
        %v722 = vmul.f32 %v720, %v310
        %725 = vrot.lane.b32.xlu0 %v721, 126
        %v726 = vpop.permute.xlu0 %725
        %727 = vrot.lane.b32.xlu0 %v722, 126
        %v728 = vpop.permute.xlu0 %727
        %v731 = vadd.f32 %v717, %v726
        %v732 = vadd.f32 %v718, %v728
        %s733 = sld [smem:[#allocation3 + $0x3c]]
        %v734 = vstv %s733
        %v735 = vmul.f32 %v734, %v309
        %v736 = vmul.f32 %v734, %v310
        %v739 = vrot.slane %v735, 1
        %v740 = vrot.slane %v736, 1
        %v741 = vsel %vm353, %v739, %v740
        %v744 = vadd.f32 %v731, %v741
        %v745 = vadd.f32 %v732, %v740
        %s746 = sld [smem:[#allocation3 + $0x4c]]
        %v747 = vstv %s746
        %v748 = vmul.f32 %v747, %v309
        %v749 = vmul.f32 %v747, %v310
        %v752 = vrot.slane %v748, 1
        %v753 = vrot.slane %v749, 1
        %v754 = vsel %vm353, %v752, %v753
        %755 = vrot.lane.b32.xlu0 %v754, 127
        %v756 = vpop.permute.xlu0 %755
        %757 = vrot.lane.b32.xlu0 %v753, 127
        %v758 = vpop.permute.xlu0 %757
        %v761 = vadd.f32 %v744, %v756
        %v762 = vadd.f32 %v745, %v758
        %s763 = sld [smem:[#allocation3 + $0x5c]]
        %v764 = vstv %s763
        %v765 = vmul.f32 %v764, %v309
        %v766 = vmul.f32 %v764, %v310
        %v769 = vrot.slane %v765, 1
        %v770 = vrot.slane %v766, 1
        %v771 = vsel %vm353, %v769, %v770
        %772 = vrot.lane.b32.xlu0 %v771, 126
        %v773 = vpop.permute.xlu0 %772
        %774 = vrot.lane.b32.xlu0 %v770, 126
        %v775 = vpop.permute.xlu0 %774
        %v778 = vadd.f32 %v761, %v773
        %v779 = vadd.f32 %v762, %v775
        %s780 = sld [smem:[#allocation3 + $0x6c]]
        %v781 = vstv %s780
        %v782 = vmul.f32 %v781, %v309
        %v783 = vmul.f32 %v781, %v310
        %v786 = vrot.slane %v782, 2
        %v787 = vrot.slane %v783, 2
        %v788 = vsel %vm401, %v786, %v787
        %v791 = vadd.f32 %v778, %v788
        %v792 = vadd.f32 %v779, %v787
        %s793 = sld [smem:[#allocation3 + $0x7c]]
        %v794 = vstv %s793
        %v795 = vmul.f32 %v794, %v309
        %v796 = vmul.f32 %v794, %v310
        %v799 = vrot.slane %v795, 2
        %v800 = vrot.slane %v796, 2
        %v801 = vsel %vm401, %v799, %v800
        %802 = vrot.lane.b32.xlu0 %v801, 127
        %v803 = vpop.permute.xlu0 %802
        %804 = vrot.lane.b32.xlu0 %v800, 127
        %v805 = vpop.permute.xlu0 %804
        %v808 = vadd.f32 %v791, %v803
        %v809 = vadd.f32 %v792, %v805
        %s810 = sld [smem:[#allocation3 + $0x8c]]
        %v811 = vstv %s810
        %v812 = vmul.f32 %v811, %v309
        %v813 = vmul.f32 %v811, %v310
        %v816 = vrot.slane %v812, 2
        %v817 = vrot.slane %v813, 2
        %v818 = vsel %vm401, %v816, %v817
        %819 = vrot.lane.b32.xlu0 %v818, 126
        %v820 = vpop.permute.xlu0 %819
        %821 = vrot.lane.b32.xlu0 %v817, 126
        %v822 = vpop.permute.xlu0 %821
        %v825 = vadd.f32 %v808, %v820
        %v826 = vadd.f32 %v809, %v822
        %v827 = vmax.f32 %v825, 0.0
        %v828 = vmax.f32 %v826, 0.0
        %831 = vrot.lane.b32.xlu0 %v827, 1
        %v832 = vpop.permute.xlu0 %831
        %833 = vrot.lane.b32.xlu0 %v828, 1
        %v834 = vpop.permute.xlu0 %833
        %vm837 = vcmask 138248
        %838 = vst.msk [vmem:[#allocation2] sm:$0xff] %vm837, %v832
        %vm839 = vcmask 132104
        %840 = vst.msk [vmem:[#allocation2 + $0x8] sm:$0x3] %vm839, %v834
        %841 = vrot.lane.b32.xlu0 %v827, 127
        %v842 = vpop.permute.xlu0 %841
        %843 = vrot.lane.b32.xlu0 %v828, 127
        %v844 = vpop.permute.xlu0 %843
        %vm847 = vcmask 7168
        %848 = vst.msk [vmem:[#allocation2] sm:$0xff] %vm847, %v842
        %vm849 = vcmask 1024
        %850 = vst.msk [vmem:[#allocation2 + $0x8] sm:$0x3] %vm849, %v844
        %851 = vrot.lane.b32.xlu0 %v827, 3
        %v852 = vpop.permute.xlu0 %851
        %853 = vrot.lane.b32.xlu0 %v828, 3
        %v854 = vpop.permute.xlu0 %853
        %vm857 = vcmask 146568
        %858 = vst.msk [vmem:[#allocation2] sm:$0xff] %vm857, %v852
        %vm859 = vcmask 140424
        %860 = vst.msk [vmem:[#allocation2 + $0x8] sm:$0x3] %vm859, %v854
        %s861 = sld [smem:[#allocation6 + $0x1]]
        %v862 = vstv %s861
        %s863 = sld [smem:[#allocation3 + $0x1]]
        %v864 = vstv %s863
        %v865 = vmul.f32 %v864, %v303
        %v866 = vmul.f32 %v864, %v304
        %v867 = vadd.f32 %v862, %v865
        %v868 = vadd.f32 %v862, %v866
        %s869 = sld [smem:[#allocation3 + $0x11]]
        %v870 = vstv %s869
        %v871 = vmul.f32 %v870, %v303
        %v872 = vmul.f32 %v870, %v304
        %875 = vrot.lane.b32.xlu0 %v871, 127
        %v876 = vpop.permute.xlu0 %875
        %877 = vrot.lane.b32.xlu0 %v872, 127
        %v878 = vpop.permute.xlu0 %877
        %v881 = vadd.f32 %v867, %v876
        %v882 = vadd.f32 %v868, %v878
        %s883 = sld [smem:[#allocation3 + $0x21]]
        %v884 = vstv %s883
        %v885 = vmul.f32 %v884, %v303
        %v886 = vmul.f32 %v884, %v304
        %889 = vrot.lane.b32.xlu0 %v885, 126
        %v890 = vpop.permute.xlu0 %889
        %891 = vrot.lane.b32.xlu0 %v886, 126
        %v892 = vpop.permute.xlu0 %891
        %v895 = vadd.f32 %v881, %v890
        %v896 = vadd.f32 %v882, %v892
        %s897 = sld [smem:[#allocation3 + $0x31]]
        %v898 = vstv %s897
        %v899 = vmul.f32 %v898, %v303
        %v900 = vmul.f32 %v898, %v304
        %v903 = vrot.slane %v899, 1
        %v904 = vrot.slane %v900, 1
        %v905 = vsel %vm353, %v903, %v904
        %v908 = vadd.f32 %v895, %v905
        %v909 = vadd.f32 %v896, %v904
        %s910 = sld [smem:[#allocation3 + $0x41]]
        %v911 = vstv %s910
        %v912 = vmul.f32 %v911, %v303
        %v913 = vmul.f32 %v911, %v304
        %v916 = vrot.slane %v912, 1
        %v917 = vrot.slane %v913, 1
        %v918 = vsel %vm353, %v916, %v917
        %919 = vrot.lane.b32.xlu0 %v918, 127
        %v920 = vpop.permute.xlu0 %919
        %921 = vrot.lane.b32.xlu0 %v917, 127
        %v922 = vpop.permute.xlu0 %921
        %v925 = vadd.f32 %v908, %v920
        %v926 = vadd.f32 %v909, %v922
        %s927 = sld [smem:[#allocation3 + $0x51]]
        %v928 = vstv %s927
        %v929 = vmul.f32 %v928, %v303
        %v930 = vmul.f32 %v928, %v304
        %v933 = vrot.slane %v929, 1
        %v934 = vrot.slane %v930, 1
        %v935 = vsel %vm353, %v933, %v934
        %936 = vrot.lane.b32.xlu0 %v935, 126
        %v937 = vpop.permute.xlu0 %936
        %938 = vrot.lane.b32.xlu0 %v934, 126
        %v939 = vpop.permute.xlu0 %938
        %v942 = vadd.f32 %v925, %v937
        %v943 = vadd.f32 %v926, %v939
        %s944 = sld [smem:[#allocation3 + $0x61]]
        %v945 = vstv %s944
        %v946 = vmul.f32 %v945, %v303
        %v947 = vmul.f32 %v945, %v304
        %v950 = vrot.slane %v946, 2
        %v951 = vrot.slane %v947, 2
        %v952 = vsel %vm401, %v950, %v951
        %v955 = vadd.f32 %v942, %v952
        %v956 = vadd.f32 %v943, %v951
        %s957 = sld [smem:[#allocation3 + $0x71]]
        %v958 = vstv %s957
        %v959 = vmul.f32 %v958, %v303
        %v960 = vmul.f32 %v958, %v304
        %v963 = vrot.slane %v959, 2
        %v964 = vrot.slane %v960, 2
        %v965 = vsel %vm401, %v963, %v964
        %966 = vrot.lane.b32.xlu0 %v965, 127
        %v967 = vpop.permute.xlu0 %966
        %968 = vrot.lane.b32.xlu0 %v964, 127
        %v969 = vpop.permute.xlu0 %968
        %v972 = vadd.f32 %v955, %v967
        %v973 = vadd.f32 %v956, %v969
        %s974 = sld [smem:[#allocation3 + $0x81]]
        %v975 = vstv %s974
        %v976 = vmul.f32 %v975, %v303
        %v977 = vmul.f32 %v975, %v304
        %v980 = vrot.slane %v976, 2
        %v981 = vrot.slane %v977, 2
        %v982 = vsel %vm401, %v980, %v981
        %983 = vrot.lane.b32.xlu0 %v982, 126
        %v984 = vpop.permute.xlu0 %983
        %985 = vrot.lane.b32.xlu0 %v981, 126
        %v986 = vpop.permute.xlu0 %985
        %v989 = vadd.f32 %v972, %v984
        %v990 = vadd.f32 %v973, %v986
        %s991 = sld [smem:[#allocation3 + $0x5]]
        %v992 = vstv %s991
        %v993 = vmul.f32 %v992, %v305
        %v994 = vmul.f32 %v992, %v306
        %v995 = vadd.f32 %v989, %v993
        %v996 = vadd.f32 %v990, %v994
        %s997 = sld [smem:[#allocation3 + $0x15]]
        %v998 = vstv %s997
        %v999 = vmul.f32 %v998, %v305
        %v1000 = vmul.f32 %v998, %v306
        %1003 = vrot.lane.b32.xlu0 %v999, 127
        %v1004 = vpop.permute.xlu0 %1003
        %1005 = vrot.lane.b32.xlu0 %v1000, 127
        %v1006 = vpop.permute.xlu0 %1005
        %v1009 = vadd.f32 %v995, %v1004
        %v1010 = vadd.f32 %v996, %v1006
        %s1011 = sld [smem:[#allocation3 + $0x25]]
        %v1012 = vstv %s1011
        %v1013 = vmul.f32 %v1012, %v305
        %v1014 = vmul.f32 %v1012, %v306
        %1017 = vrot.lane.b32.xlu0 %v1013, 126
        %v1018 = vpop.permute.xlu0 %1017
        %1019 = vrot.lane.b32.xlu0 %v1014, 126
        %v1020 = vpop.permute.xlu0 %1019
        %v1023 = vadd.f32 %v1009, %v1018
        %v1024 = vadd.f32 %v1010, %v1020
        %s1025 = sld [smem:[#allocation3 + $0x35]]
        %v1026 = vstv %s1025
        %v1027 = vmul.f32 %v1026, %v305
        %v1028 = vmul.f32 %v1026, %v306
        %v1031 = vrot.slane %v1027, 1
        %v1032 = vrot.slane %v1028, 1
        %v1033 = vsel %vm353, %v1031, %v1032
        %v1036 = vadd.f32 %v1023, %v1033
        %v1037 = vadd.f32 %v1024, %v1032
        %s1038 = sld [smem:[#allocation3 + $0x45]]
        %v1039 = vstv %s1038
        %v1040 = vmul.f32 %v1039, %v305
        %v1041 = vmul.f32 %v1039, %v306
        %v1044 = vrot.slane %v1040, 1
        %v1045 = vrot.slane %v1041, 1
        %v1046 = vsel %vm353, %v1044, %v1045
        %1047 = vrot.lane.b32.xlu0 %v1046, 127
        %v1048 = vpop.permute.xlu0 %1047
        %1049 = vrot.lane.b32.xlu0 %v1045, 127
        %v1050 = vpop.permute.xlu0 %1049
        %v1053 = vadd.f32 %v1036, %v1048
        %v1054 = vadd.f32 %v1037, %v1050
        %s1055 = sld [smem:[#allocation3 + $0x55]]
        %v1056 = vstv %s1055
        %v1057 = vmul.f32 %v1056, %v305
        %v1058 = vmul.f32 %v1056, %v306
        %v1061 = vrot.slane %v1057, 1
        %v1062 = vrot.slane %v1058, 1
        %v1063 = vsel %vm353, %v1061, %v1062
        %1064 = vrot.lane.b32.xlu0 %v1063, 126
        %v1065 = vpop.permute.xlu0 %1064
        %1066 = vrot.lane.b32.xlu0 %v1062, 126
        %v1067 = vpop.permute.xlu0 %1066
        %v1070 = vadd.f32 %v1053, %v1065
        %v1071 = vadd.f32 %v1054, %v1067
        %s1072 = sld [smem:[#allocation3 + $0x65]]
        %v1073 = vstv %s1072
        %v1074 = vmul.f32 %v1073, %v305
        %v1075 = vmul.f32 %v1073, %v306
        %v1078 = vrot.slane %v1074, 2
        %v1079 = vrot.slane %v1075, 2
        %v1080 = vsel %vm401, %v1078, %v1079
        %v1083 = vadd.f32 %v1070, %v1080
        %v1084 = vadd.f32 %v1071, %v1079
        %s1085 = sld [smem:[#allocation3 + $0x75]]
        %v1086 = vstv %s1085
        %v1087 = vmul.f32 %v1086, %v305
        %v1088 = vmul.f32 %v1086, %v306
        %v1091 = vrot.slane %v1087, 2
        %v1092 = vrot.slane %v1088, 2
        %v1093 = vsel %vm401, %v1091, %v1092
        %1094 = vrot.lane.b32.xlu0 %v1093, 127
        %v1095 = vpop.permute.xlu0 %1094
        %1096 = vrot.lane.b32.xlu0 %v1092, 127
        %v1097 = vpop.permute.xlu0 %1096
        %v1100 = vadd.f32 %v1083, %v1095
        %v1101 = vadd.f32 %v1084, %v1097
        %s1102 = sld [smem:[#allocation3 + $0x85]]
        %v1103 = vstv %s1102
        %v1104 = vmul.f32 %v1103, %v305
        %v1105 = vmul.f32 %v1103, %v306
        %v1108 = vrot.slane %v1104, 2
        %v1109 = vrot.slane %v1105, 2
        %v1110 = vsel %vm401, %v1108, %v1109
        %1111 = vrot.lane.b32.xlu0 %v1110, 126
        %v1112 = vpop.permute.xlu0 %1111
        %1113 = vrot.lane.b32.xlu0 %v1109, 126
        %v1114 = vpop.permute.xlu0 %1113
        %v1117 = vadd.f32 %v1100, %v1112
        %v1118 = vadd.f32 %v1101, %v1114
        %s1119 = sld [smem:[#allocation3 + $0x9]]
        %v1120 = vstv %s1119
        %v1121 = vmul.f32 %v1120, %v307
        %v1122 = vmul.f32 %v1120, %v308
        %v1123 = vadd.f32 %v1117, %v1121
        %v1124 = vadd.f32 %v1118, %v1122
        %s1125 = sld [smem:[#allocation3 + $0x19]]
        %v1126 = vstv %s1125
        %v1127 = vmul.f32 %v1126, %v307
        %v1128 = vmul.f32 %v1126, %v308
        %1131 = vrot.lane.b32.xlu0 %v1127, 127
        %v1132 = vpop.permute.xlu0 %1131
        %1133 = vrot.lane.b32.xlu0 %v1128, 127
        %v1134 = vpop.permute.xlu0 %1133
        %v1137 = vadd.f32 %v1123, %v1132
        %v1138 = vadd.f32 %v1124, %v1134
        %s1139 = sld [smem:[#allocation3 + $0x29]]
        %v1140 = vstv %s1139
        %v1141 = vmul.f32 %v1140, %v307
        %v1142 = vmul.f32 %v1140, %v308
        %1145 = vrot.lane.b32.xlu0 %v1141, 126
        %v1146 = vpop.permute.xlu0 %1145
        %1147 = vrot.lane.b32.xlu0 %v1142, 126
        %v1148 = vpop.permute.xlu0 %1147
        %v1151 = vadd.f32 %v1137, %v1146
        %v1152 = vadd.f32 %v1138, %v1148
        %s1153 = sld [smem:[#allocation3 + $0x39]]
        %v1154 = vstv %s1153
        %v1155 = vmul.f32 %v1154, %v307
        %v1156 = vmul.f32 %v1154, %v308
        %v1159 = vrot.slane %v1155, 1
        %v1160 = vrot.slane %v1156, 1
        %v1161 = vsel %vm353, %v1159, %v1160
        %v1164 = vadd.f32 %v1151, %v1161
        %v1165 = vadd.f32 %v1152, %v1160
        %s1166 = sld [smem:[#allocation3 + $0x49]]
        %v1167 = vstv %s1166
        %v1168 = vmul.f32 %v1167, %v307
        %v1169 = vmul.f32 %v1167, %v308
        %v1172 = vrot.slane %v1168, 1
        %v1173 = vrot.slane %v1169, 1
        %v1174 = vsel %vm353, %v1172, %v1173
        %1175 = vrot.lane.b32.xlu0 %v1174, 127
        %v1176 = vpop.permute.xlu0 %1175
        %1177 = vrot.lane.b32.xlu0 %v1173, 127
        %v1178 = vpop.permute.xlu0 %1177
        %v1181 = vadd.f32 %v1164, %v1176
        %v1182 = vadd.f32 %v1165, %v1178
        %s1183 = sld [smem:[#allocation3 + $0x59]]
        %v1184 = vstv %s1183
        %v1185 = vmul.f32 %v1184, %v307
        %v1186 = vmul.f32 %v1184, %v308
        %v1189 = vrot.slane %v1185, 1
        %v1190 = vrot.slane %v1186, 1
        %v1191 = vsel %vm353, %v1189, %v1190
        %1192 = vrot.lane.b32.xlu0 %v1191, 126
        %v1193 = vpop.permute.xlu0 %1192
        %1194 = vrot.lane.b32.xlu0 %v1190, 126
        %v1195 = vpop.permute.xlu0 %1194
        %v1198 = vadd.f32 %v1181, %v1193
        %v1199 = vadd.f32 %v1182, %v1195
        %s1200 = sld [smem:[#allocation3 + $0x69]]
        %v1201 = vstv %s1200
        %v1202 = vmul.f32 %v1201, %v307
        %v1203 = vmul.f32 %v1201, %v308
        %v1206 = vrot.slane %v1202, 2
        %v1207 = vrot.slane %v1203, 2
        %v1208 = vsel %vm401, %v1206, %v1207
        %v1211 = vadd.f32 %v1198, %v1208
        %v1212 = vadd.f32 %v1199, %v1207
        %s1213 = sld [smem:[#allocation3 + $0x79]]
        %v1214 = vstv %s1213
        %v1215 = vmul.f32 %v1214, %v307
        %v1216 = vmul.f32 %v1214, %v308
        %v1219 = vrot.slane %v1215, 2
        %v1220 = vrot.slane %v1216, 2
        %v1221 = vsel %vm401, %v1219, %v1220
        %1222 = vrot.lane.b32.xlu0 %v1221, 127
        %v1223 = vpop.permute.xlu0 %1222
        %1224 = vrot.lane.b32.xlu0 %v1220, 127
        %v1225 = vpop.permute.xlu0 %1224
        %v1228 = vadd.f32 %v1211, %v1223
        %v1229 = vadd.f32 %v1212, %v1225
        %s1230 = sld [smem:[#allocation3 + $0x89]]
        %v1231 = vstv %s1230
        %v1232 = vmul.f32 %v1231, %v307
        %v1233 = vmul.f32 %v1231, %v308
        %v1236 = vrot.slane %v1232, 2
        %v1237 = vrot.slane %v1233, 2
        %v1238 = vsel %vm401, %v1236, %v1237
        %1239 = vrot.lane.b32.xlu0 %v1238, 126
        %v1240 = vpop.permute.xlu0 %1239
        %1241 = vrot.lane.b32.xlu0 %v1237, 126
        %v1242 = vpop.permute.xlu0 %1241
        %v1245 = vadd.f32 %v1228, %v1240
        %v1246 = vadd.f32 %v1229, %v1242
        %s1247 = sld [smem:[#allocation3 + $0xd]]
        %v1248 = vstv %s1247
        %v1249 = vmul.f32 %v1248, %v309
        %v1250 = vmul.f32 %v1248, %v310
        %v1251 = vadd.f32 %v1245, %v1249
        %v1252 = vadd.f32 %v1246, %v1250
        %s1253 = sld [smem:[#allocation3 + $0x1d]]
        %v1254 = vstv %s1253
        %v1255 = vmul.f32 %v1254, %v309
        %v1256 = vmul.f32 %v1254, %v310
        %1259 = vrot.lane.b32.xlu0 %v1255, 127
        %v1260 = vpop.permute.xlu0 %1259
        %1261 = vrot.lane.b32.xlu0 %v1256, 127
        %v1262 = vpop.permute.xlu0 %1261
        %v1265 = vadd.f32 %v1251, %v1260
        %v1266 = vadd.f32 %v1252, %v1262
        %s1267 = sld [smem:[#allocation3 + $0x2d]]
        %v1268 = vstv %s1267
        %v1269 = vmul.f32 %v1268, %v309
        %v1270 = vmul.f32 %v1268, %v310
        %1273 = vrot.lane.b32.xlu0 %v1269, 126
        %v1274 = vpop.permute.xlu0 %1273
        %1275 = vrot.lane.b32.xlu0 %v1270, 126
        %v1276 = vpop.permute.xlu0 %1275
        %v1279 = vadd.f32 %v1265, %v1274
        %v1280 = vadd.f32 %v1266, %v1276
        %s1281 = sld [smem:[#allocation3 + $0x3d]]
        %v1282 = vstv %s1281
        %v1283 = vmul.f32 %v1282, %v309
        %v1284 = vmul.f32 %v1282, %v310
        %v1287 = vrot.slane %v1283, 1
        %v1288 = vrot.slane %v1284, 1
        %v1289 = vsel %vm353, %v1287, %v1288
        %v1292 = vadd.f32 %v1279, %v1289
        %v1293 = vadd.f32 %v1280, %v1288
        %s1294 = sld [smem:[#allocation3 + $0x4d]]
        %v1295 = vstv %s1294
        %v1296 = vmul.f32 %v1295, %v309
        %v1297 = vmul.f32 %v1295, %v310
        %v1300 = vrot.slane %v1296, 1
        %v1301 = vrot.slane %v1297, 1
        %v1302 = vsel %vm353, %v1300, %v1301
        %1303 = vrot.lane.b32.xlu0 %v1302, 127
        %v1304 = vpop.permute.xlu0 %1303
        %1305 = vrot.lane.b32.xlu0 %v1301, 127
        %v1306 = vpop.permute.xlu0 %1305
        %v1309 = vadd.f32 %v1292, %v1304
        %v1310 = vadd.f32 %v1293, %v1306
        %s1311 = sld [smem:[#allocation3 + $0x5d]]
        %v1312 = vstv %s1311
        %v1313 = vmul.f32 %v1312, %v309
        %v1314 = vmul.f32 %v1312, %v310
        %v1317 = vrot.slane %v1313, 1
        %v1318 = vrot.slane %v1314, 1
        %v1319 = vsel %vm353, %v1317, %v1318
        %1320 = vrot.lane.b32.xlu0 %v1319, 126
        %v1321 = vpop.permute.xlu0 %1320
        %1322 = vrot.lane.b32.xlu0 %v1318, 126
        %v1323 = vpop.permute.xlu0 %1322
        %v1326 = vadd.f32 %v1309, %v1321
        %v1327 = vadd.f32 %v1310, %v1323
        %s1328 = sld [smem:[#allocation3 + $0x6d]]
        %v1329 = vstv %s1328
        %v1330 = vmul.f32 %v1329, %v309
        %v1331 = vmul.f32 %v1329, %v310
        %v1334 = vrot.slane %v1330, 2
        %v1335 = vrot.slane %v1331, 2
        %v1336 = vsel %vm401, %v1334, %v1335
        %v1339 = vadd.f32 %v1326, %v1336
        %v1340 = vadd.f32 %v1327, %v1335
        %s1341 = sld [smem:[#allocation3 + $0x7d]]
        %v1342 = vstv %s1341
        %v1343 = vmul.f32 %v1342, %v309
        %v1344 = vmul.f32 %v1342, %v310
        %v1347 = vrot.slane %v1343, 2
        %v1348 = vrot.slane %v1344, 2
        %v1349 = vsel %vm401, %v1347, %v1348
        %1350 = vrot.lane.b32.xlu0 %v1349, 127
        %v1351 = vpop.permute.xlu0 %1350
        %1352 = vrot.lane.b32.xlu0 %v1348, 127
        %v1353 = vpop.permute.xlu0 %1352
        %v1356 = vadd.f32 %v1339, %v1351
        %v1357 = vadd.f32 %v1340, %v1353
        %s1358 = sld [smem:[#allocation3 + $0x8d]]
        %v1359 = vstv %s1358
        %v1360 = vmul.f32 %v1359, %v309
        %v1361 = vmul.f32 %v1359, %v310
        %v1364 = vrot.slane %v1360, 2
        %v1365 = vrot.slane %v1361, 2
        %v1366 = vsel %vm401, %v1364, %v1365
        %1367 = vrot.lane.b32.xlu0 %v1366, 126
        %v1368 = vpop.permute.xlu0 %1367
        %1369 = vrot.lane.b32.xlu0 %v1365, 126
        %v1370 = vpop.permute.xlu0 %1369
        %v1373 = vadd.f32 %v1356, %v1368
        %v1374 = vadd.f32 %v1357, %v1370
        %v1375 = vmax.f32 %v1373, 0.0
        %v1376 = vmax.f32 %v1374, 0.0
        %1379 = vrot.lane.b32.xlu0 %v1375, 1
        %v1380 = vpop.permute.xlu0 %1379
        %1381 = vrot.lane.b32.xlu0 %v1376, 1
        %v1382 = vpop.permute.xlu0 %1381
        %s1385 = scalar_lea.vmem [#allocation2], 16
        %1386 = vst.msk [vmem:[%s1385] sm:$0xff] %vm837, %v1380
        %1387 = vst.msk [vmem:[%s1385 + $0x8] sm:$0x3] %vm839, %v1382
        %1388 = vrot.lane.b32.xlu0 %v1375, 127
        %v1389 = vpop.permute.xlu0 %1388
        %1390 = vrot.lane.b32.xlu0 %v1376, 127
        %v1391 = vpop.permute.xlu0 %1390
        %1394 = vst.msk [vmem:[%s1385] sm:$0xff] %vm847, %v1389
        %1395 = vst.msk [vmem:[%s1385 + $0x8] sm:$0x3] %vm849, %v1391
        %1396 = vrot.lane.b32.xlu0 %v1375, 3
        %v1397 = vpop.permute.xlu0 %1396
        %1398 = vrot.lane.b32.xlu0 %v1376, 3
        %v1399 = vpop.permute.xlu0 %1398
        %1402 = vst.msk [vmem:[%s1385] sm:$0xff] %vm857, %v1397
        %1403 = vst.msk [vmem:[%s1385 + $0x8] sm:$0x3] %vm859, %v1399
        %s1404 = sld [smem:[#allocation6 + $0x2]]
        %v1405 = vstv %s1404
        %s1406 = sld [smem:[#allocation3 + $0x2]]
        %v1407 = vstv %s1406
        %v1408 = vmul.f32 %v1407, %v303
        %v1409 = vmul.f32 %v1407, %v304
        %v1410 = vadd.f32 %v1405, %v1408
        %v1411 = vadd.f32 %v1405, %v1409
        %s1412 = sld [smem:[#allocation3 + $0x12]]
        %v1413 = vstv %s1412
        %v1414 = vmul.f32 %v1413, %v303
        %v1415 = vmul.f32 %v1413, %v304
        %1418 = vrot.lane.b32.xlu0 %v1414, 127
        %v1419 = vpop.permute.xlu0 %1418
        %1420 = vrot.lane.b32.xlu0 %v1415, 127
        %v1421 = vpop.permute.xlu0 %1420
        %v1424 = vadd.f32 %v1410, %v1419
        %v1425 = vadd.f32 %v1411, %v1421
        %s1426 = sld [smem:[#allocation3 + $0x22]]
        %v1427 = vstv %s1426
        %v1428 = vmul.f32 %v1427, %v303
        %v1429 = vmul.f32 %v1427, %v304
        %1432 = vrot.lane.b32.xlu0 %v1428, 126
        %v1433 = vpop.permute.xlu0 %1432
        %1434 = vrot.lane.b32.xlu0 %v1429, 126
        %v1435 = vpop.permute.xlu0 %1434
        %v1438 = vadd.f32 %v1424, %v1433
        %v1439 = vadd.f32 %v1425, %v1435
        %s1440 = sld [smem:[#allocation3 + $0x32]]
        %v1441 = vstv %s1440
        %v1442 = vmul.f32 %v1441, %v303
        %v1443 = vmul.f32 %v1441, %v304
        %v1446 = vrot.slane %v1442, 1
        %v1447 = vrot.slane %v1443, 1
        %v1448 = vsel %vm353, %v1446, %v1447
        %v1451 = vadd.f32 %v1438, %v1448
        %v1452 = vadd.f32 %v1439, %v1447
        %s1453 = sld [smem:[#allocation3 + $0x42]]
        %v1454 = vstv %s1453
        %v1455 = vmul.f32 %v1454, %v303
        %v1456 = vmul.f32 %v1454, %v304
        %v1459 = vrot.slane %v1455, 1
        %v1460 = vrot.slane %v1456, 1
        %v1461 = vsel %vm353, %v1459, %v1460
        %1462 = vrot.lane.b32.xlu0 %v1461, 127
        %v1463 = vpop.permute.xlu0 %1462
        %1464 = vrot.lane.b32.xlu0 %v1460, 127
        %v1465 = vpop.permute.xlu0 %1464
        %v1468 = vadd.f32 %v1451, %v1463
        %v1469 = vadd.f32 %v1452, %v1465
        %s1470 = sld [smem:[#allocation3 + $0x52]]
        %v1471 = vstv %s1470
        %v1472 = vmul.f32 %v1471, %v303
        %v1473 = vmul.f32 %v1471, %v304
        %v1476 = vrot.slane %v1472, 1
        %v1477 = vrot.slane %v1473, 1
        %v1478 = vsel %vm353, %v1476, %v1477
        %1479 = vrot.lane.b32.xlu0 %v1478, 126
        %v1480 = vpop.permute.xlu0 %1479
        %1481 = vrot.lane.b32.xlu0 %v1477, 126
        %v1482 = vpop.permute.xlu0 %1481
        %v1485 = vadd.f32 %v1468, %v1480
        %v1486 = vadd.f32 %v1469, %v1482
        %s1487 = sld [smem:[#allocation3 + $0x62]]
        %v1488 = vstv %s1487
        %v1489 = vmul.f32 %v1488, %v303
        %v1490 = vmul.f32 %v1488, %v304
        %v1493 = vrot.slane %v1489, 2
        %v1494 = vrot.slane %v1490, 2
        %v1495 = vsel %vm401, %v1493, %v1494
        %v1498 = vadd.f32 %v1485, %v1495
        %v1499 = vadd.f32 %v1486, %v1494
        %s1500 = sld [smem:[#allocation3 + $0x72]]
        %v1501 = vstv %s1500
        %v1502 = vmul.f32 %v1501, %v303
        %v1503 = vmul.f32 %v1501, %v304
        %v1506 = vrot.slane %v1502, 2
        %v1507 = vrot.slane %v1503, 2
        %v1508 = vsel %vm401, %v1506, %v1507
        %1509 = vrot.lane.b32.xlu0 %v1508, 127
        %v1510 = vpop.permute.xlu0 %1509
        %1511 = vrot.lane.b32.xlu0 %v1507, 127
        %v1512 = vpop.permute.xlu0 %1511
        %v1515 = vadd.f32 %v1498, %v1510
        %v1516 = vadd.f32 %v1499, %v1512
        %s1517 = sld [smem:[#allocation3 + $0x82]]
        %v1518 = vstv %s1517
        %v1519 = vmul.f32 %v1518, %v303
        %v1520 = vmul.f32 %v1518, %v304
        %v1523 = vrot.slane %v1519, 2
        %v1524 = vrot.slane %v1520, 2
        %v1525 = vsel %vm401, %v1523, %v1524
        %1526 = vrot.lane.b32.xlu0 %v1525, 126
        %v1527 = vpop.permute.xlu0 %1526
        %1528 = vrot.lane.b32.xlu0 %v1524, 126
        %v1529 = vpop.permute.xlu0 %1528
        %v1532 = vadd.f32 %v1515, %v1527
        %v1533 = vadd.f32 %v1516, %v1529
        %s1534 = sld [smem:[#allocation3 + $0x6]]
        %v1535 = vstv %s1534
        %v1536 = vmul.f32 %v1535, %v305
        %v1537 = vmul.f32 %v1535, %v306
        %v1538 = vadd.f32 %v1532, %v1536
        %v1539 = vadd.f32 %v1533, %v1537
        %s1540 = sld [smem:[#allocation3 + $0x16]]
        %v1541 = vstv %s1540
        %v1542 = vmul.f32 %v1541, %v305
        %v1543 = vmul.f32 %v1541, %v306
        %1546 = vrot.lane.b32.xlu0 %v1542, 127
        %v1547 = vpop.permute.xlu0 %1546
        %1548 = vrot.lane.b32.xlu0 %v1543, 127
        %v1549 = vpop.permute.xlu0 %1548
        %v1552 = vadd.f32 %v1538, %v1547
        %v1553 = vadd.f32 %v1539, %v1549
        %s1554 = sld [smem:[#allocation3 + $0x26]]
        %v1555 = vstv %s1554
        %v1556 = vmul.f32 %v1555, %v305
        %v1557 = vmul.f32 %v1555, %v306
        %1560 = vrot.lane.b32.xlu0 %v1556, 126
        %v1561 = vpop.permute.xlu0 %1560
        %1562 = vrot.lane.b32.xlu0 %v1557, 126
        %v1563 = vpop.permute.xlu0 %1562
        %v1566 = vadd.f32 %v1552, %v1561
        %v1567 = vadd.f32 %v1553, %v1563
        %s1568 = sld [smem:[#allocation3 + $0x36]]
        %v1569 = vstv %s1568
        %v1570 = vmul.f32 %v1569, %v305
        %v1571 = vmul.f32 %v1569, %v306
        %v1574 = vrot.slane %v1570, 1
        %v1575 = vrot.slane %v1571, 1
        %v1576 = vsel %vm353, %v1574, %v1575
        %v1579 = vadd.f32 %v1566, %v1576
        %v1580 = vadd.f32 %v1567, %v1575
        %s1581 = sld [smem:[#allocation3 + $0x46]]
        %v1582 = vstv %s1581
        %v1583 = vmul.f32 %v1582, %v305
        %v1584 = vmul.f32 %v1582, %v306
        %v1587 = vrot.slane %v1583, 1
        %v1588 = vrot.slane %v1584, 1
        %v1589 = vsel %vm353, %v1587, %v1588
        %1590 = vrot.lane.b32.xlu0 %v1589, 127
        %v1591 = vpop.permute.xlu0 %1590
        %1592 = vrot.lane.b32.xlu0 %v1588, 127
        %v1593 = vpop.permute.xlu0 %1592
        %v1596 = vadd.f32 %v1579, %v1591
        %v1597 = vadd.f32 %v1580, %v1593
        %s1598 = sld [smem:[#allocation3 + $0x56]]
        %v1599 = vstv %s1598
        %v1600 = vmul.f32 %v1599, %v305
        %v1601 = vmul.f32 %v1599, %v306
        %v1604 = vrot.slane %v1600, 1
        %v1605 = vrot.slane %v1601, 1
        %v1606 = vsel %vm353, %v1604, %v1605
        %1607 = vrot.lane.b32.xlu0 %v1606, 126
        %v1608 = vpop.permute.xlu0 %1607
        %1609 = vrot.lane.b32.xlu0 %v1605, 126
        %v1610 = vpop.permute.xlu0 %1609
        %v1613 = vadd.f32 %v1596, %v1608
        %v1614 = vadd.f32 %v1597, %v1610
        %s1615 = sld [smem:[#allocation3 + $0x66]]
        %v1616 = vstv %s1615
        %v1617 = vmul.f32 %v1616, %v305
        %v1618 = vmul.f32 %v1616, %v306
        %v1621 = vrot.slane %v1617, 2
        %v1622 = vrot.slane %v1618, 2
        %v1623 = vsel %vm401, %v1621, %v1622
        %v1626 = vadd.f32 %v1613, %v1623
        %v1627 = vadd.f32 %v1614, %v1622
        %s1628 = sld [smem:[#allocation3 + $0x76]]
        %v1629 = vstv %s1628
        %v1630 = vmul.f32 %v1629, %v305
        %v1631 = vmul.f32 %v1629, %v306
        %v1634 = vrot.slane %v1630, 2
        %v1635 = vrot.slane %v1631, 2
        %v1636 = vsel %vm401, %v1634, %v1635
        %1637 = vrot.lane.b32.xlu0 %v1636, 127
        %v1638 = vpop.permute.xlu0 %1637
        %1639 = vrot.lane.b32.xlu0 %v1635, 127
        %v1640 = vpop.permute.xlu0 %1639
        %v1643 = vadd.f32 %v1626, %v1638
        %v1644 = vadd.f32 %v1627, %v1640
        %s1645 = sld [smem:[#allocation3 + $0x86]]
        %v1646 = vstv %s1645
        %v1647 = vmul.f32 %v1646, %v305
        %v1648 = vmul.f32 %v1646, %v306
        %v1651 = vrot.slane %v1647, 2
        %v1652 = vrot.slane %v1648, 2
        %v1653 = vsel %vm401, %v1651, %v1652
        %1654 = vrot.lane.b32.xlu0 %v1653, 126
        %v1655 = vpop.permute.xlu0 %1654
        %1656 = vrot.lane.b32.xlu0 %v1652, 126
        %v1657 = vpop.permute.xlu0 %1656
        %v1660 = vadd.f32 %v1643, %v1655
        %v1661 = vadd.f32 %v1644, %v1657
        %s1662 = sld [smem:[#allocation3 + $0xa]]
        %v1663 = vstv %s1662
        %v1664 = vmul.f32 %v1663, %v307
        %v1665 = vmul.f32 %v1663, %v308
        %v1666 = vadd.f32 %v1660, %v1664
        %v1667 = vadd.f32 %v1661, %v1665
        %s1668 = sld [smem:[#allocation3 + $0x1a]]
        %v1669 = vstv %s1668
        %v1670 = vmul.f32 %v1669, %v307
        %v1671 = vmul.f32 %v1669, %v308
        %1674 = vrot.lane.b32.xlu0 %v1670, 127
        %v1675 = vpop.permute.xlu0 %1674
        %1676 = vrot.lane.b32.xlu0 %v1671, 127
        %v1677 = vpop.permute.xlu0 %1676
        %v1680 = vadd.f32 %v1666, %v1675
        %v1681 = vadd.f32 %v1667, %v1677
        %s1682 = sld [smem:[#allocation3 + $0x2a]]
        %v1683 = vstv %s1682
        %v1684 = vmul.f32 %v1683, %v307
        %v1685 = vmul.f32 %v1683, %v308
        %1688 = vrot.lane.b32.xlu0 %v1684, 126
        %v1689 = vpop.permute.xlu0 %1688
        %1690 = vrot.lane.b32.xlu0 %v1685, 126
        %v1691 = vpop.permute.xlu0 %1690
        %v1694 = vadd.f32 %v1680, %v1689
        %v1695 = vadd.f32 %v1681, %v1691
        %s1696 = sld [smem:[#allocation3 + $0x3a]]
        %v1697 = vstv %s1696
        %v1698 = vmul.f32 %v1697, %v307
        %v1699 = vmul.f32 %v1697, %v308
        %v1702 = vrot.slane %v1698, 1
        %v1703 = vrot.slane %v1699, 1
        %v1704 = vsel %vm353, %v1702, %v1703
        %v1707 = vadd.f32 %v1694, %v1704
        %v1708 = vadd.f32 %v1695, %v1703
        %s1709 = sld [smem:[#allocation3 + $0x4a]]
        %v1710 = vstv %s1709
        %v1711 = vmul.f32 %v1710, %v307
        %v1712 = vmul.f32 %v1710, %v308
        %v1715 = vrot.slane %v1711, 1
        %v1716 = vrot.slane %v1712, 1
        %v1717 = vsel %vm353, %v1715, %v1716
        %1718 = vrot.lane.b32.xlu0 %v1717, 127
        %v1719 = vpop.permute.xlu0 %1718
        %1720 = vrot.lane.b32.xlu0 %v1716, 127
        %v1721 = vpop.permute.xlu0 %1720
        %v1724 = vadd.f32 %v1707, %v1719
        %v1725 = vadd.f32 %v1708, %v1721
        %s1726 = sld [smem:[#allocation3 + $0x5a]]
        %v1727 = vstv %s1726
        %v1728 = vmul.f32 %v1727, %v307
        %v1729 = vmul.f32 %v1727, %v308
        %v1732 = vrot.slane %v1728, 1
        %v1733 = vrot.slane %v1729, 1
        %v1734 = vsel %vm353, %v1732, %v1733
        %1735 = vrot.lane.b32.xlu0 %v1734, 126
        %v1736 = vpop.permute.xlu0 %1735
        %1737 = vrot.lane.b32.xlu0 %v1733, 126
        %v1738 = vpop.permute.xlu0 %1737
        %v1741 = vadd.f32 %v1724, %v1736
        %v1742 = vadd.f32 %v1725, %v1738
        %s1743 = sld [smem:[#allocation3 + $0x6a]]
        %v1744 = vstv %s1743
        %v1745 = vmul.f32 %v1744, %v307
        %v1746 = vmul.f32 %v1744, %v308
        %v1749 = vrot.slane %v1745, 2
        %v1750 = vrot.slane %v1746, 2
        %v1751 = vsel %vm401, %v1749, %v1750
        %v1754 = vadd.f32 %v1741, %v1751
        %v1755 = vadd.f32 %v1742, %v1750
        %s1756 = sld [smem:[#allocation3 + $0x7a]]
        %v1757 = vstv %s1756
        %v1758 = vmul.f32 %v1757, %v307
        %v1759 = vmul.f32 %v1757, %v308
        %v1762 = vrot.slane %v1758, 2
        %v1763 = vrot.slane %v1759, 2
        %v1764 = vsel %vm401, %v1762, %v1763
        %1765 = vrot.lane.b32.xlu0 %v1764, 127
        %v1766 = vpop.permute.xlu0 %1765
        %1767 = vrot.lane.b32.xlu0 %v1763, 127
        %v1768 = vpop.permute.xlu0 %1767
        %v1771 = vadd.f32 %v1754, %v1766
        %v1772 = vadd.f32 %v1755, %v1768
        %s1773 = sld [smem:[#allocation3 + $0x8a]]
        %v1774 = vstv %s1773
        %v1775 = vmul.f32 %v1774, %v307
        %v1776 = vmul.f32 %v1774, %v308
        %v1779 = vrot.slane %v1775, 2
        %v1780 = vrot.slane %v1776, 2
        %v1781 = vsel %vm401, %v1779, %v1780
        %1782 = vrot.lane.b32.xlu0 %v1781, 126
        %v1783 = vpop.permute.xlu0 %1782
        %1784 = vrot.lane.b32.xlu0 %v1780, 126
        %v1785 = vpop.permute.xlu0 %1784
        %v1788 = vadd.f32 %v1771, %v1783
        %v1789 = vadd.f32 %v1772, %v1785
        %s1790 = sld [smem:[#allocation3 + $0xe]]
        %v1791 = vstv %s1790
        %v1792 = vmul.f32 %v1791, %v309
        %v1793 = vmul.f32 %v1791, %v310
        %v1794 = vadd.f32 %v1788, %v1792
        %v1795 = vadd.f32 %v1789, %v1793
        %s1796 = sld [smem:[#allocation3 + $0x1e]]
        %v1797 = vstv %s1796
        %v1798 = vmul.f32 %v1797, %v309
        %v1799 = vmul.f32 %v1797, %v310
        %1802 = vrot.lane.b32.xlu0 %v1798, 127
        %v1803 = vpop.permute.xlu0 %1802
        %1804 = vrot.lane.b32.xlu0 %v1799, 127
        %v1805 = vpop.permute.xlu0 %1804
        %v1808 = vadd.f32 %v1794, %v1803
        %v1809 = vadd.f32 %v1795, %v1805
        %s1810 = sld [smem:[#allocation3 + $0x2e]]
        %v1811 = vstv %s1810
        %v1812 = vmul.f32 %v1811, %v309
        %v1813 = vmul.f32 %v1811, %v310
        %1816 = vrot.lane.b32.xlu0 %v1812, 126
        %v1817 = vpop.permute.xlu0 %1816
        %1818 = vrot.lane.b32.xlu0 %v1813, 126
        %v1819 = vpop.permute.xlu0 %1818
        %v1822 = vadd.f32 %v1808, %v1817
        %v1823 = vadd.f32 %v1809, %v1819
        %s1824 = sld [smem:[#allocation3 + $0x3e]]
        %v1825 = vstv %s1824
        %v1826 = vmul.f32 %v1825, %v309
        %v1827 = vmul.f32 %v1825, %v310
        %v1830 = vrot.slane %v1826, 1
        %v1831 = vrot.slane %v1827, 1
        %v1832 = vsel %vm353, %v1830, %v1831
        %v1835 = vadd.f32 %v1822, %v1832
        %v1836 = vadd.f32 %v1823, %v1831
        %s1837 = sld [smem:[#allocation3 + $0x4e]]
        %v1838 = vstv %s1837
        %v1839 = vmul.f32 %v1838, %v309
        %v1840 = vmul.f32 %v1838, %v310
        %v1843 = vrot.slane %v1839, 1
        %v1844 = vrot.slane %v1840, 1
        %v1845 = vsel %vm353, %v1843, %v1844
        %1846 = vrot.lane.b32.xlu0 %v1845, 127
        %v1847 = vpop.permute.xlu0 %1846
        %1848 = vrot.lane.b32.xlu0 %v1844, 127
        %v1849 = vpop.permute.xlu0 %1848
        %v1852 = vadd.f32 %v1835, %v1847
        %v1853 = vadd.f32 %v1836, %v1849
        %s1854 = sld [smem:[#allocation3 + $0x5e]]
        %v1855 = vstv %s1854
        %v1856 = vmul.f32 %v1855, %v309
        %v1857 = vmul.f32 %v1855, %v310
        %v1860 = vrot.slane %v1856, 1
        %v1861 = vrot.slane %v1857, 1
        %v1862 = vsel %vm353, %v1860, %v1861
        %1863 = vrot.lane.b32.xlu0 %v1862, 126
        %v1864 = vpop.permute.xlu0 %1863
        %1865 = vrot.lane.b32.xlu0 %v1861, 126
        %v1866 = vpop.permute.xlu0 %1865
        %v1869 = vadd.f32 %v1852, %v1864
        %v1870 = vadd.f32 %v1853, %v1866
        %s1871 = sld [smem:[#allocation3 + $0x6e]]
        %v1872 = vstv %s1871
        %v1873 = vmul.f32 %v1872, %v309
        %v1874 = vmul.f32 %v1872, %v310
        %v1877 = vrot.slane %v1873, 2
        %v1878 = vrot.slane %v1874, 2
        %v1879 = vsel %vm401, %v1877, %v1878
        %v1882 = vadd.f32 %v1869, %v1879
        %v1883 = vadd.f32 %v1870, %v1878
        %s1884 = sld [smem:[#allocation3 + $0x7e]]
        %v1885 = vstv %s1884
        %v1886 = vmul.f32 %v1885, %v309
        %v1887 = vmul.f32 %v1885, %v310
        %v1890 = vrot.slane %v1886, 2
        %v1891 = vrot.slane %v1887, 2
        %v1892 = vsel %vm401, %v1890, %v1891
        %1893 = vrot.lane.b32.xlu0 %v1892, 127
        %v1894 = vpop.permute.xlu0 %1893
        %1895 = vrot.lane.b32.xlu0 %v1891, 127
        %v1896 = vpop.permute.xlu0 %1895
        %v1899 = vadd.f32 %v1882, %v1894
        %v1900 = vadd.f32 %v1883, %v1896
        %s1901 = sld [smem:[#allocation3 + $0x8e]]
        %v1902 = vstv %s1901
        %v1903 = vmul.f32 %v1902, %v309
        %v1904 = vmul.f32 %v1902, %v310
        %v1907 = vrot.slane %v1903, 2
        %v1908 = vrot.slane %v1904, 2
        %v1909 = vsel %vm401, %v1907, %v1908
        %1910 = vrot.lane.b32.xlu0 %v1909, 126
        %v1911 = vpop.permute.xlu0 %1910
        %1912 = vrot.lane.b32.xlu0 %v1908, 126
        %v1913 = vpop.permute.xlu0 %1912
        %v1916 = vadd.f32 %v1899, %v1911
        %v1917 = vadd.f32 %v1900, %v1913
        %v1918 = vmax.f32 %v1916, 0.0
        %v1919 = vmax.f32 %v1917, 0.0
        %1922 = vrot.lane.b32.xlu0 %v1918, 1
        %v1923 = vpop.permute.xlu0 %1922
        %1924 = vrot.lane.b32.xlu0 %v1919, 1
        %v1925 = vpop.permute.xlu0 %1924
        %s1928 = scalar_lea.vmem [#allocation2], 32
        %1929 = vst.msk [vmem:[%s1928] sm:$0xff] %vm837, %v1923
        %1930 = vst.msk [vmem:[%s1928 + $0x8] sm:$0x3] %vm839, %v1925
        %1931 = vrot.lane.b32.xlu0 %v1918, 127
        %v1932 = vpop.permute.xlu0 %1931
        %1933 = vrot.lane.b32.xlu0 %v1919, 127
        %v1934 = vpop.permute.xlu0 %1933
        %1937 = vst.msk [vmem:[%s1928] sm:$0xff] %vm847, %v1932
        %1938 = vst.msk [vmem:[%s1928 + $0x8] sm:$0x3] %vm849, %v1934
        %1939 = vrot.lane.b32.xlu0 %v1918, 3
        %v1940 = vpop.permute.xlu0 %1939
        %1941 = vrot.lane.b32.xlu0 %v1919, 3
        %v1942 = vpop.permute.xlu0 %1941
        %1945 = vst.msk [vmem:[%s1928] sm:$0xff] %vm857, %v1940
        %1946 = vst.msk [vmem:[%s1928 + $0x8] sm:$0x3] %vm859, %v1942
        %s1947 = sld [smem:[#allocation6 + $0x3]]
        %v1948 = vstv %s1947
        %s1949 = sld [smem:[#allocation3 + $0x3]]
        %v1950 = vstv %s1949
        %v1951 = vmul.f32 %v1950, %v303
        %v1952 = vmul.f32 %v1950, %v304
        %v1953 = vadd.f32 %v1948, %v1951
        %v1954 = vadd.f32 %v1948, %v1952
        %s1955 = sld [smem:[#allocation3 + $0x13]]
        %v1956 = vstv %s1955
        %v1957 = vmul.f32 %v1956, %v303
        %v1958 = vmul.f32 %v1956, %v304
        %1961 = vrot.lane.b32.xlu0 %v1957, 127
        %v1962 = vpop.permute.xlu0 %1961
        %1963 = vrot.lane.b32.xlu0 %v1958, 127
        %v1964 = vpop.permute.xlu0 %1963
        %v1967 = vadd.f32 %v1953, %v1962
        %v1968 = vadd.f32 %v1954, %v1964
        %s1969 = sld [smem:[#allocation3 + $0x23]]
        %v1970 = vstv %s1969
        %v1971 = vmul.f32 %v1970, %v303
        %v1972 = vmul.f32 %v1970, %v304
        %1975 = vrot.lane.b32.xlu0 %v1971, 126
        %v1976 = vpop.permute.xlu0 %1975
        %1977 = vrot.lane.b32.xlu0 %v1972, 126
        %v1978 = vpop.permute.xlu0 %1977
        %v1981 = vadd.f32 %v1967, %v1976
        %v1982 = vadd.f32 %v1968, %v1978
        %s1983 = sld [smem:[#allocation3 + $0x33]]
        %v1984 = vstv %s1983
        %v1985 = vmul.f32 %v1984, %v303
        %v1986 = vmul.f32 %v1984, %v304
        %v1989 = vrot.slane %v1985, 1
        %v1990 = vrot.slane %v1986, 1
        %v1991 = vsel %vm353, %v1989, %v1990
        %v1994 = vadd.f32 %v1981, %v1991
        %v1995 = vadd.f32 %v1982, %v1990
        %s1996 = sld [smem:[#allocation3 + $0x43]]
        %v1997 = vstv %s1996
        %v1998 = vmul.f32 %v1997, %v303
        %v1999 = vmul.f32 %v1997, %v304
        %v2002 = vrot.slane %v1998, 1
        %v2003 = vrot.slane %v1999, 1
        %v2004 = vsel %vm353, %v2002, %v2003
        %2005 = vrot.lane.b32.xlu0 %v2004, 127
        %v2006 = vpop.permute.xlu0 %2005
        %2007 = vrot.lane.b32.xlu0 %v2003, 127
        %v2008 = vpop.permute.xlu0 %2007
        %v2011 = vadd.f32 %v1994, %v2006
        %v2012 = vadd.f32 %v1995, %v2008
        %s2013 = sld [smem:[#allocation3 + $0x53]]
        %v2014 = vstv %s2013
        %v2015 = vmul.f32 %v2014, %v303
        %v2016 = vmul.f32 %v2014, %v304
        %v2019 = vrot.slane %v2015, 1
        %v2020 = vrot.slane %v2016, 1
        %v2021 = vsel %vm353, %v2019, %v2020
        %2022 = vrot.lane.b32.xlu0 %v2021, 126
        %v2023 = vpop.permute.xlu0 %2022
        %2024 = vrot.lane.b32.xlu0 %v2020, 126
        %v2025 = vpop.permute.xlu0 %2024
        %v2028 = vadd.f32 %v2011, %v2023
        %v2029 = vadd.f32 %v2012, %v2025
        %s2030 = sld [smem:[#allocation3 + $0x63]]
        %v2031 = vstv %s2030
        %v2032 = vmul.f32 %v2031, %v303
        %v2033 = vmul.f32 %v2031, %v304
        %v2036 = vrot.slane %v2032, 2
        %v2037 = vrot.slane %v2033, 2
        %v2038 = vsel %vm401, %v2036, %v2037
        %v2041 = vadd.f32 %v2028, %v2038
        %v2042 = vadd.f32 %v2029, %v2037
        %s2043 = sld [smem:[#allocation3 + $0x73]]
        %v2044 = vstv %s2043
        %v2045 = vmul.f32 %v2044, %v303
        %v2046 = vmul.f32 %v2044, %v304
        %v2049 = vrot.slane %v2045, 2
        %v2050 = vrot.slane %v2046, 2
        %v2051 = vsel %vm401, %v2049, %v2050
        %2052 = vrot.lane.b32.xlu0 %v2051, 127
        %v2053 = vpop.permute.xlu0 %2052
        %2054 = vrot.lane.b32.xlu0 %v2050, 127
        %v2055 = vpop.permute.xlu0 %2054
        %v2058 = vadd.f32 %v2041, %v2053
        %v2059 = vadd.f32 %v2042, %v2055
        %s2060 = sld [smem:[#allocation3 + $0x83]]
        %v2061 = vstv %s2060
        %v2062 = vmul.f32 %v2061, %v303
        %v2063 = vmul.f32 %v2061, %v304
        %v2066 = vrot.slane %v2062, 2
        %v2067 = vrot.slane %v2063, 2
        %v2068 = vsel %vm401, %v2066, %v2067
        %2069 = vrot.lane.b32.xlu0 %v2068, 126
        %v2070 = vpop.permute.xlu0 %2069
        %2071 = vrot.lane.b32.xlu0 %v2067, 126
        %v2072 = vpop.permute.xlu0 %2071
        %v2075 = vadd.f32 %v2058, %v2070
        %v2076 = vadd.f32 %v2059, %v2072
        %s2077 = sld [smem:[#allocation3 + $0x7]]
        %v2078 = vstv %s2077
        %v2079 = vmul.f32 %v2078, %v305
        %v2080 = vmul.f32 %v2078, %v306
        %v2081 = vadd.f32 %v2075, %v2079
        %v2082 = vadd.f32 %v2076, %v2080
        %s2083 = sld [smem:[#allocation3 + $0x17]]
        %v2084 = vstv %s2083
        %v2085 = vmul.f32 %v2084, %v305
        %v2086 = vmul.f32 %v2084, %v306
        %2089 = vrot.lane.b32.xlu0 %v2085, 127
        %v2090 = vpop.permute.xlu0 %2089
        %2091 = vrot.lane.b32.xlu0 %v2086, 127
        %v2092 = vpop.permute.xlu0 %2091
        %v2095 = vadd.f32 %v2081, %v2090
        %v2096 = vadd.f32 %v2082, %v2092
        %s2097 = sld [smem:[#allocation3 + $0x27]]
        %v2098 = vstv %s2097
        %v2099 = vmul.f32 %v2098, %v305
        %v2100 = vmul.f32 %v2098, %v306
        %2103 = vrot.lane.b32.xlu0 %v2099, 126
        %v2104 = vpop.permute.xlu0 %2103
        %2105 = vrot.lane.b32.xlu0 %v2100, 126
        %v2106 = vpop.permute.xlu0 %2105
        %v2109 = vadd.f32 %v2095, %v2104
        %v2110 = vadd.f32 %v2096, %v2106
        %s2111 = sld [smem:[#allocation3 + $0x37]]
        %v2112 = vstv %s2111
        %v2113 = vmul.f32 %v2112, %v305
        %v2114 = vmul.f32 %v2112, %v306
        %v2117 = vrot.slane %v2113, 1
        %v2118 = vrot.slane %v2114, 1
        %v2119 = vsel %vm353, %v2117, %v2118
        %v2122 = vadd.f32 %v2109, %v2119
        %v2123 = vadd.f32 %v2110, %v2118
        %s2124 = sld [smem:[#allocation3 + $0x47]]
        %v2125 = vstv %s2124
        %v2126 = vmul.f32 %v2125, %v305
        %v2127 = vmul.f32 %v2125, %v306
        %v2130 = vrot.slane %v2126, 1
        %v2131 = vrot.slane %v2127, 1
        %v2132 = vsel %vm353, %v2130, %v2131
        %2133 = vrot.lane.b32.xlu0 %v2132, 127
        %v2134 = vpop.permute.xlu0 %2133
        %2135 = vrot.lane.b32.xlu0 %v2131, 127
        %v2136 = vpop.permute.xlu0 %2135
        %v2139 = vadd.f32 %v2122, %v2134
        %v2140 = vadd.f32 %v2123, %v2136
        %s2141 = sld [smem:[#allocation3 + $0x57]]
        %v2142 = vstv %s2141
        %v2143 = vmul.f32 %v2142, %v305
        %v2144 = vmul.f32 %v2142, %v306
        %v2147 = vrot.slane %v2143, 1
        %v2148 = vrot.slane %v2144, 1
        %v2149 = vsel %vm353, %v2147, %v2148
        %2150 = vrot.lane.b32.xlu0 %v2149, 126
        %v2151 = vpop.permute.xlu0 %2150
        %2152 = vrot.lane.b32.xlu0 %v2148, 126
        %v2153 = vpop.permute.xlu0 %2152
        %v2156 = vadd.f32 %v2139, %v2151
        %v2157 = vadd.f32 %v2140, %v2153
        %s2158 = sld [smem:[#allocation3 + $0x67]]
        %v2159 = vstv %s2158
        %v2160 = vmul.f32 %v2159, %v305
        %v2161 = vmul.f32 %v2159, %v306
        %v2164 = vrot.slane %v2160, 2
        %v2165 = vrot.slane %v2161, 2
        %v2166 = vsel %vm401, %v2164, %v2165
        %v2169 = vadd.f32 %v2156, %v2166
        %v2170 = vadd.f32 %v2157, %v2165
        %s2171 = sld [smem:[#allocation3 + $0x77]]
        %v2172 = vstv %s2171
        %v2173 = vmul.f32 %v2172, %v305
        %v2174 = vmul.f32 %v2172, %v306
        %v2177 = vrot.slane %v2173, 2
        %v2178 = vrot.slane %v2174, 2
        %v2179 = vsel %vm401, %v2177, %v2178
        %2180 = vrot.lane.b32.xlu0 %v2179, 127
        %v2181 = vpop.permute.xlu0 %2180
        %2182 = vrot.lane.b32.xlu0 %v2178, 127
        %v2183 = vpop.permute.xlu0 %2182
        %v2186 = vadd.f32 %v2169, %v2181
        %v2187 = vadd.f32 %v2170, %v2183
        %s2188 = sld [smem:[#allocation3 + $0x87]]
        %v2189 = vstv %s2188
        %v2190 = vmul.f32 %v2189, %v305
        %v2191 = vmul.f32 %v2189, %v306
        %v2194 = vrot.slane %v2190, 2
        %v2195 = vrot.slane %v2191, 2
        %v2196 = vsel %vm401, %v2194, %v2195
        %2197 = vrot.lane.b32.xlu0 %v2196, 126
        %v2198 = vpop.permute.xlu0 %2197
        %2199 = vrot.lane.b32.xlu0 %v2195, 126
        %v2200 = vpop.permute.xlu0 %2199
        %v2203 = vadd.f32 %v2186, %v2198
        %v2204 = vadd.f32 %v2187, %v2200
        %s2205 = sld [smem:[#allocation3 + $0xb]]
        %v2206 = vstv %s2205
        %v2207 = vmul.f32 %v2206, %v307
        %v2208 = vmul.f32 %v2206, %v308
        %v2209 = vadd.f32 %v2203, %v2207
        %v2210 = vadd.f32 %v2204, %v2208
        %s2211 = sld [smem:[#allocation3 + $0x1b]]
        %v2212 = vstv %s2211
        %v2213 = vmul.f32 %v2212, %v307
        %v2214 = vmul.f32 %v2212, %v308
        %2217 = vrot.lane.b32.xlu0 %v2213, 127
        %v2218 = vpop.permute.xlu0 %2217
        %2219 = vrot.lane.b32.xlu0 %v2214, 127
        %v2220 = vpop.permute.xlu0 %2219
        %v2223 = vadd.f32 %v2209, %v2218
        %v2224 = vadd.f32 %v2210, %v2220
        %s2225 = sld [smem:[#allocation3 + $0x2b]]
        %v2226 = vstv %s2225
        %v2227 = vmul.f32 %v2226, %v307
        %v2228 = vmul.f32 %v2226, %v308
        %2231 = vrot.lane.b32.xlu0 %v2227, 126
        %v2232 = vpop.permute.xlu0 %2231
        %2233 = vrot.lane.b32.xlu0 %v2228, 126
        %v2234 = vpop.permute.xlu0 %2233
        %v2237 = vadd.f32 %v2223, %v2232
        %v2238 = vadd.f32 %v2224, %v2234
        %s2239 = sld [smem:[#allocation3 + $0x3b]]
        %v2240 = vstv %s2239
        %v2241 = vmul.f32 %v2240, %v307
        %v2242 = vmul.f32 %v2240, %v308
        %v2245 = vrot.slane %v2241, 1
        %v2246 = vrot.slane %v2242, 1
        %v2247 = vsel %vm353, %v2245, %v2246
        %v2250 = vadd.f32 %v2237, %v2247
        %v2251 = vadd.f32 %v2238, %v2246
        %s2252 = sld [smem:[#allocation3 + $0x4b]]
        %v2253 = vstv %s2252
        %v2254 = vmul.f32 %v2253, %v307
        %v2255 = vmul.f32 %v2253, %v308
        %v2258 = vrot.slane %v2254, 1
        %v2259 = vrot.slane %v2255, 1
        %v2260 = vsel %vm353, %v2258, %v2259
        %2261 = vrot.lane.b32.xlu0 %v2260, 127
        %v2262 = vpop.permute.xlu0 %2261
        %2263 = vrot.lane.b32.xlu0 %v2259, 127
        %v2264 = vpop.permute.xlu0 %2263
        %v2267 = vadd.f32 %v2250, %v2262
        %v2268 = vadd.f32 %v2251, %v2264
        %s2269 = sld [smem:[#allocation3 + $0x5b]]
        %v2270 = vstv %s2269
        %v2271 = vmul.f32 %v2270, %v307
        %v2272 = vmul.f32 %v2270, %v308
        %v2275 = vrot.slane %v2271, 1
        %v2276 = vrot.slane %v2272, 1
        %v2277 = vsel %vm353, %v2275, %v2276
        %2278 = vrot.lane.b32.xlu0 %v2277, 126
        %v2279 = vpop.permute.xlu0 %2278
        %2280 = vrot.lane.b32.xlu0 %v2276, 126
        %v2281 = vpop.permute.xlu0 %2280
        %v2284 = vadd.f32 %v2267, %v2279
        %v2285 = vadd.f32 %v2268, %v2281
        %s2286 = sld [smem:[#allocation3 + $0x6b]]
        %v2287 = vstv %s2286
        %v2288 = vmul.f32 %v2287, %v307
        %v2289 = vmul.f32 %v2287, %v308
        %v2292 = vrot.slane %v2288, 2
        %v2293 = vrot.slane %v2289, 2
        %v2294 = vsel %vm401, %v2292, %v2293
        %v2297 = vadd.f32 %v2284, %v2294
        %v2298 = vadd.f32 %v2285, %v2293
        %s2299 = sld [smem:[#allocation3 + $0x7b]]
        %v2300 = vstv %s2299
        %v2301 = vmul.f32 %v2300, %v307
        %v2302 = vmul.f32 %v2300, %v308
        %v2305 = vrot.slane %v2301, 2
        %v2306 = vrot.slane %v2302, 2
        %v2307 = vsel %vm401, %v2305, %v2306
        %2308 = vrot.lane.b32.xlu0 %v2307, 127
        %v2309 = vpop.permute.xlu0 %2308
        %2310 = vrot.lane.b32.xlu0 %v2306, 127
        %v2311 = vpop.permute.xlu0 %2310
        %v2314 = vadd.f32 %v2297, %v2309
        %v2315 = vadd.f32 %v2298, %v2311
        %s2316 = sld [smem:[#allocation3 + $0x8b]]
        %v2317 = vstv %s2316
        %v2318 = vmul.f32 %v2317, %v307
        %v2319 = vmul.f32 %v2317, %v308
        %v2322 = vrot.slane %v2318, 2
        %v2323 = vrot.slane %v2319, 2
        %v2324 = vsel %vm401, %v2322, %v2323
        %2325 = vrot.lane.b32.xlu0 %v2324, 126
        %v2326 = vpop.permute.xlu0 %2325
        %2327 = vrot.lane.b32.xlu0 %v2323, 126
        %v2328 = vpop.permute.xlu0 %2327
        %v2331 = vadd.f32 %v2314, %v2326
        %v2332 = vadd.f32 %v2315, %v2328
        %s2333 = sld [smem:[#allocation3 + $0xf]]
        %v2334 = vstv %s2333
        %v2335 = vmul.f32 %v2334, %v309
        %v2336 = vmul.f32 %v2334, %v310
        %v2337 = vadd.f32 %v2331, %v2335
        %v2338 = vadd.f32 %v2332, %v2336
        %s2339 = sld [smem:[#allocation3 + $0x1f]]
        %v2340 = vstv %s2339
        %v2341 = vmul.f32 %v2340, %v309
        %v2342 = vmul.f32 %v2340, %v310
        %2345 = vrot.lane.b32.xlu0 %v2341, 127
        %v2346 = vpop.permute.xlu0 %2345
        %2347 = vrot.lane.b32.xlu0 %v2342, 127
        %v2348 = vpop.permute.xlu0 %2347
        %v2351 = vadd.f32 %v2337, %v2346
        %v2352 = vadd.f32 %v2338, %v2348
        %s2353 = sld [smem:[#allocation3 + $0x2f]]
        %v2354 = vstv %s2353
        %v2355 = vmul.f32 %v2354, %v309
        %v2356 = vmul.f32 %v2354, %v310
        %2359 = vrot.lane.b32.xlu0 %v2355, 126
        %v2360 = vpop.permute.xlu0 %2359
        %2361 = vrot.lane.b32.xlu0 %v2356, 126
        %v2362 = vpop.permute.xlu0 %2361
        %v2365 = vadd.f32 %v2351, %v2360
        %v2366 = vadd.f32 %v2352, %v2362
        %s2367 = sld [smem:[#allocation3 + $0x3f]]
        %v2368 = vstv %s2367
        %v2369 = vmul.f32 %v2368, %v309
        %v2370 = vmul.f32 %v2368, %v310
        %v2373 = vrot.slane %v2369, 1
        %v2374 = vrot.slane %v2370, 1
        %v2375 = vsel %vm353, %v2373, %v2374
        %v2378 = vadd.f32 %v2365, %v2375
        %v2379 = vadd.f32 %v2366, %v2374
        %s2380 = sld [smem:[#allocation3 + $0x4f]]
        %v2381 = vstv %s2380
        %v2382 = vmul.f32 %v2381, %v309
        %v2383 = vmul.f32 %v2381, %v310
        %v2386 = vrot.slane %v2382, 1
        %v2387 = vrot.slane %v2383, 1
        %v2388 = vsel %vm353, %v2386, %v2387
        %2389 = vrot.lane.b32.xlu0 %v2388, 127
        %v2390 = vpop.permute.xlu0 %2389
        %2391 = vrot.lane.b32.xlu0 %v2387, 127
        %v2392 = vpop.permute.xlu0 %2391
        %v2395 = vadd.f32 %v2378, %v2390
        %v2396 = vadd.f32 %v2379, %v2392
        %s2397 = sld [smem:[#allocation3 + $0x5f]]
        %v2398 = vstv %s2397
        %v2399 = vmul.f32 %v2398, %v309
        %v2400 = vmul.f32 %v2398, %v310
        %v2403 = vrot.slane %v2399, 1
        %v2404 = vrot.slane %v2400, 1
        %v2405 = vsel %vm353, %v2403, %v2404
        %2406 = vrot.lane.b32.xlu0 %v2405, 126
        %v2407 = vpop.permute.xlu0 %2406
        %2408 = vrot.lane.b32.xlu0 %v2404, 126
        %v2409 = vpop.permute.xlu0 %2408
        %v2412 = vadd.f32 %v2395, %v2407
        %v2413 = vadd.f32 %v2396, %v2409
        %s2414 = sld [smem:[#allocation3 + $0x6f]]
        %v2415 = vstv %s2414
        %v2416 = vmul.f32 %v2415, %v309
        %v2417 = vmul.f32 %v2415, %v310
        %v2420 = vrot.slane %v2416, 2
        %v2421 = vrot.slane %v2417, 2
        %v2422 = vsel %vm401, %v2420, %v2421
        %v2425 = vadd.f32 %v2412, %v2422
        %v2426 = vadd.f32 %v2413, %v2421
        %s2427 = sld [smem:[#allocation3 + $0x7f]]
        %v2428 = vstv %s2427
        %v2429 = vmul.f32 %v2428, %v309
        %v2430 = vmul.f32 %v2428, %v310
        %v2433 = vrot.slane %v2429, 2
        %v2434 = vrot.slane %v2430, 2
        %v2435 = vsel %vm401, %v2433, %v2434
        %2436 = vrot.lane.b32.xlu0 %v2435, 127
        %v2437 = vpop.permute.xlu0 %2436
        %2438 = vrot.lane.b32.xlu0 %v2434, 127
        %v2439 = vpop.permute.xlu0 %2438
        %v2442 = vadd.f32 %v2425, %v2437
        %v2443 = vadd.f32 %v2426, %v2439
        %s2444 = sld [smem:[#allocation3 + $0x8f]]
        %v2445 = vstv %s2444
        %v2446 = vmul.f32 %v2445, %v309
        %v2447 = vmul.f32 %v2445, %v310
        %v2450 = vrot.slane %v2446, 2
        %v2451 = vrot.slane %v2447, 2
        %v2452 = vsel %vm401, %v2450, %v2451
        %2453 = vrot.lane.b32.xlu0 %v2452, 126
        %v2454 = vpop.permute.xlu0 %2453
        %2455 = vrot.lane.b32.xlu0 %v2451, 126
        %v2456 = vpop.permute.xlu0 %2455
        %v2459 = vadd.f32 %v2442, %v2454
        %v2460 = vadd.f32 %v2443, %v2456
        %v2461 = vmax.f32 %v2459, 0.0
        %v2462 = vmax.f32 %v2460, 0.0
        %2465 = vrot.lane.b32.xlu0 %v2461, 1
        %v2466 = vpop.permute.xlu0 %2465
        %2467 = vrot.lane.b32.xlu0 %v2462, 1
        %v2468 = vpop.permute.xlu0 %2467
        %s2471 = scalar_lea.vmem [#allocation2], 48
        %2472 = vst.msk [vmem:[%s2471] sm:$0xff] %vm837, %v2466
        %2473 = vst.msk [vmem:[%s2471 + $0x8] sm:$0x3] %vm839, %v2468
        %2474 = vrot.lane.b32.xlu0 %v2461, 127
        %v2475 = vpop.permute.xlu0 %2474
        %2476 = vrot.lane.b32.xlu0 %v2462, 127
        %v2477 = vpop.permute.xlu0 %2476
        %2480 = vst.msk [vmem:[%s2471] sm:$0xff] %vm847, %v2475
        %2481 = vst.msk [vmem:[%s2471 + $0x8] sm:$0x3] %vm849, %v2477
        %2482 = vrot.lane.b32.xlu0 %v2461, 3
        %v2483 = vpop.permute.xlu0 %2482
        %2484 = vrot.lane.b32.xlu0 %v2462, 3
        %v2485 = vpop.permute.xlu0 %2484
        %2488 = vst.msk [vmem:[%s2471] sm:$0xff] %vm857, %v2483
        %2489 = vst.msk [vmem:[%s2471 + $0x8] sm:$0x3] %vm859, %v2485
        %p2490 = scmp.eq.s32.totalorder %s27, 0
        // Predicated region
        $region57: #{msrb_pallas.1} parent=39 // pred_check
          %p2491 = pneg %p2490
        $region58: #{msrb_pallas.1} parent=39 // pred_check_branch
          %2493 = sbr.rel (%p2491) target = $region60
        $region59: #{msrb_pallas.1} parent=39 // pred_region
          %v2494 = vld [vmem:[#allocation2 + $0x2] sm:$0x1]
          %v2495 = vld [vmem:[#allocation2 + $0x12] sm:$0x1]
          %v2496 = vld [vmem:[#allocation2 + $0x22] sm:$0x1]
          %v2497 = vld [vmem:[#allocation2 + $0x32] sm:$0x1]
          %vm2498 = vcmask 139264
          %2499 = vst.msk [vmem:[#allocation2] sm:$0x1] %vm2498, %v2494
          %2500 = vst.msk [vmem:[#allocation2 + $0x10] sm:$0x1] %vm2498, %v2495
          %2501 = vst.msk [vmem:[#allocation2 + $0x20] sm:$0x1] %vm2498, %v2496
          %2502 = vst.msk [vmem:[#allocation2 + $0x30] sm:$0x1] %vm2498, %v2497
        $region60: #{msrb_pallas.1} parent=39 // pred_fallthru
          _
        %p2503 = scmp.eq.s32.totalorder %s27, 1
        // Predicated region
        $region61: #{msrb_pallas.1} parent=39 // pred_check
          %p2504 = pneg %p2503
        $region62: #{msrb_pallas.1} parent=39 // pred_check_branch
          %2506 = sbr.rel (%p2504) target = $region64
        $region63: #{msrb_pallas.1} parent=39 // pred_region
          %v2507 = vld [vmem:[#allocation2 + $0x7] sm:$0x1]
          %v2508 = vld [vmem:[#allocation2 + $0x17] sm:$0x1]
          %v2509 = vld [vmem:[#allocation2 + $0x27] sm:$0x1]
          %v2510 = vld [vmem:[#allocation2 + $0x37] sm:$0x1]
          %vm2511 = vcmask 139264
          %2512 = vst.msk [vmem:[#allocation2 + $0x9] sm:$0x1] %vm2511, %v2507
          %2513 = vst.msk [vmem:[#allocation2 + $0x19] sm:$0x1] %vm2511, %v2508
          %2514 = vst.msk [vmem:[#allocation2 + $0x29] sm:$0x1] %vm2511, %v2509
          %2515 = vst.msk [vmem:[#allocation2 + $0x39] sm:$0x1] %vm2511, %v2510
        $region64: #{msrb_pallas.1} parent=39 // pred_fallthru
          _
        %v2516 = vld [vmem:[#allocation2] sm:$0xff]
        %v2517 = vld [vmem:[#allocation2 + $0x8] sm:$0x3]
        %v2518 = vld [vmem:[#allocation2 + $0x10] sm:$0xff]
        %v2519 = vld [vmem:[#allocation2 + $0x18] sm:$0x3]
        %v2520 = vld [vmem:[#allocation2 + $0x20] sm:$0xff]
        %v2521 = vld [vmem:[#allocation2 + $0x28] sm:$0x3]
        %v2522 = vld [vmem:[#allocation2 + $0x30] sm:$0xff]
        %v2523 = vld [vmem:[#allocation2 + $0x38] sm:$0x3]
        %s2524 = sld [smem:[#allocation9]]
        %v2525 = vstv %s2524
        %s2526 = sld [smem:[#allocation8]]
        %v2527 = vstv %s2526
        %v2528 = vmul.f32 %v2527, %v2516
        %v2529 = vadd.f32 %v2525, %v2528
        %s2530 = sld [smem:[#allocation8 + $0x10]]
        %v2531 = vstv %s2530
        %v2532 = vmul.f32 %v2531, %v2516
        %2534 = vrot.lane.b32.xlu0 %v2532, 127
        %v2535 = vpop.permute.xlu0 %2534
        %v2537 = vadd.f32 %v2529, %v2535
        %s2538 = sld [smem:[#allocation8 + $0x20]]
        %v2539 = vstv %s2538
        %v2540 = vmul.f32 %v2539, %v2516
        %2542 = vrot.lane.b32.xlu0 %v2540, 126
        %v2543 = vpop.permute.xlu0 %2542
        %v2545 = vadd.f32 %v2537, %v2543
        %s2546 = sld [smem:[#allocation8 + $0x30]]
        %v2547 = vstv %s2546
        %v2548 = vmul.f32 %v2547, %v2516
        %v2549 = vmul.f32 %v2547, %v2517
        %v2552 = vrot.slane %v2548, 1
        %v2553 = vrot.slane %v2549, 1
        %v2554 = vsel %vm353, %v2552, %v2553
        %v2556 = vadd.f32 %v2545, %v2554
        %s2557 = sld [smem:[#allocation8 + $0x40]]
        %v2558 = vstv %s2557
        %v2559 = vmul.f32 %v2558, %v2516
        %v2560 = vmul.f32 %v2558, %v2517
        %v2563 = vrot.slane %v2559, 1
        %v2564 = vrot.slane %v2560, 1
        %v2565 = vsel %vm353, %v2563, %v2564
        %2566 = vrot.lane.b32.xlu0 %v2565, 127
        %v2567 = vpop.permute.xlu0 %2566
        %v2569 = vadd.f32 %v2556, %v2567
        %s2570 = sld [smem:[#allocation8 + $0x50]]
        %v2571 = vstv %s2570
        %v2572 = vmul.f32 %v2571, %v2516
        %v2573 = vmul.f32 %v2571, %v2517
        %v2576 = vrot.slane %v2572, 1
        %v2577 = vrot.slane %v2573, 1
        %v2578 = vsel %vm353, %v2576, %v2577
        %2579 = vrot.lane.b32.xlu0 %v2578, 126
        %v2580 = vpop.permute.xlu0 %2579
        %v2582 = vadd.f32 %v2569, %v2580
        %s2583 = sld [smem:[#allocation8 + $0x60]]
        %v2584 = vstv %s2583
        %v2585 = vmul.f32 %v2584, %v2516
        %v2586 = vmul.f32 %v2584, %v2517
        %v2589 = vrot.slane %v2585, 2
        %v2590 = vrot.slane %v2586, 2
        %v2591 = vsel %vm401, %v2589, %v2590
        %v2593 = vadd.f32 %v2582, %v2591
        %s2594 = sld [smem:[#allocation8 + $0x70]]
        %v2595 = vstv %s2594
        %v2596 = vmul.f32 %v2595, %v2516
        %v2597 = vmul.f32 %v2595, %v2517
        %v2600 = vrot.slane %v2596, 2
        %v2601 = vrot.slane %v2597, 2
        %v2602 = vsel %vm401, %v2600, %v2601
        %2603 = vrot.lane.b32.xlu0 %v2602, 127
        %v2604 = vpop.permute.xlu0 %2603
        %v2606 = vadd.f32 %v2593, %v2604
        %s2607 = sld [smem:[#allocation8 + $0x80]]
        %v2608 = vstv %s2607
        %v2609 = vmul.f32 %v2608, %v2516
        %v2610 = vmul.f32 %v2608, %v2517
        %v2613 = vrot.slane %v2609, 2
        %v2614 = vrot.slane %v2610, 2
        %v2615 = vsel %vm401, %v2613, %v2614
        %2616 = vrot.lane.b32.xlu0 %v2615, 126
        %v2617 = vpop.permute.xlu0 %2616
        %v2619 = vadd.f32 %v2606, %v2617
        %s2620 = sld [smem:[#allocation8 + $0x4]]
        %v2621 = vstv %s2620
        %v2622 = vmul.f32 %v2621, %v2518
        %v2623 = vadd.f32 %v2619, %v2622
        %s2624 = sld [smem:[#allocation8 + $0x14]]
        %v2625 = vstv %s2624
        %v2626 = vmul.f32 %v2625, %v2518
        %2628 = vrot.lane.b32.xlu0 %v2626, 127
        %v2629 = vpop.permute.xlu0 %2628
        %v2631 = vadd.f32 %v2623, %v2629
        %s2632 = sld [smem:[#allocation8 + $0x24]]
        %v2633 = vstv %s2632
        %v2634 = vmul.f32 %v2633, %v2518
        %2636 = vrot.lane.b32.xlu0 %v2634, 126
        %v2637 = vpop.permute.xlu0 %2636
        %v2639 = vadd.f32 %v2631, %v2637
        %s2640 = sld [smem:[#allocation8 + $0x34]]
        %v2641 = vstv %s2640
        %v2642 = vmul.f32 %v2641, %v2518
        %v2643 = vmul.f32 %v2641, %v2519
        %v2646 = vrot.slane %v2642, 1
        %v2647 = vrot.slane %v2643, 1
        %v2648 = vsel %vm353, %v2646, %v2647
        %v2650 = vadd.f32 %v2639, %v2648
        %s2651 = sld [smem:[#allocation8 + $0x44]]
        %v2652 = vstv %s2651
        %v2653 = vmul.f32 %v2652, %v2518
        %v2654 = vmul.f32 %v2652, %v2519
        %v2657 = vrot.slane %v2653, 1
        %v2658 = vrot.slane %v2654, 1
        %v2659 = vsel %vm353, %v2657, %v2658
        %2660 = vrot.lane.b32.xlu0 %v2659, 127
        %v2661 = vpop.permute.xlu0 %2660
        %v2663 = vadd.f32 %v2650, %v2661
        %s2664 = sld [smem:[#allocation8 + $0x54]]
        %v2665 = vstv %s2664
        %v2666 = vmul.f32 %v2665, %v2518
        %v2667 = vmul.f32 %v2665, %v2519
        %v2670 = vrot.slane %v2666, 1
        %v2671 = vrot.slane %v2667, 1
        %v2672 = vsel %vm353, %v2670, %v2671
        %2673 = vrot.lane.b32.xlu0 %v2672, 126
        %v2674 = vpop.permute.xlu0 %2673
        %v2676 = vadd.f32 %v2663, %v2674
        %s2677 = sld [smem:[#allocation8 + $0x64]]
        %v2678 = vstv %s2677
        %v2679 = vmul.f32 %v2678, %v2518
        %v2680 = vmul.f32 %v2678, %v2519
        %v2683 = vrot.slane %v2679, 2
        %v2684 = vrot.slane %v2680, 2
        %v2685 = vsel %vm401, %v2683, %v2684
        %v2687 = vadd.f32 %v2676, %v2685
        %s2688 = sld [smem:[#allocation8 + $0x74]]
        %v2689 = vstv %s2688
        %v2690 = vmul.f32 %v2689, %v2518
        %v2691 = vmul.f32 %v2689, %v2519
        %v2694 = vrot.slane %v2690, 2
        %v2695 = vrot.slane %v2691, 2
        %v2696 = vsel %vm401, %v2694, %v2695
        %2697 = vrot.lane.b32.xlu0 %v2696, 127
        %v2698 = vpop.permute.xlu0 %2697
        %v2700 = vadd.f32 %v2687, %v2698
        %s2701 = sld [smem:[#allocation8 + $0x84]]
        %v2702 = vstv %s2701
        %v2703 = vmul.f32 %v2702, %v2518
        %v2704 = vmul.f32 %v2702, %v2519
        %v2707 = vrot.slane %v2703, 2
        %v2708 = vrot.slane %v2704, 2
        %v2709 = vsel %vm401, %v2707, %v2708
        %2710 = vrot.lane.b32.xlu0 %v2709, 126
        %v2711 = vpop.permute.xlu0 %2710
        %v2713 = vadd.f32 %v2700, %v2711
        %s2714 = sld [smem:[#allocation8 + $0x8]]
        %v2715 = vstv %s2714
        %v2716 = vmul.f32 %v2715, %v2520
        %v2717 = vadd.f32 %v2713, %v2716
        %s2718 = sld [smem:[#allocation8 + $0x18]]
        %v2719 = vstv %s2718
        %v2720 = vmul.f32 %v2719, %v2520
        %2722 = vrot.lane.b32.xlu0 %v2720, 127
        %v2723 = vpop.permute.xlu0 %2722
        %v2725 = vadd.f32 %v2717, %v2723
        %s2726 = sld [smem:[#allocation8 + $0x28]]
        %v2727 = vstv %s2726
        %v2728 = vmul.f32 %v2727, %v2520
        %2730 = vrot.lane.b32.xlu0 %v2728, 126
        %v2731 = vpop.permute.xlu0 %2730
        %v2733 = vadd.f32 %v2725, %v2731
        %s2734 = sld [smem:[#allocation8 + $0x38]]
        %v2735 = vstv %s2734
        %v2736 = vmul.f32 %v2735, %v2520
        %v2737 = vmul.f32 %v2735, %v2521
        %v2740 = vrot.slane %v2736, 1
        %v2741 = vrot.slane %v2737, 1
        %v2742 = vsel %vm353, %v2740, %v2741
        %v2744 = vadd.f32 %v2733, %v2742
        %s2745 = sld [smem:[#allocation8 + $0x48]]
        %v2746 = vstv %s2745
        %v2747 = vmul.f32 %v2746, %v2520
        %v2748 = vmul.f32 %v2746, %v2521
        %v2751 = vrot.slane %v2747, 1
        %v2752 = vrot.slane %v2748, 1
        %v2753 = vsel %vm353, %v2751, %v2752
        %2754 = vrot.lane.b32.xlu0 %v2753, 127
        %v2755 = vpop.permute.xlu0 %2754
        %v2757 = vadd.f32 %v2744, %v2755
        %s2758 = sld [smem:[#allocation8 + $0x58]]
        %v2759 = vstv %s2758
        %v2760 = vmul.f32 %v2759, %v2520
        %v2761 = vmul.f32 %v2759, %v2521
        %v2764 = vrot.slane %v2760, 1
        %v2765 = vrot.slane %v2761, 1
        %v2766 = vsel %vm353, %v2764, %v2765
        %2767 = vrot.lane.b32.xlu0 %v2766, 126
        %v2768 = vpop.permute.xlu0 %2767
        %v2770 = vadd.f32 %v2757, %v2768
        %s2771 = sld [smem:[#allocation8 + $0x68]]
        %v2772 = vstv %s2771
        %v2773 = vmul.f32 %v2772, %v2520
        %v2774 = vmul.f32 %v2772, %v2521
        %v2777 = vrot.slane %v2773, 2
        %v2778 = vrot.slane %v2774, 2
        %v2779 = vsel %vm401, %v2777, %v2778
        %v2781 = vadd.f32 %v2770, %v2779
        %s2782 = sld [smem:[#allocation8 + $0x78]]
        %v2783 = vstv %s2782
        %v2784 = vmul.f32 %v2783, %v2520
        %v2785 = vmul.f32 %v2783, %v2521
        %v2788 = vrot.slane %v2784, 2
        %v2789 = vrot.slane %v2785, 2
        %v2790 = vsel %vm401, %v2788, %v2789
        %2791 = vrot.lane.b32.xlu0 %v2790, 127
        %v2792 = vpop.permute.xlu0 %2791
        %v2794 = vadd.f32 %v2781, %v2792
        %s2795 = sld [smem:[#allocation8 + $0x88]]
        %v2796 = vstv %s2795
        %v2797 = vmul.f32 %v2796, %v2520
        %v2798 = vmul.f32 %v2796, %v2521
        %v2801 = vrot.slane %v2797, 2
        %v2802 = vrot.slane %v2798, 2
        %v2803 = vsel %vm401, %v2801, %v2802
        %2804 = vrot.lane.b32.xlu0 %v2803, 126
        %v2805 = vpop.permute.xlu0 %2804
        %v2807 = vadd.f32 %v2794, %v2805
        %s2808 = sld [smem:[#allocation8 + $0xc]]
        %v2809 = vstv %s2808
        %v2810 = vmul.f32 %v2809, %v2522
        %v2811 = vadd.f32 %v2807, %v2810
        %s2812 = sld [smem:[#allocation8 + $0x1c]]
        %v2813 = vstv %s2812
        %v2814 = vmul.f32 %v2813, %v2522
        %2816 = vrot.lane.b32.xlu0 %v2814, 127
        %v2817 = vpop.permute.xlu0 %2816
        %v2819 = vadd.f32 %v2811, %v2817
        %s2820 = sld [smem:[#allocation8 + $0x2c]]
        %v2821 = vstv %s2820
        %v2822 = vmul.f32 %v2821, %v2522
        %2824 = vrot.lane.b32.xlu0 %v2822, 126
        %v2825 = vpop.permute.xlu0 %2824
        %v2827 = vadd.f32 %v2819, %v2825
        %s2828 = sld [smem:[#allocation8 + $0x3c]]
        %v2829 = vstv %s2828
        %v2830 = vmul.f32 %v2829, %v2522
        %v2831 = vmul.f32 %v2829, %v2523
        %v2834 = vrot.slane %v2830, 1
        %v2835 = vrot.slane %v2831, 1
        %v2836 = vsel %vm353, %v2834, %v2835
        %v2838 = vadd.f32 %v2827, %v2836
        %s2839 = sld [smem:[#allocation8 + $0x4c]]
        %v2840 = vstv %s2839
        %v2841 = vmul.f32 %v2840, %v2522
        %v2842 = vmul.f32 %v2840, %v2523
        %v2845 = vrot.slane %v2841, 1
        %v2846 = vrot.slane %v2842, 1
        %v2847 = vsel %vm353, %v2845, %v2846
        %2848 = vrot.lane.b32.xlu0 %v2847, 127
        %v2849 = vpop.permute.xlu0 %2848
        %v2851 = vadd.f32 %v2838, %v2849
        %s2852 = sld [smem:[#allocation8 + $0x5c]]
        %v2853 = vstv %s2852
        %v2854 = vmul.f32 %v2853, %v2522
        %v2855 = vmul.f32 %v2853, %v2523
        %v2858 = vrot.slane %v2854, 1
        %v2859 = vrot.slane %v2855, 1
        %v2860 = vsel %vm353, %v2858, %v2859
        %2861 = vrot.lane.b32.xlu0 %v2860, 126
        %v2862 = vpop.permute.xlu0 %2861
        %v2864 = vadd.f32 %v2851, %v2862
        %s2865 = sld [smem:[#allocation8 + $0x6c]]
        %v2866 = vstv %s2865
        %v2867 = vmul.f32 %v2866, %v2522
        %v2868 = vmul.f32 %v2866, %v2523
        %v2871 = vrot.slane %v2867, 2
        %v2872 = vrot.slane %v2868, 2
        %v2873 = vsel %vm401, %v2871, %v2872
        %v2875 = vadd.f32 %v2864, %v2873
        %s2876 = sld [smem:[#allocation8 + $0x7c]]
        %v2877 = vstv %s2876
        %v2878 = vmul.f32 %v2877, %v2522
        %v2879 = vmul.f32 %v2877, %v2523
        %v2882 = vrot.slane %v2878, 2
        %v2883 = vrot.slane %v2879, 2
        %v2884 = vsel %vm401, %v2882, %v2883
        %2885 = vrot.lane.b32.xlu0 %v2884, 127
        %v2886 = vpop.permute.xlu0 %2885
        %v2888 = vadd.f32 %v2875, %v2886
        %s2889 = sld [smem:[#allocation8 + $0x8c]]
        %v2890 = vstv %s2889
        %v2891 = vmul.f32 %v2890, %v2522
        %v2892 = vmul.f32 %v2890, %v2523
        %v2895 = vrot.slane %v2891, 2
        %v2896 = vrot.slane %v2892, 2
        %v2897 = vsel %vm401, %v2895, %v2896
        %2898 = vrot.lane.b32.xlu0 %v2897, 126
        %v2899 = vpop.permute.xlu0 %2898
        %v2901 = vadd.f32 %v2888, %v2899
        %v2904 = vrot.slane %v303, 2
        %v2905 = vrot.slane %v304, 2
        %v2906 = vsel %vm401, %v2904, %v2905
        %2907 = vrot.lane.b32.xlu0 %v2906, 127
        %v2908 = vpop.permute.xlu0 %2907
        %v2910 = vadd.f32 %v2901, %v2908
        %v2911 = vmax.f32 %v2910, 0.0
        %vm2912 = vcmask 130048
        %2913 = vst.msk [vmem:[%s293] sm:$0xff] %vm2912, %v2911
        %s2914 = sld [smem:[#allocation9 + $0x1]]
        %v2915 = vstv %s2914
        %s2916 = sld [smem:[#allocation8 + $0x1]]
        %v2917 = vstv %s2916
        %v2918 = vmul.f32 %v2917, %v2516
        %v2919 = vadd.f32 %v2915, %v2918
        %s2920 = sld [smem:[#allocation8 + $0x11]]
        %v2921 = vstv %s2920
        %v2922 = vmul.f32 %v2921, %v2516
        %2924 = vrot.lane.b32.xlu0 %v2922, 127
        %v2925 = vpop.permute.xlu0 %2924
        %v2927 = vadd.f32 %v2919, %v2925
        %s2928 = sld [smem:[#allocation8 + $0x21]]
        %v2929 = vstv %s2928
        %v2930 = vmul.f32 %v2929, %v2516
        %2932 = vrot.lane.b32.xlu0 %v2930, 126
        %v2933 = vpop.permute.xlu0 %2932
        %v2935 = vadd.f32 %v2927, %v2933
        %s2936 = sld [smem:[#allocation8 + $0x31]]
        %v2937 = vstv %s2936
        %v2938 = vmul.f32 %v2937, %v2516
        %v2939 = vmul.f32 %v2937, %v2517
        %v2942 = vrot.slane %v2938, 1
        %v2943 = vrot.slane %v2939, 1
        %v2944 = vsel %vm353, %v2942, %v2943
        %v2946 = vadd.f32 %v2935, %v2944
        %s2947 = sld [smem:[#allocation8 + $0x41]]
        %v2948 = vstv %s2947
        %v2949 = vmul.f32 %v2948, %v2516
        %v2950 = vmul.f32 %v2948, %v2517
        %v2953 = vrot.slane %v2949, 1
        %v2954 = vrot.slane %v2950, 1
        %v2955 = vsel %vm353, %v2953, %v2954
        %2956 = vrot.lane.b32.xlu0 %v2955, 127
        %v2957 = vpop.permute.xlu0 %2956
        %v2959 = vadd.f32 %v2946, %v2957
        %s2960 = sld [smem:[#allocation8 + $0x51]]
        %v2961 = vstv %s2960
        %v2962 = vmul.f32 %v2961, %v2516
        %v2963 = vmul.f32 %v2961, %v2517
        %v2966 = vrot.slane %v2962, 1
        %v2967 = vrot.slane %v2963, 1
        %v2968 = vsel %vm353, %v2966, %v2967
        %2969 = vrot.lane.b32.xlu0 %v2968, 126
        %v2970 = vpop.permute.xlu0 %2969
        %v2972 = vadd.f32 %v2959, %v2970
        %s2973 = sld [smem:[#allocation8 + $0x61]]
        %v2974 = vstv %s2973
        %v2975 = vmul.f32 %v2974, %v2516
        %v2976 = vmul.f32 %v2974, %v2517
        %v2979 = vrot.slane %v2975, 2
        %v2980 = vrot.slane %v2976, 2
        %v2981 = vsel %vm401, %v2979, %v2980
        %v2983 = vadd.f32 %v2972, %v2981
        %s2984 = sld [smem:[#allocation8 + $0x71]]
        %v2985 = vstv %s2984
        %v2986 = vmul.f32 %v2985, %v2516
        %v2987 = vmul.f32 %v2985, %v2517
        %v2990 = vrot.slane %v2986, 2
        %v2991 = vrot.slane %v2987, 2
        %v2992 = vsel %vm401, %v2990, %v2991
        %2993 = vrot.lane.b32.xlu0 %v2992, 127
        %v2994 = vpop.permute.xlu0 %2993
        %v2996 = vadd.f32 %v2983, %v2994
        %s2997 = sld [smem:[#allocation8 + $0x81]]
        %v2998 = vstv %s2997
        %v2999 = vmul.f32 %v2998, %v2516
        %v3000 = vmul.f32 %v2998, %v2517
        %v3003 = vrot.slane %v2999, 2
        %v3004 = vrot.slane %v3000, 2
        %v3005 = vsel %vm401, %v3003, %v3004
        %3006 = vrot.lane.b32.xlu0 %v3005, 126
        %v3007 = vpop.permute.xlu0 %3006
        %v3009 = vadd.f32 %v2996, %v3007
        %s3010 = sld [smem:[#allocation8 + $0x5]]
        %v3011 = vstv %s3010
        %v3012 = vmul.f32 %v3011, %v2518
        %v3013 = vadd.f32 %v3009, %v3012
        %s3014 = sld [smem:[#allocation8 + $0x15]]
        %v3015 = vstv %s3014
        %v3016 = vmul.f32 %v3015, %v2518
        %3018 = vrot.lane.b32.xlu0 %v3016, 127
        %v3019 = vpop.permute.xlu0 %3018
        %v3021 = vadd.f32 %v3013, %v3019
        %s3022 = sld [smem:[#allocation8 + $0x25]]
        %v3023 = vstv %s3022
        %v3024 = vmul.f32 %v3023, %v2518
        %3026 = vrot.lane.b32.xlu0 %v3024, 126
        %v3027 = vpop.permute.xlu0 %3026
        %v3029 = vadd.f32 %v3021, %v3027
        %s3030 = sld [smem:[#allocation8 + $0x35]]
        %v3031 = vstv %s3030
        %v3032 = vmul.f32 %v3031, %v2518
        %v3033 = vmul.f32 %v3031, %v2519
        %v3036 = vrot.slane %v3032, 1
        %v3037 = vrot.slane %v3033, 1
        %v3038 = vsel %vm353, %v3036, %v3037
        %v3040 = vadd.f32 %v3029, %v3038
        %s3041 = sld [smem:[#allocation8 + $0x45]]
        %v3042 = vstv %s3041
        %v3043 = vmul.f32 %v3042, %v2518
        %v3044 = vmul.f32 %v3042, %v2519
        %v3047 = vrot.slane %v3043, 1
        %v3048 = vrot.slane %v3044, 1
        %v3049 = vsel %vm353, %v3047, %v3048
        %3050 = vrot.lane.b32.xlu0 %v3049, 127
        %v3051 = vpop.permute.xlu0 %3050
        %v3053 = vadd.f32 %v3040, %v3051
        %s3054 = sld [smem:[#allocation8 + $0x55]]
        %v3055 = vstv %s3054
        %v3056 = vmul.f32 %v3055, %v2518
        %v3057 = vmul.f32 %v3055, %v2519
        %v3060 = vrot.slane %v3056, 1
        %v3061 = vrot.slane %v3057, 1
        %v3062 = vsel %vm353, %v3060, %v3061
        %3063 = vrot.lane.b32.xlu0 %v3062, 126
        %v3064 = vpop.permute.xlu0 %3063
        %v3066 = vadd.f32 %v3053, %v3064
        %s3067 = sld [smem:[#allocation8 + $0x65]]
        %v3068 = vstv %s3067
        %v3069 = vmul.f32 %v3068, %v2518
        %v3070 = vmul.f32 %v3068, %v2519
        %v3073 = vrot.slane %v3069, 2
        %v3074 = vrot.slane %v3070, 2
        %v3075 = vsel %vm401, %v3073, %v3074
        %v3077 = vadd.f32 %v3066, %v3075
        %s3078 = sld [smem:[#allocation8 + $0x75]]
        %v3079 = vstv %s3078
        %v3080 = vmul.f32 %v3079, %v2518
        %v3081 = vmul.f32 %v3079, %v2519
        %v3084 = vrot.slane %v3080, 2
        %v3085 = vrot.slane %v3081, 2
        %v3086 = vsel %vm401, %v3084, %v3085
        %3087 = vrot.lane.b32.xlu0 %v3086, 127
        %v3088 = vpop.permute.xlu0 %3087
        %v3090 = vadd.f32 %v3077, %v3088
        %s3091 = sld [smem:[#allocation8 + $0x85]]
        %v3092 = vstv %s3091
        %v3093 = vmul.f32 %v3092, %v2518
        %v3094 = vmul.f32 %v3092, %v2519
        %v3097 = vrot.slane %v3093, 2
        %v3098 = vrot.slane %v3094, 2
        %v3099 = vsel %vm401, %v3097, %v3098
        %3100 = vrot.lane.b32.xlu0 %v3099, 126
        %v3101 = vpop.permute.xlu0 %3100
        %v3103 = vadd.f32 %v3090, %v3101
        %s3104 = sld [smem:[#allocation8 + $0x9]]
        %v3105 = vstv %s3104
        %v3106 = vmul.f32 %v3105, %v2520
        %v3107 = vadd.f32 %v3103, %v3106
        %s3108 = sld [smem:[#allocation8 + $0x19]]
        %v3109 = vstv %s3108
        %v3110 = vmul.f32 %v3109, %v2520
        %3112 = vrot.lane.b32.xlu0 %v3110, 127
        %v3113 = vpop.permute.xlu0 %3112
        %v3115 = vadd.f32 %v3107, %v3113
        %s3116 = sld [smem:[#allocation8 + $0x29]]
        %v3117 = vstv %s3116
        %v3118 = vmul.f32 %v3117, %v2520
        %3120 = vrot.lane.b32.xlu0 %v3118, 126
        %v3121 = vpop.permute.xlu0 %3120
        %v3123 = vadd.f32 %v3115, %v3121
        %s3124 = sld [smem:[#allocation8 + $0x39]]
        %v3125 = vstv %s3124
        %v3126 = vmul.f32 %v3125, %v2520
        %v3127 = vmul.f32 %v3125, %v2521
        %v3130 = vrot.slane %v3126, 1
        %v3131 = vrot.slane %v3127, 1
        %v3132 = vsel %vm353, %v3130, %v3131
        %v3134 = vadd.f32 %v3123, %v3132
        %s3135 = sld [smem:[#allocation8 + $0x49]]
        %v3136 = vstv %s3135
        %v3137 = vmul.f32 %v3136, %v2520
        %v3138 = vmul.f32 %v3136, %v2521
        %v3141 = vrot.slane %v3137, 1
        %v3142 = vrot.slane %v3138, 1
        %v3143 = vsel %vm353, %v3141, %v3142
        %3144 = vrot.lane.b32.xlu0 %v3143, 127
        %v3145 = vpop.permute.xlu0 %3144
        %v3147 = vadd.f32 %v3134, %v3145
        %s3148 = sld [smem:[#allocation8 + $0x59]]
        %v3149 = vstv %s3148
        %v3150 = vmul.f32 %v3149, %v2520
        %v3151 = vmul.f32 %v3149, %v2521
        %v3154 = vrot.slane %v3150, 1
        %v3155 = vrot.slane %v3151, 1
        %v3156 = vsel %vm353, %v3154, %v3155
        %3157 = vrot.lane.b32.xlu0 %v3156, 126
        %v3158 = vpop.permute.xlu0 %3157
        %v3160 = vadd.f32 %v3147, %v3158
        %s3161 = sld [smem:[#allocation8 + $0x69]]
        %v3162 = vstv %s3161
        %v3163 = vmul.f32 %v3162, %v2520
        %v3164 = vmul.f32 %v3162, %v2521
        %v3167 = vrot.slane %v3163, 2
        %v3168 = vrot.slane %v3164, 2
        %v3169 = vsel %vm401, %v3167, %v3168
        %v3171 = vadd.f32 %v3160, %v3169
        %s3172 = sld [smem:[#allocation8 + $0x79]]
        %v3173 = vstv %s3172
        %v3174 = vmul.f32 %v3173, %v2520
        %v3175 = vmul.f32 %v3173, %v2521
        %v3178 = vrot.slane %v3174, 2
        %v3179 = vrot.slane %v3175, 2
        %v3180 = vsel %vm401, %v3178, %v3179
        %3181 = vrot.lane.b32.xlu0 %v3180, 127
        %v3182 = vpop.permute.xlu0 %3181
        %v3184 = vadd.f32 %v3171, %v3182
        %s3185 = sld [smem:[#allocation8 + $0x89]]
        %v3186 = vstv %s3185
        %v3187 = vmul.f32 %v3186, %v2520
        %v3188 = vmul.f32 %v3186, %v2521
        %v3191 = vrot.slane %v3187, 2
        %v3192 = vrot.slane %v3188, 2
        %v3193 = vsel %vm401, %v3191, %v3192
        %3194 = vrot.lane.b32.xlu0 %v3193, 126
        %v3195 = vpop.permute.xlu0 %3194
        %v3197 = vadd.f32 %v3184, %v3195
        %s3198 = sld [smem:[#allocation8 + $0xd]]
        %v3199 = vstv %s3198
        %v3200 = vmul.f32 %v3199, %v2522
        %v3201 = vadd.f32 %v3197, %v3200
        %s3202 = sld [smem:[#allocation8 + $0x1d]]
        %v3203 = vstv %s3202
        %v3204 = vmul.f32 %v3203, %v2522
        %3206 = vrot.lane.b32.xlu0 %v3204, 127
        %v3207 = vpop.permute.xlu0 %3206
        %v3209 = vadd.f32 %v3201, %v3207
        %s3210 = sld [smem:[#allocation8 + $0x2d]]
        %v3211 = vstv %s3210
        %v3212 = vmul.f32 %v3211, %v2522
        %3214 = vrot.lane.b32.xlu0 %v3212, 126
        %v3215 = vpop.permute.xlu0 %3214
        %v3217 = vadd.f32 %v3209, %v3215
        %s3218 = sld [smem:[#allocation8 + $0x3d]]
        %v3219 = vstv %s3218
        %v3220 = vmul.f32 %v3219, %v2522
        %v3221 = vmul.f32 %v3219, %v2523
        %v3224 = vrot.slane %v3220, 1
        %v3225 = vrot.slane %v3221, 1
        %v3226 = vsel %vm353, %v3224, %v3225
        %v3228 = vadd.f32 %v3217, %v3226
        %s3229 = sld [smem:[#allocation8 + $0x4d]]
        %v3230 = vstv %s3229
        %v3231 = vmul.f32 %v3230, %v2522
        %v3232 = vmul.f32 %v3230, %v2523
        %v3235 = vrot.slane %v3231, 1
        %v3236 = vrot.slane %v3232, 1
        %v3237 = vsel %vm353, %v3235, %v3236
        %3238 = vrot.lane.b32.xlu0 %v3237, 127
        %v3239 = vpop.permute.xlu0 %3238
        %v3241 = vadd.f32 %v3228, %v3239
        %s3242 = sld [smem:[#allocation8 + $0x5d]]
        %v3243 = vstv %s3242
        %v3244 = vmul.f32 %v3243, %v2522
        %v3245 = vmul.f32 %v3243, %v2523
        %v3248 = vrot.slane %v3244, 1
        %v3249 = vrot.slane %v3245, 1
        %v3250 = vsel %vm353, %v3248, %v3249
        %3251 = vrot.lane.b32.xlu0 %v3250, 126
        %v3252 = vpop.permute.xlu0 %3251
        %v3254 = vadd.f32 %v3241, %v3252
        %s3255 = sld [smem:[#allocation8 + $0x6d]]
        %v3256 = vstv %s3255
        %v3257 = vmul.f32 %v3256, %v2522
        %v3258 = vmul.f32 %v3256, %v2523
        %v3261 = vrot.slane %v3257, 2
        %v3262 = vrot.slane %v3258, 2
        %v3263 = vsel %vm401, %v3261, %v3262
        %v3265 = vadd.f32 %v3254, %v3263
        %s3266 = sld [smem:[#allocation8 + $0x7d]]
        %v3267 = vstv %s3266
        %v3268 = vmul.f32 %v3267, %v2522
        %v3269 = vmul.f32 %v3267, %v2523
        %v3272 = vrot.slane %v3268, 2
        %v3273 = vrot.slane %v3269, 2
        %v3274 = vsel %vm401, %v3272, %v3273
        %3275 = vrot.lane.b32.xlu0 %v3274, 127
        %v3276 = vpop.permute.xlu0 %3275
        %v3278 = vadd.f32 %v3265, %v3276
        %s3279 = sld [smem:[#allocation8 + $0x8d]]
        %v3280 = vstv %s3279
        %v3281 = vmul.f32 %v3280, %v2522
        %v3282 = vmul.f32 %v3280, %v2523
        %v3285 = vrot.slane %v3281, 2
        %v3286 = vrot.slane %v3282, 2
        %v3287 = vsel %vm401, %v3285, %v3286
        %3288 = vrot.lane.b32.xlu0 %v3287, 126
        %v3289 = vpop.permute.xlu0 %3288
        %v3291 = vadd.f32 %v3278, %v3289
        %v3294 = vrot.slane %v305, 2
        %v3295 = vrot.slane %v306, 2
        %v3296 = vsel %vm401, %v3294, %v3295
        %3297 = vrot.lane.b32.xlu0 %v3296, 127
        %v3298 = vpop.permute.xlu0 %3297
        %v3300 = vadd.f32 %v3291, %v3298
        %v3301 = vmax.f32 %v3300, 0.0
        %s3302 = scalar_lea.vmem %s293, 8 [#allocation11]
        %3303 = vst.msk [vmem:[%s3302] sm:$0xff] %vm2912, %v3301
        %s3304 = sld [smem:[#allocation9 + $0x2]]
        %v3305 = vstv %s3304
        %s3306 = sld [smem:[#allocation8 + $0x2]]
        %v3307 = vstv %s3306
        %v3308 = vmul.f32 %v3307, %v2516
        %v3309 = vadd.f32 %v3305, %v3308
        %s3310 = sld [smem:[#allocation8 + $0x12]]
        %v3311 = vstv %s3310
        %v3312 = vmul.f32 %v3311, %v2516
        %3314 = vrot.lane.b32.xlu0 %v3312, 127
        %v3315 = vpop.permute.xlu0 %3314
        %v3317 = vadd.f32 %v3309, %v3315
        %s3318 = sld [smem:[#allocation8 + $0x22]]
        %v3319 = vstv %s3318
        %v3320 = vmul.f32 %v3319, %v2516
        %3322 = vrot.lane.b32.xlu0 %v3320, 126
        %v3323 = vpop.permute.xlu0 %3322
        %v3325 = vadd.f32 %v3317, %v3323
        %s3326 = sld [smem:[#allocation8 + $0x32]]
        %v3327 = vstv %s3326
        %v3328 = vmul.f32 %v3327, %v2516
        %v3329 = vmul.f32 %v3327, %v2517
        %v3332 = vrot.slane %v3328, 1
        %v3333 = vrot.slane %v3329, 1
        %v3334 = vsel %vm353, %v3332, %v3333
        %v3336 = vadd.f32 %v3325, %v3334
        %s3337 = sld [smem:[#allocation8 + $0x42]]
        %v3338 = vstv %s3337
        %v3339 = vmul.f32 %v3338, %v2516
        %v3340 = vmul.f32 %v3338, %v2517
        %v3343 = vrot.slane %v3339, 1
        %v3344 = vrot.slane %v3340, 1
        %v3345 = vsel %vm353, %v3343, %v3344
        %3346 = vrot.lane.b32.xlu0 %v3345, 127
        %v3347 = vpop.permute.xlu0 %3346
        %v3349 = vadd.f32 %v3336, %v3347
        %s3350 = sld [smem:[#allocation8 + $0x52]]
        %v3351 = vstv %s3350
        %v3352 = vmul.f32 %v3351, %v2516
        %v3353 = vmul.f32 %v3351, %v2517
        %v3356 = vrot.slane %v3352, 1
        %v3357 = vrot.slane %v3353, 1
        %v3358 = vsel %vm353, %v3356, %v3357
        %3359 = vrot.lane.b32.xlu0 %v3358, 126
        %v3360 = vpop.permute.xlu0 %3359
        %v3362 = vadd.f32 %v3349, %v3360
        %s3363 = sld [smem:[#allocation8 + $0x62]]
        %v3364 = vstv %s3363
        %v3365 = vmul.f32 %v3364, %v2516
        %v3366 = vmul.f32 %v3364, %v2517
        %v3369 = vrot.slane %v3365, 2
        %v3370 = vrot.slane %v3366, 2
        %v3371 = vsel %vm401, %v3369, %v3370
        %v3373 = vadd.f32 %v3362, %v3371
        %s3374 = sld [smem:[#allocation8 + $0x72]]
        %v3375 = vstv %s3374
        %v3376 = vmul.f32 %v3375, %v2516
        %v3377 = vmul.f32 %v3375, %v2517
        %v3380 = vrot.slane %v3376, 2
        %v3381 = vrot.slane %v3377, 2
        %v3382 = vsel %vm401, %v3380, %v3381
        %3383 = vrot.lane.b32.xlu0 %v3382, 127
        %v3384 = vpop.permute.xlu0 %3383
        %v3386 = vadd.f32 %v3373, %v3384
        %s3387 = sld [smem:[#allocation8 + $0x82]]
        %v3388 = vstv %s3387
        %v3389 = vmul.f32 %v3388, %v2516
        %v3390 = vmul.f32 %v3388, %v2517
        %v3393 = vrot.slane %v3389, 2
        %v3394 = vrot.slane %v3390, 2
        %v3395 = vsel %vm401, %v3393, %v3394
        %3396 = vrot.lane.b32.xlu0 %v3395, 126
        %v3397 = vpop.permute.xlu0 %3396
        %v3399 = vadd.f32 %v3386, %v3397
        %s3400 = sld [smem:[#allocation8 + $0x6]]
        %v3401 = vstv %s3400
        %v3402 = vmul.f32 %v3401, %v2518
        %v3403 = vadd.f32 %v3399, %v3402
        %s3404 = sld [smem:[#allocation8 + $0x16]]
        %v3405 = vstv %s3404
        %v3406 = vmul.f32 %v3405, %v2518
        %3408 = vrot.lane.b32.xlu0 %v3406, 127
        %v3409 = vpop.permute.xlu0 %3408
        %v3411 = vadd.f32 %v3403, %v3409
        %s3412 = sld [smem:[#allocation8 + $0x26]]
        %v3413 = vstv %s3412
        %v3414 = vmul.f32 %v3413, %v2518
        %3416 = vrot.lane.b32.xlu0 %v3414, 126
        %v3417 = vpop.permute.xlu0 %3416
        %v3419 = vadd.f32 %v3411, %v3417
        %s3420 = sld [smem:[#allocation8 + $0x36]]
        %v3421 = vstv %s3420
        %v3422 = vmul.f32 %v3421, %v2518
        %v3423 = vmul.f32 %v3421, %v2519
        %v3426 = vrot.slane %v3422, 1
        %v3427 = vrot.slane %v3423, 1
        %v3428 = vsel %vm353, %v3426, %v3427
        %v3430 = vadd.f32 %v3419, %v3428
        %s3431 = sld [smem:[#allocation8 + $0x46]]
        %v3432 = vstv %s3431
        %v3433 = vmul.f32 %v3432, %v2518
        %v3434 = vmul.f32 %v3432, %v2519
        %v3437 = vrot.slane %v3433, 1
        %v3438 = vrot.slane %v3434, 1
        %v3439 = vsel %vm353, %v3437, %v3438
        %3440 = vrot.lane.b32.xlu0 %v3439, 127
        %v3441 = vpop.permute.xlu0 %3440
        %v3443 = vadd.f32 %v3430, %v3441
        %s3444 = sld [smem:[#allocation8 + $0x56]]
        %v3445 = vstv %s3444
        %v3446 = vmul.f32 %v3445, %v2518
        %v3447 = vmul.f32 %v3445, %v2519
        %v3450 = vrot.slane %v3446, 1
        %v3451 = vrot.slane %v3447, 1
        %v3452 = vsel %vm353, %v3450, %v3451
        %3453 = vrot.lane.b32.xlu0 %v3452, 126
        %v3454 = vpop.permute.xlu0 %3453
        %v3456 = vadd.f32 %v3443, %v3454
        %s3457 = sld [smem:[#allocation8 + $0x66]]
        %v3458 = vstv %s3457
        %v3459 = vmul.f32 %v3458, %v2518
        %v3460 = vmul.f32 %v3458, %v2519
        %v3463 = vrot.slane %v3459, 2
        %v3464 = vrot.slane %v3460, 2
        %v3465 = vsel %vm401, %v3463, %v3464
        %v3467 = vadd.f32 %v3456, %v3465
        %s3468 = sld [smem:[#allocation8 + $0x76]]
        %v3469 = vstv %s3468
        %v3470 = vmul.f32 %v3469, %v2518
        %v3471 = vmul.f32 %v3469, %v2519
        %v3474 = vrot.slane %v3470, 2
        %v3475 = vrot.slane %v3471, 2
        %v3476 = vsel %vm401, %v3474, %v3475
        %3477 = vrot.lane.b32.xlu0 %v3476, 127
        %v3478 = vpop.permute.xlu0 %3477
        %v3480 = vadd.f32 %v3467, %v3478
        %s3481 = sld [smem:[#allocation8 + $0x86]]
        %v3482 = vstv %s3481
        %v3483 = vmul.f32 %v3482, %v2518
        %v3484 = vmul.f32 %v3482, %v2519
        %v3487 = vrot.slane %v3483, 2
        %v3488 = vrot.slane %v3484, 2
        %v3489 = vsel %vm401, %v3487, %v3488
        %3490 = vrot.lane.b32.xlu0 %v3489, 126
        %v3491 = vpop.permute.xlu0 %3490
        %v3493 = vadd.f32 %v3480, %v3491
        %s3494 = sld [smem:[#allocation8 + $0xa]]
        %v3495 = vstv %s3494
        %v3496 = vmul.f32 %v3495, %v2520
        %v3497 = vadd.f32 %v3493, %v3496
        %s3498 = sld [smem:[#allocation8 + $0x1a]]
        %v3499 = vstv %s3498
        %v3500 = vmul.f32 %v3499, %v2520
        %3502 = vrot.lane.b32.xlu0 %v3500, 127
        %v3503 = vpop.permute.xlu0 %3502
        %v3505 = vadd.f32 %v3497, %v3503
        %s3506 = sld [smem:[#allocation8 + $0x2a]]
        %v3507 = vstv %s3506
        %v3508 = vmul.f32 %v3507, %v2520
        %3510 = vrot.lane.b32.xlu0 %v3508, 126
        %v3511 = vpop.permute.xlu0 %3510
        %v3513 = vadd.f32 %v3505, %v3511
        %s3514 = sld [smem:[#allocation8 + $0x3a]]
        %v3515 = vstv %s3514
        %v3516 = vmul.f32 %v3515, %v2520
        %v3517 = vmul.f32 %v3515, %v2521
        %v3520 = vrot.slane %v3516, 1
        %v3521 = vrot.slane %v3517, 1
        %v3522 = vsel %vm353, %v3520, %v3521
        %v3524 = vadd.f32 %v3513, %v3522
        %s3525 = sld [smem:[#allocation8 + $0x4a]]
        %v3526 = vstv %s3525
        %v3527 = vmul.f32 %v3526, %v2520
        %v3528 = vmul.f32 %v3526, %v2521
        %v3531 = vrot.slane %v3527, 1
        %v3532 = vrot.slane %v3528, 1
        %v3533 = vsel %vm353, %v3531, %v3532
        %3534 = vrot.lane.b32.xlu0 %v3533, 127
        %v3535 = vpop.permute.xlu0 %3534
        %v3537 = vadd.f32 %v3524, %v3535
        %s3538 = sld [smem:[#allocation8 + $0x5a]]
        %v3539 = vstv %s3538
        %v3540 = vmul.f32 %v3539, %v2520
        %v3541 = vmul.f32 %v3539, %v2521
        %v3544 = vrot.slane %v3540, 1
        %v3545 = vrot.slane %v3541, 1
        %v3546 = vsel %vm353, %v3544, %v3545
        %3547 = vrot.lane.b32.xlu0 %v3546, 126
        %v3548 = vpop.permute.xlu0 %3547
        %v3550 = vadd.f32 %v3537, %v3548
        %s3551 = sld [smem:[#allocation8 + $0x6a]]
        %v3552 = vstv %s3551
        %v3553 = vmul.f32 %v3552, %v2520
        %v3554 = vmul.f32 %v3552, %v2521
        %v3557 = vrot.slane %v3553, 2
        %v3558 = vrot.slane %v3554, 2
        %v3559 = vsel %vm401, %v3557, %v3558
        %v3561 = vadd.f32 %v3550, %v3559
        %s3562 = sld [smem:[#allocation8 + $0x7a]]
        %v3563 = vstv %s3562
        %v3564 = vmul.f32 %v3563, %v2520
        %v3565 = vmul.f32 %v3563, %v2521
        %v3568 = vrot.slane %v3564, 2
        %v3569 = vrot.slane %v3565, 2
        %v3570 = vsel %vm401, %v3568, %v3569
        %3571 = vrot.lane.b32.xlu0 %v3570, 127
        %v3572 = vpop.permute.xlu0 %3571
        %v3574 = vadd.f32 %v3561, %v3572
        %s3575 = sld [smem:[#allocation8 + $0x8a]]
        %v3576 = vstv %s3575
        %v3577 = vmul.f32 %v3576, %v2520
        %v3578 = vmul.f32 %v3576, %v2521
        %v3581 = vrot.slane %v3577, 2
        %v3582 = vrot.slane %v3578, 2
        %v3583 = vsel %vm401, %v3581, %v3582
        %3584 = vrot.lane.b32.xlu0 %v3583, 126
        %v3585 = vpop.permute.xlu0 %3584
        %v3587 = vadd.f32 %v3574, %v3585
        %s3588 = sld [smem:[#allocation8 + $0xe]]
        %v3589 = vstv %s3588
        %v3590 = vmul.f32 %v3589, %v2522
        %v3591 = vadd.f32 %v3587, %v3590
        %s3592 = sld [smem:[#allocation8 + $0x1e]]
        %v3593 = vstv %s3592
        %v3594 = vmul.f32 %v3593, %v2522
        %3596 = vrot.lane.b32.xlu0 %v3594, 127
        %v3597 = vpop.permute.xlu0 %3596
        %v3599 = vadd.f32 %v3591, %v3597
        %s3600 = sld [smem:[#allocation8 + $0x2e]]
        %v3601 = vstv %s3600
        %v3602 = vmul.f32 %v3601, %v2522
        %3604 = vrot.lane.b32.xlu0 %v3602, 126
        %v3605 = vpop.permute.xlu0 %3604
        %v3607 = vadd.f32 %v3599, %v3605
        %s3608 = sld [smem:[#allocation8 + $0x3e]]
        %v3609 = vstv %s3608
        %v3610 = vmul.f32 %v3609, %v2522
        %v3611 = vmul.f32 %v3609, %v2523
        %v3614 = vrot.slane %v3610, 1
        %v3615 = vrot.slane %v3611, 1
        %v3616 = vsel %vm353, %v3614, %v3615
        %v3618 = vadd.f32 %v3607, %v3616
        %s3619 = sld [smem:[#allocation8 + $0x4e]]
        %v3620 = vstv %s3619
        %v3621 = vmul.f32 %v3620, %v2522
        %v3622 = vmul.f32 %v3620, %v2523
        %v3625 = vrot.slane %v3621, 1
        %v3626 = vrot.slane %v3622, 1
        %v3627 = vsel %vm353, %v3625, %v3626
        %3628 = vrot.lane.b32.xlu0 %v3627, 127
        %v3629 = vpop.permute.xlu0 %3628
        %v3631 = vadd.f32 %v3618, %v3629
        %s3632 = sld [smem:[#allocation8 + $0x5e]]
        %v3633 = vstv %s3632
        %v3634 = vmul.f32 %v3633, %v2522
        %v3635 = vmul.f32 %v3633, %v2523
        %v3638 = vrot.slane %v3634, 1
        %v3639 = vrot.slane %v3635, 1
        %v3640 = vsel %vm353, %v3638, %v3639
        %3641 = vrot.lane.b32.xlu0 %v3640, 126
        %v3642 = vpop.permute.xlu0 %3641
        %v3644 = vadd.f32 %v3631, %v3642
        %s3645 = sld [smem:[#allocation8 + $0x6e]]
        %v3646 = vstv %s3645
        %v3647 = vmul.f32 %v3646, %v2522
        %v3648 = vmul.f32 %v3646, %v2523
        %v3651 = vrot.slane %v3647, 2
        %v3652 = vrot.slane %v3648, 2
        %v3653 = vsel %vm401, %v3651, %v3652
        %v3655 = vadd.f32 %v3644, %v3653
        %s3656 = sld [smem:[#allocation8 + $0x7e]]
        %v3657 = vstv %s3656
        %v3658 = vmul.f32 %v3657, %v2522
        %v3659 = vmul.f32 %v3657, %v2523
        %v3662 = vrot.slane %v3658, 2
        %v3663 = vrot.slane %v3659, 2
        %v3664 = vsel %vm401, %v3662, %v3663
        %3665 = vrot.lane.b32.xlu0 %v3664, 127
        %v3666 = vpop.permute.xlu0 %3665
        %v3668 = vadd.f32 %v3655, %v3666
        %s3669 = sld [smem:[#allocation8 + $0x8e]]
        %v3670 = vstv %s3669
        %v3671 = vmul.f32 %v3670, %v2522
        %v3672 = vmul.f32 %v3670, %v2523
        %v3675 = vrot.slane %v3671, 2
        %v3676 = vrot.slane %v3672, 2
        %v3677 = vsel %vm401, %v3675, %v3676
        %3678 = vrot.lane.b32.xlu0 %v3677, 126
        %v3679 = vpop.permute.xlu0 %3678
        %v3681 = vadd.f32 %v3668, %v3679
        %v3684 = vrot.slane %v307, 2
        %v3685 = vrot.slane %v308, 2
        %v3686 = vsel %vm401, %v3684, %v3685
        %3687 = vrot.lane.b32.xlu0 %v3686, 127
        %v3688 = vpop.permute.xlu0 %3687
        %v3690 = vadd.f32 %v3681, %v3688
        %v3691 = vmax.f32 %v3690, 0.0
        %s3692 = scalar_lea.vmem %s293, 16 [#allocation11]
        %3693 = vst.msk [vmem:[%s3692] sm:$0xff] %vm2912, %v3691
        %s3694 = sld [smem:[#allocation9 + $0x3]]
        %v3695 = vstv %s3694
        %s3696 = sld [smem:[#allocation8 + $0x3]]
        %v3697 = vstv %s3696
        %v3698 = vmul.f32 %v3697, %v2516
        %v3699 = vadd.f32 %v3695, %v3698
        %s3700 = sld [smem:[#allocation8 + $0x13]]
        %v3701 = vstv %s3700
        %v3702 = vmul.f32 %v3701, %v2516
        %3704 = vrot.lane.b32.xlu0 %v3702, 127
        %v3705 = vpop.permute.xlu0 %3704
        %v3707 = vadd.f32 %v3699, %v3705
        %s3708 = sld [smem:[#allocation8 + $0x23]]
        %v3709 = vstv %s3708
        %v3710 = vmul.f32 %v3709, %v2516
        %3712 = vrot.lane.b32.xlu0 %v3710, 126
        %v3713 = vpop.permute.xlu0 %3712
        %v3715 = vadd.f32 %v3707, %v3713
        %s3716 = sld [smem:[#allocation8 + $0x33]]
        %v3717 = vstv %s3716
        %v3718 = vmul.f32 %v3717, %v2516
        %v3719 = vmul.f32 %v3717, %v2517
        %v3722 = vrot.slane %v3718, 1
        %v3723 = vrot.slane %v3719, 1
        %v3724 = vsel %vm353, %v3722, %v3723
        %v3726 = vadd.f32 %v3715, %v3724
        %s3727 = sld [smem:[#allocation8 + $0x43]]
        %v3728 = vstv %s3727
        %v3729 = vmul.f32 %v3728, %v2516
        %v3730 = vmul.f32 %v3728, %v2517
        %v3733 = vrot.slane %v3729, 1
        %v3734 = vrot.slane %v3730, 1
        %v3735 = vsel %vm353, %v3733, %v3734
        %3736 = vrot.lane.b32.xlu0 %v3735, 127
        %v3737 = vpop.permute.xlu0 %3736
        %v3739 = vadd.f32 %v3726, %v3737
        %s3740 = sld [smem:[#allocation8 + $0x53]]
        %v3741 = vstv %s3740
        %v3742 = vmul.f32 %v3741, %v2516
        %v3743 = vmul.f32 %v3741, %v2517
        %v3746 = vrot.slane %v3742, 1
        %v3747 = vrot.slane %v3743, 1
        %v3748 = vsel %vm353, %v3746, %v3747
        %3749 = vrot.lane.b32.xlu0 %v3748, 126
        %v3750 = vpop.permute.xlu0 %3749
        %v3752 = vadd.f32 %v3739, %v3750
        %s3753 = sld [smem:[#allocation8 + $0x63]]
        %v3754 = vstv %s3753
        %v3755 = vmul.f32 %v3754, %v2516
        %v3756 = vmul.f32 %v3754, %v2517
        %v3759 = vrot.slane %v3755, 2
        %v3760 = vrot.slane %v3756, 2
        %v3761 = vsel %vm401, %v3759, %v3760
        %v3763 = vadd.f32 %v3752, %v3761
        %s3764 = sld [smem:[#allocation8 + $0x73]]
        %v3765 = vstv %s3764
        %v3766 = vmul.f32 %v3765, %v2516
        %v3767 = vmul.f32 %v3765, %v2517
        %v3770 = vrot.slane %v3766, 2
        %v3771 = vrot.slane %v3767, 2
        %v3772 = vsel %vm401, %v3770, %v3771
        %3773 = vrot.lane.b32.xlu0 %v3772, 127
        %v3774 = vpop.permute.xlu0 %3773
        %v3776 = vadd.f32 %v3763, %v3774
        %s3777 = sld [smem:[#allocation8 + $0x83]]
        %v3778 = vstv %s3777
        %v3779 = vmul.f32 %v3778, %v2516
        %v3780 = vmul.f32 %v3778, %v2517
        %v3783 = vrot.slane %v3779, 2
        %v3784 = vrot.slane %v3780, 2
        %v3785 = vsel %vm401, %v3783, %v3784
        %3786 = vrot.lane.b32.xlu0 %v3785, 126
        %v3787 = vpop.permute.xlu0 %3786
        %v3789 = vadd.f32 %v3776, %v3787
        %s3790 = sld [smem:[#allocation8 + $0x7]]
        %v3791 = vstv %s3790
        %v3792 = vmul.f32 %v3791, %v2518
        %v3793 = vadd.f32 %v3789, %v3792
        %s3794 = sld [smem:[#allocation8 + $0x17]]
        %v3795 = vstv %s3794
        %v3796 = vmul.f32 %v3795, %v2518
        %3798 = vrot.lane.b32.xlu0 %v3796, 127
        %v3799 = vpop.permute.xlu0 %3798
        %v3801 = vadd.f32 %v3793, %v3799
        %s3802 = sld [smem:[#allocation8 + $0x27]]
        %v3803 = vstv %s3802
        %v3804 = vmul.f32 %v3803, %v2518
        %3806 = vrot.lane.b32.xlu0 %v3804, 126
        %v3807 = vpop.permute.xlu0 %3806
        %v3809 = vadd.f32 %v3801, %v3807
        %s3810 = sld [smem:[#allocation8 + $0x37]]
        %v3811 = vstv %s3810
        %v3812 = vmul.f32 %v3811, %v2518
        %v3813 = vmul.f32 %v3811, %v2519
        %v3816 = vrot.slane %v3812, 1
        %v3817 = vrot.slane %v3813, 1
        %v3818 = vsel %vm353, %v3816, %v3817
        %v3820 = vadd.f32 %v3809, %v3818
        %s3821 = sld [smem:[#allocation8 + $0x47]]
        %v3822 = vstv %s3821
        %v3823 = vmul.f32 %v3822, %v2518
        %v3824 = vmul.f32 %v3822, %v2519
        %v3827 = vrot.slane %v3823, 1
        %v3828 = vrot.slane %v3824, 1
        %v3829 = vsel %vm353, %v3827, %v3828
        %3830 = vrot.lane.b32.xlu0 %v3829, 127
        %v3831 = vpop.permute.xlu0 %3830
        %v3833 = vadd.f32 %v3820, %v3831
        %s3834 = sld [smem:[#allocation8 + $0x57]]
        %v3835 = vstv %s3834
        %v3836 = vmul.f32 %v3835, %v2518
        %v3837 = vmul.f32 %v3835, %v2519
        %v3840 = vrot.slane %v3836, 1
        %v3841 = vrot.slane %v3837, 1
        %v3842 = vsel %vm353, %v3840, %v3841
        %3843 = vrot.lane.b32.xlu0 %v3842, 126
        %v3844 = vpop.permute.xlu0 %3843
        %v3846 = vadd.f32 %v3833, %v3844
        %s3847 = sld [smem:[#allocation8 + $0x67]]
        %v3848 = vstv %s3847
        %v3849 = vmul.f32 %v3848, %v2518
        %v3850 = vmul.f32 %v3848, %v2519
        %v3853 = vrot.slane %v3849, 2
        %v3854 = vrot.slane %v3850, 2
        %v3855 = vsel %vm401, %v3853, %v3854
        %v3857 = vadd.f32 %v3846, %v3855
        %s3858 = sld [smem:[#allocation8 + $0x77]]
        %v3859 = vstv %s3858
        %v3860 = vmul.f32 %v3859, %v2518
        %v3861 = vmul.f32 %v3859, %v2519
        %v3864 = vrot.slane %v3860, 2
        %v3865 = vrot.slane %v3861, 2
        %v3866 = vsel %vm401, %v3864, %v3865
        %3867 = vrot.lane.b32.xlu0 %v3866, 127
        %v3868 = vpop.permute.xlu0 %3867
        %v3870 = vadd.f32 %v3857, %v3868
        %s3871 = sld [smem:[#allocation8 + $0x87]]
        %v3872 = vstv %s3871
        %v3873 = vmul.f32 %v3872, %v2518
        %v3874 = vmul.f32 %v3872, %v2519
        %v3877 = vrot.slane %v3873, 2
        %v3878 = vrot.slane %v3874, 2
        %v3879 = vsel %vm401, %v3877, %v3878
        %3880 = vrot.lane.b32.xlu0 %v3879, 126
        %v3881 = vpop.permute.xlu0 %3880
        %v3883 = vadd.f32 %v3870, %v3881
        %s3884 = sld [smem:[#allocation8 + $0xb]]
        %v3885 = vstv %s3884
        %v3886 = vmul.f32 %v3885, %v2520
        %v3887 = vadd.f32 %v3883, %v3886
        %s3888 = sld [smem:[#allocation8 + $0x1b]]
        %v3889 = vstv %s3888
        %v3890 = vmul.f32 %v3889, %v2520
        %3892 = vrot.lane.b32.xlu0 %v3890, 127
        %v3893 = vpop.permute.xlu0 %3892
        %v3895 = vadd.f32 %v3887, %v3893
        %s3896 = sld [smem:[#allocation8 + $0x2b]]
        %v3897 = vstv %s3896
        %v3898 = vmul.f32 %v3897, %v2520
        %3900 = vrot.lane.b32.xlu0 %v3898, 126
        %v3901 = vpop.permute.xlu0 %3900
        %v3903 = vadd.f32 %v3895, %v3901
        %s3904 = sld [smem:[#allocation8 + $0x3b]]
        %v3905 = vstv %s3904
        %v3906 = vmul.f32 %v3905, %v2520
        %v3907 = vmul.f32 %v3905, %v2521
        %v3910 = vrot.slane %v3906, 1
        %v3911 = vrot.slane %v3907, 1
        %v3912 = vsel %vm353, %v3910, %v3911
        %v3914 = vadd.f32 %v3903, %v3912
        %s3915 = sld [smem:[#allocation8 + $0x4b]]
        %v3916 = vstv %s3915
        %v3917 = vmul.f32 %v3916, %v2520
        %v3918 = vmul.f32 %v3916, %v2521
        %v3921 = vrot.slane %v3917, 1
        %v3922 = vrot.slane %v3918, 1
        %v3923 = vsel %vm353, %v3921, %v3922
        %3924 = vrot.lane.b32.xlu0 %v3923, 127
        %v3925 = vpop.permute.xlu0 %3924
        %v3927 = vadd.f32 %v3914, %v3925
        %s3928 = sld [smem:[#allocation8 + $0x5b]]
        %v3929 = vstv %s3928
        %v3930 = vmul.f32 %v3929, %v2520
        %v3931 = vmul.f32 %v3929, %v2521
        %v3934 = vrot.slane %v3930, 1
        %v3935 = vrot.slane %v3931, 1
        %v3936 = vsel %vm353, %v3934, %v3935
        %3937 = vrot.lane.b32.xlu0 %v3936, 126
        %v3938 = vpop.permute.xlu0 %3937
        %v3940 = vadd.f32 %v3927, %v3938
        %s3941 = sld [smem:[#allocation8 + $0x6b]]
        %v3942 = vstv %s3941
        %v3943 = vmul.f32 %v3942, %v2520
        %v3944 = vmul.f32 %v3942, %v2521
        %v3947 = vrot.slane %v3943, 2
        %v3948 = vrot.slane %v3944, 2
        %v3949 = vsel %vm401, %v3947, %v3948
        %v3951 = vadd.f32 %v3940, %v3949
        %s3952 = sld [smem:[#allocation8 + $0x7b]]
        %v3953 = vstv %s3952
        %v3954 = vmul.f32 %v3953, %v2520
        %v3955 = vmul.f32 %v3953, %v2521
        %v3958 = vrot.slane %v3954, 2
        %v3959 = vrot.slane %v3955, 2
        %v3960 = vsel %vm401, %v3958, %v3959
        %3961 = vrot.lane.b32.xlu0 %v3960, 127
        %v3962 = vpop.permute.xlu0 %3961
        %v3964 = vadd.f32 %v3951, %v3962
        %s3965 = sld [smem:[#allocation8 + $0x8b]]
        %v3966 = vstv %s3965
        %v3967 = vmul.f32 %v3966, %v2520
        %v3968 = vmul.f32 %v3966, %v2521
        %v3971 = vrot.slane %v3967, 2
        %v3972 = vrot.slane %v3968, 2
        %v3973 = vsel %vm401, %v3971, %v3972
        %3974 = vrot.lane.b32.xlu0 %v3973, 126
        %v3975 = vpop.permute.xlu0 %3974
        %v3977 = vadd.f32 %v3964, %v3975
        %s3978 = sld [smem:[#allocation8 + $0xf]]
        %v3979 = vstv %s3978
        %v3980 = vmul.f32 %v3979, %v2522
        %v3981 = vadd.f32 %v3977, %v3980
        %s3982 = sld [smem:[#allocation8 + $0x1f]]
        %v3983 = vstv %s3982
        %v3984 = vmul.f32 %v3983, %v2522
        %3986 = vrot.lane.b32.xlu0 %v3984, 127
        %v3987 = vpop.permute.xlu0 %3986
        %v3989 = vadd.f32 %v3981, %v3987
        %s3990 = sld [smem:[#allocation8 + $0x2f]]
        %v3991 = vstv %s3990
        %v3992 = vmul.f32 %v3991, %v2522
        %3994 = vrot.lane.b32.xlu0 %v3992, 126
        %v3995 = vpop.permute.xlu0 %3994
        %v3997 = vadd.f32 %v3989, %v3995
        %s3998 = sld [smem:[#allocation8 + $0x3f]]
        %v3999 = vstv %s3998
        %v4000 = vmul.f32 %v3999, %v2522
        %v4001 = vmul.f32 %v3999, %v2523
        %v4004 = vrot.slane %v4000, 1
        %v4005 = vrot.slane %v4001, 1
        %v4006 = vsel %vm353, %v4004, %v4005
        %v4008 = vadd.f32 %v3997, %v4006
        %s4009 = sld [smem:[#allocation8 + $0x4f]]
        %v4010 = vstv %s4009
        %v4011 = vmul.f32 %v4010, %v2522
        %v4012 = vmul.f32 %v4010, %v2523
        %v4015 = vrot.slane %v4011, 1
        %v4016 = vrot.slane %v4012, 1
        %v4017 = vsel %vm353, %v4015, %v4016
        %4018 = vrot.lane.b32.xlu0 %v4017, 127
        %v4019 = vpop.permute.xlu0 %4018
        %v4021 = vadd.f32 %v4008, %v4019
        %s4022 = sld [smem:[#allocation8 + $0x5f]]
        %v4023 = vstv %s4022
        %v4024 = vmul.f32 %v4023, %v2522
        %v4025 = vmul.f32 %v4023, %v2523
        %v4028 = vrot.slane %v4024, 1
        %v4029 = vrot.slane %v4025, 1
        %v4030 = vsel %vm353, %v4028, %v4029
        %4031 = vrot.lane.b32.xlu0 %v4030, 126
        %v4032 = vpop.permute.xlu0 %4031
        %v4034 = vadd.f32 %v4021, %v4032
        %s4035 = sld [smem:[#allocation8 + $0x6f]]
        %v4036 = vstv %s4035
        %v4037 = vmul.f32 %v4036, %v2522
        %v4038 = vmul.f32 %v4036, %v2523
        %v4041 = vrot.slane %v4037, 2
        %v4042 = vrot.slane %v4038, 2
        %v4043 = vsel %vm401, %v4041, %v4042
        %v4045 = vadd.f32 %v4034, %v4043
        %s4046 = sld [smem:[#allocation8 + $0x7f]]
        %v4047 = vstv %s4046
        %v4048 = vmul.f32 %v4047, %v2522
        %v4049 = vmul.f32 %v4047, %v2523
        %v4052 = vrot.slane %v4048, 2
        %v4053 = vrot.slane %v4049, 2
        %v4054 = vsel %vm401, %v4052, %v4053
        %4055 = vrot.lane.b32.xlu0 %v4054, 127
        %v4056 = vpop.permute.xlu0 %4055
        %v4058 = vadd.f32 %v4045, %v4056
        %s4059 = sld [smem:[#allocation8 + $0x8f]]
        %v4060 = vstv %s4059
        %v4061 = vmul.f32 %v4060, %v2522
        %v4062 = vmul.f32 %v4060, %v2523
        %v4065 = vrot.slane %v4061, 2
        %v4066 = vrot.slane %v4062, 2
        %v4067 = vsel %vm401, %v4065, %v4066
        %4068 = vrot.lane.b32.xlu0 %v4067, 126
        %v4069 = vpop.permute.xlu0 %4068
        %v4071 = vadd.f32 %v4058, %v4069
        %v4074 = vrot.slane %v309, 2
        %v4075 = vrot.slane %v310, 2
        %v4076 = vsel %vm401, %v4074, %v4075
        %4077 = vrot.lane.b32.xlu0 %v4076, 127
        %v4078 = vpop.permute.xlu0 %4077
        %v4080 = vadd.f32 %v4071, %v4078
        %v4081 = vmax.f32 %v4080, 0.0
        %s4082 = scalar_lea.vmem %s293, 24 [#allocation11]
        %4083 = vst.msk [vmem:[%s4082] sm:$0xff] %vm2912, %v4081
        %s4084 = sand.u32 %s156, 1
        %s4085 = scalar_lea.sflag [#allocation4], %s4084
        %s4086 = sand.u32 %s156, 1
        %s4087 = smul.addr %s4086, 32
        %s4088 = scalar_lea.vmem [#allocation11], %s4087
        // Predicated region
        $region65: #{msrb_pallas.1} parent=39 // pred_check
          %p4089 = pneg %p166
        $region66: #{msrb_pallas.1} parent=39 // pred_check_branch
          %4091 = sbr.rel (%p4089) target = $region68
        $region67: #{msrb_pallas.1} parent=39 // pred_region
          %4093 = vsyncadd %s4085, 0
          %s4094 = smul.addr %s26, 8
          %s4095 = sadd.s32 %s27, %s4094
          %s4096 = smul.addr %s4095, 8
          %s4097 = scalar_lea.hbm %s5, %s4096
          %s4098 = sshll.u32 %s4088, 4
          %s4099 = int_to_ptr.vmem [resolvable:$true] %s4098
          %s4100 = sshll.u32 %s4097, 4
          %s4101 = int_to_ptr.hbm [resolvable:$true] %s4100
          %4106 = dma.vmem_to_hbm [thread:$0]  %s4099, 512, %s4101, %s4085, 128, 256, 8
        $region68: #{msrb_pallas.1} parent=39 // pred_fallthru
          _
      $region40: #{msrb_pallas.1} parent=5 // pred_fallthru
        _
      %p4107 = scmp.le.s32.totalorder 2, %s17
      // Predicated region
      $region69: #{msrb_pallas.1} parent=5 // pred_check
        %p4108 = pneg %p4107
      $region70: #{msrb_pallas.1} parent=5 // pred_check_branch
        %4110 = sbr.rel (%p4108) target = $region72
      $region71: #{msrb_pallas.1} parent=5 // pred_region
        %s4111 = ssub.s32 %s17, 2
        // Predicated region
        $region73: #{msrb_pallas.1} parent=71 // pred_check
          %p4112 = pneg %p172
        $region74: #{msrb_pallas.1} parent=71 // pred_check_branch
          %4114 = sbr.rel (%p4112) target = $region76
        $region75: #{msrb_pallas.1} parent=71 // pred_region
          %s4115 = sand.u32 %s157, 1
          %s4116 = scalar_lea.sflag [#allocation4], %s4115
          %s4117 = sand.u32 %s157, 1
          %s4118 = smul.addr %s4117, 32
          %s4119 = scalar_lea.vmem [#allocation11], %s4118
          %4121 = dma.done %s4116, 512
        $region76: #{msrb_pallas.1} parent=71 // pred_fallthru
          _
      $region72: #{msrb_pallas.1} parent=5 // pred_fallthru
        _
    $region6: #{msrb_pallas.1} parent=1 // loop_footer
      %s21 = sadd.s32 1, %s17
    $region7: #{msrb_pallas.1} parent=1 // loop_footer_branch
      %16 = sbr.rel target = $region3
    $region8: #{msrb_pallas.1} parent=1 // loop_exit
      _
    %4122 = vsyncpa [#allocation4], 1
    %s4123 = scalar_lea.sflag [#allocation4], 1
    %4124 = vsyncpa %s4123, 1
    %4125 = vsyncpa [#allocation5], 1
    %s4126 = scalar_lea.sflag [#allocation5], 1
    %4127 = vsyncpa %s4126, 1
    %4128 = vsyncpa [#allocation7], 1
    %4129 = vsyncpa [#allocation10], 1

</llo_original>
